<compile_context>
chip_gen: v7x
topology: tpu7x:2x2x1
jax: 0.10.0
libtpu: 0.0.40
codegen_flags: <defaults>
</compile_context>

<pallas_src>
import jax
import jax.numpy as jnp
from jax import lax
from jax.experimental import pallas as pl
from jax.experimental.pallas import tpu as pltpu


# ------------------------------- Pallas kernel -------------------------------

def _vccnn_kernel(img_ref, dm_ref,
                  s1_ref, s2_ref, s3_ref,
                  m1_ref, m2_ref, m3_ref,
                  b1_ref, b2_ref, b3_ref,
                  t1_ref, t2_ref, t3_ref,
                  db1_ref, db2_ref, db3_ref,
                  d1w_ref, d1b_ref, d2w_ref, d2b_ref,
                  o_ref):
    """Whole VCCNN forward for a batch, fully fused.

    img_ref : (B*32, 64)  rows = (b, ih), lanes = [sub cols 0..31 | time cols 32..63]
    dm_ref  : (B, 64)     lanes = DM time positions
    s*_ref  : batched stride-2 row-tap selection matrices (shared by both branches)
    m*_ref  : (4, n_in, n_out) block-diagonal (sub|time) lane-expanded conv weights
    t*_ref  : lane-expanded Toeplitz matrices for the DM 1-D convs
    """
    batch = dm_ref.shape[0]

    def conv2d_layer(x, s_ref, m_ref, b_ref):
        kh = m_ref.shape[0]                       # 4 kernel rows
        rows = s_ref.shape[0] // kh               # batch * H_out rows per tap
        y = jnp.dot(s_ref[...], x, preferred_element_type=jnp.float32)
        acc = jnp.dot(y[0:rows, :], m_ref[0], preferred_element_type=jnp.float32)
        for dy in range(1, kh):
            acc = acc + jnp.dot(y[dy * rows:(dy + 1) * rows, :], m_ref[dy],
                                preferred_element_type=jnp.float32)
        return jnp.maximum(acc + b_ref[...], 0.0)

    # ---- fused Sub + Time 2-D branches (lanes block-diag: [sub | time]) ----
    x = img_ref[...]                                         # (B*32, 64)
    x = conv2d_layer(x, s1_ref, m1_ref, b1_ref)              # (B*15, 480)
    x = conv2d_layer(x, s2_ref, m2_ref, b2_ref)              # (B*6,  384)
    x = conv2d_layer(x, s3_ref, m3_ref, b3_ref)              # (2*B,  256) rows = oh*B + b

    # global max-pool: max over output rows (oh-major -> two block slices),
    # then over output cols (two 64-lane halves per branch block).
    m = jnp.maximum(x[0:batch, :], x[batch:2 * batch, :])    # (B, 256)
    sub_feat = jnp.maximum(m[:, 0:64], m[:, 64:128])         # (B, 64)
    time_feat = jnp.maximum(m[:, 128:192], m[:, 192:256])    # (B, 64)

    # ---- DM 1-D branch: three lane-dense Toeplitz matmuls on (B, lanes) ----
    a = dm_ref[...]                                          # (B, 64)
    a = jnp.maximum(jnp.dot(a, t1_ref[...], preferred_element_type=jnp.float32)
                    + db1_ref[...], 0.0)                     # (B, 49*16 = 784)
    a = jnp.maximum(jnp.dot(a, t2_ref[...], preferred_element_type=jnp.float32)
                    + db2_ref[...], 0.0)                     # (B, 17*32 = 544)
    a = jnp.maximum(jnp.dot(a, t3_ref[...], preferred_element_type=jnp.float32)
                    + db3_ref[...], 0.0)                     # (B, 10*64 = 640)
    dm_feat = a[:, 0:64]                                     # max over the 10 positions
    for l in range(1, 10):
        dm_feat = jnp.maximum(dm_feat, a[:, l * 64:(l + 1) * 64])   # (B, 64)

    # ---- head: batched dense1 / ReLU / dense2 / sigmoid, single store ----
    merged = jnp.concatenate([sub_feat, time_feat, dm_feat], axis=1)   # (B, 192)
    h = jnp.maximum(jnp.dot(merged, d1w_ref[...], preferred_element_type=jnp.float32)
                    + d1b_ref[...], 0.0)                               # (B, 32)
    z = jnp.dot(h, d2w_ref[...], preferred_element_type=jnp.float32) + d2b_ref[...]
    o_ref[...] = jax.nn.sigmoid(z)                                     # (B, 1)


# ---------------------- weight / operand precomputation ----------------------

def _h_select_batched(h_in, k, stride, batch, out_hb=False):
    """Batched stride-`stride` row-tap selection matrix.

    Input rows are ordered (b, ih); output rows are grouped by tap dy and,
    within each dy block, ordered (b, oh) (default) or (oh, b) if out_hb.
    S[row_out, row_in] = 1 iff same sample and ih == stride*oh + dy.
    """
    ho = (h_in - k) // stride + 1
    dy = jnp.arange(k).reshape(k, 1, 1, 1, 1)
    bo = jnp.arange(batch).reshape(1, batch, 1, 1, 1)
    oh = jnp.arange(ho).reshape(1, 1, ho, 1, 1)
    bi = jnp.arange(batch).reshape(1, 1, 1, batch, 1)
    ih = jnp.arange(h_in).reshape(1, 1, 1, 1, h_in)
    sel = ((bo == bi) & (ih == stride * oh + dy)).astype(jnp.float32)
    if out_hb:
        sel = jnp.transpose(sel, (0, 2, 1, 3, 4))   # (k, oh, b, bi, ih)
    return sel.reshape(k * batch * ho, batch * h_in)


def _lane_weight(w, w_in, stride):
    """Fold W-taps + channel mixing into per-row-tap matrices.

    w: torch layout (Cout, Cin, kh, kw).
    Returns M of shape (kh, W_in*Cin, Wo*Cout) with
      M[dy, iw*Cin+cin, ow*Cout+cout] = w[cout, cin, dy, iw - stride*ow]
      when 0 <= iw - stride*ow < kw, else 0.
    """
    cout, cin, kh, kw = w.shape
    wo = (w_in - kw) // stride + 1
    wt = jnp.transpose(w, (2, 3, 1, 0))              # (kh, kw, Cin, Cout)
    iw = jnp.arange(w_in)[:, None]
    ow = jnp.arange(wo)[None, :]
    dx = iw - stride * ow                            # (W_in, Wo)
    valid = (dx >= 0) & (dx < kw)
    m = wt[:, jnp.clip(dx, 0, kw - 1)]               # (kh, W_in, Wo, Cin, Cout)
    m = jnp.where(valid[None, :, :, None, None], m, 0.0)
    m = jnp.transpose(m, (0, 1, 3, 2, 4))            # (kh, W_in, Cin, Wo, Cout)
    return m.reshape(kh, w_in * cin, wo * cout)


def _block_diag_pair(a, b):
    """Stack two (kh, n_in, n_out) lane-weight tensors block-diagonally."""
    kh, ni, no = a.shape
    zero = jnp.zeros((kh, ni, no), a.dtype)
    top = jnp.concatenate([a, zero], axis=2)
    bot = jnp.concatenate([zero, b], axis=2)
    return jnp.concatenate([top, bot], axis=1)       # (kh, 2*ni, 2*no)


def _toeplitz_1d(w, l_in, stride):
    """Lane-expanded 1-D conv matrix.

    w: torch layout (Cout, Cin, K).  Input lanes = (pos_in*Cin + cin),
    output lanes = (pos_out*Cout + cout).
    T[pi*Cin+ci, po*Cout+co] = w[co, ci, pi - stride*po] when valid, else 0.
    """
    cout, cin, k = w.shape
    l_out = (l_in - k) // stride + 1
    wt = jnp.transpose(w, (2, 1, 0))                 # (K, Cin, Cout)
    pi = jnp.arange(l_in)[:, None]
    po = jnp.arange(l_out)[None, :]
    dt = pi - stride * po                            # (l_in, l_out)
    valid = (dt >= 0) & (dt < k)
    m = wt[jnp.clip(dt, 0, k - 1)]                   # (l_in, l_out, Cin, Cout)
    m = jnp.where(valid[:, :, None, None], m, 0.0)
    m = jnp.transpose(m, (0, 2, 1, 3))               # (l_in, Cin, l_out, Cout)
    return m.reshape(l_in * cin, l_out * cout)


def precompute(params, batch):
    """One-time transform of the PyTorch-layout weights into kernel operands."""
    prep = {}
    # Batched row-tap selection matrices (shared by both 2-D branches).
    prep["s1"] = _h_select_batched(32, 4, 2, batch)               # (4*B*15, B*32)
    prep["s2"] = _h_select_batched(15, 4, 2, batch)               # (4*B*6,  B*15)
    prep["s3"] = _h_select_batched(6, 4, 2, batch, out_hb=True)   # (4*B*2,  B*6)

    # Block-diagonal (Sub | Time) lane-expanded conv weights + lane biases.
    for li, (w_in, wo) in enumerate([(32, 15), (15, 6), (6, 2)], start=1):
        ms = _lane_weight(params[f"sub_w{li}"], w_in, 2)
        mt = _lane_weight(params[f"time_w{li}"], w_in, 2)
        prep[f"m{li}"] = _block_diag_pair(ms, mt)
        prep[f"b{li}"] = jnp.concatenate(
            [jnp.tile(params[f"sub_b{li}"], wo),
             jnp.tile(params[f"time_b{li}"], wo)]).reshape(1, -1)

    # DM branch: lane-expanded Toeplitz matmuls (64 -> 49*16 -> 17*32 -> 10*64).
    prep["t1"] = _toeplitz_1d(params["dm_w1"], 64, 1)    # (64, 784)
    prep["t2"] = _toeplitz_1d(params["dm_w2"], 49, 2)    # (784, 544)
    prep["t3"] = _toeplitz_1d(params["dm_w3"], 17, 1)    # (544, 640)
    prep["db1"] = jnp.tile(params["dm_b1"], 49).reshape(1, -1)
    prep["db2"] = jnp.tile(params["dm_b2"], 17).reshape(1, -1)
    prep["db3"] = jnp.tile(params["dm_b3"], 10).reshape(1, -1)

    # Dense head (stored as (in, out)).
    prep["d1_w"] = params["d1_w"]
    prep["d1_b"] = params["d1_b"].reshape(1, -1)
    prep["d2_w"] = params["d2_w"]
    prep["d2_b"] = params["d2_b"].reshape(1, -1)
    return prep


# ------------------------------- pallas wrapper -------------------------------

def vccnn_forward(prep, Sub_x, Time_x, DM_x):
    batch = Sub_x.shape[0]
    # NCHW / NCL torch layout at the boundary -> kernel operand layouts.
    img = jnp.concatenate([Sub_x[:, 0], Time_x[:, 0]], axis=2)   # (B, 32, 64)
    img = img.reshape(batch * 32, 64)                            # rows = (b, ih)
    dm = DM_x[:, 0, :]                                           # (B, 64)

    args = (img, dm,
            prep["s1"], prep["s2"], prep["s3"],
            prep["m1"], prep["m2"], prep["m3"],
            prep["b1"], prep["b2"], prep["b3"],
            prep["t1"], prep["t2"], prep["t3"],
            prep["db1"], prep["db2"], prep["db3"],
            prep["d1_w"], prep["d1_b"], prep["d2_w"], prep["d2_b"])

    return pl.pallas_call(
        _vccnn_kernel,
        out_shape=jax.ShapeDtypeStruct((batch, 1), jnp.float32),
        in_specs=[pl.BlockSpec(memory_space=pltpu.MemorySpace.VMEM) for _ in args],
        out_specs=pl.BlockSpec(memory_space=pltpu.MemorySpace.VMEM),
        compiler_params=pltpu.CompilerParams(vmem_limit_bytes=48 * 1024 * 1024),
    )(*args)


# ----------------------------- pure-JAX reference -----------------------------

def _ref_conv1d(x, w, b, stride):
    y = lax.conv_general_dilated(x, w, (stride,), "VALID",
                                 dimension_numbers=("NCH", "OIH", "NCH"))
    return jax.nn.relu(y + b[None, :, None])


def _ref_conv2d(x, w, b, stride):
    y = lax.conv_general_dilated(x, w, (stride, stride), "VALID",
                                 dimension_numbers=("NCHW", "OIHW", "NCHW"))
    return jax.nn.relu(y + b[None, :, None, None])


def vccnn_reference(params, Sub_x, Time_x, DM_x):
    p = params
    dm = _ref_conv1d(DM_x, p["dm_w1"], p["dm_b1"], 1)
    dm = _ref_conv1d(dm, p["dm_w2"], p["dm_b2"], 2)
    dm = _ref_conv1d(dm, p["dm_w3"], p["dm_b3"], 1)
    dm_feat = jnp.max(dm, axis=2)

    def branch2d(x, pref):
        x = _ref_conv2d(x, p[f"{pref}_w1"], p[f"{pref}_b1"], 2)
        x = _ref_conv2d(x, p[f"{pref}_w2"], p[f"{pref}_b2"], 2)
        x = _ref_conv2d(x, p[f"{pref}_w3"], p[f"{pref}_b3"], 2)
        return jnp.max(x, axis=(2, 3))

    time_feat = branch2d(Time_x, "time")
    sub_feat = branch2d(Sub_x, "sub")
    merged = jnp.concatenate([sub_feat, time_feat, dm_feat], axis=1)
    h = jax.nn.relu(merged @ p["d1_w"] + p["d1_b"])
    return jax.nn.sigmoid(h @ p["d2_w"] + p["d2_b"])


# --------------------------------- params init ---------------------------------

def init_params(key):
    def w(key, shape, scale=0.05):
        return scale * jax.random.normal(key, shape, dtype=jnp.float32)

    keys = jax.random.split(key, 24)
    k = iter(keys)
    params = {
        # DM 1D-conv branch (torch layout (Cout, Cin, K))
        "dm_w1": w(next(k), (16, 1, 16)),  "dm_b1": w(next(k), (16,)),
        "dm_w2": w(next(k), (32, 16, 16)), "dm_b2": w(next(k), (32,)),
        "dm_w3": w(next(k), (64, 32, 8)),  "dm_b3": w(next(k), (64,)),
        # Time 2D-conv branch (torch layout (Cout, Cin, kh, kw))
        "time_w1": w(next(k), (16, 1, 4, 4)),  "time_b1": w(next(k), (16,)),
        "time_w2": w(next(k), (32, 16, 4, 4)), "time_b2": w(next(k), (32,)),
        "time_w3": w(next(k), (64, 32, 4, 4)), "time_b3": w(next(k), (64,)),
        # Sub 2D-conv branch
        "sub_w1": w(next(k), (16, 1, 4, 4)),  "sub_b1": w(next(k), (16,)),
        "sub_w2": w(next(k), (32, 16, 4, 4)), "sub_b2": w(next(k), (32,)),
        "sub_w3": w(next(k), (64, 32, 4, 4)), "sub_b3": w(next(k), (64,)),
        # Dense head ((in, out), i.e. transposed PyTorch Linear weights)
        "d1_w": w(next(k), (192, 32)), "d1_b": w(next(k), (32,)),
        "d2_w": w(next(k), (32, 1)),   "d2_b": w(next(k), (1,)),
    }
    return params


# ------------------------------------ main ------------------------------------

if __name__ == "__main__":
    key = jax.random.PRNGKey(0)
    kp, ks, kt, kd = jax.random.split(key, 4)

    params = init_params(kp)

    B = 2
    prep = precompute(params, B)       # one-time weight transform (JAX, outside kernel)

    Sub_x = jax.random.normal(ks, (B, 1, 32, 32), dtype=jnp.float32)   # NCHW
    Time_x = jax.random.normal(kt, (B, 1, 32, 32), dtype=jnp.float32)  # NCHW
    DM_x = jax.random.normal(kd, (B, 1, 64), dtype=jnp.float32)        # NCL

    fwd = jax.jit(vccnn_forward)
    out = jax.block_until_ready(fwd(prep, Sub_x, Time_x, DM_x))

    ref = jax.block_until_ready(vccnn_reference(params, Sub_x, Time_x, DM_x))
    assert out.shape == (B, 1), out.shape
    assert jnp.allclose(out, ref, atol=1e-4, rtol=1e-4), (out, ref)

    print("KERNEL_OK")
</pallas_src>

<mosaic_0001>
module attributes {stable_mosaic.version = 11 : i64} {
  func.func @_vccnn_kernel(%arg0: memref<64x64xf32, #tpu.memory_space<vmem>>, %arg1: memref<2x64xf32, #tpu.memory_space<vmem>>, %arg2: memref<120x64xf32, #tpu.memory_space<vmem>>, %arg3: memref<48x30xf32, #tpu.memory_space<vmem>>, %arg4: memref<16x12xf32, #tpu.memory_space<vmem>>, %arg5: memref<4x64x480xf32, #tpu.memory_space<vmem>>, %arg6: memref<4x480x384xf32, #tpu.memory_space<vmem>>, %arg7: memref<4x384x256xf32, #tpu.memory_space<vmem>>, %arg8: memref<1x480xf32, #tpu.memory_space<vmem>>, %arg9: memref<1x384xf32, #tpu.memory_space<vmem>>, %arg10: memref<1x256xf32, #tpu.memory_space<vmem>>, %arg11: memref<64x784xf32, #tpu.memory_space<vmem>>, %arg12: memref<784x544xf32, #tpu.memory_space<vmem>>, %arg13: memref<544x640xf32, #tpu.memory_space<vmem>>, %arg14: memref<1x784xf32, #tpu.memory_space<vmem>>, %arg15: memref<1x544xf32, #tpu.memory_space<vmem>>, %arg16: memref<1x640xf32, #tpu.memory_space<vmem>>, %arg17: memref<192x32xf32, #tpu.memory_space<vmem>>, %arg18: memref<1x32xf32, #tpu.memory_space<vmem>>, %arg19: memref<32x1xf32, #tpu.memory_space<vmem>>, %arg20: memref<1x1xf32, #tpu.memory_space<vmem>>, %arg21: memref<2x1xf32, #tpu.memory_space<vmem>>) attributes {dimension_semantics = [], scalar_prefetch = 0 : i64, scratch_operands = 0 : i64, tpu.core_type = #tpu.core_type<tc>} {
    %c0 = arith.constant 0 : index
    %c0_0 = arith.constant 0 : index
    %0 = vector.load %arg0[%c0, %c0_0] : memref<64x64xf32, #tpu.memory_space<vmem>>, vector<64x64xf32>
    %c0_1 = arith.constant 0 : index
    %c0_2 = arith.constant 0 : index
    %1 = vector.load %arg2[%c0_1, %c0_2] : memref<120x64xf32, #tpu.memory_space<vmem>>, vector<120x64xf32>
    %cst = arith.constant dense<0.000000e+00> : vector<120x64xf32>
    %2 = tpu.matmul %1, %0, %cst {dimension_numbers = #tpu.dot_dimension_numbers<[1], [0], [0], [1], [0, 0, 1, 1], [], []>} : vector<120x64xf32>, vector<64x64xf32>, vector<120x64xf32> -> vector<120x64xf32>
    %3 = vector.extract_strided_slice %2 {offsets = [0, 0], sizes = [30, 64], strides = [1, 1]} : vector<120x64xf32> to vector<30x64xf32>
    %c0_3 = arith.constant 0 : index
    %c0_4 = arith.constant 0 : index
    %c0_5 = arith.constant 0 : index
    %4 = vector.load %arg5[%c0_3, %c0_4, %c0_5] : memref<4x64x480xf32, #tpu.memory_space<vmem>>, vector<1x64x480xf32>
    %5 = vector.shape_cast %4 : vector<1x64x480xf32> to vector<64x480xf32>
    %cst_6 = arith.constant dense<0.000000e+00> : vector<30x480xf32>
    %6 = tpu.matmul %3, %5, %cst_6 {dimension_numbers = #tpu.dot_dimension_numbers<[1], [0], [0], [1], [0, 0, 1, 1], [], []>} : vector<30x64xf32>, vector<64x480xf32>, vector<30x480xf32> -> vector<30x480xf32>
    %7 = vector.extract_strided_slice %2 {offsets = [30, 0], sizes = [30, 64], strides = [1, 1]} : vector<120x64xf32> to vector<30x64xf32>
    %c1 = arith.constant 1 : index
    %c0_7 = arith.constant 0 : index
    %c0_8 = arith.constant 0 : index
    %8 = vector.load %arg5[%c1, %c0_7, %c0_8] : memref<4x64x480xf32, #tpu.memory_space<vmem>>, vector<1x64x480xf32>
    %9 = vector.shape_cast %8 : vector<1x64x480xf32> to vector<64x480xf32>
    %cst_9 = arith.constant dense<0.000000e+00> : vector<30x480xf32>
    %10 = tpu.matmul %7, %9, %cst_9 {dimension_numbers = #tpu.dot_dimension_numbers<[1], [0], [0], [1], [0, 0, 1, 1], [], []>} : vector<30x64xf32>, vector<64x480xf32>, vector<30x480xf32> -> vector<30x480xf32>
    %11 = arith.addf %6, %10 : vector<30x480xf32>
    %12 = vector.extract_strided_slice %2 {offsets = [60, 0], sizes = [30, 64], strides = [1, 1]} : vector<120x64xf32> to vector<30x64xf32>
    %c2 = arith.constant 2 : index
    %c0_10 = arith.constant 0 : index
    %c0_11 = arith.constant 0 : index
    %13 = vector.load %arg5[%c2, %c0_10, %c0_11] : memref<4x64x480xf32, #tpu.memory_space<vmem>>, vector<1x64x480xf32>
    %14 = vector.shape_cast %13 : vector<1x64x480xf32> to vector<64x480xf32>
    %cst_12 = arith.constant dense<0.000000e+00> : vector<30x480xf32>
    %15 = tpu.matmul %12, %14, %cst_12 {dimension_numbers = #tpu.dot_dimension_numbers<[1], [0], [0], [1], [0, 0, 1, 1], [], []>} : vector<30x64xf32>, vector<64x480xf32>, vector<30x480xf32> -> vector<30x480xf32>
    %16 = arith.addf %11, %15 : vector<30x480xf32>
    %17 = vector.extract_strided_slice %2 {offsets = [90, 0], sizes = [30, 64], strides = [1, 1]} : vector<120x64xf32> to vector<30x64xf32>
    %c3 = arith.constant 3 : index
    %c0_13 = arith.constant 0 : index
    %c0_14 = arith.constant 0 : index
    %18 = vector.load %arg5[%c3, %c0_13, %c0_14] : memref<4x64x480xf32, #tpu.memory_space<vmem>>, vector<1x64x480xf32>
    %19 = vector.shape_cast %18 : vector<1x64x480xf32> to vector<64x480xf32>
    %cst_15 = arith.constant dense<0.000000e+00> : vector<30x480xf32>
    %20 = tpu.matmul %17, %19, %cst_15 {dimension_numbers = #tpu.dot_dimension_numbers<[1], [0], [0], [1], [0, 0, 1, 1], [], []>} : vector<30x64xf32>, vector<64x480xf32>, vector<30x480xf32> -> vector<30x480xf32>
    %21 = arith.addf %16, %20 : vector<30x480xf32>
    %c0_16 = arith.constant 0 : index
    %c0_17 = arith.constant 0 : index
    %22 = vector.load %arg8[%c0_16, %c0_17] : memref<1x480xf32, #tpu.memory_space<vmem>>, vector<1x480xf32>
    %23 = vector.broadcast %22 : vector<1x480xf32> to vector<30x480xf32>
    %24 = arith.addf %21, %23 : vector<30x480xf32>
    %cst_18 = arith.constant 0.000000e+00 : f32
    %25 = vector.broadcast %cst_18 : f32 to vector<30x480xf32>
    %26 = arith.maximumf %24, %25 : vector<30x480xf32>
    %c0_19 = arith.constant 0 : index
    %c0_20 = arith.constant 0 : index
    %27 = vector.load %arg3[%c0_19, %c0_20] : memref<48x30xf32, #tpu.memory_space<vmem>>, vector<48x30xf32>
    %cst_21 = arith.constant dense<0.000000e+00> : vector<48x480xf32>
    %28 = tpu.matmul %27, %26, %cst_21 {dimension_numbers = #tpu.dot_dimension_numbers<[1], [0], [0], [1], [0, 0, 1, 1], [], []>} : vector<48x30xf32>, vector<30x480xf32>, vector<48x480xf32> -> vector<48x480xf32>
    %29 = vector.extract_strided_slice %28 {offsets = [0, 0], sizes = [12, 480], strides = [1, 1]} : vector<48x480xf32> to vector<12x480xf32>
    %c0_22 = arith.constant 0 : index
    %c0_23 = arith.constant 0 : index
    %c0_24 = arith.constant 0 : index
    %30 = vector.load %arg6[%c0_22, %c0_23, %c0_24] : memref<4x480x384xf32, #tpu.memory_space<vmem>>, vector<1x480x384xf32>
    %31 = vector.shape_cast %30 : vector<1x480x384xf32> to vector<480x384xf32>
    %cst_25 = arith.constant dense<0.000000e+00> : vector<12x384xf32>
    %32 = tpu.matmul %29, %31, %cst_25 {dimension_numbers = #tpu.dot_dimension_numbers<[1], [0], [0], [1], [0, 0, 1, 1], [], []>} : vector<12x480xf32>, vector<480x384xf32>, vector<12x384xf32> -> vector<12x384xf32>
    %33 = vector.extract_strided_slice %28 {offsets = [12, 0], sizes = [12, 480], strides = [1, 1]} : vector<48x480xf32> to vector<12x480xf32>
    %c1_26 = arith.constant 1 : index
    %c0_27 = arith.constant 0 : index
    %c0_28 = arith.constant 0 : index
    %34 = vector.load %arg6[%c1_26, %c0_27, %c0_28] : memref<4x480x384xf32, #tpu.memory_space<vmem>>, vector<1x480x384xf32>
    %35 = vector.shape_cast %34 : vector<1x480x384xf32> to vector<480x384xf32>
    %cst_29 = arith.constant dense<0.000000e+00> : vector<12x384xf32>
    %36 = tpu.matmul %33, %35, %cst_29 {dimension_numbers = #tpu.dot_dimension_numbers<[1], [0], [0], [1], [0, 0, 1, 1], [], []>} : vector<12x480xf32>, vector<480x384xf32>, vector<12x384xf32> -> vector<12x384xf32>
    %37 = arith.addf %32, %36 : vector<12x384xf32>
    %38 = vector.extract_strided_slice %28 {offsets = [24, 0], sizes = [12, 480], strides = [1, 1]} : vector<48x480xf32> to vector<12x480xf32>
    %c2_30 = arith.constant 2 : index
    %c0_31 = arith.constant 0 : index
    %c0_32 = arith.constant 0 : index
    %39 = vector.load %arg6[%c2_30, %c0_31, %c0_32] : memref<4x480x384xf32, #tpu.memory_space<vmem>>, vector<1x480x384xf32>
    %40 = vector.shape_cast %39 : vector<1x480x384xf32> to vector<480x384xf32>
    %cst_33 = arith.constant dense<0.000000e+00> : vector<12x384xf32>
    %41 = tpu.matmul %38, %40, %cst_33 {dimension_numbers = #tpu.dot_dimension_numbers<[1], [0], [0], [1], [0, 0, 1, 1], [], []>} : vector<12x480xf32>, vector<480x384xf32>, vector<12x384xf32> -> vector<12x384xf32>
    %42 = arith.addf %37, %41 : vector<12x384xf32>
    %43 = vector.extract_strided_slice %28 {offsets = [36, 0], sizes = [12, 480], strides = [1, 1]} : vector<48x480xf32> to vector<12x480xf32>
    %c3_34 = arith.constant 3 : index
    %c0_35 = arith.constant 0 : index
    %c0_36 = arith.constant 0 : index
    %44 = vector.load %arg6[%c3_34, %c0_35, %c0_36] : memref<4x480x384xf32, #tpu.memory_space<vmem>>, vector<1x480x384xf32>
    %45 = vector.shape_cast %44 : vector<1x480x384xf32> to vector<480x384xf32>
    %cst_37 = arith.constant dense<0.000000e+00> : vector<12x384xf32>
    %46 = tpu.matmul %43, %45, %cst_37 {dimension_numbers = #tpu.dot_dimension_numbers<[1], [0], [0], [1], [0, 0, 1, 1], [], []>} : vector<12x480xf32>, vector<480x384xf32>, vector<12x384xf32> -> vector<12x384xf32>
    %47 = arith.addf %42, %46 : vector<12x384xf32>
    %c0_38 = arith.constant 0 : index
    %c0_39 = arith.constant 0 : index
    %48 = vector.load %arg9[%c0_38, %c0_39] : memref<1x384xf32, #tpu.memory_space<vmem>>, vector<1x384xf32>
    %49 = vector.broadcast %48 : vector<1x384xf32> to vector<12x384xf32>
    %50 = arith.addf %47, %49 : vector<12x384xf32>
    %cst_40 = arith.constant 0.000000e+00 : f32
    %51 = vector.broadcast %cst_40 : f32 to vector<12x384xf32>
    %52 = arith.maximumf %50, %51 : vector<12x384xf32>
    %c0_41 = arith.constant 0 : index
    %c0_42 = arith.constant 0 : index
    %53 = vector.load %arg4[%c0_41, %c0_42] : memref<16x12xf32, #tpu.memory_space<vmem>>, vector<16x12xf32>
    %cst_43 = arith.constant dense<0.000000e+00> : vector<16x384xf32>
    %54 = tpu.matmul %53, %52, %cst_43 {dimension_numbers = #tpu.dot_dimension_numbers<[1], [0], [0], [1], [0, 0, 1, 1], [], []>} : vector<16x12xf32>, vector<12x384xf32>, vector<16x384xf32> -> vector<16x384xf32>
    %55 = vector.extract_strided_slice %54 {offsets = [0, 0], sizes = [4, 384], strides = [1, 1]} : vector<16x384xf32> to vector<4x384xf32>
    %c0_44 = arith.constant 0 : index
    %c0_45 = arith.constant 0 : index
    %c0_46 = arith.constant 0 : index
    %56 = vector.load %arg7[%c0_44, %c0_45, %c0_46] : memref<4x384x256xf32, #tpu.memory_space<vmem>>, vector<1x384x256xf32>
    %57 = vector.shape_cast %56 : vector<1x384x256xf32> to vector<384x256xf32>
    %cst_47 = arith.constant dense<0.000000e+00> : vector<4x256xf32>
    %58 = tpu.matmul %55, %57, %cst_47 {dimension_numbers = #tpu.dot_dimension_numbers<[1], [0], [0], [1], [0, 0, 1, 1], [], []>} : vector<4x384xf32>, vector<384x256xf32>, vector<4x256xf32> -> vector<4x256xf32>
    %59 = vector.extract_strided_slice %54 {offsets = [4, 0], sizes = [4, 384], strides = [1, 1]} : vector<16x384xf32> to vector<4x384xf32>
    %c1_48 = arith.constant 1 : index
    %c0_49 = arith.constant 0 : index
    %c0_50 = arith.constant 0 : index
    %60 = vector.load %arg7[%c1_48, %c0_49, %c0_50] : memref<4x384x256xf32, #tpu.memory_space<vmem>>, vector<1x384x256xf32>
    %61 = vector.shape_cast %60 : vector<1x384x256xf32> to vector<384x256xf32>
    %cst_51 = arith.constant dense<0.000000e+00> : vector<4x256xf32>
    %62 = tpu.matmul %59, %61, %cst_51 {dimension_numbers = #tpu.dot_dimension_numbers<[1], [0], [0], [1], [0, 0, 1, 1], [], []>} : vector<4x384xf32>, vector<384x256xf32>, vector<4x256xf32> -> vector<4x256xf32>
    %63 = arith.addf %58, %62 : vector<4x256xf32>
    %64 = vector.extract_strided_slice %54 {offsets = [8, 0], sizes = [4, 384], strides = [1, 1]} : vector<16x384xf32> to vector<4x384xf32>
    %c2_52 = arith.constant 2 : index
    %c0_53 = arith.constant 0 : index
    %c0_54 = arith.constant 0 : index
    %65 = vector.load %arg7[%c2_52, %c0_53, %c0_54] : memref<4x384x256xf32, #tpu.memory_space<vmem>>, vector<1x384x256xf32>
    %66 = vector.shape_cast %65 : vector<1x384x256xf32> to vector<384x256xf32>
    %cst_55 = arith.constant dense<0.000000e+00> : vector<4x256xf32>
    %67 = tpu.matmul %64, %66, %cst_55 {dimension_numbers = #tpu.dot_dimension_numbers<[1], [0], [0], [1], [0, 0, 1, 1], [], []>} : vector<4x384xf32>, vector<384x256xf32>, vector<4x256xf32> -> vector<4x256xf32>
    %68 = arith.addf %63, %67 : vector<4x256xf32>
    %69 = vector.extract_strided_slice %54 {offsets = [12, 0], sizes = [4, 384], strides = [1, 1]} : vector<16x384xf32> to vector<4x384xf32>
    %c3_56 = arith.constant 3 : index
    %c0_57 = arith.constant 0 : index
    %c0_58 = arith.constant 0 : index
    %70 = vector.load %arg7[%c3_56, %c0_57, %c0_58] : memref<4x384x256xf32, #tpu.memory_space<vmem>>, vector<1x384x256xf32>
    %71 = vector.shape_cast %70 : vector<1x384x256xf32> to vector<384x256xf32>
    %cst_59 = arith.constant dense<0.000000e+00> : vector<4x256xf32>
    %72 = tpu.matmul %69, %71, %cst_59 {dimension_numbers = #tpu.dot_dimension_numbers<[1], [0], [0], [1], [0, 0, 1, 1], [], []>} : vector<4x384xf32>, vector<384x256xf32>, vector<4x256xf32> -> vector<4x256xf32>
    %73 = arith.addf %68, %72 : vector<4x256xf32>
    %c0_60 = arith.constant 0 : index
    %c0_61 = arith.constant 0 : index
    %74 = vector.load %arg10[%c0_60, %c0_61] : memref<1x256xf32, #tpu.memory_space<vmem>>, vector<1x256xf32>
    %75 = vector.broadcast %74 : vector<1x256xf32> to vector<4x256xf32>
    %76 = arith.addf %73, %75 : vector<4x256xf32>
    %cst_62 = arith.constant 0.000000e+00 : f32
    %77 = vector.broadcast %cst_62 : f32 to vector<4x256xf32>
    %78 = arith.maximumf %76, %77 : vector<4x256xf32>
    %79 = vector.extract_strided_slice %78 {offsets = [0, 0], sizes = [2, 256], strides = [1, 1]} : vector<4x256xf32> to vector<2x256xf32>
    %80 = vector.extract_strided_slice %78 {offsets = [2, 0], sizes = [2, 256], strides = [1, 1]} : vector<4x256xf32> to vector<2x256xf32>
    %81 = arith.maximumf %79, %80 : vector<2x256xf32>
    %82 = vector.extract_strided_slice %81 {offsets = [0, 0], sizes = [2, 64], strides = [1, 1]} : vector<2x256xf32> to vector<2x64xf32>
    %83 = vector.extract_strided_slice %81 {offsets = [0, 64], sizes = [2, 64], strides = [1, 1]} : vector<2x256xf32> to vector<2x64xf32>
    %84 = arith.maximumf %82, %83 : vector<2x64xf32>
    %85 = vector.extract_strided_slice %81 {offsets = [0, 128], sizes = [2, 64], strides = [1, 1]} : vector<2x256xf32> to vector<2x64xf32>
    %86 = vector.extract_strided_slice %81 {offsets = [0, 192], sizes = [2, 64], strides = [1, 1]} : vector<2x256xf32> to vector<2x64xf32>
    %87 = arith.maximumf %85, %86 : vector<2x64xf32>
    %c0_63 = arith.constant 0 : index
    %c0_64 = arith.constant 0 : index
    %88 = vector.load %arg1[%c0_63, %c0_64] : memref<2x64xf32, #tpu.memory_space<vmem>>, vector<2x64xf32>
    %c0_65 = arith.constant 0 : index
    %c0_66 = arith.constant 0 : index
    %89 = vector.load %arg11[%c0_65, %c0_66] : memref<64x784xf32, #tpu.memory_space<vmem>>, vector<64x784xf32>
    %cst_67 = arith.constant dense<0.000000e+00> : vector<2x784xf32>
    %90 = tpu.matmul %88, %89, %cst_67 {dimension_numbers = #tpu.dot_dimension_numbers<[1], [0], [0], [1], [0, 0, 1, 1], [], []>} : vector<2x64xf32>, vector<64x784xf32>, vector<2x784xf32> -> vector<2x784xf32>
    %c0_68 = arith.constant 0 : index
    %c0_69 = arith.constant 0 : index
    %91 = vector.load %arg14[%c0_68, %c0_69] : memref<1x784xf32, #tpu.memory_space<vmem>>, vector<1x784xf32>
    %92 = vector.broadcast %91 : vector<1x784xf32> to vector<2x784xf32>
    %93 = arith.addf %90, %92 : vector<2x784xf32>
    %cst_70 = arith.constant 0.000000e+00 : f32
    %94 = vector.broadcast %cst_70 : f32 to vector<2x784xf32>
    %95 = arith.maximumf %93, %94 : vector<2x784xf32>
    %c0_71 = arith.constant 0 : index
    %c0_72 = arith.constant 0 : index
    %96 = vector.load %arg12[%c0_71, %c0_72] : memref<784x544xf32, #tpu.memory_space<vmem>>, vector<784x544xf32>
    %cst_73 = arith.constant dense<0.000000e+00> : vector<2x544xf32>
    %97 = tpu.matmul %95, %96, %cst_73 {dimension_numbers = #tpu.dot_dimension_numbers<[1], [0], [0], [1], [0, 0, 1, 1], [], []>} : vector<2x784xf32>, vector<784x544xf32>, vector<2x544xf32> -> vector<2x544xf32>
    %c0_74 = arith.constant 0 : index
    %c0_75 = arith.constant 0 : index
    %98 = vector.load %arg15[%c0_74, %c0_75] : memref<1x544xf32, #tpu.memory_space<vmem>>, vector<1x544xf32>
    %99 = vector.broadcast %98 : vector<1x544xf32> to vector<2x544xf32>
    %100 = arith.addf %97, %99 : vector<2x544xf32>
    %cst_76 = arith.constant 0.000000e+00 : f32
    %101 = vector.broadcast %cst_76 : f32 to vector<2x544xf32>
    %102 = arith.maximumf %100, %101 : vector<2x544xf32>
    %c0_77 = arith.constant 0 : index
    %c0_78 = arith.constant 0 : index
    %103 = vector.load %arg13[%c0_77, %c0_78] : memref<544x640xf32, #tpu.memory_space<vmem>>, vector<544x640xf32>
    %cst_79 = arith.constant dense<0.000000e+00> : vector<2x640xf32>
    %104 = tpu.matmul %102, %103, %cst_79 {dimension_numbers = #tpu.dot_dimension_numbers<[1], [0], [0], [1], [0, 0, 1, 1], [], []>} : vector<2x544xf32>, vector<544x640xf32>, vector<2x640xf32> -> vector<2x640xf32>
    %c0_80 = arith.constant 0 : index
    %c0_81 = arith.constant 0 : index
    %105 = vector.load %arg16[%c0_80, %c0_81] : memref<1x640xf32, #tpu.memory_space<vmem>>, vector<1x640xf32>
    %106 = vector.broadcast %105 : vector<1x640xf32> to vector<2x640xf32>
    %107 = arith.addf %104, %106 : vector<2x640xf32>
    %cst_82 = arith.constant 0.000000e+00 : f32
    %108 = vector.broadcast %cst_82 : f32 to vector<2x640xf32>
    %109 = arith.maximumf %107, %108 : vector<2x640xf32>
    %110 = vector.extract_strided_slice %109 {offsets = [0, 0], sizes = [2, 64], strides = [1, 1]} : vector<2x640xf32> to vector<2x64xf32>
    %111 = vector.extract_strided_slice %109 {offsets = [0, 64], sizes = [2, 64], strides = [1, 1]} : vector<2x640xf32> to vector<2x64xf32>
    %112 = arith.maximumf %110, %111 : vector<2x64xf32>
    %113 = vector.extract_strided_slice %109 {offsets = [0, 128], sizes = [2, 64], strides = [1, 1]} : vector<2x640xf32> to vector<2x64xf32>
    %114 = arith.maximumf %112, %113 : vector<2x64xf32>
    %115 = vector.extract_strided_slice %109 {offsets = [0, 192], sizes = [2, 64], strides = [1, 1]} : vector<2x640xf32> to vector<2x64xf32>
    %116 = arith.maximumf %114, %115 : vector<2x64xf32>
    %117 = vector.extract_strided_slice %109 {offsets = [0, 256], sizes = [2, 64], strides = [1, 1]} : vector<2x640xf32> to vector<2x64xf32>
    %118 = arith.maximumf %116, %117 : vector<2x64xf32>
    %119 = vector.extract_strided_slice %109 {offsets = [0, 320], sizes = [2, 64], strides = [1, 1]} : vector<2x640xf32> to vector<2x64xf32>
    %120 = arith.maximumf %118, %119 : vector<2x64xf32>
    %121 = vector.extract_strided_slice %109 {offsets = [0, 384], sizes = [2, 64], strides = [1, 1]} : vector<2x640xf32> to vector<2x64xf32>
    %122 = arith.maximumf %120, %121 : vector<2x64xf32>
    %123 = vector.extract_strided_slice %109 {offsets = [0, 448], sizes = [2, 64], strides = [1, 1]} : vector<2x640xf32> to vector<2x64xf32>
    %124 = arith.maximumf %122, %123 : vector<2x64xf32>
    %125 = vector.extract_strided_slice %109 {offsets = [0, 512], sizes = [2, 64], strides = [1, 1]} : vector<2x640xf32> to vector<2x64xf32>
    %126 = arith.maximumf %124, %125 : vector<2x64xf32>
    %127 = vector.extract_strided_slice %109 {offsets = [0, 576], sizes = [2, 64], strides = [1, 1]} : vector<2x640xf32> to vector<2x64xf32>
    %128 = arith.maximumf %126, %127 : vector<2x64xf32>
    %129 = tpu.concatenate %84, %87, %128 in 1 : vector<2x64xf32>, vector<2x64xf32>, vector<2x64xf32> -> vector<2x192xf32>
    %c0_83 = arith.constant 0 : index
    %c0_84 = arith.constant 0 : index
    %130 = vector.load %arg17[%c0_83, %c0_84] : memref<192x32xf32, #tpu.memory_space<vmem>>, vector<192x32xf32>
    %cst_85 = arith.constant dense<0.000000e+00> : vector<2x32xf32>
    %131 = tpu.matmul %129, %130, %cst_85 {dimension_numbers = #tpu.dot_dimension_numbers<[1], [0], [0], [1], [0, 0, 1, 1], [], []>} : vector<2x192xf32>, vector<192x32xf32>, vector<2x32xf32> -> vector<2x32xf32>
    %c0_86 = arith.constant 0 : index
    %c0_87 = arith.constant 0 : index
    %132 = vector.load %arg18[%c0_86, %c0_87] : memref<1x32xf32, #tpu.memory_space<vmem>>, vector<1x32xf32>
    %133 = vector.broadcast %132 : vector<1x32xf32> to vector<2x32xf32>
    %134 = arith.addf %131, %133 : vector<2x32xf32>
    %cst_88 = arith.constant 0.000000e+00 : f32
    %135 = vector.broadcast %cst_88 : f32 to vector<2x32xf32>
    %136 = arith.maximumf %134, %135 : vector<2x32xf32>
    %c0_89 = arith.constant 0 : index
    %c0_90 = arith.constant 0 : index
    %137 = vector.load %arg19[%c0_89, %c0_90] : memref<32x1xf32, #tpu.memory_space<vmem>>, vector<32x1xf32>
    %cst_91 = arith.constant dense<0.000000e+00> : vector<2x1xf32>
    %138 = tpu.matmul %136, %137, %cst_91 {dimension_numbers = #tpu.dot_dimension_numbers<[1], [0], [0], [1], [0, 0, 1, 1], [], []>} : vector<2x32xf32>, vector<32x1xf32>, vector<2x1xf32> -> vector<2x1xf32>
    %c0_92 = arith.constant 0 : index
    %c0_93 = arith.constant 0 : index
    %139 = vector.load %arg20[%c0_92, %c0_93] : memref<1x1xf32, #tpu.memory_space<vmem>>, vector<1x1xf32>
    %140 = vector.broadcast %139 : vector<1x1xf32> to vector<2x1xf32>
    %141 = arith.addf %138, %140 : vector<2x1xf32>
    %142 = arith.negf %141 : vector<2x1xf32>
    %143 = math.exp %142 : vector<2x1xf32>
    %cst_94 = arith.constant 1.000000e+00 : f32
    %144 = vector.broadcast %cst_94 : f32 to vector<2x1xf32>
    %145 = arith.addf %144, %143 : vector<2x1xf32>
    %146 = arith.divf %144, %145 : vector<2x1xf32>
    %c0_95 = arith.constant 0 : index
    %c0_96 = arith.constant 0 : index
    %147 = vector.load %arg21[%c0_95, %c0_96] : memref<2x1xf32, #tpu.memory_space<vmem>>, vector<2x1xf32>
    tpu.vector_store %arg21[%c0_95, %c0_96], %146 {strides = array<i32>} : memref<2x1xf32, #tpu.memory_space<vmem>>, vector<2x1xf32>,
    return
  }
}

</mosaic_0001>

<llo_original>
// kernel: vccnn_forward.1
$region0: #{vccnn_forward.1}
  #allocation0 [shape = 'u32[]', space=smem, size = 0x4, offset = 0x4, fixed_abs, tag = 'smem constant byte address 0x4 - core index']
  #allocation1 [shape = 'u32[144,128]{1,0:T(1,128)}', space=vmem, size = 0x12000, scoped, tag = 'internal scratch']
  #allocation2 [shape = 'f32[1,1]{1,0:T(1,128)S(1)}', space=vmem, size = 0x200, scoped, tag = 'scoped memory for vccnn_forward.1']
  %s0 = inlined_call_operand.vmem [shape: f32[64,64], index: 0, kind: input, shape index: {}]
  %s1 = inlined_call_operand.vmem [shape: f32[2,64], index: 1, kind: input, shape index: {}]
  %s2 = inlined_call_operand.vmem [shape: f32[120,64], index: 2, kind: input, shape index: {}]
  %s3 = inlined_call_operand.vmem [shape: f32[48,30], index: 3, kind: input, shape index: {}]
  %s4 = inlined_call_operand.vmem [shape: f32[16,12], index: 4, kind: input, shape index: {}]
  %s5 = inlined_call_operand.vmem [shape: f32[4,64,480], index: 5, kind: input, shape index: {}]
  %s6 = inlined_call_operand.vmem [shape: f32[4,480,384], index: 6, kind: input, shape index: {}]
  %s7 = inlined_call_operand.hbm [shape: f32[4,384,256], index: 7, kind: input, shape index: {}]
  %s8 = inlined_call_operand.vmem [shape: f32[1,480], index: 8, kind: input, shape index: {}]
  %s9 = inlined_call_operand.vmem [shape: f32[1,384], index: 9, kind: input, shape index: {}]
  %s10 = inlined_call_operand.vmem [shape: f32[1,256], index: 10, kind: input, shape index: {}]
  %s11 = inlined_call_operand.vmem [shape: f32[64,784], index: 11, kind: input, shape index: {}]
  %s12 = inlined_call_operand.vmem [shape: f32[784,544], index: 12, kind: input, shape index: {}]
  %s13 = inlined_call_operand.hbm [shape: f32[544,640], index: 13, kind: input, shape index: {}]
  %s14 = inlined_call_operand.vmem [shape: f32[1,784], index: 14, kind: input, shape index: {}]
  %s15 = inlined_call_operand.vmem [shape: f32[1,544], index: 15, kind: input, shape index: {}]
  %s16 = inlined_call_operand.vmem [shape: f32[1,640], index: 16, kind: input, shape index: {}]
  %s17 = inlined_call_operand.vmem [shape: f32[192,32], index: 17, kind: input, shape index: {}]
  %s18 = inlined_call_operand.vmem [shape: f32[1,32], index: 18, kind: input, shape index: {}]
  %s19 = inlined_call_operand.vmem [shape: f32[32,1], index: 19, kind: input, shape index: {}]
  %s20 = inlined_call_operand.<no memory space> [shape: f32[1,1], index: 20, kind: input, shape index: {}]
  %s21 = inlined_call_operand.vmem [shape: f32[2,1], index: 21, kind: output, shape index: {}]
  %s22 = sld [smem:[#allocation0]]
  $region102: #{vccnn_forward.1} parent=0
    _
  %s24 = ssub.s32 1, %s22
  %s25 = scalar_select 0, %s24, %s22
  %v26 = vstv %s20
  %27 = vst [vmem:[#allocation2] sm:$0x1] %v26
  $region1: #{vccnn_forward.1} parent=0
    #allocation3 [shape = 'u8[1572864]{0}', space=vmem, size = 0x180000, scoped, tag = 'input window, operand 7, single buffered']
    #allocation4 [shape = 's32[1]{0}', space=sflag, size = 0x4, scoped, tag = 'scoped memory for vccnn_forward.1']
    #allocation5 [shape = 'u8[1392640]{0}', space=vmem, size = 0x154000, scoped, tag = 'input window, operand 13, single buffered']
    #allocation6 [shape = 's32[1]{0}', space=sflag, size = 0x4, scoped, tag = 'scoped memory for vccnn_forward.1']
    %28 = vsyncpa [#allocation4], 0
    %29 = vsyncpa [#allocation6], 0
    // Predicated region
    $region2: #{vccnn_forward.1} parent=1 // pred_check
      _
    $region3: #{vccnn_forward.1} parent=1 // pred_check_branch
      %31 = sbr.rel (0) target = $region5
    $region4: #{vccnn_forward.1} parent=1 // pred_region
      _
    $region5: #{vccnn_forward.1} parent=1 // pred_fallthru
      _
    // Predicated region
    $region6: #{vccnn_forward.1} parent=1 // pred_check
      _
    $region7: #{vccnn_forward.1} parent=1 // pred_check_branch
      %33 = sbr.rel (0) target = $region9
    $region8: #{vccnn_forward.1} parent=1 // pred_region
      _
    $region9: #{vccnn_forward.1} parent=1 // pred_fallthru
      _
    // Predicated region
    $region10: #{vccnn_forward.1} parent=1 // pred_check
      _
    $region11: #{vccnn_forward.1} parent=1 // pred_check_branch
      %35 = sbr.rel (0) target = $region13
    $region12: #{vccnn_forward.1} parent=1 // pred_region
      _
    $region13: #{vccnn_forward.1} parent=1 // pred_fallthru
      _
    // Predicated region
    $region14: #{vccnn_forward.1} parent=1 // pred_check
      _
    $region15: #{vccnn_forward.1} parent=1 // pred_check_branch
      %37 = sbr.rel (0) target = $region17
    $region16: #{vccnn_forward.1} parent=1 // pred_region
      _
    $region17: #{vccnn_forward.1} parent=1 // pred_fallthru
      _
    // Predicated region
    $region18: #{vccnn_forward.1} parent=1 // pred_check
      _
    $region19: #{vccnn_forward.1} parent=1 // pred_check_branch
      %39 = sbr.rel (0) target = $region21
    $region20: #{vccnn_forward.1} parent=1 // pred_region
      _
    $region21: #{vccnn_forward.1} parent=1 // pred_fallthru
      _
    // Predicated region
    $region22: #{vccnn_forward.1} parent=1 // pred_check
      _
    $region23: #{vccnn_forward.1} parent=1 // pred_check_branch
      %41 = sbr.rel (0) target = $region25
    $region24: #{vccnn_forward.1} parent=1 // pred_region
      _
    $region25: #{vccnn_forward.1} parent=1 // pred_fallthru
      _
    // Predicated region
    $region26: #{vccnn_forward.1} parent=1 // pred_check
      _
    $region27: #{vccnn_forward.1} parent=1 // pred_check_branch
      %43 = sbr.rel (0) target = $region29
    $region28: #{vccnn_forward.1} parent=1 // pred_region
      _
    $region29: #{vccnn_forward.1} parent=1 // pred_fallthru
      _
    // Predicated region
    $region30: #{vccnn_forward.1} parent=1 // pred_check
      _
    $region31: #{vccnn_forward.1} parent=1 // pred_check_branch
      %45 = sbr.rel (0) target = $region33
    $region32: #{vccnn_forward.1} parent=1 // pred_region
      %s47 = ssub.s32 49152, 49152
      %48 = vsyncadd [#allocation4], %s47
      %s49 = sshll.u32 [#allocation3], 4
      %s50 = int_to_ptr.vmem [resolvable:$true] %s49
      %55 = dma.hbm_to_vmem [thread:$0]  %s7, 49152, %s50, [#allocation4], 256, 256, 16
    $region33: #{vccnn_forward.1} parent=1 // pred_fallthru
      _
    // Predicated region
    $region34: #{vccnn_forward.1} parent=1 // pred_check
      _
    $region35: #{vccnn_forward.1} parent=1 // pred_check_branch
      %57 = sbr.rel (0) target = $region37
    $region36: #{vccnn_forward.1} parent=1 // pred_region
      _
    $region37: #{vccnn_forward.1} parent=1 // pred_fallthru
      _
    // Predicated region
    $region38: #{vccnn_forward.1} parent=1 // pred_check
      _
    $region39: #{vccnn_forward.1} parent=1 // pred_check_branch
      %59 = sbr.rel (0) target = $region41
    $region40: #{vccnn_forward.1} parent=1 // pred_region
      _
    $region41: #{vccnn_forward.1} parent=1 // pred_fallthru
      _
    // Predicated region
    $region42: #{vccnn_forward.1} parent=1 // pred_check
      _
    $region43: #{vccnn_forward.1} parent=1 // pred_check_branch
      %61 = sbr.rel (0) target = $region45
    $region44: #{vccnn_forward.1} parent=1 // pred_region
      _
    $region45: #{vccnn_forward.1} parent=1 // pred_fallthru
      _
    // Predicated region
    $region46: #{vccnn_forward.1} parent=1 // pred_check
      _
    $region47: #{vccnn_forward.1} parent=1 // pred_check_branch
      %63 = sbr.rel (0) target = $region49
    $region48: #{vccnn_forward.1} parent=1 // pred_region
      _
    $region49: #{vccnn_forward.1} parent=1 // pred_fallthru
      _
    // Predicated region
    $region50: #{vccnn_forward.1} parent=1 // pred_check
      _
    $region51: #{vccnn_forward.1} parent=1 // pred_check_branch
      %65 = sbr.rel (0) target = $region53
    $region52: #{vccnn_forward.1} parent=1 // pred_region
      _
    $region53: #{vccnn_forward.1} parent=1 // pred_fallthru
      _
    // Predicated region
    $region54: #{vccnn_forward.1} parent=1 // pred_check
      _
    $region55: #{vccnn_forward.1} parent=1 // pred_check_branch
      %67 = sbr.rel (0) target = $region57
    $region56: #{vccnn_forward.1} parent=1 // pred_region
      %s69 = ssub.s32 43520, 43520
      %70 = vsyncadd [#allocation6], %s69
      %s71 = sshll.u32 [#allocation5], 4
      %s72 = int_to_ptr.vmem [resolvable:$true] %s71
      %77 = dma.hbm_to_vmem [thread:$0]  %s13, 43520, %s72, [#allocation6], 640, 640, 40
    $region57: #{vccnn_forward.1} parent=1 // pred_fallthru
      _
    // Predicated region
    $region58: #{vccnn_forward.1} parent=1 // pred_check
      _
    $region59: #{vccnn_forward.1} parent=1 // pred_check_branch
      %79 = sbr.rel (0) target = $region61
    $region60: #{vccnn_forward.1} parent=1 // pred_region
      _
    $region61: #{vccnn_forward.1} parent=1 // pred_fallthru
      _
    // Predicated region
    $region62: #{vccnn_forward.1} parent=1 // pred_check
      _
    $region63: #{vccnn_forward.1} parent=1 // pred_check_branch
      %81 = sbr.rel (0) target = $region65
    $region64: #{vccnn_forward.1} parent=1 // pred_region
      _
    $region65: #{vccnn_forward.1} parent=1 // pred_fallthru
      _
    // Predicated region
    $region66: #{vccnn_forward.1} parent=1 // pred_check
      _
    $region67: #{vccnn_forward.1} parent=1 // pred_check_branch
      %83 = sbr.rel (0) target = $region69
    $region68: #{vccnn_forward.1} parent=1 // pred_region
      _
    $region69: #{vccnn_forward.1} parent=1 // pred_fallthru
      _
    // Predicated region
    $region70: #{vccnn_forward.1} parent=1 // pred_check
      _
    $region71: #{vccnn_forward.1} parent=1 // pred_check_branch
      %85 = sbr.rel (0) target = $region73
    $region72: #{vccnn_forward.1} parent=1 // pred_region
      _
    $region73: #{vccnn_forward.1} parent=1 // pred_fallthru
      _
    // Predicated region
    $region74: #{vccnn_forward.1} parent=1 // pred_check
      _
    $region75: #{vccnn_forward.1} parent=1 // pred_check_branch
      %87 = sbr.rel (0) target = $region77
    $region76: #{vccnn_forward.1} parent=1 // pred_region
      _
    $region77: #{vccnn_forward.1} parent=1 // pred_fallthru
      _
    // Predicated region
    $region78: #{vccnn_forward.1} parent=1 // pred_check
      _
    $region79: #{vccnn_forward.1} parent=1 // pred_check_branch
      %89 = sbr.rel (0) target = $region81
    $region80: #{vccnn_forward.1} parent=1 // pred_region
      _
    $region81: #{vccnn_forward.1} parent=1 // pred_fallthru
      _
    // Predicated region
    $region82: #{vccnn_forward.1} parent=1 // pred_check
      _
    $region83: #{vccnn_forward.1} parent=1 // pred_check_branch
      %91 = sbr.rel (0) target = $region85
    $region84: #{vccnn_forward.1} parent=1 // pred_region
      _
    $region85: #{vccnn_forward.1} parent=1 // pred_fallthru
      _
    // Predicated region
    $region86: #{vccnn_forward.1} parent=1 // pred_check
      _
    $region87: #{vccnn_forward.1} parent=1 // pred_check_branch
      %93 = sbr.rel (0) target = $region89
    $region88: #{vccnn_forward.1} parent=1 // pred_region
      %94 = dma.done [#allocation4], 49152
    $region89: #{vccnn_forward.1} parent=1 // pred_fallthru
      _
    // Predicated region
    $region90: #{vccnn_forward.1} parent=1 // pred_check
      _
    $region91: #{vccnn_forward.1} parent=1 // pred_check_branch
      %96 = sbr.rel (0) target = $region93
    $region92: #{vccnn_forward.1} parent=1 // pred_region
      %97 = dma.done [#allocation6], 43520
    $region93: #{vccnn_forward.1} parent=1 // pred_fallthru
      _
    %v98 = vld [vmem:[%s0] sm:$0xff]
    %v99 = vld [vmem:[%s0 + $0x8] sm:$0xff]
    %v100 = vld [vmem:[%s0 + $0x10] sm:$0xff]
    %v101 = vld [vmem:[%s0 + $0x18] sm:$0xff]
    %v102 = vld [vmem:[%s0 + $0x20] sm:$0xff]
    %v103 = vld [vmem:[%s0 + $0x28] sm:$0xff]
    %v104 = vld [vmem:[%s0 + $0x30] sm:$0xff]
    %v105 = vld [vmem:[%s0 + $0x38] sm:$0xff]
    %v106 = vld [vmem:[%s2] sm:$0xff]
    %v107 = vld [vmem:[%s2 + $0x8] sm:$0xff]
    %v108 = vld [vmem:[%s2 + $0x10] sm:$0xff]
    %v109 = vld [vmem:[%s2 + $0x18] sm:$0xff]
    %v110 = vld [vmem:[%s2 + $0x20] sm:$0xff]
    %v111 = vld [vmem:[%s2 + $0x28] sm:$0xff]
    %v112 = vld [vmem:[%s2 + $0x30] sm:$0xff]
    %v113 = vld [vmem:[%s2 + $0x38] sm:$0xff]
    %v114 = vld [vmem:[%s2 + $0x40] sm:$0xff]
    %v115 = vld [vmem:[%s2 + $0x48] sm:$0xff]
    %v116 = vld [vmem:[%s2 + $0x50] sm:$0xff]
    %v117 = vld [vmem:[%s2 + $0x58] sm:$0xff]
    %v118 = vld [vmem:[%s2 + $0x60] sm:$0xff]
    %v119 = vld [vmem:[%s2 + $0x68] sm:$0xff]
    %v120 = vld [vmem:[%s2 + $0x70] sm:$0xff]
    %vm121 = vcmask 523264
    %v123 = vsel %vm121, %v106, 0
    %v126 = vsel %vm121, %v107, 0
    %v129 = vsel %vm121, %v108, 0
    %v132 = vsel %vm121, %v109, 0
    %v135 = vsel %vm121, %v110, 0
    %v138 = vsel %vm121, %v111, 0
    %v141 = vsel %vm121, %v112, 0
    %v144 = vsel %vm121, %v113, 0
    %v147 = vsel %vm121, %v114, 0
    %v150 = vsel %vm121, %v115, 0
    %v153 = vsel %vm121, %v116, 0
    %v156 = vsel %vm121, %v117, 0
    %v159 = vsel %vm121, %v118, 0
    %v162 = vsel %vm121, %v119, 0
    %v165 = vsel %vm121, %v120, 0
    %167 = vmatprep.subr.mxu0 0.0
    %168 = vmatpush1.msra.mxu0 %v98
    %169 = vmatprep.subr.mxu0 0.0
    %170 = vmatpush1.msra.mxu0 %v99
    %171 = vmatprep.subr.mxu0 0.0
    %172 = vmatpush1.msra.mxu0 %v100
    %173 = vmatprep.subr.mxu0 0.0
    %174 = vmatpush1.msra.mxu0 %v101
    %175 = vmatprep.subr.mxu0 0.0
    %176 = vmatpush1.msra.mxu0 %v102
    %177 = vmatprep.subr.mxu0 0.0
    %178 = vmatpush1.msra.mxu0 %v103
    %179 = vmatprep.subr.mxu0 0.0
    %180 = vmatpush1.msra.mxu0 %v104
    %181 = vmatprep.subr.mxu0 0.0
    %182 = vmatpush1.msra.mxu0 %v105
    %183 = vmatprep.subr.mxu0 0.0
    %184 = vmatpush1.msra.mxu0 0.0
    %185 = vmatprep.subr.mxu0 0.0
    %186 = vmatpush1.msra.mxu0 0.0
    %187 = vmatprep.subr.mxu0 0.0
    %188 = vmatpush1.msra.mxu0 0.0
    %189 = vmatprep.subr.mxu0 0.0
    %190 = vmatpush1.msra.mxu0 0.0
    %191 = vmatprep.subr.mxu0 0.0
    %192 = vmatpush1.msra.mxu0 0.0
    %193 = vmatprep.subr.mxu0 0.0
    %194 = vmatpush1.msra.mxu0 0.0
    %195 = vmatprep.subr.mxu0 0.0
    %196 = vmatpush1.msra.mxu0 0.0
    %197 = vmatprep.subr.mxu0 0.0
    %198 = vmatpush1.msra.mxu0 0.0
    %199 = vmatprep.subr.mxu0 0.0
    %200 = vmatpush1.msra.mxu0 0.0
    %201 = vmatprep.subr.mxu0 0.0
    %202 = vmatpush1.msra.mxu0 0.0
    %203 = vmatprep.subr.mxu0 0.0
    %204 = vmatpush1.msra.mxu0 0.0
    %205 = vmatprep.subr.mxu0 0.0
    %206 = vmatpush1.msra.mxu0 0.0
    %207 = vmatprep.subr.mxu0 0.0
    %208 = vmatpush1.msra.mxu0 0.0
    %209 = vmatprep.subr.mxu0 0.0
    %210 = vmatpush1.msra.mxu0 0.0
    %211 = vmatprep.subr.mxu0 0.0
    %212 = vmatpush1.msra.mxu0 0.0
    %213 = vmatprep.subr.mxu0 0.0
    %214 = vmatpush1.msra.mxu0 0.0
    %215 = vmatprep.subr.mxu0 0.0
    %216 = vmatpush1.msra.mxu0 0.0
    %217 = vmatprep.subr.mxu0 0.0
    %218 = vmatpush1.msra.mxu0 0.0
    %219 = vmatprep.subr.mxu0 0.0
    %220 = vmatpush1.msra.mxu0 0.0
    %221 = vmatprep.subr.mxu0 0.0
    %222 = vmatpush1.msra.mxu0 0.0
    %223 = vmatprep.subr.mxu0 0.0
    %224 = vmatpush1.msra.mxu0 0.0
    %225 = vmatprep.subr.mxu0 0.0
    %226 = vmatpush1.msra.mxu0 0.0
    %227 = vmatprep.subr.mxu0 0.0
    %228 = vmatpush1.msra.mxu0 0.0
    %229 = vmatprep.subr.mxu0 0.0
    %230 = vmatpush1.msra.mxu0 0.0
    %231 = vmatprep.mubr.f32.mxu0 0.0
    %232 = vmatmul.mubr.f32.gmra.mrb[0].mxu0 %v123
    %v233 = vpop.f32.mrb[0].mxu0
    %v234 = vadd.f32 0.0, %v233
    %v235 = vpop.f32.mrb[0].mxu0
    %236 = vmatprep.mubr.f32.mxu0 0.0
    %237 = vmatmul.mubr.f32.gmra.mrb[0].mxu0 %v126
    %v238 = vpop.f32.mrb[0].mxu0
    %v239 = vadd.f32 0.0, %v238
    %v240 = vpop.f32.mrb[0].mxu0
    %241 = vmatprep.mubr.f32.mxu0 0.0
    %242 = vmatmul.mubr.f32.gmra.mrb[0].mxu0 %v129
    %v243 = vpop.f32.mrb[0].mxu0
    %v244 = vadd.f32 0.0, %v243
    %v245 = vpop.f32.mrb[0].mxu0
    %246 = vmatprep.mubr.f32.mxu0 0.0
    %247 = vmatmul.mubr.f32.gmra.mrb[0].mxu0 %v132
    %v248 = vpop.f32.mrb[0].mxu0
    %v249 = vadd.f32 0.0, %v248
    %v250 = vpop.f32.mrb[0].mxu0
    %251 = vmatprep.mubr.f32.mxu0 0.0
    %252 = vmatmul.mubr.f32.gmra.mrb[0].mxu0 %v135
    %v253 = vpop.f32.mrb[0].mxu0
    %v254 = vadd.f32 0.0, %v253
    %v255 = vpop.f32.mrb[0].mxu0
    %256 = vmatprep.mubr.f32.mxu0 0.0
    %257 = vmatmul.mubr.f32.gmra.mrb[0].mxu0 %v138
    %v258 = vpop.f32.mrb[0].mxu0
    %v259 = vadd.f32 0.0, %v258
    %v260 = vpop.f32.mrb[0].mxu0
    %261 = vmatprep.mubr.f32.mxu0 0.0
    %262 = vmatmul.mubr.f32.gmra.mrb[0].mxu0 %v141
    %v263 = vpop.f32.mrb[0].mxu0
    %v264 = vadd.f32 0.0, %v263
    %v265 = vpop.f32.mrb[0].mxu0
    %266 = vmatprep.mubr.f32.mxu0 0.0
    %267 = vmatmul.mubr.f32.gmra.mrb[0].mxu0 %v144
    %v268 = vpop.f32.mrb[0].mxu0
    %v269 = vadd.f32 0.0, %v268
    %v270 = vpop.f32.mrb[0].mxu0
    %271 = vmatprep.mubr.f32.mxu0 0.0
    %272 = vmatmul.mubr.f32.gmra.mrb[0].mxu0 %v147
    %v273 = vpop.f32.mrb[0].mxu0
    %v274 = vadd.f32 0.0, %v273
    %v275 = vpop.f32.mrb[0].mxu0
    %276 = vmatprep.mubr.f32.mxu0 0.0
    %277 = vmatmul.mubr.f32.gmra.mrb[0].mxu0 %v150
    %v278 = vpop.f32.mrb[0].mxu0
    %v279 = vadd.f32 0.0, %v278
    %v280 = vpop.f32.mrb[0].mxu0
    %281 = vmatprep.mubr.f32.mxu0 0.0
    %282 = vmatmul.mubr.f32.gmra.mrb[0].mxu0 %v153
    %v283 = vpop.f32.mrb[0].mxu0
    %v284 = vadd.f32 0.0, %v283
    %v285 = vpop.f32.mrb[0].mxu0
    %286 = vmatprep.mubr.f32.mxu0 0.0
    %287 = vmatmul.mubr.f32.gmra.mrb[0].mxu0 %v156
    %v288 = vpop.f32.mrb[0].mxu0
    %v289 = vadd.f32 0.0, %v288
    %v290 = vpop.f32.mrb[0].mxu0
    %291 = vmatprep.mubr.f32.mxu0 0.0
    %292 = vmatmul.mubr.f32.gmra.mrb[0].mxu0 %v159
    %v293 = vpop.f32.mrb[0].mxu0
    %v294 = vadd.f32 0.0, %v293
    %v295 = vpop.f32.mrb[0].mxu0
    %296 = vmatprep.mubr.f32.mxu0 0.0
    %297 = vmatmul.mubr.f32.gmra.mrb[0].mxu0 %v162
    %v298 = vpop.f32.mrb[0].mxu0
    %v299 = vadd.f32 0.0, %v298
    %v300 = vpop.f32.mrb[0].mxu0
    %301 = vmatprep.mubr.f32.mxu0 0.0
    %302 = vmatmul.mubr.f32.gmra.mrb[0].mxu0 %v165
    %v303 = vpop.f32.mrb[0].mxu0
    %v304 = vadd.f32 0.0, %v303
    %v305 = vpop.f32.mrb[0].mxu0
    %306 = vdwg.mxu0
    %v307 = vld [vmem:[%s5] sm:$0xff]
    %v308 = vld [vmem:[%s5 + $0x8] sm:$0xff]
    %v309 = vld [vmem:[%s5 + $0x10] sm:$0xff]
    %v310 = vld [vmem:[%s5 + $0x18] sm:$0xff]
    %v311 = vld [vmem:[%s5 + $0x20] sm:$0xff]
    %v312 = vld [vmem:[%s5 + $0x28] sm:$0xff]
    %v313 = vld [vmem:[%s5 + $0x30] sm:$0xff]
    %v314 = vld [vmem:[%s5 + $0x38] sm:$0xff]
    %v315 = vld [vmem:[%s5 + $0x40] sm:$0xff]
    %v316 = vld [vmem:[%s5 + $0x48] sm:$0xff]
    %v317 = vld [vmem:[%s5 + $0x50] sm:$0xff]
    %v318 = vld [vmem:[%s5 + $0x58] sm:$0xff]
    %v319 = vld [vmem:[%s5 + $0x60] sm:$0xff]
    %v320 = vld [vmem:[%s5 + $0x68] sm:$0xff]
    %v321 = vld [vmem:[%s5 + $0x70] sm:$0xff]
    %v322 = vld [vmem:[%s5 + $0x78] sm:$0xff]
    %v323 = vld [vmem:[%s5 + $0x80] sm:$0xff]
    %v324 = vld [vmem:[%s5 + $0x88] sm:$0xff]
    %v325 = vld [vmem:[%s5 + $0x90] sm:$0xff]
    %v326 = vld [vmem:[%s5 + $0x98] sm:$0xff]
    %v327 = vld [vmem:[%s5 + $0xa0] sm:$0xff]
    %v328 = vld [vmem:[%s5 + $0xa8] sm:$0xff]
    %v329 = vld [vmem:[%s5 + $0xb0] sm:$0xff]
    %v330 = vld [vmem:[%s5 + $0xb8] sm:$0xff]
    %v331 = vld [vmem:[%s5 + $0xc0] sm:$0xff]
    %v332 = vld [vmem:[%s5 + $0xc8] sm:$0xff]
    %v333 = vld [vmem:[%s5 + $0xd0] sm:$0xff]
    %v334 = vld [vmem:[%s5 + $0xd8] sm:$0xff]
    %v335 = vld [vmem:[%s5 + $0xe0] sm:$0xff]
    %v336 = vld [vmem:[%s5 + $0xe8] sm:$0xff]
    %v337 = vld [vmem:[%s5 + $0xf0] sm:$0xff]
    %v338 = vld [vmem:[%s5 + $0xf8] sm:$0xff]
    %s339 = scalar_lea.vmem %s5, 256
    %v340 = vld [vmem:[%s339] sm:$0xff]
    %v341 = vld [vmem:[%s339 + $0x8] sm:$0xff]
    %v342 = vld [vmem:[%s339 + $0x10] sm:$0xff]
    %v343 = vld [vmem:[%s339 + $0x18] sm:$0xff]
    %v344 = vld [vmem:[%s339 + $0x20] sm:$0xff]
    %v345 = vld [vmem:[%s339 + $0x28] sm:$0xff]
    %v346 = vld [vmem:[%s339 + $0x30] sm:$0xff]
    %v347 = vld [vmem:[%s339 + $0x38] sm:$0xff]
    %v348 = vld [vmem:[%s339 + $0x40] sm:$0xff]
    %v349 = vld [vmem:[%s339 + $0x48] sm:$0xff]
    %v350 = vld [vmem:[%s339 + $0x50] sm:$0xff]
    %v351 = vld [vmem:[%s339 + $0x58] sm:$0xff]
    %v352 = vld [vmem:[%s339 + $0x60] sm:$0xff]
    %v353 = vld [vmem:[%s339 + $0x68] sm:$0xff]
    %v354 = vld [vmem:[%s339 + $0x70] sm:$0xff]
    %v355 = vld [vmem:[%s339 + $0x78] sm:$0xff]
    %v356 = vld [vmem:[%s339 + $0x80] sm:$0xff]
    %v357 = vld [vmem:[%s339 + $0x88] sm:$0xff]
    %v358 = vld [vmem:[%s339 + $0x90] sm:$0xff]
    %v359 = vld [vmem:[%s339 + $0x98] sm:$0xff]
    %v360 = vld [vmem:[%s339 + $0xa0] sm:$0xff]
    %v361 = vld [vmem:[%s339 + $0xa8] sm:$0xff]
    %v362 = vld [vmem:[%s339 + $0xb0] sm:$0xff]
    %v363 = vld [vmem:[%s339 + $0xb8] sm:$0xff]
    %v364 = vld [vmem:[%s339 + $0xc0] sm:$0xff]
    %v365 = vld [vmem:[%s339 + $0xc8] sm:$0xff]
    %v366 = vld [vmem:[%s339 + $0xd0] sm:$0xff]
    %v367 = vld [vmem:[%s339 + $0xd8] sm:$0xff]
    %v368 = vld [vmem:[%s339 + $0xe0] sm:$0xff]
    %v369 = vld [vmem:[%s339 + $0xe8] sm:$0xff]
    %v370 = vld [vmem:[%s339 + $0xf0] sm:$0xff]
    %v371 = vld [vmem:[%s339 + $0xf8] sm:$0xff]
    %vm377 = vcmask 1041408
    %v378 = vrot.slane %v249, 6
    %v379 = vrot.slane %v254, 6
    %v380 = vsel %vm377, %v378, %v379
    %v381 = vrot.slane %v259, 6
    %v382 = vsel %vm377, %v379, %v381
    %v383 = vrot.slane %v264, 6
    %v384 = vsel %vm377, %v381, %v383
    %v385 = vrot.slane %v269, 6
    %v386 = vsel %vm377, %v383, %v385
    %v387 = vsel %vm121, %v380, 0
    %v389 = vsel %vm121, %v382, 0
    %v391 = vsel %vm121, %v384, 0
    %v393 = vsel %vm121, %v386, 0
    %395 = vmatprep.subr.mxu0 %v341
    %396 = vmatpush1.msra.mxu0 %v340
    %397 = vmatprep.subr.mxu0 %v345
    %398 = vmatpush1.msra.mxu0 %v344
    %399 = vmatprep.subr.mxu0 %v349
    %400 = vmatpush1.msra.mxu0 %v348
    %401 = vmatprep.subr.mxu0 %v353
    %402 = vmatpush1.msra.mxu0 %v352
    %403 = vmatprep.subr.mxu0 %v357
    %404 = vmatpush1.msra.mxu0 %v356
    %405 = vmatprep.subr.mxu0 %v361
    %406 = vmatpush1.msra.mxu0 %v360
    %407 = vmatprep.subr.mxu0 %v365
    %408 = vmatpush1.msra.mxu0 %v364
    %409 = vmatprep.subr.mxu0 %v369
    %410 = vmatpush1.msra.mxu0 %v368
    %411 = vmatprep.subr.mxu0 0.0
    %412 = vmatpush1.msra.mxu0 0.0
    %413 = vmatprep.subr.mxu0 0.0
    %414 = vmatpush1.msra.mxu0 0.0
    %415 = vmatprep.subr.mxu0 0.0
    %416 = vmatpush1.msra.mxu0 0.0
    %417 = vmatprep.subr.mxu0 0.0
    %418 = vmatpush1.msra.mxu0 0.0
    %419 = vmatprep.subr.mxu0 0.0
    %420 = vmatpush1.msra.mxu0 0.0
    %421 = vmatprep.subr.mxu0 0.0
    %422 = vmatpush1.msra.mxu0 0.0
    %423 = vmatprep.subr.mxu0 0.0
    %424 = vmatpush1.msra.mxu0 0.0
    %425 = vmatprep.subr.mxu0 0.0
    %426 = vmatpush1.msra.mxu0 0.0
    %427 = vmatprep.subr.mxu0 0.0
    %428 = vmatpush1.msra.mxu0 0.0
    %429 = vmatprep.subr.mxu0 0.0
    %430 = vmatpush1.msra.mxu0 0.0
    %431 = vmatprep.subr.mxu0 0.0
    %432 = vmatpush1.msra.mxu0 0.0
    %433 = vmatprep.subr.mxu0 0.0
    %434 = vmatpush1.msra.mxu0 0.0
    %435 = vmatprep.subr.mxu0 0.0
    %436 = vmatpush1.msra.mxu0 0.0
    %437 = vmatprep.subr.mxu0 0.0
    %438 = vmatpush1.msra.mxu0 0.0
    %439 = vmatprep.subr.mxu0 0.0
    %440 = vmatpush1.msra.mxu0 0.0
    %441 = vmatprep.subr.mxu0 0.0
    %442 = vmatpush1.msra.mxu0 0.0
    %443 = vmatprep.subr.mxu0 0.0
    %444 = vmatpush1.msra.mxu0 0.0
    %445 = vmatprep.subr.mxu0 0.0
    %446 = vmatpush1.msra.mxu0 0.0
    %447 = vmatprep.subr.mxu0 0.0
    %448 = vmatpush1.msra.mxu0 0.0
    %449 = vmatprep.subr.mxu0 0.0
    %450 = vmatpush1.msra.mxu0 0.0
    %451 = vmatprep.subr.mxu0 0.0
    %452 = vmatpush1.msra.mxu0 0.0
    %453 = vmatprep.subr.mxu0 0.0
    %454 = vmatpush1.msra.mxu0 0.0
    %455 = vmatprep.subr.mxu0 0.0
    %456 = vmatpush1.msra.mxu0 0.0
    %457 = vmatprep.subr.mxu0 0.0
    %458 = vmatpush1.msra.mxu0 0.0
    %459 = vmatprep.mubr.f32.mxu0 0.0
    %460 = vmatmul.mubr.f32.gmra.mrb[0].mxu0 %v387
    %v461 = vpop.f32.mrb[0].mxu0
    %v462 = vadd.f32 0.0, %v461
    %v463 = vpop.f32.mrb[0].mxu0
    %v464 = vadd.f32 0.0, %v463
    %465 = vmatprep.mubr.f32.mxu0 0.0
    %466 = vmatmul.mubr.f32.gmra.mrb[0].mxu0 %v389
    %v467 = vpop.f32.mrb[0].mxu0
    %v468 = vadd.f32 0.0, %v467
    %v469 = vpop.f32.mrb[0].mxu0
    %v470 = vadd.f32 0.0, %v469
    %471 = vmatprep.mubr.f32.mxu0 0.0
    %472 = vmatmul.mubr.f32.gmra.mrb[0].mxu0 %v391
    %v473 = vpop.f32.mrb[0].mxu0
    %v474 = vadd.f32 0.0, %v473
    %v475 = vpop.f32.mrb[0].mxu0
    %v476 = vadd.f32 0.0, %v475
    %477 = vmatprep.mubr.f32.mxu0 0.0
    %478 = vmatmul.mubr.f32.gmra.mrb[0].mxu0 %v393
    %v479 = vpop.f32.mrb[0].mxu0
    %v480 = vadd.f32 0.0, %v479
    %v481 = vpop.f32.mrb[0].mxu0
    %v482 = vadd.f32 0.0, %v481
    %483 = vdwg.mxu0
    %484 = vmatprep.subr.mxu0 %v343
    %485 = vmatpush1.msra.mxu0 %v342
    %486 = vmatprep.subr.mxu0 %v347
    %487 = vmatpush1.msra.mxu0 %v346
    %488 = vmatprep.subr.mxu0 %v351
    %489 = vmatpush1.msra.mxu0 %v350
    %490 = vmatprep.subr.mxu0 %v355
    %491 = vmatpush1.msra.mxu0 %v354
    %492 = vmatprep.subr.mxu0 %v359
    %493 = vmatpush1.msra.mxu0 %v358
    %494 = vmatprep.subr.mxu0 %v363
    %495 = vmatpush1.msra.mxu0 %v362
    %496 = vmatprep.subr.mxu0 %v367
    %497 = vmatpush1.msra.mxu0 %v366
    %498 = vmatprep.subr.mxu0 %v371
    %499 = vmatpush1.msra.mxu0 %v370
    %500 = vmatprep.subr.mxu0 0.0
    %501 = vmatpush1.msra.mxu0 0.0
    %502 = vmatprep.subr.mxu0 0.0
    %503 = vmatpush1.msra.mxu0 0.0
    %504 = vmatprep.subr.mxu0 0.0
    %505 = vmatpush1.msra.mxu0 0.0
    %506 = vmatprep.subr.mxu0 0.0
    %507 = vmatpush1.msra.mxu0 0.0
    %508 = vmatprep.subr.mxu0 0.0
    %509 = vmatpush1.msra.mxu0 0.0
    %510 = vmatprep.subr.mxu0 0.0
    %511 = vmatpush1.msra.mxu0 0.0
    %512 = vmatprep.subr.mxu0 0.0
    %513 = vmatpush1.msra.mxu0 0.0
    %514 = vmatprep.subr.mxu0 0.0
    %515 = vmatpush1.msra.mxu0 0.0
    %516 = vmatprep.subr.mxu0 0.0
    %517 = vmatpush1.msra.mxu0 0.0
    %518 = vmatprep.subr.mxu0 0.0
    %519 = vmatpush1.msra.mxu0 0.0
    %520 = vmatprep.subr.mxu0 0.0
    %521 = vmatpush1.msra.mxu0 0.0
    %522 = vmatprep.subr.mxu0 0.0
    %523 = vmatpush1.msra.mxu0 0.0
    %524 = vmatprep.subr.mxu0 0.0
    %525 = vmatpush1.msra.mxu0 0.0
    %526 = vmatprep.subr.mxu0 0.0
    %527 = vmatpush1.msra.mxu0 0.0
    %528 = vmatprep.subr.mxu0 0.0
    %529 = vmatpush1.msra.mxu0 0.0
    %530 = vmatprep.subr.mxu0 0.0
    %531 = vmatpush1.msra.mxu0 0.0
    %532 = vmatprep.subr.mxu0 0.0
    %533 = vmatpush1.msra.mxu0 0.0
    %534 = vmatprep.subr.mxu0 0.0
    %535 = vmatpush1.msra.mxu0 0.0
    %536 = vmatprep.subr.mxu0 0.0
    %537 = vmatpush1.msra.mxu0 0.0
    %538 = vmatprep.subr.mxu0 0.0
    %539 = vmatpush1.msra.mxu0 0.0
    %540 = vmatprep.subr.mxu0 0.0
    %541 = vmatpush1.msra.mxu0 0.0
    %542 = vmatprep.subr.mxu0 0.0
    %543 = vmatpush1.msra.mxu0 0.0
    %544 = vmatprep.subr.mxu0 0.0
    %545 = vmatpush1.msra.mxu0 0.0
    %546 = vmatprep.subr.mxu0 0.0
    %547 = vmatpush1.msra.mxu0 0.0
    %548 = vmatprep.mubr.f32.mxu0 0.0
    %549 = vmatmul.mubr.f32.gmra.mrb[0].mxu0 %v387
    %v550 = vpop.f32.mrb[0].mxu0
    %v551 = vadd.f32 0.0, %v550
    %v552 = vpop.f32.mrb[0].mxu0
    %v553 = vadd.f32 0.0, %v552
    %554 = vmatprep.mubr.f32.mxu0 0.0
    %555 = vmatmul.mubr.f32.gmra.mrb[0].mxu0 %v389
    %v556 = vpop.f32.mrb[0].mxu0
    %v557 = vadd.f32 0.0, %v556
    %v558 = vpop.f32.mrb[0].mxu0
    %v559 = vadd.f32 0.0, %v558
    %560 = vmatprep.mubr.f32.mxu0 0.0
    %561 = vmatmul.mubr.f32.gmra.mrb[0].mxu0 %v391
    %v562 = vpop.f32.mrb[0].mxu0
    %v563 = vadd.f32 0.0, %v562
    %v564 = vpop.f32.mrb[0].mxu0
    %v565 = vadd.f32 0.0, %v564
    %566 = vmatprep.mubr.f32.mxu0 0.0
    %567 = vmatmul.mubr.f32.gmra.mrb[0].mxu0 %v393
    %v568 = vpop.f32.mrb[0].mxu0
    %v569 = vadd.f32 0.0, %v568
    %v570 = vpop.f32.mrb[0].mxu0
    %v571 = vadd.f32 0.0, %v570
    %572 = vdwg.mxu0
    %v574 = vsel %vm121, %v234, 0
    %v577 = vsel %vm121, %v239, 0
    %v580 = vsel %vm121, %v244, 0
    %v582 = vsel %vm121, %v249, 0
    %584 = vmatprep.subr.mxu0 %v308
    %585 = vmatpush1.msra.mxu0 %v307
    %586 = vmatprep.subr.mxu0 %v312
    %587 = vmatpush1.msra.mxu0 %v311
    %588 = vmatprep.subr.mxu0 %v316
    %589 = vmatpush1.msra.mxu0 %v315
    %590 = vmatprep.subr.mxu0 %v320
    %591 = vmatpush1.msra.mxu0 %v319
    %592 = vmatprep.subr.mxu0 %v324
    %593 = vmatpush1.msra.mxu0 %v323
    %594 = vmatprep.subr.mxu0 %v328
    %595 = vmatpush1.msra.mxu0 %v327
    %596 = vmatprep.subr.mxu0 %v332
    %597 = vmatpush1.msra.mxu0 %v331
    %598 = vmatprep.subr.mxu0 %v336
    %599 = vmatpush1.msra.mxu0 %v335
    %600 = vmatprep.subr.mxu0 0.0
    %601 = vmatpush1.msra.mxu0 0.0
    %602 = vmatprep.subr.mxu0 0.0
    %603 = vmatpush1.msra.mxu0 0.0
    %604 = vmatprep.subr.mxu0 0.0
    %605 = vmatpush1.msra.mxu0 0.0
    %606 = vmatprep.subr.mxu0 0.0
    %607 = vmatpush1.msra.mxu0 0.0
    %608 = vmatprep.subr.mxu0 0.0
    %609 = vmatpush1.msra.mxu0 0.0
    %610 = vmatprep.subr.mxu0 0.0
    %611 = vmatpush1.msra.mxu0 0.0
    %612 = vmatprep.subr.mxu0 0.0
    %613 = vmatpush1.msra.mxu0 0.0
    %614 = vmatprep.subr.mxu0 0.0
    %615 = vmatpush1.msra.mxu0 0.0
    %616 = vmatprep.subr.mxu0 0.0
    %617 = vmatpush1.msra.mxu0 0.0
    %618 = vmatprep.subr.mxu0 0.0
    %619 = vmatpush1.msra.mxu0 0.0
    %620 = vmatprep.subr.mxu0 0.0
    %621 = vmatpush1.msra.mxu0 0.0
    %622 = vmatprep.subr.mxu0 0.0
    %623 = vmatpush1.msra.mxu0 0.0
    %624 = vmatprep.subr.mxu0 0.0
    %625 = vmatpush1.msra.mxu0 0.0
    %626 = vmatprep.subr.mxu0 0.0
    %627 = vmatpush1.msra.mxu0 0.0
    %628 = vmatprep.subr.mxu0 0.0
    %629 = vmatpush1.msra.mxu0 0.0
    %630 = vmatprep.subr.mxu0 0.0
    %631 = vmatpush1.msra.mxu0 0.0
    %632 = vmatprep.subr.mxu0 0.0
    %633 = vmatpush1.msra.mxu0 0.0
    %634 = vmatprep.subr.mxu0 0.0
    %635 = vmatpush1.msra.mxu0 0.0
    %636 = vmatprep.subr.mxu0 0.0
    %637 = vmatpush1.msra.mxu0 0.0
    %638 = vmatprep.subr.mxu0 0.0
    %639 = vmatpush1.msra.mxu0 0.0
    %640 = vmatprep.subr.mxu0 0.0
    %641 = vmatpush1.msra.mxu0 0.0
    %642 = vmatprep.subr.mxu0 0.0
    %643 = vmatpush1.msra.mxu0 0.0
    %644 = vmatprep.subr.mxu0 0.0
    %645 = vmatpush1.msra.mxu0 0.0
    %646 = vmatprep.subr.mxu0 0.0
    %647 = vmatpush1.msra.mxu0 0.0
    %648 = vmatprep.mubr.f32.mxu0 0.0
    %649 = vmatmul.mubr.f32.gmra.mrb[0].mxu0 %v574
    %v650 = vpop.f32.mrb[0].mxu0
    %v651 = vadd.f32 %v462, %v650
    %v652 = vpop.f32.mrb[0].mxu0
    %v653 = vadd.f32 %v464, %v652
    %654 = vmatprep.mubr.f32.mxu0 0.0
    %655 = vmatmul.mubr.f32.gmra.mrb[0].mxu0 %v577
    %v656 = vpop.f32.mrb[0].mxu0
    %v657 = vadd.f32 %v468, %v656
    %v658 = vpop.f32.mrb[0].mxu0
    %v659 = vadd.f32 %v470, %v658
    %660 = vmatprep.mubr.f32.mxu0 0.0
    %661 = vmatmul.mubr.f32.gmra.mrb[0].mxu0 %v580
    %v662 = vpop.f32.mrb[0].mxu0
    %v663 = vadd.f32 %v474, %v662
    %v664 = vpop.f32.mrb[0].mxu0
    %v665 = vadd.f32 %v476, %v664
    %666 = vmatprep.mubr.f32.mxu0 0.0
    %667 = vmatmul.mubr.f32.gmra.mrb[0].mxu0 %v582
    %v668 = vpop.f32.mrb[0].mxu0
    %v669 = vadd.f32 %v480, %v668
    %v670 = vpop.f32.mrb[0].mxu0
    %v671 = vadd.f32 %v482, %v670
    %672 = vdwg.mxu0
    %673 = vmatprep.subr.mxu0 %v310
    %674 = vmatpush1.msra.mxu0 %v309
    %675 = vmatprep.subr.mxu0 %v314
    %676 = vmatpush1.msra.mxu0 %v313
    %677 = vmatprep.subr.mxu0 %v318
    %678 = vmatpush1.msra.mxu0 %v317
    %679 = vmatprep.subr.mxu0 %v322
    %680 = vmatpush1.msra.mxu0 %v321
    %681 = vmatprep.subr.mxu0 %v326
    %682 = vmatpush1.msra.mxu0 %v325
    %683 = vmatprep.subr.mxu0 %v330
    %684 = vmatpush1.msra.mxu0 %v329
    %685 = vmatprep.subr.mxu0 %v334
    %686 = vmatpush1.msra.mxu0 %v333
    %687 = vmatprep.subr.mxu0 %v338
    %688 = vmatpush1.msra.mxu0 %v337
    %689 = vmatprep.subr.mxu0 0.0
    %690 = vmatpush1.msra.mxu0 0.0
    %691 = vmatprep.subr.mxu0 0.0
    %692 = vmatpush1.msra.mxu0 0.0
    %693 = vmatprep.subr.mxu0 0.0
    %694 = vmatpush1.msra.mxu0 0.0
    %695 = vmatprep.subr.mxu0 0.0
    %696 = vmatpush1.msra.mxu0 0.0
    %697 = vmatprep.subr.mxu0 0.0
    %698 = vmatpush1.msra.mxu0 0.0
    %699 = vmatprep.subr.mxu0 0.0
    %700 = vmatpush1.msra.mxu0 0.0
    %701 = vmatprep.subr.mxu0 0.0
    %702 = vmatpush1.msra.mxu0 0.0
    %703 = vmatprep.subr.mxu0 0.0
    %704 = vmatpush1.msra.mxu0 0.0
    %705 = vmatprep.subr.mxu0 0.0
    %706 = vmatpush1.msra.mxu0 0.0
    %707 = vmatprep.subr.mxu0 0.0
    %708 = vmatpush1.msra.mxu0 0.0
    %709 = vmatprep.subr.mxu0 0.0
    %710 = vmatpush1.msra.mxu0 0.0
    %711 = vmatprep.subr.mxu0 0.0
    %712 = vmatpush1.msra.mxu0 0.0
    %713 = vmatprep.subr.mxu0 0.0
    %714 = vmatpush1.msra.mxu0 0.0
    %715 = vmatprep.subr.mxu0 0.0
    %716 = vmatpush1.msra.mxu0 0.0
    %717 = vmatprep.subr.mxu0 0.0
    %718 = vmatpush1.msra.mxu0 0.0
    %719 = vmatprep.subr.mxu0 0.0
    %720 = vmatpush1.msra.mxu0 0.0
    %721 = vmatprep.subr.mxu0 0.0
    %722 = vmatpush1.msra.mxu0 0.0
    %723 = vmatprep.subr.mxu0 0.0
    %724 = vmatpush1.msra.mxu0 0.0
    %725 = vmatprep.subr.mxu0 0.0
    %726 = vmatpush1.msra.mxu0 0.0
    %727 = vmatprep.subr.mxu0 0.0
    %728 = vmatpush1.msra.mxu0 0.0
    %729 = vmatprep.subr.mxu0 0.0
    %730 = vmatpush1.msra.mxu0 0.0
    %731 = vmatprep.subr.mxu0 0.0
    %732 = vmatpush1.msra.mxu0 0.0
    %733 = vmatprep.subr.mxu0 0.0
    %734 = vmatpush1.msra.mxu0 0.0
    %735 = vmatprep.subr.mxu0 0.0
    %736 = vmatpush1.msra.mxu0 0.0
    %737 = vmatprep.mubr.f32.mxu0 0.0
    %738 = vmatmul.mubr.f32.gmra.mrb[0].mxu0 %v574
    %v739 = vpop.f32.mrb[0].mxu0
    %v740 = vadd.f32 %v551, %v739
    %v741 = vpop.f32.mrb[0].mxu0
    %v742 = vadd.f32 %v553, %v741
    %743 = vmatprep.mubr.f32.mxu0 0.0
    %744 = vmatmul.mubr.f32.gmra.mrb[0].mxu0 %v577
    %v745 = vpop.f32.mrb[0].mxu0
    %v746 = vadd.f32 %v557, %v745
    %v747 = vpop.f32.mrb[0].mxu0
    %v748 = vadd.f32 %v559, %v747
    %749 = vmatprep.mubr.f32.mxu0 0.0
    %750 = vmatmul.mubr.f32.gmra.mrb[0].mxu0 %v580
    %v751 = vpop.f32.mrb[0].mxu0
    %v752 = vadd.f32 %v563, %v751
    %v753 = vpop.f32.mrb[0].mxu0
    %v754 = vadd.f32 %v565, %v753
    %755 = vmatprep.mubr.f32.mxu0 0.0
    %756 = vmatmul.mubr.f32.gmra.mrb[0].mxu0 %v582
    %v757 = vpop.f32.mrb[0].mxu0
    %v758 = vadd.f32 %v569, %v757
    %v759 = vpop.f32.mrb[0].mxu0
    %v760 = vadd.f32 %v571, %v759
    %761 = vdwg.mxu0
    %s762 = scalar_lea.vmem %s5, 512
    %v763 = vld [vmem:[%s762] sm:$0xff]
    %v764 = vld [vmem:[%s762 + $0x8] sm:$0xff]
    %v765 = vld [vmem:[%s762 + $0x10] sm:$0xff]
    %v766 = vld [vmem:[%s762 + $0x18] sm:$0xff]
    %v767 = vld [vmem:[%s762 + $0x20] sm:$0xff]
    %v768 = vld [vmem:[%s762 + $0x28] sm:$0xff]
    %v769 = vld [vmem:[%s762 + $0x30] sm:$0xff]
    %v770 = vld [vmem:[%s762 + $0x38] sm:$0xff]
    %v771 = vld [vmem:[%s762 + $0x40] sm:$0xff]
    %v772 = vld [vmem:[%s762 + $0x48] sm:$0xff]
    %v773 = vld [vmem:[%s762 + $0x50] sm:$0xff]
    %v774 = vld [vmem:[%s762 + $0x58] sm:$0xff]
    %v775 = vld [vmem:[%s762 + $0x60] sm:$0xff]
    %v776 = vld [vmem:[%s762 + $0x68] sm:$0xff]
    %v777 = vld [vmem:[%s762 + $0x70] sm:$0xff]
    %v778 = vld [vmem:[%s762 + $0x78] sm:$0xff]
    %v779 = vld [vmem:[%s762 + $0x80] sm:$0xff]
    %v780 = vld [vmem:[%s762 + $0x88] sm:$0xff]
    %v781 = vld [vmem:[%s762 + $0x90] sm:$0xff]
    %v782 = vld [vmem:[%s762 + $0x98] sm:$0xff]
    %v783 = vld [vmem:[%s762 + $0xa0] sm:$0xff]
    %v784 = vld [vmem:[%s762 + $0xa8] sm:$0xff]
    %v785 = vld [vmem:[%s762 + $0xb0] sm:$0xff]
    %v786 = vld [vmem:[%s762 + $0xb8] sm:$0xff]
    %v787 = vld [vmem:[%s762 + $0xc0] sm:$0xff]
    %v788 = vld [vmem:[%s762 + $0xc8] sm:$0xff]
    %v789 = vld [vmem:[%s762 + $0xd0] sm:$0xff]
    %v790 = vld [vmem:[%s762 + $0xd8] sm:$0xff]
    %v791 = vld [vmem:[%s762 + $0xe0] sm:$0xff]
    %v792 = vld [vmem:[%s762 + $0xe8] sm:$0xff]
    %v793 = vld [vmem:[%s762 + $0xf0] sm:$0xff]
    %v794 = vld [vmem:[%s762 + $0xf8] sm:$0xff]
    %vm799 = vcmask 1043456
    %v800 = vrot.slane %v269, 4
    %v801 = vrot.slane %v274, 4
    %v802 = vsel %vm799, %v800, %v801
    %v803 = vrot.slane %v279, 4
    %v804 = vsel %vm799, %v801, %v803
    %v805 = vrot.slane %v284, 4
    %v806 = vsel %vm799, %v803, %v805
    %v807 = vrot.slane %v289, 4
    %v808 = vsel %vm799, %v805, %v807
    %v809 = vsel %vm121, %v802, 0
    %v811 = vsel %vm121, %v804, 0
    %v813 = vsel %vm121, %v806, 0
    %v815 = vsel %vm121, %v808, 0
    %817 = vmatprep.subr.mxu0 %v764
    %818 = vmatpush1.msra.mxu0 %v763
    %819 = vmatprep.subr.mxu0 %v768
    %820 = vmatpush1.msra.mxu0 %v767
    %821 = vmatprep.subr.mxu0 %v772
    %822 = vmatpush1.msra.mxu0 %v771
    %823 = vmatprep.subr.mxu0 %v776
    %824 = vmatpush1.msra.mxu0 %v775
    %825 = vmatprep.subr.mxu0 %v780
    %826 = vmatpush1.msra.mxu0 %v779
    %827 = vmatprep.subr.mxu0 %v784
    %828 = vmatpush1.msra.mxu0 %v783
    %829 = vmatprep.subr.mxu0 %v788
    %830 = vmatpush1.msra.mxu0 %v787
    %831 = vmatprep.subr.mxu0 %v792
    %832 = vmatpush1.msra.mxu0 %v791
    %833 = vmatprep.subr.mxu0 0.0
    %834 = vmatpush1.msra.mxu0 0.0
    %835 = vmatprep.subr.mxu0 0.0
    %836 = vmatpush1.msra.mxu0 0.0
    %837 = vmatprep.subr.mxu0 0.0
    %838 = vmatpush1.msra.mxu0 0.0
    %839 = vmatprep.subr.mxu0 0.0
    %840 = vmatpush1.msra.mxu0 0.0
    %841 = vmatprep.subr.mxu0 0.0
    %842 = vmatpush1.msra.mxu0 0.0
    %843 = vmatprep.subr.mxu0 0.0
    %844 = vmatpush1.msra.mxu0 0.0
    %845 = vmatprep.subr.mxu0 0.0
    %846 = vmatpush1.msra.mxu0 0.0
    %847 = vmatprep.subr.mxu0 0.0
    %848 = vmatpush1.msra.mxu0 0.0
    %849 = vmatprep.subr.mxu0 0.0
    %850 = vmatpush1.msra.mxu0 0.0
    %851 = vmatprep.subr.mxu0 0.0
    %852 = vmatpush1.msra.mxu0 0.0
    %853 = vmatprep.subr.mxu0 0.0
    %854 = vmatpush1.msra.mxu0 0.0
    %855 = vmatprep.subr.mxu0 0.0
    %856 = vmatpush1.msra.mxu0 0.0
    %857 = vmatprep.subr.mxu0 0.0
    %858 = vmatpush1.msra.mxu0 0.0
    %859 = vmatprep.subr.mxu0 0.0
    %860 = vmatpush1.msra.mxu0 0.0
    %861 = vmatprep.subr.mxu0 0.0
    %862 = vmatpush1.msra.mxu0 0.0
    %863 = vmatprep.subr.mxu0 0.0
    %864 = vmatpush1.msra.mxu0 0.0
    %865 = vmatprep.subr.mxu0 0.0
    %866 = vmatpush1.msra.mxu0 0.0
    %867 = vmatprep.subr.mxu0 0.0
    %868 = vmatpush1.msra.mxu0 0.0
    %869 = vmatprep.subr.mxu0 0.0
    %870 = vmatpush1.msra.mxu0 0.0
    %871 = vmatprep.subr.mxu0 0.0
    %872 = vmatpush1.msra.mxu0 0.0
    %873 = vmatprep.subr.mxu0 0.0
    %874 = vmatpush1.msra.mxu0 0.0
    %875 = vmatprep.subr.mxu0 0.0
    %876 = vmatpush1.msra.mxu0 0.0
    %877 = vmatprep.subr.mxu0 0.0
    %878 = vmatpush1.msra.mxu0 0.0
    %879 = vmatprep.subr.mxu0 0.0
    %880 = vmatpush1.msra.mxu0 0.0
    %881 = vmatprep.mubr.f32.mxu0 0.0
    %882 = vmatmul.mubr.f32.gmra.mrb[0].mxu0 %v809
    %v883 = vpop.f32.mrb[0].mxu0
    %v884 = vadd.f32 0.0, %v883
    %v885 = vpop.f32.mrb[0].mxu0
    %v886 = vadd.f32 0.0, %v885
    %887 = vmatprep.mubr.f32.mxu0 0.0
    %888 = vmatmul.mubr.f32.gmra.mrb[0].mxu0 %v811
    %v889 = vpop.f32.mrb[0].mxu0
    %v890 = vadd.f32 0.0, %v889
    %v891 = vpop.f32.mrb[0].mxu0
    %v892 = vadd.f32 0.0, %v891
    %893 = vmatprep.mubr.f32.mxu0 0.0
    %894 = vmatmul.mubr.f32.gmra.mrb[0].mxu0 %v813
    %v895 = vpop.f32.mrb[0].mxu0
    %v896 = vadd.f32 0.0, %v895
    %v897 = vpop.f32.mrb[0].mxu0
    %v898 = vadd.f32 0.0, %v897
    %899 = vmatprep.mubr.f32.mxu0 0.0
    %900 = vmatmul.mubr.f32.gmra.mrb[0].mxu0 %v815
    %v901 = vpop.f32.mrb[0].mxu0
    %v902 = vadd.f32 0.0, %v901
    %v903 = vpop.f32.mrb[0].mxu0
    %v904 = vadd.f32 0.0, %v903
    %905 = vdwg.mxu0
    %906 = vmatprep.subr.mxu0 %v766
    %907 = vmatpush1.msra.mxu0 %v765
    %908 = vmatprep.subr.mxu0 %v770
    %909 = vmatpush1.msra.mxu0 %v769
    %910 = vmatprep.subr.mxu0 %v774
    %911 = vmatpush1.msra.mxu0 %v773
    %912 = vmatprep.subr.mxu0 %v778
    %913 = vmatpush1.msra.mxu0 %v777
    %914 = vmatprep.subr.mxu0 %v782
    %915 = vmatpush1.msra.mxu0 %v781
    %916 = vmatprep.subr.mxu0 %v786
    %917 = vmatpush1.msra.mxu0 %v785
    %918 = vmatprep.subr.mxu0 %v790
    %919 = vmatpush1.msra.mxu0 %v789
    %920 = vmatprep.subr.mxu0 %v794
    %921 = vmatpush1.msra.mxu0 %v793
    %922 = vmatprep.subr.mxu0 0.0
    %923 = vmatpush1.msra.mxu0 0.0
    %924 = vmatprep.subr.mxu0 0.0
    %925 = vmatpush1.msra.mxu0 0.0
    %926 = vmatprep.subr.mxu0 0.0
    %927 = vmatpush1.msra.mxu0 0.0
    %928 = vmatprep.subr.mxu0 0.0
    %929 = vmatpush1.msra.mxu0 0.0
    %930 = vmatprep.subr.mxu0 0.0
    %931 = vmatpush1.msra.mxu0 0.0
    %932 = vmatprep.subr.mxu0 0.0
    %933 = vmatpush1.msra.mxu0 0.0
    %934 = vmatprep.subr.mxu0 0.0
    %935 = vmatpush1.msra.mxu0 0.0
    %936 = vmatprep.subr.mxu0 0.0
    %937 = vmatpush1.msra.mxu0 0.0
    %938 = vmatprep.subr.mxu0 0.0
    %939 = vmatpush1.msra.mxu0 0.0
    %940 = vmatprep.subr.mxu0 0.0
    %941 = vmatpush1.msra.mxu0 0.0
    %942 = vmatprep.subr.mxu0 0.0
    %943 = vmatpush1.msra.mxu0 0.0
    %944 = vmatprep.subr.mxu0 0.0
    %945 = vmatpush1.msra.mxu0 0.0
    %946 = vmatprep.subr.mxu0 0.0
    %947 = vmatpush1.msra.mxu0 0.0
    %948 = vmatprep.subr.mxu0 0.0
    %949 = vmatpush1.msra.mxu0 0.0
    %950 = vmatprep.subr.mxu0 0.0
    %951 = vmatpush1.msra.mxu0 0.0
    %952 = vmatprep.subr.mxu0 0.0
    %953 = vmatpush1.msra.mxu0 0.0
    %954 = vmatprep.subr.mxu0 0.0
    %955 = vmatpush1.msra.mxu0 0.0
    %956 = vmatprep.subr.mxu0 0.0
    %957 = vmatpush1.msra.mxu0 0.0
    %958 = vmatprep.subr.mxu0 0.0
    %959 = vmatpush1.msra.mxu0 0.0
    %960 = vmatprep.subr.mxu0 0.0
    %961 = vmatpush1.msra.mxu0 0.0
    %962 = vmatprep.subr.mxu0 0.0
    %963 = vmatpush1.msra.mxu0 0.0
    %964 = vmatprep.subr.mxu0 0.0
    %965 = vmatpush1.msra.mxu0 0.0
    %966 = vmatprep.subr.mxu0 0.0
    %967 = vmatpush1.msra.mxu0 0.0
    %968 = vmatprep.subr.mxu0 0.0
    %969 = vmatpush1.msra.mxu0 0.0
    %970 = vmatprep.mubr.f32.mxu0 0.0
    %971 = vmatmul.mubr.f32.gmra.mrb[0].mxu0 %v809
    %v972 = vpop.f32.mrb[0].mxu0
    %v973 = vadd.f32 0.0, %v972
    %v974 = vpop.f32.mrb[0].mxu0
    %v975 = vadd.f32 0.0, %v974
    %976 = vmatprep.mubr.f32.mxu0 0.0
    %977 = vmatmul.mubr.f32.gmra.mrb[0].mxu0 %v811
    %v978 = vpop.f32.mrb[0].mxu0
    %v979 = vadd.f32 0.0, %v978
    %v980 = vpop.f32.mrb[0].mxu0
    %v981 = vadd.f32 0.0, %v980
    %982 = vmatprep.mubr.f32.mxu0 0.0
    %983 = vmatmul.mubr.f32.gmra.mrb[0].mxu0 %v813
    %v984 = vpop.f32.mrb[0].mxu0
    %v985 = vadd.f32 0.0, %v984
    %v986 = vpop.f32.mrb[0].mxu0
    %v987 = vadd.f32 0.0, %v986
    %988 = vmatprep.mubr.f32.mxu0 0.0
    %989 = vmatmul.mubr.f32.gmra.mrb[0].mxu0 %v815
    %v990 = vpop.f32.mrb[0].mxu0
    %v991 = vadd.f32 0.0, %v990
    %v992 = vpop.f32.mrb[0].mxu0
    %v993 = vadd.f32 0.0, %v992
    %994 = vdwg.mxu0
    %v995 = vadd.f32 %v651, %v884
    %v996 = vadd.f32 %v653, %v886
    %v997 = vadd.f32 %v740, %v973
    %v998 = vadd.f32 %v742, %v975
    %v999 = vadd.f32 %v657, %v890
    %v1000 = vadd.f32 %v659, %v892
    %v1001 = vadd.f32 %v746, %v979
    %v1002 = vadd.f32 %v748, %v981
    %v1003 = vadd.f32 %v663, %v896
    %v1004 = vadd.f32 %v665, %v898
    %v1005 = vadd.f32 %v752, %v985
    %v1006 = vadd.f32 %v754, %v987
    %v1007 = vadd.f32 %v669, %v902
    %v1008 = vadd.f32 %v671, %v904
    %v1009 = vadd.f32 %v758, %v991
    %v1010 = vadd.f32 %v760, %v993
    %s1011 = scalar_lea.vmem %s5, 768
    %v1012 = vld [vmem:[%s1011] sm:$0xff]
    %v1013 = vld [vmem:[%s1011 + $0x8] sm:$0xff]
    %v1014 = vld [vmem:[%s1011 + $0x10] sm:$0xff]
    %v1015 = vld [vmem:[%s1011 + $0x18] sm:$0xff]
    %v1016 = vld [vmem:[%s1011 + $0x20] sm:$0xff]
    %v1017 = vld [vmem:[%s1011 + $0x28] sm:$0xff]
    %v1018 = vld [vmem:[%s1011 + $0x30] sm:$0xff]
    %v1019 = vld [vmem:[%s1011 + $0x38] sm:$0xff]
    %v1020 = vld [vmem:[%s1011 + $0x40] sm:$0xff]
    %v1021 = vld [vmem:[%s1011 + $0x48] sm:$0xff]
    %v1022 = vld [vmem:[%s1011 + $0x50] sm:$0xff]
    %v1023 = vld [vmem:[%s1011 + $0x58] sm:$0xff]
    %v1024 = vld [vmem:[%s1011 + $0x60] sm:$0xff]
    %v1025 = vld [vmem:[%s1011 + $0x68] sm:$0xff]
    %v1026 = vld [vmem:[%s1011 + $0x70] sm:$0xff]
    %v1027 = vld [vmem:[%s1011 + $0x78] sm:$0xff]
    %v1028 = vld [vmem:[%s1011 + $0x80] sm:$0xff]
    %v1029 = vld [vmem:[%s1011 + $0x88] sm:$0xff]
    %v1030 = vld [vmem:[%s1011 + $0x90] sm:$0xff]
    %v1031 = vld [vmem:[%s1011 + $0x98] sm:$0xff]
    %v1032 = vld [vmem:[%s1011 + $0xa0] sm:$0xff]
    %v1033 = vld [vmem:[%s1011 + $0xa8] sm:$0xff]
    %v1034 = vld [vmem:[%s1011 + $0xb0] sm:$0xff]
    %v1035 = vld [vmem:[%s1011 + $0xb8] sm:$0xff]
    %v1036 = vld [vmem:[%s1011 + $0xc0] sm:$0xff]
    %v1037 = vld [vmem:[%s1011 + $0xc8] sm:$0xff]
    %v1038 = vld [vmem:[%s1011 + $0xd0] sm:$0xff]
    %v1039 = vld [vmem:[%s1011 + $0xd8] sm:$0xff]
    %v1040 = vld [vmem:[%s1011 + $0xe0] sm:$0xff]
    %v1041 = vld [vmem:[%s1011 + $0xe8] sm:$0xff]
    %v1042 = vld [vmem:[%s1011 + $0xf0] sm:$0xff]
    %v1043 = vld [vmem:[%s1011 + $0xf8] sm:$0xff]
    %vm1047 = vcmask 1045504
    %v1048 = vrot.slane %v289, 2
    %v1049 = vrot.slane %v294, 2
    %v1050 = vsel %vm1047, %v1048, %v1049
    %v1051 = vrot.slane %v299, 2
    %v1052 = vsel %vm1047, %v1049, %v1051
    %v1053 = vrot.slane %v304, 2
    %v1054 = vsel %vm1047, %v1051, %v1053
    %v1055 = vsel %vm121, %v1050, 0
    %v1057 = vsel %vm121, %v1052, 0
    %v1059 = vsel %vm121, %v1054, 0
    %v1061 = vsel %vm121, %v1053, 0
    %1063 = vmatprep.subr.mxu0 %v1013
    %1064 = vmatpush1.msra.mxu0 %v1012
    %1065 = vmatprep.subr.mxu0 %v1017
    %1066 = vmatpush1.msra.mxu0 %v1016
    %1067 = vmatprep.subr.mxu0 %v1021
    %1068 = vmatpush1.msra.mxu0 %v1020
    %1069 = vmatprep.subr.mxu0 %v1025
    %1070 = vmatpush1.msra.mxu0 %v1024
    %1071 = vmatprep.subr.mxu0 %v1029
    %1072 = vmatpush1.msra.mxu0 %v1028
    %1073 = vmatprep.subr.mxu0 %v1033
    %1074 = vmatpush1.msra.mxu0 %v1032
    %1075 = vmatprep.subr.mxu0 %v1037
    %1076 = vmatpush1.msra.mxu0 %v1036
    %1077 = vmatprep.subr.mxu0 %v1041
    %1078 = vmatpush1.msra.mxu0 %v1040
    %1079 = vmatprep.subr.mxu0 0.0
    %1080 = vmatpush1.msra.mxu0 0.0
    %1081 = vmatprep.subr.mxu0 0.0
    %1082 = vmatpush1.msra.mxu0 0.0
    %1083 = vmatprep.subr.mxu0 0.0
    %1084 = vmatpush1.msra.mxu0 0.0
    %1085 = vmatprep.subr.mxu0 0.0
    %1086 = vmatpush1.msra.mxu0 0.0
    %1087 = vmatprep.subr.mxu0 0.0
    %1088 = vmatpush1.msra.mxu0 0.0
    %1089 = vmatprep.subr.mxu0 0.0
    %1090 = vmatpush1.msra.mxu0 0.0
    %1091 = vmatprep.subr.mxu0 0.0
    %1092 = vmatpush1.msra.mxu0 0.0
    %1093 = vmatprep.subr.mxu0 0.0
    %1094 = vmatpush1.msra.mxu0 0.0
    %1095 = vmatprep.subr.mxu0 0.0
    %1096 = vmatpush1.msra.mxu0 0.0
    %1097 = vmatprep.subr.mxu0 0.0
    %1098 = vmatpush1.msra.mxu0 0.0
    %1099 = vmatprep.subr.mxu0 0.0
    %1100 = vmatpush1.msra.mxu0 0.0
    %1101 = vmatprep.subr.mxu0 0.0
    %1102 = vmatpush1.msra.mxu0 0.0
    %1103 = vmatprep.subr.mxu0 0.0
    %1104 = vmatpush1.msra.mxu0 0.0
    %1105 = vmatprep.subr.mxu0 0.0
    %1106 = vmatpush1.msra.mxu0 0.0
    %1107 = vmatprep.subr.mxu0 0.0
    %1108 = vmatpush1.msra.mxu0 0.0
    %1109 = vmatprep.subr.mxu0 0.0
    %1110 = vmatpush1.msra.mxu0 0.0
    %1111 = vmatprep.subr.mxu0 0.0
    %1112 = vmatpush1.msra.mxu0 0.0
    %1113 = vmatprep.subr.mxu0 0.0
    %1114 = vmatpush1.msra.mxu0 0.0
    %1115 = vmatprep.subr.mxu0 0.0
    %1116 = vmatpush1.msra.mxu0 0.0
    %1117 = vmatprep.subr.mxu0 0.0
    %1118 = vmatpush1.msra.mxu0 0.0
    %1119 = vmatprep.subr.mxu0 0.0
    %1120 = vmatpush1.msra.mxu0 0.0
    %1121 = vmatprep.subr.mxu0 0.0
    %1122 = vmatpush1.msra.mxu0 0.0
    %1123 = vmatprep.subr.mxu0 0.0
    %1124 = vmatpush1.msra.mxu0 0.0
    %1125 = vmatprep.subr.mxu0 0.0
    %1126 = vmatpush1.msra.mxu0 0.0
    %1127 = vmatprep.mubr.f32.mxu0 0.0
    %1128 = vmatmul.mubr.f32.gmra.mrb[0].mxu0 %v1055
    %v1129 = vpop.f32.mrb[0].mxu0
    %v1130 = vadd.f32 0.0, %v1129
    %v1131 = vpop.f32.mrb[0].mxu0
    %v1132 = vadd.f32 0.0, %v1131
    %1133 = vmatprep.mubr.f32.mxu0 0.0
    %1134 = vmatmul.mubr.f32.gmra.mrb[0].mxu0 %v1057
    %v1135 = vpop.f32.mrb[0].mxu0
    %v1136 = vadd.f32 0.0, %v1135
    %v1137 = vpop.f32.mrb[0].mxu0
    %v1138 = vadd.f32 0.0, %v1137
    %1139 = vmatprep.mubr.f32.mxu0 0.0
    %1140 = vmatmul.mubr.f32.gmra.mrb[0].mxu0 %v1059
    %v1141 = vpop.f32.mrb[0].mxu0
    %v1142 = vadd.f32 0.0, %v1141
    %v1143 = vpop.f32.mrb[0].mxu0
    %v1144 = vadd.f32 0.0, %v1143
    %1145 = vmatprep.mubr.f32.mxu0 0.0
    %1146 = vmatmul.mubr.f32.gmra.mrb[0].mxu0 %v1061
    %v1147 = vpop.f32.mrb[0].mxu0
    %v1148 = vadd.f32 0.0, %v1147
    %v1149 = vpop.f32.mrb[0].mxu0
    %v1150 = vadd.f32 0.0, %v1149
    %1151 = vdwg.mxu0
    %1152 = vmatprep.subr.mxu0 %v1015
    %1153 = vmatpush1.msra.mxu0 %v1014
    %1154 = vmatprep.subr.mxu0 %v1019
    %1155 = vmatpush1.msra.mxu0 %v1018
    %1156 = vmatprep.subr.mxu0 %v1023
    %1157 = vmatpush1.msra.mxu0 %v1022
    %1158 = vmatprep.subr.mxu0 %v1027
    %1159 = vmatpush1.msra.mxu0 %v1026
    %1160 = vmatprep.subr.mxu0 %v1031
    %1161 = vmatpush1.msra.mxu0 %v1030
    %1162 = vmatprep.subr.mxu0 %v1035
    %1163 = vmatpush1.msra.mxu0 %v1034
    %1164 = vmatprep.subr.mxu0 %v1039
    %1165 = vmatpush1.msra.mxu0 %v1038
    %1166 = vmatprep.subr.mxu0 %v1043
    %1167 = vmatpush1.msra.mxu0 %v1042
    %1168 = vmatprep.subr.mxu0 0.0
    %1169 = vmatpush1.msra.mxu0 0.0
    %1170 = vmatprep.subr.mxu0 0.0
    %1171 = vmatpush1.msra.mxu0 0.0
    %1172 = vmatprep.subr.mxu0 0.0
    %1173 = vmatpush1.msra.mxu0 0.0
    %1174 = vmatprep.subr.mxu0 0.0
    %1175 = vmatpush1.msra.mxu0 0.0
    %1176 = vmatprep.subr.mxu0 0.0
    %1177 = vmatpush1.msra.mxu0 0.0
    %1178 = vmatprep.subr.mxu0 0.0
    %1179 = vmatpush1.msra.mxu0 0.0
    %1180 = vmatprep.subr.mxu0 0.0
    %1181 = vmatpush1.msra.mxu0 0.0
    %1182 = vmatprep.subr.mxu0 0.0
    %1183 = vmatpush1.msra.mxu0 0.0
    %1184 = vmatprep.subr.mxu0 0.0
    %1185 = vmatpush1.msra.mxu0 0.0
    %1186 = vmatprep.subr.mxu0 0.0
    %1187 = vmatpush1.msra.mxu0 0.0
    %1188 = vmatprep.subr.mxu0 0.0
    %1189 = vmatpush1.msra.mxu0 0.0
    %1190 = vmatprep.subr.mxu0 0.0
    %1191 = vmatpush1.msra.mxu0 0.0
    %1192 = vmatprep.subr.mxu0 0.0
    %1193 = vmatpush1.msra.mxu0 0.0
    %1194 = vmatprep.subr.mxu0 0.0
    %1195 = vmatpush1.msra.mxu0 0.0
    %1196 = vmatprep.subr.mxu0 0.0
    %1197 = vmatpush1.msra.mxu0 0.0
    %1198 = vmatprep.subr.mxu0 0.0
    %1199 = vmatpush1.msra.mxu0 0.0
    %1200 = vmatprep.subr.mxu0 0.0
    %1201 = vmatpush1.msra.mxu0 0.0
    %1202 = vmatprep.subr.mxu0 0.0
    %1203 = vmatpush1.msra.mxu0 0.0
    %1204 = vmatprep.subr.mxu0 0.0
    %1205 = vmatpush1.msra.mxu0 0.0
    %1206 = vmatprep.subr.mxu0 0.0
    %1207 = vmatpush1.msra.mxu0 0.0
    %1208 = vmatprep.subr.mxu0 0.0
    %1209 = vmatpush1.msra.mxu0 0.0
    %1210 = vmatprep.subr.mxu0 0.0
    %1211 = vmatpush1.msra.mxu0 0.0
    %1212 = vmatprep.subr.mxu0 0.0
    %1213 = vmatpush1.msra.mxu0 0.0
    %1214 = vmatprep.subr.mxu0 0.0
    %1215 = vmatpush1.msra.mxu0 0.0
    %1216 = vmatprep.mubr.f32.mxu0 0.0
    %1217 = vmatmul.mubr.f32.gmra.mrb[0].mxu0 %v1055
    %v1218 = vpop.f32.mrb[0].mxu0
    %v1219 = vadd.f32 0.0, %v1218
    %v1220 = vpop.f32.mrb[0].mxu0
    %v1221 = vadd.f32 0.0, %v1220
    %1222 = vmatprep.mubr.f32.mxu0 0.0
    %1223 = vmatmul.mubr.f32.gmra.mrb[0].mxu0 %v1057
    %v1224 = vpop.f32.mrb[0].mxu0
    %v1225 = vadd.f32 0.0, %v1224
    %v1226 = vpop.f32.mrb[0].mxu0
    %v1227 = vadd.f32 0.0, %v1226
    %1228 = vmatprep.mubr.f32.mxu0 0.0
    %1229 = vmatmul.mubr.f32.gmra.mrb[0].mxu0 %v1059
    %v1230 = vpop.f32.mrb[0].mxu0
    %v1231 = vadd.f32 0.0, %v1230
    %v1232 = vpop.f32.mrb[0].mxu0
    %v1233 = vadd.f32 0.0, %v1232
    %1234 = vmatprep.mubr.f32.mxu0 0.0
    %1235 = vmatmul.mubr.f32.gmra.mrb[0].mxu0 %v1061
    %v1236 = vpop.f32.mrb[0].mxu0
    %v1237 = vadd.f32 0.0, %v1236
    %v1238 = vpop.f32.mrb[0].mxu0
    %v1239 = vadd.f32 0.0, %v1238
    %1240 = vdwg.mxu0
    %v1241 = vadd.f32 %v995, %v1130
    %v1242 = vadd.f32 %v996, %v1132
    %v1243 = vadd.f32 %v997, %v1219
    %v1244 = vadd.f32 %v998, %v1221
    %v1245 = vadd.f32 %v999, %v1136
    %v1246 = vadd.f32 %v1000, %v1138
    %v1247 = vadd.f32 %v1001, %v1225
    %v1248 = vadd.f32 %v1002, %v1227
    %v1249 = vadd.f32 %v1003, %v1142
    %v1250 = vadd.f32 %v1004, %v1144
    %v1251 = vadd.f32 %v1005, %v1231
    %v1252 = vadd.f32 %v1006, %v1233
    %v1253 = vadd.f32 %v1007, %v1148
    %v1254 = vadd.f32 %v1008, %v1150
    %v1255 = vadd.f32 %v1009, %v1237
    %v1256 = vadd.f32 %v1010, %v1239
    %v1257 = vld [vmem:[%s8] sm:$0xf]
    %v1259 = vlaneseq
    %v1260 = vshrl.u32 %v1259, 7
    %v1261 = vsub.s32 0, %v1260
    %v1262 = vrot.slane %v1257, %v1261
    %v1263 = vlaneseq
    %v1264 = vshrl.u32 %v1263, 7
    %v1265 = vsub.s32 1, %v1264
    %v1266 = vrot.slane %v1257, %v1265
    %v1267 = vlaneseq
    %v1268 = vshrl.u32 %v1267, 7
    %v1269 = vsub.s32 2, %v1268
    %v1270 = vrot.slane %v1257, %v1269
    %v1271 = vlaneseq
    %v1272 = vshrl.u32 %v1271, 7
    %v1273 = vsub.s32 3, %v1272
    %v1274 = vrot.slane %v1257, %v1273
    %v1279 = vadd.f32 %v1241, %v1262
    %v1280 = vadd.f32 %v1242, %v1266
    %v1281 = vadd.f32 %v1243, %v1270
    %v1282 = vadd.f32 %v1244, %v1274
    %v1283 = vadd.f32 %v1245, %v1262
    %v1284 = vadd.f32 %v1246, %v1266
    %v1285 = vadd.f32 %v1247, %v1270
    %v1286 = vadd.f32 %v1248, %v1274
    %v1287 = vadd.f32 %v1249, %v1262
    %v1288 = vadd.f32 %v1250, %v1266
    %v1289 = vadd.f32 %v1251, %v1270
    %v1290 = vadd.f32 %v1252, %v1274
    %v1291 = vadd.f32 %v1253, %v1262
    %v1292 = vadd.f32 %v1254, %v1266
    %v1293 = vadd.f32 %v1255, %v1270
    %v1294 = vadd.f32 %v1256, %v1274
    %v1295 = vmax.f32 %v1279, 0.0
    %v1296 = vmax.f32 %v1280, 0.0
    %v1297 = vmax.f32 %v1281, 0.0
    %v1298 = vmax.f32 %v1282, 0.0
    %v1299 = vmax.f32 %v1283, 0.0
    %v1300 = vmax.f32 %v1284, 0.0
    %v1301 = vmax.f32 %v1285, 0.0
    %v1302 = vmax.f32 %v1286, 0.0
    %v1303 = vmax.f32 %v1287, 0.0
    %v1304 = vmax.f32 %v1288, 0.0
    %v1305 = vmax.f32 %v1289, 0.0
    %v1306 = vmax.f32 %v1290, 0.0
    %v1307 = vmax.f32 %v1291, 0.0
    %v1308 = vmax.f32 %v1292, 0.0
    %v1309 = vmax.f32 %v1293, 0.0
    %v1310 = vmax.f32 %v1294, 0.0
    %v1311 = vld [vmem:[%s3] sm:$0xff]
    %v1312 = vld [vmem:[%s3 + $0x8] sm:$0xff]
    %v1313 = vld [vmem:[%s3 + $0x10] sm:$0xff]
    %v1314 = vld [vmem:[%s3 + $0x18] sm:$0xff]
    %v1315 = vld [vmem:[%s3 + $0x20] sm:$0xff]
    %v1316 = vld [vmem:[%s3 + $0x28] sm:$0xff]
    %vm1317 = vcmask 244736
    %v1319 = vsel %vm1317, %v1311, 0
    %v1322 = vsel %vm1317, %v1312, 0
    %v1325 = vsel %vm1317, %v1313, 0
    %v1328 = vsel %vm1317, %v1314, 0
    %v1331 = vsel %vm1317, %v1315, 0
    %v1334 = vsel %vm1317, %v1316, 0
    %v1337 = vsel %vm1047, %v1307, 0
    %v1340 = vsel %vm1047, %v1308, 0
    %v1343 = vsel %vm1047, %v1309, 0
    %v1346 = vsel %vm1047, %v1310, 0
    %1348 = vmatprep.subr.mxu0 %v1296
    %1349 = vmatpush1.msra.mxu0 %v1295
    %1350 = vmatprep.subr.mxu0 %v1300
    %1351 = vmatpush1.msra.mxu0 %v1299
    %1352 = vmatprep.subr.mxu0 %v1304
    %1353 = vmatpush1.msra.mxu0 %v1303
    %1354 = vmatprep.subr.mxu0 %v1340
    %1355 = vmatpush1.msra.mxu0 %v1337
    %1356 = vmatprep.subr.mxu0 0.0
    %1357 = vmatpush1.msra.mxu0 0.0
    %1358 = vmatprep.subr.mxu0 0.0
    %1359 = vmatpush1.msra.mxu0 0.0
    %1360 = vmatprep.subr.mxu0 0.0
    %1361 = vmatpush1.msra.mxu0 0.0
    %1362 = vmatprep.subr.mxu0 0.0
    %1363 = vmatpush1.msra.mxu0 0.0
    %1364 = vmatprep.subr.mxu0 0.0
    %1365 = vmatpush1.msra.mxu0 0.0
    %1366 = vmatprep.subr.mxu0 0.0
    %1367 = vmatpush1.msra.mxu0 0.0
    %1368 = vmatprep.subr.mxu0 0.0
    %1369 = vmatpush1.msra.mxu0 0.0
    %1370 = vmatprep.subr.mxu0 0.0
    %1371 = vmatpush1.msra.mxu0 0.0
    %1372 = vmatprep.subr.mxu0 0.0
    %1373 = vmatpush1.msra.mxu0 0.0
    %1374 = vmatprep.subr.mxu0 0.0
    %1375 = vmatpush1.msra.mxu0 0.0
    %1376 = vmatprep.subr.mxu0 0.0
    %1377 = vmatpush1.msra.mxu0 0.0
    %1378 = vmatprep.subr.mxu0 0.0
    %1379 = vmatpush1.msra.mxu0 0.0
    %1380 = vmatprep.subr.mxu0 0.0
    %1381 = vmatpush1.msra.mxu0 0.0
    %1382 = vmatprep.subr.mxu0 0.0
    %1383 = vmatpush1.msra.mxu0 0.0
    %1384 = vmatprep.subr.mxu0 0.0
    %1385 = vmatpush1.msra.mxu0 0.0
    %1386 = vmatprep.subr.mxu0 0.0
    %1387 = vmatpush1.msra.mxu0 0.0
    %1388 = vmatprep.subr.mxu0 0.0
    %1389 = vmatpush1.msra.mxu0 0.0
    %1390 = vmatprep.subr.mxu0 0.0
    %1391 = vmatpush1.msra.mxu0 0.0
    %1392 = vmatprep.subr.mxu0 0.0
    %1393 = vmatpush1.msra.mxu0 0.0
    %1394 = vmatprep.subr.mxu0 0.0
    %1395 = vmatpush1.msra.mxu0 0.0
    %1396 = vmatprep.subr.mxu0 0.0
    %1397 = vmatpush1.msra.mxu0 0.0
    %1398 = vmatprep.subr.mxu0 0.0
    %1399 = vmatpush1.msra.mxu0 0.0
    %1400 = vmatprep.subr.mxu0 0.0
    %1401 = vmatpush1.msra.mxu0 0.0
    %1402 = vmatprep.subr.mxu0 0.0
    %1403 = vmatpush1.msra.mxu0 0.0
    %1404 = vmatprep.subr.mxu0 0.0
    %1405 = vmatpush1.msra.mxu0 0.0
    %1406 = vmatprep.subr.mxu0 0.0
    %1407 = vmatpush1.msra.mxu0 0.0
    %1408 = vmatprep.subr.mxu0 0.0
    %1409 = vmatpush1.msra.mxu0 0.0
    %1410 = vmatprep.subr.mxu0 0.0
    %1411 = vmatpush1.msra.mxu0 0.0
    %1412 = vmatprep.mubr.f32.mxu0 0.0
    %1413 = vmatmul.mubr.f32.gmra.mrb[0].mxu0 %v1319
    %v1414 = vpop.f32.mrb[0].mxu0
    %v1415 = vadd.f32 0.0, %v1414
    %v1416 = vpop.f32.mrb[0].mxu0
    %v1417 = vadd.f32 0.0, %v1416
    %1418 = vmatprep.mubr.f32.mxu0 0.0
    %1419 = vmatmul.mubr.f32.gmra.mrb[0].mxu0 %v1322
    %v1420 = vpop.f32.mrb[0].mxu0
    %v1421 = vadd.f32 0.0, %v1420
    %v1422 = vpop.f32.mrb[0].mxu0
    %v1423 = vadd.f32 0.0, %v1422
    %1424 = vmatprep.mubr.f32.mxu0 0.0
    %1425 = vmatmul.mubr.f32.gmra.mrb[0].mxu0 %v1325
    %v1426 = vpop.f32.mrb[0].mxu0
    %v1427 = vadd.f32 0.0, %v1426
    %v1428 = vpop.f32.mrb[0].mxu0
    %v1429 = vadd.f32 0.0, %v1428
    %1430 = vmatprep.mubr.f32.mxu0 0.0
    %1431 = vmatmul.mubr.f32.gmra.mrb[0].mxu0 %v1328
    %v1432 = vpop.f32.mrb[0].mxu0
    %v1433 = vadd.f32 0.0, %v1432
    %v1434 = vpop.f32.mrb[0].mxu0
    %v1435 = vadd.f32 0.0, %v1434
    %1436 = vmatprep.mubr.f32.mxu0 0.0
    %1437 = vmatmul.mubr.f32.gmra.mrb[0].mxu0 %v1331
    %v1438 = vpop.f32.mrb[0].mxu0
    %v1439 = vadd.f32 0.0, %v1438
    %v1440 = vpop.f32.mrb[0].mxu0
    %v1441 = vadd.f32 0.0, %v1440
    %1442 = vmatprep.mubr.f32.mxu0 0.0
    %1443 = vmatmul.mubr.f32.gmra.mrb[0].mxu0 %v1334
    %v1444 = vpop.f32.mrb[0].mxu0
    %v1445 = vadd.f32 0.0, %v1444
    %v1446 = vpop.f32.mrb[0].mxu0
    %v1447 = vadd.f32 0.0, %v1446
    %1448 = vdwg.mxu0
    %1449 = vmatprep.subr.mxu0 %v1298
    %1450 = vmatpush1.msra.mxu0 %v1297
    %1451 = vmatprep.subr.mxu0 %v1302
    %1452 = vmatpush1.msra.mxu0 %v1301
    %1453 = vmatprep.subr.mxu0 %v1306
    %1454 = vmatpush1.msra.mxu0 %v1305
    %1455 = vmatprep.subr.mxu0 %v1346
    %1456 = vmatpush1.msra.mxu0 %v1343
    %1457 = vmatprep.subr.mxu0 0.0
    %1458 = vmatpush1.msra.mxu0 0.0
    %1459 = vmatprep.subr.mxu0 0.0
    %1460 = vmatpush1.msra.mxu0 0.0
    %1461 = vmatprep.subr.mxu0 0.0
    %1462 = vmatpush1.msra.mxu0 0.0
    %1463 = vmatprep.subr.mxu0 0.0
    %1464 = vmatpush1.msra.mxu0 0.0
    %1465 = vmatprep.subr.mxu0 0.0
    %1466 = vmatpush1.msra.mxu0 0.0
    %1467 = vmatprep.subr.mxu0 0.0
    %1468 = vmatpush1.msra.mxu0 0.0
    %1469 = vmatprep.subr.mxu0 0.0
    %1470 = vmatpush1.msra.mxu0 0.0
    %1471 = vmatprep.subr.mxu0 0.0
    %1472 = vmatpush1.msra.mxu0 0.0
    %1473 = vmatprep.subr.mxu0 0.0
    %1474 = vmatpush1.msra.mxu0 0.0
    %1475 = vmatprep.subr.mxu0 0.0
    %1476 = vmatpush1.msra.mxu0 0.0
    %1477 = vmatprep.subr.mxu0 0.0
    %1478 = vmatpush1.msra.mxu0 0.0
    %1479 = vmatprep.subr.mxu0 0.0
    %1480 = vmatpush1.msra.mxu0 0.0
    %1481 = vmatprep.subr.mxu0 0.0
    %1482 = vmatpush1.msra.mxu0 0.0
    %1483 = vmatprep.subr.mxu0 0.0
    %1484 = vmatpush1.msra.mxu0 0.0
    %1485 = vmatprep.subr.mxu0 0.0
    %1486 = vmatpush1.msra.mxu0 0.0
    %1487 = vmatprep.subr.mxu0 0.0
    %1488 = vmatpush1.msra.mxu0 0.0
    %1489 = vmatprep.subr.mxu0 0.0
    %1490 = vmatpush1.msra.mxu0 0.0
    %1491 = vmatprep.subr.mxu0 0.0
    %1492 = vmatpush1.msra.mxu0 0.0
    %1493 = vmatprep.subr.mxu0 0.0
    %1494 = vmatpush1.msra.mxu0 0.0
    %1495 = vmatprep.subr.mxu0 0.0
    %1496 = vmatpush1.msra.mxu0 0.0
    %1497 = vmatprep.subr.mxu0 0.0
    %1498 = vmatpush1.msra.mxu0 0.0
    %1499 = vmatprep.subr.mxu0 0.0
    %1500 = vmatpush1.msra.mxu0 0.0
    %1501 = vmatprep.subr.mxu0 0.0
    %1502 = vmatpush1.msra.mxu0 0.0
    %1503 = vmatprep.subr.mxu0 0.0
    %1504 = vmatpush1.msra.mxu0 0.0
    %1505 = vmatprep.subr.mxu0 0.0
    %1506 = vmatpush1.msra.mxu0 0.0
    %1507 = vmatprep.subr.mxu0 0.0
    %1508 = vmatpush1.msra.mxu0 0.0
    %1509 = vmatprep.subr.mxu0 0.0
    %1510 = vmatpush1.msra.mxu0 0.0
    %1511 = vmatprep.subr.mxu0 0.0
    %1512 = vmatpush1.msra.mxu0 0.0
    %1513 = vmatprep.mubr.f32.mxu0 0.0
    %1514 = vmatmul.mubr.f32.gmra.mrb[0].mxu0 %v1319
    %v1515 = vpop.f32.mrb[0].mxu0
    %v1516 = vadd.f32 0.0, %v1515
    %v1517 = vpop.f32.mrb[0].mxu0
    %v1518 = vadd.f32 0.0, %v1517
    %1519 = vmatprep.mubr.f32.mxu0 0.0
    %1520 = vmatmul.mubr.f32.gmra.mrb[0].mxu0 %v1322
    %v1521 = vpop.f32.mrb[0].mxu0
    %v1522 = vadd.f32 0.0, %v1521
    %v1523 = vpop.f32.mrb[0].mxu0
    %v1524 = vadd.f32 0.0, %v1523
    %1525 = vmatprep.mubr.f32.mxu0 0.0
    %1526 = vmatmul.mubr.f32.gmra.mrb[0].mxu0 %v1325
    %v1527 = vpop.f32.mrb[0].mxu0
    %v1528 = vadd.f32 0.0, %v1527
    %v1529 = vpop.f32.mrb[0].mxu0
    %v1530 = vadd.f32 0.0, %v1529
    %1531 = vmatprep.mubr.f32.mxu0 0.0
    %1532 = vmatmul.mubr.f32.gmra.mrb[0].mxu0 %v1328
    %v1533 = vpop.f32.mrb[0].mxu0
    %v1534 = vadd.f32 0.0, %v1533
    %v1535 = vpop.f32.mrb[0].mxu0
    %v1536 = vadd.f32 0.0, %v1535
    %1537 = vmatprep.mubr.f32.mxu0 0.0
    %1538 = vmatmul.mubr.f32.gmra.mrb[0].mxu0 %v1331
    %v1539 = vpop.f32.mrb[0].mxu0
    %v1540 = vadd.f32 0.0, %v1539
    %v1541 = vpop.f32.mrb[0].mxu0
    %v1542 = vadd.f32 0.0, %v1541
    %1543 = vmatprep.mubr.f32.mxu0 0.0
    %1544 = vmatmul.mubr.f32.gmra.mrb[0].mxu0 %v1334
    %v1545 = vpop.f32.mrb[0].mxu0
    %v1546 = vadd.f32 0.0, %v1545
    %v1547 = vpop.f32.mrb[0].mxu0
    %v1548 = vadd.f32 0.0, %v1547
    %1549 = vdwg.mxu0
    %v1550 = vld [vmem:[%s6] sm:$0xff]
    %v1551 = vld [vmem:[%s6 + $0x8] sm:$0xff]
    %v1552 = vld [vmem:[%s6 + $0x10] sm:$0xff]
    %v1553 = vld [vmem:[%s6 + $0x18] sm:$0xff]
    %v1554 = vld [vmem:[%s6 + $0x20] sm:$0xff]
    %v1555 = vld [vmem:[%s6 + $0x28] sm:$0xff]
    %v1556 = vld [vmem:[%s6 + $0x30] sm:$0xff]
    %v1557 = vld [vmem:[%s6 + $0x38] sm:$0xff]
    %v1558 = vld [vmem:[%s6 + $0x40] sm:$0xff]
    %v1559 = vld [vmem:[%s6 + $0x48] sm:$0xff]
    %v1560 = vld [vmem:[%s6 + $0x50] sm:$0xff]
    %v1561 = vld [vmem:[%s6 + $0x58] sm:$0xff]
    %v1562 = vld [vmem:[%s6 + $0x60] sm:$0xff]
    %v1563 = vld [vmem:[%s6 + $0x68] sm:$0xff]
    %v1564 = vld [vmem:[%s6 + $0x70] sm:$0xff]
    %v1565 = vld [vmem:[%s6 + $0x78] sm:$0xff]
    %v1566 = vld [vmem:[%s6 + $0x80] sm:$0xff]
    %v1567 = vld [vmem:[%s6 + $0x88] sm:$0xff]
    %v1568 = vld [vmem:[%s6 + $0x90] sm:$0xff]
    %v1569 = vld [vmem:[%s6 + $0x98] sm:$0xff]
    %v1570 = vld [vmem:[%s6 + $0xa0] sm:$0xff]
    %v1571 = vld [vmem:[%s6 + $0xa8] sm:$0xff]
    %v1572 = vld [vmem:[%s6 + $0xb0] sm:$0xff]
    %v1573 = vld [vmem:[%s6 + $0xb8] sm:$0xff]
    %v1574 = vld [vmem:[%s6 + $0xc0] sm:$0xff]
    %v1575 = vld [vmem:[%s6 + $0xc8] sm:$0xff]
    %v1576 = vld [vmem:[%s6 + $0xd0] sm:$0xff]
    %v1577 = vld [vmem:[%s6 + $0xd8] sm:$0xff]
    %v1578 = vld [vmem:[%s6 + $0xe0] sm:$0xff]
    %v1579 = vld [vmem:[%s6 + $0xe8] sm:$0xff]
    %v1580 = vld [vmem:[%s6 + $0xf0] sm:$0xff]
    %v1581 = vld [vmem:[%s6 + $0xf8] sm:$0xff]
    %v1582 = vld [vmem:[%s6 + $0x100] sm:$0xff]
    %v1583 = vld [vmem:[%s6 + $0x108] sm:$0xff]
    %v1584 = vld [vmem:[%s6 + $0x110] sm:$0xff]
    %v1585 = vld [vmem:[%s6 + $0x118] sm:$0xff]
    %v1586 = vld [vmem:[%s6 + $0x120] sm:$0xff]
    %v1587 = vld [vmem:[%s6 + $0x128] sm:$0xff]
    %v1588 = vld [vmem:[%s6 + $0x130] sm:$0xff]
    %v1589 = vld [vmem:[%s6 + $0x138] sm:$0xff]
    %v1590 = vld [vmem:[%s6 + $0x140] sm:$0xff]
    %v1591 = vld [vmem:[%s6 + $0x148] sm:$0xff]
    %v1592 = vld [vmem:[%s6 + $0x150] sm:$0xff]
    %v1593 = vld [vmem:[%s6 + $0x158] sm:$0xff]
    %v1594 = vld [vmem:[%s6 + $0x160] sm:$0xff]
    %v1595 = vld [vmem:[%s6 + $0x168] sm:$0xff]
    %v1596 = vld [vmem:[%s6 + $0x170] sm:$0xff]
    %v1597 = vld [vmem:[%s6 + $0x178] sm:$0xff]
    %v1598 = vld [vmem:[%s6 + $0x180] sm:$0xff]
    %v1599 = vld [vmem:[%s6 + $0x188] sm:$0xff]
    %v1600 = vld [vmem:[%s6 + $0x190] sm:$0xff]
    %v1601 = vld [vmem:[%s6 + $0x198] sm:$0xff]
    %v1602 = vld [vmem:[%s6 + $0x1a0] sm:$0xff]
    %v1603 = vld [vmem:[%s6 + $0x1a8] sm:$0xff]
    %v1604 = vld [vmem:[%s6 + $0x1b0] sm:$0xff]
    %v1605 = vld [vmem:[%s6 + $0x1b8] sm:$0xff]
    %v1606 = vld [vmem:[%s6 + $0x1c0] sm:$0xff]
    %v1607 = vld [vmem:[%s6 + $0x1c8] sm:$0xff]
    %v1608 = vld [vmem:[%s6 + $0x1d0] sm:$0xff]
    %v1609 = vld [vmem:[%s6 + $0x1d8] sm:$0xff]
    %v1610 = vld [vmem:[%s6 + $0x1e0] sm:$0xff]
    %v1611 = vld [vmem:[%s6 + $0x1e8] sm:$0xff]
    %v1612 = vld [vmem:[%s6 + $0x1f0] sm:$0xff]
    %v1613 = vld [vmem:[%s6 + $0x1f8] sm:$0xff]
    %v1614 = vld [vmem:[%s6 + $0x200] sm:$0xff]
    %v1615 = vld [vmem:[%s6 + $0x208] sm:$0xff]
    %v1616 = vld [vmem:[%s6 + $0x210] sm:$0xff]
    %v1617 = vld [vmem:[%s6 + $0x218] sm:$0xff]
    %v1618 = vld [vmem:[%s6 + $0x220] sm:$0xff]
    %v1619 = vld [vmem:[%s6 + $0x228] sm:$0xff]
    %v1620 = vld [vmem:[%s6 + $0x230] sm:$0xff]
    %v1621 = vld [vmem:[%s6 + $0x238] sm:$0xff]
    %v1622 = vld [vmem:[%s6 + $0x240] sm:$0xff]
    %v1623 = vld [vmem:[%s6 + $0x248] sm:$0xff]
    %v1624 = vld [vmem:[%s6 + $0x250] sm:$0xff]
    %v1625 = vld [vmem:[%s6 + $0x258] sm:$0xff]
    %v1626 = vld [vmem:[%s6 + $0x260] sm:$0xff]
    %v1627 = vld [vmem:[%s6 + $0x268] sm:$0xff]
    %v1628 = vld [vmem:[%s6 + $0x270] sm:$0xff]
    %v1629 = vld [vmem:[%s6 + $0x278] sm:$0xff]
    %v1630 = vld [vmem:[%s6 + $0x280] sm:$0xff]
    %v1631 = vld [vmem:[%s6 + $0x288] sm:$0xff]
    %v1632 = vld [vmem:[%s6 + $0x290] sm:$0xff]
    %v1633 = vld [vmem:[%s6 + $0x298] sm:$0xff]
    %v1634 = vld [vmem:[%s6 + $0x2a0] sm:$0xff]
    %v1635 = vld [vmem:[%s6 + $0x2a8] sm:$0xff]
    %v1636 = vld [vmem:[%s6 + $0x2b0] sm:$0xff]
    %v1637 = vld [vmem:[%s6 + $0x2b8] sm:$0xff]
    %v1638 = vld [vmem:[%s6 + $0x2c0] sm:$0xff]
    %v1639 = vld [vmem:[%s6 + $0x2c8] sm:$0xff]
    %v1640 = vld [vmem:[%s6 + $0x2d0] sm:$0xff]
    %v1641 = vld [vmem:[%s6 + $0x2d8] sm:$0xff]
    %v1642 = vld [vmem:[%s6 + $0x2e0] sm:$0xff]
    %v1643 = vld [vmem:[%s6 + $0x2e8] sm:$0xff]
    %v1644 = vld [vmem:[%s6 + $0x2f0] sm:$0xff]
    %v1645 = vld [vmem:[%s6 + $0x2f8] sm:$0xff]
    %v1646 = vld [vmem:[%s6 + $0x300] sm:$0xff]
    %v1647 = vld [vmem:[%s6 + $0x308] sm:$0xff]
    %v1648 = vld [vmem:[%s6 + $0x310] sm:$0xff]
    %v1649 = vld [vmem:[%s6 + $0x318] sm:$0xff]
    %v1650 = vld [vmem:[%s6 + $0x320] sm:$0xff]
    %v1651 = vld [vmem:[%s6 + $0x328] sm:$0xff]
    %v1652 = vld [vmem:[%s6 + $0x330] sm:$0xff]
    %v1653 = vld [vmem:[%s6 + $0x338] sm:$0xff]
    %v1654 = vld [vmem:[%s6 + $0x340] sm:$0xff]
    %v1655 = vld [vmem:[%s6 + $0x348] sm:$0xff]
    %v1656 = vld [vmem:[%s6 + $0x350] sm:$0xff]
    %v1657 = vld [vmem:[%s6 + $0x358] sm:$0xff]
    %v1658 = vld [vmem:[%s6 + $0x360] sm:$0xff]
    %v1659 = vld [vmem:[%s6 + $0x368] sm:$0xff]
    %v1660 = vld [vmem:[%s6 + $0x370] sm:$0xff]
    %v1661 = vld [vmem:[%s6 + $0x378] sm:$0xff]
    %v1662 = vld [vmem:[%s6 + $0x380] sm:$0xff]
    %v1663 = vld [vmem:[%s6 + $0x388] sm:$0xff]
    %v1664 = vld [vmem:[%s6 + $0x390] sm:$0xff]
    %v1665 = vld [vmem:[%s6 + $0x398] sm:$0xff]
    %v1666 = vld [vmem:[%s6 + $0x3a0] sm:$0xff]
    %v1667 = vld [vmem:[%s6 + $0x3a8] sm:$0xff]
    %v1668 = vld [vmem:[%s6 + $0x3b0] sm:$0xff]
    %v1669 = vld [vmem:[%s6 + $0x3b8] sm:$0xff]
    %v1670 = vld [vmem:[%s6 + $0x3c0] sm:$0xff]
    %v1671 = vld [vmem:[%s6 + $0x3c8] sm:$0xff]
    %v1672 = vld [vmem:[%s6 + $0x3d0] sm:$0xff]
    %v1673 = vld [vmem:[%s6 + $0x3d8] sm:$0xff]
    %v1674 = vld [vmem:[%s6 + $0x3e0] sm:$0xff]
    %v1675 = vld [vmem:[%s6 + $0x3e8] sm:$0xff]
    %v1676 = vld [vmem:[%s6 + $0x3f0] sm:$0xff]
    %v1677 = vld [vmem:[%s6 + $0x3f8] sm:$0xff]
    %v1678 = vld [vmem:[%s6 + $0x400] sm:$0xff]
    %v1679 = vld [vmem:[%s6 + $0x408] sm:$0xff]
    %v1680 = vld [vmem:[%s6 + $0x410] sm:$0xff]
    %v1681 = vld [vmem:[%s6 + $0x418] sm:$0xff]
    %v1682 = vld [vmem:[%s6 + $0x420] sm:$0xff]
    %v1683 = vld [vmem:[%s6 + $0x428] sm:$0xff]
    %v1684 = vld [vmem:[%s6 + $0x430] sm:$0xff]
    %v1685 = vld [vmem:[%s6 + $0x438] sm:$0xff]
    %v1686 = vld [vmem:[%s6 + $0x440] sm:$0xff]
    %v1687 = vld [vmem:[%s6 + $0x448] sm:$0xff]
    %v1688 = vld [vmem:[%s6 + $0x450] sm:$0xff]
    %v1689 = vld [vmem:[%s6 + $0x458] sm:$0xff]
    %v1690 = vld [vmem:[%s6 + $0x460] sm:$0xff]
    %v1691 = vld [vmem:[%s6 + $0x468] sm:$0xff]
    %v1692 = vld [vmem:[%s6 + $0x470] sm:$0xff]
    %v1693 = vld [vmem:[%s6 + $0x478] sm:$0xff]
    %v1694 = vld [vmem:[%s6 + $0x480] sm:$0xff]
    %v1695 = vld [vmem:[%s6 + $0x488] sm:$0xff]
    %v1696 = vld [vmem:[%s6 + $0x490] sm:$0xff]
    %v1697 = vld [vmem:[%s6 + $0x498] sm:$0xff]
    %v1698 = vld [vmem:[%s6 + $0x4a0] sm:$0xff]
    %v1699 = vld [vmem:[%s6 + $0x4a8] sm:$0xff]
    %v1700 = vld [vmem:[%s6 + $0x4b0] sm:$0xff]
    %v1701 = vld [vmem:[%s6 + $0x4b8] sm:$0xff]
    %v1702 = vld [vmem:[%s6 + $0x4c0] sm:$0xff]
    %v1703 = vld [vmem:[%s6 + $0x4c8] sm:$0xff]
    %v1704 = vld [vmem:[%s6 + $0x4d0] sm:$0xff]
    %v1705 = vld [vmem:[%s6 + $0x4d8] sm:$0xff]
    %v1706 = vld [vmem:[%s6 + $0x4e0] sm:$0xff]
    %v1707 = vld [vmem:[%s6 + $0x4e8] sm:$0xff]
    %v1708 = vld [vmem:[%s6 + $0x4f0] sm:$0xff]
    %v1709 = vld [vmem:[%s6 + $0x4f8] sm:$0xff]
    %v1710 = vld [vmem:[%s6 + $0x500] sm:$0xff]
    %v1711 = vld [vmem:[%s6 + $0x508] sm:$0xff]
    %v1712 = vld [vmem:[%s6 + $0x510] sm:$0xff]
    %v1713 = vld [vmem:[%s6 + $0x518] sm:$0xff]
    %v1714 = vld [vmem:[%s6 + $0x520] sm:$0xff]
    %v1715 = vld [vmem:[%s6 + $0x528] sm:$0xff]
    %v1716 = vld [vmem:[%s6 + $0x530] sm:$0xff]
    %v1717 = vld [vmem:[%s6 + $0x538] sm:$0xff]
    %v1718 = vld [vmem:[%s6 + $0x540] sm:$0xff]
    %v1719 = vld [vmem:[%s6 + $0x548] sm:$0xff]
    %v1720 = vld [vmem:[%s6 + $0x550] sm:$0xff]
    %v1721 = vld [vmem:[%s6 + $0x558] sm:$0xff]
    %v1722 = vld [vmem:[%s6 + $0x560] sm:$0xff]
    %v1723 = vld [vmem:[%s6 + $0x568] sm:$0xff]
    %v1724 = vld [vmem:[%s6 + $0x570] sm:$0xff]
    %v1725 = vld [vmem:[%s6 + $0x578] sm:$0xff]
    %v1726 = vld [vmem:[%s6 + $0x580] sm:$0xff]
    %v1727 = vld [vmem:[%s6 + $0x588] sm:$0xff]
    %v1728 = vld [vmem:[%s6 + $0x590] sm:$0xff]
    %v1729 = vld [vmem:[%s6 + $0x598] sm:$0xff]
    %s1730 = scalar_lea.vmem %s6, 1440
    %v1731 = vld [vmem:[%s1730] sm:$0xff]
    %v1732 = vld [vmem:[%s1730 + $0x8] sm:$0xff]
    %v1733 = vld [vmem:[%s1730 + $0x10] sm:$0xff]
    %v1734 = vld [vmem:[%s1730 + $0x18] sm:$0xff]
    %v1735 = vld [vmem:[%s1730 + $0x20] sm:$0xff]
    %v1736 = vld [vmem:[%s1730 + $0x28] sm:$0xff]
    %v1737 = vld [vmem:[%s1730 + $0x30] sm:$0xff]
    %v1738 = vld [vmem:[%s1730 + $0x38] sm:$0xff]
    %v1739 = vld [vmem:[%s1730 + $0x40] sm:$0xff]
    %v1740 = vld [vmem:[%s1730 + $0x48] sm:$0xff]
    %v1741 = vld [vmem:[%s1730 + $0x50] sm:$0xff]
    %v1742 = vld [vmem:[%s1730 + $0x58] sm:$0xff]
    %v1743 = vld [vmem:[%s1730 + $0x60] sm:$0xff]
    %v1744 = vld [vmem:[%s1730 + $0x68] sm:$0xff]
    %v1745 = vld [vmem:[%s1730 + $0x70] sm:$0xff]
    %v1746 = vld [vmem:[%s1730 + $0x78] sm:$0xff]
    %v1747 = vld [vmem:[%s1730 + $0x80] sm:$0xff]
    %v1748 = vld [vmem:[%s1730 + $0x88] sm:$0xff]
    %v1749 = vld [vmem:[%s1730 + $0x90] sm:$0xff]
    %v1750 = vld [vmem:[%s1730 + $0x98] sm:$0xff]
    %v1751 = vld [vmem:[%s1730 + $0xa0] sm:$0xff]
    %v1752 = vld [vmem:[%s1730 + $0xa8] sm:$0xff]
    %v1753 = vld [vmem:[%s1730 + $0xb0] sm:$0xff]
    %v1754 = vld [vmem:[%s1730 + $0xb8] sm:$0xff]
    %v1755 = vld [vmem:[%s1730 + $0xc0] sm:$0xff]
    %v1756 = vld [vmem:[%s1730 + $0xc8] sm:$0xff]
    %v1757 = vld [vmem:[%s1730 + $0xd0] sm:$0xff]
    %v1758 = vld [vmem:[%s1730 + $0xd8] sm:$0xff]
    %v1759 = vld [vmem:[%s1730 + $0xe0] sm:$0xff]
    %v1760 = vld [vmem:[%s1730 + $0xe8] sm:$0xff]
    %v1761 = vld [vmem:[%s1730 + $0xf0] sm:$0xff]
    %v1762 = vld [vmem:[%s1730 + $0xf8] sm:$0xff]
    %v1763 = vld [vmem:[%s1730 + $0x100] sm:$0xff]
    %v1764 = vld [vmem:[%s1730 + $0x108] sm:$0xff]
    %v1765 = vld [vmem:[%s1730 + $0x110] sm:$0xff]
    %v1766 = vld [vmem:[%s1730 + $0x118] sm:$0xff]
    %v1767 = vld [vmem:[%s1730 + $0x120] sm:$0xff]
    %v1768 = vld [vmem:[%s1730 + $0x128] sm:$0xff]
    %v1769 = vld [vmem:[%s1730 + $0x130] sm:$0xff]
    %v1770 = vld [vmem:[%s1730 + $0x138] sm:$0xff]
    %v1771 = vld [vmem:[%s1730 + $0x140] sm:$0xff]
    %v1772 = vld [vmem:[%s1730 + $0x148] sm:$0xff]
    %v1773 = vld [vmem:[%s1730 + $0x150] sm:$0xff]
    %v1774 = vld [vmem:[%s1730 + $0x158] sm:$0xff]
    %v1775 = vld [vmem:[%s1730 + $0x160] sm:$0xff]
    %v1776 = vld [vmem:[%s1730 + $0x168] sm:$0xff]
    %v1777 = vld [vmem:[%s1730 + $0x170] sm:$0xff]
    %v1778 = vld [vmem:[%s1730 + $0x178] sm:$0xff]
    %v1779 = vld [vmem:[%s1730 + $0x180] sm:$0xff]
    %v1780 = vld [vmem:[%s1730 + $0x188] sm:$0xff]
    %v1781 = vld [vmem:[%s1730 + $0x190] sm:$0xff]
    %v1782 = vld [vmem:[%s1730 + $0x198] sm:$0xff]
    %v1783 = vld [vmem:[%s1730 + $0x1a0] sm:$0xff]
    %v1784 = vld [vmem:[%s1730 + $0x1a8] sm:$0xff]
    %v1785 = vld [vmem:[%s1730 + $0x1b0] sm:$0xff]
    %v1786 = vld [vmem:[%s1730 + $0x1b8] sm:$0xff]
    %v1787 = vld [vmem:[%s1730 + $0x1c0] sm:$0xff]
    %v1788 = vld [vmem:[%s1730 + $0x1c8] sm:$0xff]
    %v1789 = vld [vmem:[%s1730 + $0x1d0] sm:$0xff]
    %v1790 = vld [vmem:[%s1730 + $0x1d8] sm:$0xff]
    %v1791 = vld [vmem:[%s1730 + $0x1e0] sm:$0xff]
    %v1792 = vld [vmem:[%s1730 + $0x1e8] sm:$0xff]
    %v1793 = vld [vmem:[%s1730 + $0x1f0] sm:$0xff]
    %v1794 = vld [vmem:[%s1730 + $0x1f8] sm:$0xff]
    %v1795 = vld [vmem:[%s1730 + $0x200] sm:$0xff]
    %v1796 = vld [vmem:[%s1730 + $0x208] sm:$0xff]
    %v1797 = vld [vmem:[%s1730 + $0x210] sm:$0xff]
    %v1798 = vld [vmem:[%s1730 + $0x218] sm:$0xff]
    %v1799 = vld [vmem:[%s1730 + $0x220] sm:$0xff]
    %v1800 = vld [vmem:[%s1730 + $0x228] sm:$0xff]
    %v1801 = vld [vmem:[%s1730 + $0x230] sm:$0xff]
    %v1802 = vld [vmem:[%s1730 + $0x238] sm:$0xff]
    %v1803 = vld [vmem:[%s1730 + $0x240] sm:$0xff]
    %v1804 = vld [vmem:[%s1730 + $0x248] sm:$0xff]
    %v1805 = vld [vmem:[%s1730 + $0x250] sm:$0xff]
    %v1806 = vld [vmem:[%s1730 + $0x258] sm:$0xff]
    %v1807 = vld [vmem:[%s1730 + $0x260] sm:$0xff]
    %v1808 = vld [vmem:[%s1730 + $0x268] sm:$0xff]
    %v1809 = vld [vmem:[%s1730 + $0x270] sm:$0xff]
    %v1810 = vld [vmem:[%s1730 + $0x278] sm:$0xff]
    %v1811 = vld [vmem:[%s1730 + $0x280] sm:$0xff]
    %v1812 = vld [vmem:[%s1730 + $0x288] sm:$0xff]
    %v1813 = vld [vmem:[%s1730 + $0x290] sm:$0xff]
    %v1814 = vld [vmem:[%s1730 + $0x298] sm:$0xff]
    %v1815 = vld [vmem:[%s1730 + $0x2a0] sm:$0xff]
    %v1816 = vld [vmem:[%s1730 + $0x2a8] sm:$0xff]
    %v1817 = vld [vmem:[%s1730 + $0x2b0] sm:$0xff]
    %v1818 = vld [vmem:[%s1730 + $0x2b8] sm:$0xff]
    %v1819 = vld [vmem:[%s1730 + $0x2c0] sm:$0xff]
    %v1820 = vld [vmem:[%s1730 + $0x2c8] sm:$0xff]
    %v1821 = vld [vmem:[%s1730 + $0x2d0] sm:$0xff]
    %v1822 = vld [vmem:[%s1730 + $0x2d8] sm:$0xff]
    %v1823 = vld [vmem:[%s1730 + $0x2e0] sm:$0xff]
    %v1824 = vld [vmem:[%s1730 + $0x2e8] sm:$0xff]
    %v1825 = vld [vmem:[%s1730 + $0x2f0] sm:$0xff]
    %v1826 = vld [vmem:[%s1730 + $0x2f8] sm:$0xff]
    %v1827 = vld [vmem:[%s1730 + $0x300] sm:$0xff]
    %v1828 = vld [vmem:[%s1730 + $0x308] sm:$0xff]
    %v1829 = vld [vmem:[%s1730 + $0x310] sm:$0xff]
    %v1830 = vld [vmem:[%s1730 + $0x318] sm:$0xff]
    %v1831 = vld [vmem:[%s1730 + $0x320] sm:$0xff]
    %v1832 = vld [vmem:[%s1730 + $0x328] sm:$0xff]
    %v1833 = vld [vmem:[%s1730 + $0x330] sm:$0xff]
    %v1834 = vld [vmem:[%s1730 + $0x338] sm:$0xff]
    %v1835 = vld [vmem:[%s1730 + $0x340] sm:$0xff]
    %v1836 = vld [vmem:[%s1730 + $0x348] sm:$0xff]
    %v1837 = vld [vmem:[%s1730 + $0x350] sm:$0xff]
    %v1838 = vld [vmem:[%s1730 + $0x358] sm:$0xff]
    %v1839 = vld [vmem:[%s1730 + $0x360] sm:$0xff]
    %v1840 = vld [vmem:[%s1730 + $0x368] sm:$0xff]
    %v1841 = vld [vmem:[%s1730 + $0x370] sm:$0xff]
    %v1842 = vld [vmem:[%s1730 + $0x378] sm:$0xff]
    %v1843 = vld [vmem:[%s1730 + $0x380] sm:$0xff]
    %v1844 = vld [vmem:[%s1730 + $0x388] sm:$0xff]
    %v1845 = vld [vmem:[%s1730 + $0x390] sm:$0xff]
    %v1846 = vld [vmem:[%s1730 + $0x398] sm:$0xff]
    %v1847 = vld [vmem:[%s1730 + $0x3a0] sm:$0xff]
    %v1848 = vld [vmem:[%s1730 + $0x3a8] sm:$0xff]
    %v1849 = vld [vmem:[%s1730 + $0x3b0] sm:$0xff]
    %v1850 = vld [vmem:[%s1730 + $0x3b8] sm:$0xff]
    %v1851 = vld [vmem:[%s1730 + $0x3c0] sm:$0xff]
    %v1852 = vld [vmem:[%s1730 + $0x3c8] sm:$0xff]
    %v1853 = vld [vmem:[%s1730 + $0x3d0] sm:$0xff]
    %v1854 = vld [vmem:[%s1730 + $0x3d8] sm:$0xff]
    %v1855 = vld [vmem:[%s1730 + $0x3e0] sm:$0xff]
    %v1856 = vld [vmem:[%s1730 + $0x3e8] sm:$0xff]
    %v1857 = vld [vmem:[%s1730 + $0x3f0] sm:$0xff]
    %v1858 = vld [vmem:[%s1730 + $0x3f8] sm:$0xff]
    %v1859 = vld [vmem:[%s1730 + $0x400] sm:$0xff]
    %v1860 = vld [vmem:[%s1730 + $0x408] sm:$0xff]
    %v1861 = vld [vmem:[%s1730 + $0x410] sm:$0xff]
    %v1862 = vld [vmem:[%s1730 + $0x418] sm:$0xff]
    %v1863 = vld [vmem:[%s1730 + $0x420] sm:$0xff]
    %v1864 = vld [vmem:[%s1730 + $0x428] sm:$0xff]
    %v1865 = vld [vmem:[%s1730 + $0x430] sm:$0xff]
    %v1866 = vld [vmem:[%s1730 + $0x438] sm:$0xff]
    %v1867 = vld [vmem:[%s1730 + $0x440] sm:$0xff]
    %v1868 = vld [vmem:[%s1730 + $0x448] sm:$0xff]
    %v1869 = vld [vmem:[%s1730 + $0x450] sm:$0xff]
    %v1870 = vld [vmem:[%s1730 + $0x458] sm:$0xff]
    %v1871 = vld [vmem:[%s1730 + $0x460] sm:$0xff]
    %v1872 = vld [vmem:[%s1730 + $0x468] sm:$0xff]
    %v1873 = vld [vmem:[%s1730 + $0x470] sm:$0xff]
    %v1874 = vld [vmem:[%s1730 + $0x478] sm:$0xff]
    %v1875 = vld [vmem:[%s1730 + $0x480] sm:$0xff]
    %v1876 = vld [vmem:[%s1730 + $0x488] sm:$0xff]
    %v1877 = vld [vmem:[%s1730 + $0x490] sm:$0xff]
    %v1878 = vld [vmem:[%s1730 + $0x498] sm:$0xff]
    %v1879 = vld [vmem:[%s1730 + $0x4a0] sm:$0xff]
    %v1880 = vld [vmem:[%s1730 + $0x4a8] sm:$0xff]
    %v1881 = vld [vmem:[%s1730 + $0x4b0] sm:$0xff]
    %v1882 = vld [vmem:[%s1730 + $0x4b8] sm:$0xff]
    %v1883 = vld [vmem:[%s1730 + $0x4c0] sm:$0xff]
    %v1884 = vld [vmem:[%s1730 + $0x4c8] sm:$0xff]
    %v1885 = vld [vmem:[%s1730 + $0x4d0] sm:$0xff]
    %v1886 = vld [vmem:[%s1730 + $0x4d8] sm:$0xff]
    %v1887 = vld [vmem:[%s1730 + $0x4e0] sm:$0xff]
    %v1888 = vld [vmem:[%s1730 + $0x4e8] sm:$0xff]
    %v1889 = vld [vmem:[%s1730 + $0x4f0] sm:$0xff]
    %v1890 = vld [vmem:[%s1730 + $0x4f8] sm:$0xff]
    %v1891 = vld [vmem:[%s1730 + $0x500] sm:$0xff]
    %v1892 = vld [vmem:[%s1730 + $0x508] sm:$0xff]
    %v1893 = vld [vmem:[%s1730 + $0x510] sm:$0xff]
    %v1894 = vld [vmem:[%s1730 + $0x518] sm:$0xff]
    %v1895 = vld [vmem:[%s1730 + $0x520] sm:$0xff]
    %v1896 = vld [vmem:[%s1730 + $0x528] sm:$0xff]
    %v1897 = vld [vmem:[%s1730 + $0x530] sm:$0xff]
    %v1898 = vld [vmem:[%s1730 + $0x538] sm:$0xff]
    %v1899 = vld [vmem:[%s1730 + $0x540] sm:$0xff]
    %v1900 = vld [vmem:[%s1730 + $0x548] sm:$0xff]
    %v1901 = vld [vmem:[%s1730 + $0x550] sm:$0xff]
    %v1902 = vld [vmem:[%s1730 + $0x558] sm:$0xff]
    %v1903 = vld [vmem:[%s1730 + $0x560] sm:$0xff]
    %v1904 = vld [vmem:[%s1730 + $0x568] sm:$0xff]
    %v1905 = vld [vmem:[%s1730 + $0x570] sm:$0xff]
    %v1906 = vld [vmem:[%s1730 + $0x578] sm:$0xff]
    %v1907 = vld [vmem:[%s1730 + $0x580] sm:$0xff]
    %v1908 = vld [vmem:[%s1730 + $0x588] sm:$0xff]
    %v1909 = vld [vmem:[%s1730 + $0x590] sm:$0xff]
    %v1910 = vld [vmem:[%s1730 + $0x598] sm:$0xff]
    %v1919 = vrot.slane %v1421, 4
    %v1920 = vrot.slane %v1427, 4
    %v1921 = vsel %vm799, %v1919, %v1920
    %v1922 = vrot.slane %v1423, 4
    %v1923 = vrot.slane %v1429, 4
    %v1924 = vsel %vm799, %v1922, %v1923
    %v1925 = vrot.slane %v1522, 4
    %v1926 = vrot.slane %v1528, 4
    %v1927 = vsel %vm799, %v1925, %v1926
    %v1928 = vrot.slane %v1524, 4
    %v1929 = vrot.slane %v1530, 4
    %v1930 = vsel %vm799, %v1928, %v1929
    %vm1937 = vcmask 785408
    %v1938 = vsel %vm1937, %v1930, 0
    %v1940 = vsel %vm1937, %v1929, 0
    %1942 = vmatprep.subr.mxu0 %v1732
    %1943 = vmatpush1.msra.mxu0 %v1731
    %1944 = vmatprep.subr.mxu0 %v1735
    %1945 = vmatpush1.msra.mxu0 %v1734
    %1946 = vmatprep.subr.mxu0 %v1738
    %1947 = vmatpush1.msra.mxu0 %v1737
    %1948 = vmatprep.subr.mxu0 %v1741
    %1949 = vmatpush1.msra.mxu0 %v1740
    %1950 = vmatprep.subr.mxu0 %v1744
    %1951 = vmatpush1.msra.mxu0 %v1743
    %1952 = vmatprep.subr.mxu0 %v1747
    %1953 = vmatpush1.msra.mxu0 %v1746
    %1954 = vmatprep.subr.mxu0 %v1750
    %1955 = vmatpush1.msra.mxu0 %v1749
    %1956 = vmatprep.subr.mxu0 %v1753
    %1957 = vmatpush1.msra.mxu0 %v1752
    %1958 = vmatprep.subr.mxu0 %v1756
    %1959 = vmatpush1.msra.mxu0 %v1755
    %1960 = vmatprep.subr.mxu0 %v1759
    %1961 = vmatpush1.msra.mxu0 %v1758
    %1962 = vmatprep.subr.mxu0 %v1762
    %1963 = vmatpush1.msra.mxu0 %v1761
    %1964 = vmatprep.subr.mxu0 %v1765
    %1965 = vmatpush1.msra.mxu0 %v1764
    %1966 = vmatprep.subr.mxu0 %v1768
    %1967 = vmatpush1.msra.mxu0 %v1767
    %1968 = vmatprep.subr.mxu0 %v1771
    %1969 = vmatpush1.msra.mxu0 %v1770
    %1970 = vmatprep.subr.mxu0 %v1774
    %1971 = vmatpush1.msra.mxu0 %v1773
    %1972 = vmatprep.subr.mxu0 %v1777
    %1973 = vmatpush1.msra.mxu0 %v1776
    %1974 = vmatprep.subr.mxu0 %v1780
    %1975 = vmatpush1.msra.mxu0 %v1779
    %1976 = vmatprep.subr.mxu0 %v1783
    %1977 = vmatpush1.msra.mxu0 %v1782
    %1978 = vmatprep.subr.mxu0 %v1786
    %1979 = vmatpush1.msra.mxu0 %v1785
    %1980 = vmatprep.subr.mxu0 %v1789
    %1981 = vmatpush1.msra.mxu0 %v1788
    %1982 = vmatprep.subr.mxu0 %v1792
    %1983 = vmatpush1.msra.mxu0 %v1791
    %1984 = vmatprep.subr.mxu0 %v1795
    %1985 = vmatpush1.msra.mxu0 %v1794
    %1986 = vmatprep.subr.mxu0 %v1798
    %1987 = vmatpush1.msra.mxu0 %v1797
    %1988 = vmatprep.subr.mxu0 %v1801
    %1989 = vmatpush1.msra.mxu0 %v1800
    %1990 = vmatprep.subr.mxu0 %v1804
    %1991 = vmatpush1.msra.mxu0 %v1803
    %1992 = vmatprep.subr.mxu0 %v1807
    %1993 = vmatpush1.msra.mxu0 %v1806
    %1994 = vmatprep.subr.mxu0 %v1810
    %1995 = vmatpush1.msra.mxu0 %v1809
    %1996 = vmatprep.subr.mxu0 %v1813
    %1997 = vmatpush1.msra.mxu0 %v1812
    %1998 = vmatprep.subr.mxu0 %v1816
    %1999 = vmatpush1.msra.mxu0 %v1815
    %2000 = vmatprep.subr.mxu0 %v1819
    %2001 = vmatpush1.msra.mxu0 %v1818
    %2002 = vmatprep.subr.mxu0 %v1822
    %2003 = vmatpush1.msra.mxu0 %v1821
    %2004 = vmatprep.subr.mxu0 %v1825
    %2005 = vmatpush1.msra.mxu0 %v1824
    %2006 = vmatprep.mubr.f32.mxu0 %v1924
    %2007 = vmatmul.mubr.f32.gmra.mrb[0].mxu0 %v1921
    %v2008 = vpop.f32.mrb[0].mxu0
    %v2009 = vadd.f32 0.0, %v2008
    %v2010 = vpop.f32.mrb[0].mxu0
    %v2011 = vadd.f32 0.0, %v2010
    %2012 = vmatprep.mubr.f32.mxu0 %v1923
    %2013 = vmatmul.mubr.f32.gmra.mrb[0].mxu0 %v1920
    %v2014 = vpop.f32.mrb[0].mxu0
    %v2015 = vadd.f32 0.0, %v2014
    %v2016 = vpop.f32.mrb[0].mxu0
    %v2017 = vadd.f32 0.0, %v2016
    %2018 = vdwg.mxu0
    %2019 = vmatprep.subr.mxu0 %v1828
    %2020 = vmatpush1.msra.mxu0 %v1827
    %2021 = vmatprep.subr.mxu0 %v1831
    %2022 = vmatpush1.msra.mxu0 %v1830
    %2023 = vmatprep.subr.mxu0 %v1834
    %2024 = vmatpush1.msra.mxu0 %v1833
    %2025 = vmatprep.subr.mxu0 %v1837
    %2026 = vmatpush1.msra.mxu0 %v1836
    %2027 = vmatprep.subr.mxu0 %v1840
    %2028 = vmatpush1.msra.mxu0 %v1839
    %2029 = vmatprep.subr.mxu0 %v1843
    %2030 = vmatpush1.msra.mxu0 %v1842
    %2031 = vmatprep.subr.mxu0 %v1846
    %2032 = vmatpush1.msra.mxu0 %v1845
    %2033 = vmatprep.subr.mxu0 %v1849
    %2034 = vmatpush1.msra.mxu0 %v1848
    %2035 = vmatprep.subr.mxu0 %v1852
    %2036 = vmatpush1.msra.mxu0 %v1851
    %2037 = vmatprep.subr.mxu0 %v1855
    %2038 = vmatpush1.msra.mxu0 %v1854
    %2039 = vmatprep.subr.mxu0 %v1858
    %2040 = vmatpush1.msra.mxu0 %v1857
    %2041 = vmatprep.subr.mxu0 %v1861
    %2042 = vmatpush1.msra.mxu0 %v1860
    %2043 = vmatprep.subr.mxu0 %v1864
    %2044 = vmatpush1.msra.mxu0 %v1863
    %2045 = vmatprep.subr.mxu0 %v1867
    %2046 = vmatpush1.msra.mxu0 %v1866
    %2047 = vmatprep.subr.mxu0 %v1870
    %2048 = vmatpush1.msra.mxu0 %v1869
    %2049 = vmatprep.subr.mxu0 %v1873
    %2050 = vmatpush1.msra.mxu0 %v1872
    %2051 = vmatprep.subr.mxu0 %v1876
    %2052 = vmatpush1.msra.mxu0 %v1875
    %2053 = vmatprep.subr.mxu0 %v1879
    %2054 = vmatpush1.msra.mxu0 %v1878
    %2055 = vmatprep.subr.mxu0 %v1882
    %2056 = vmatpush1.msra.mxu0 %v1881
    %2057 = vmatprep.subr.mxu0 %v1885
    %2058 = vmatpush1.msra.mxu0 %v1884
    %2059 = vmatprep.subr.mxu0 %v1888
    %2060 = vmatpush1.msra.mxu0 %v1887
    %2061 = vmatprep.subr.mxu0 %v1891
    %2062 = vmatpush1.msra.mxu0 %v1890
    %2063 = vmatprep.subr.mxu0 %v1894
    %2064 = vmatpush1.msra.mxu0 %v1893
    %2065 = vmatprep.subr.mxu0 %v1897
    %2066 = vmatpush1.msra.mxu0 %v1896
    %2067 = vmatprep.subr.mxu0 %v1900
    %2068 = vmatpush1.msra.mxu0 %v1899
    %2069 = vmatprep.subr.mxu0 %v1903
    %2070 = vmatpush1.msra.mxu0 %v1902
    %2071 = vmatprep.subr.mxu0 %v1906
    %2072 = vmatpush1.msra.mxu0 %v1905
    %2073 = vmatprep.subr.mxu0 %v1909
    %2074 = vmatpush1.msra.mxu0 %v1908
    %2075 = vmatprep.subr.mxu0 0.0
    %2076 = vmatpush1.msra.mxu0 0.0
    %2077 = vmatprep.subr.mxu0 0.0
    %2078 = vmatpush1.msra.mxu0 0.0
    %2079 = vmatprep.subr.mxu0 0.0
    %2080 = vmatpush1.msra.mxu0 0.0
    %2081 = vmatprep.subr.mxu0 0.0
    %2082 = vmatpush1.msra.mxu0 0.0
    %2083 = vmatprep.mubr.f32.mxu0 %v1938
    %2084 = vmatmul.mubr.f32.gmra.mrb[0].mxu0 %v1927
    %v2085 = vpop.f32.mrb[0].mxu0
    %v2086 = vadd.f32 %v2009, %v2085
    %v2087 = vpop.f32.mrb[0].mxu0
    %v2088 = vadd.f32 %v2011, %v2087
    %2089 = vmatprep.mubr.f32.mxu0 %v1940
    %2090 = vmatmul.mubr.f32.gmra.mrb[0].mxu0 %v1926
    %v2091 = vpop.f32.mrb[0].mxu0
    %v2092 = vadd.f32 %v2015, %v2091
    %v2093 = vpop.f32.mrb[0].mxu0
    %v2094 = vadd.f32 %v2017, %v2093
    %2095 = vdwg.mxu0
    %2096 = vmatprep.subr.mxu0 0.0
    %2097 = vmatpush1.msra.mxu0 %v1733
    %2098 = vmatprep.subr.mxu0 0.0
    %2099 = vmatpush1.msra.mxu0 %v1736
    %2100 = vmatprep.subr.mxu0 0.0
    %2101 = vmatpush1.msra.mxu0 %v1739
    %2102 = vmatprep.subr.mxu0 0.0
    %2103 = vmatpush1.msra.mxu0 %v1742
    %2104 = vmatprep.subr.mxu0 0.0
    %2105 = vmatpush1.msra.mxu0 %v1745
    %2106 = vmatprep.subr.mxu0 0.0
    %2107 = vmatpush1.msra.mxu0 %v1748
    %2108 = vmatprep.subr.mxu0 0.0
    %2109 = vmatpush1.msra.mxu0 %v1751
    %2110 = vmatprep.subr.mxu0 0.0
    %2111 = vmatpush1.msra.mxu0 %v1754
    %2112 = vmatprep.subr.mxu0 0.0
    %2113 = vmatpush1.msra.mxu0 %v1757
    %2114 = vmatprep.subr.mxu0 0.0
    %2115 = vmatpush1.msra.mxu0 %v1760
    %2116 = vmatprep.subr.mxu0 0.0
    %2117 = vmatpush1.msra.mxu0 %v1763
    %2118 = vmatprep.subr.mxu0 0.0
    %2119 = vmatpush1.msra.mxu0 %v1766
    %2120 = vmatprep.subr.mxu0 0.0
    %2121 = vmatpush1.msra.mxu0 %v1769
    %2122 = vmatprep.subr.mxu0 0.0
    %2123 = vmatpush1.msra.mxu0 %v1772
    %2124 = vmatprep.subr.mxu0 0.0
    %2125 = vmatpush1.msra.mxu0 %v1775
    %2126 = vmatprep.subr.mxu0 0.0
    %2127 = vmatpush1.msra.mxu0 %v1778
    %2128 = vmatprep.subr.mxu0 0.0
    %2129 = vmatpush1.msra.mxu0 %v1781
    %2130 = vmatprep.subr.mxu0 0.0
    %2131 = vmatpush1.msra.mxu0 %v1784
    %2132 = vmatprep.subr.mxu0 0.0
    %2133 = vmatpush1.msra.mxu0 %v1787
    %2134 = vmatprep.subr.mxu0 0.0
    %2135 = vmatpush1.msra.mxu0 %v1790
    %2136 = vmatprep.subr.mxu0 0.0
    %2137 = vmatpush1.msra.mxu0 %v1793
    %2138 = vmatprep.subr.mxu0 0.0
    %2139 = vmatpush1.msra.mxu0 %v1796
    %2140 = vmatprep.subr.mxu0 0.0
    %2141 = vmatpush1.msra.mxu0 %v1799
    %2142 = vmatprep.subr.mxu0 0.0
    %2143 = vmatpush1.msra.mxu0 %v1802
    %2144 = vmatprep.subr.mxu0 0.0
    %2145 = vmatpush1.msra.mxu0 %v1805
    %2146 = vmatprep.subr.mxu0 0.0
    %2147 = vmatpush1.msra.mxu0 %v1808
    %2148 = vmatprep.subr.mxu0 0.0
    %2149 = vmatpush1.msra.mxu0 %v1811
    %2150 = vmatprep.subr.mxu0 0.0
    %2151 = vmatpush1.msra.mxu0 %v1814
    %2152 = vmatprep.subr.mxu0 0.0
    %2153 = vmatpush1.msra.mxu0 %v1817
    %2154 = vmatprep.subr.mxu0 0.0
    %2155 = vmatpush1.msra.mxu0 %v1820
    %2156 = vmatprep.subr.mxu0 0.0
    %2157 = vmatpush1.msra.mxu0 %v1823
    %2158 = vmatprep.subr.mxu0 0.0
    %2159 = vmatpush1.msra.mxu0 %v1826
    %2160 = vmatprep.mubr.f32.mxu0 %v1924
    %2161 = vmatmul.mubr.f32.gmra.mrb[0].mxu0 %v1921
    %v2162 = vpop.f32.mrb[0].mxu0
    %v2163 = vadd.f32 0.0, %v2162
    %v2164 = vpop.f32.mrb[0].mxu0
    %2165 = vmatprep.mubr.f32.mxu0 %v1923
    %2166 = vmatmul.mubr.f32.gmra.mrb[0].mxu0 %v1920
    %v2167 = vpop.f32.mrb[0].mxu0
    %v2168 = vadd.f32 0.0, %v2167
    %v2169 = vpop.f32.mrb[0].mxu0
    %2170 = vdwg.mxu0
    %2171 = vmatprep.subr.mxu0 0.0
    %2172 = vmatpush1.msra.mxu0 %v1829
    %2173 = vmatprep.subr.mxu0 0.0
    %2174 = vmatpush1.msra.mxu0 %v1832
    %2175 = vmatprep.subr.mxu0 0.0
    %2176 = vmatpush1.msra.mxu0 %v1835
    %2177 = vmatprep.subr.mxu0 0.0
    %2178 = vmatpush1.msra.mxu0 %v1838
    %2179 = vmatprep.subr.mxu0 0.0
    %2180 = vmatpush1.msra.mxu0 %v1841
    %2181 = vmatprep.subr.mxu0 0.0
    %2182 = vmatpush1.msra.mxu0 %v1844
    %2183 = vmatprep.subr.mxu0 0.0
    %2184 = vmatpush1.msra.mxu0 %v1847
    %2185 = vmatprep.subr.mxu0 0.0
    %2186 = vmatpush1.msra.mxu0 %v1850
    %2187 = vmatprep.subr.mxu0 0.0
    %2188 = vmatpush1.msra.mxu0 %v1853
    %2189 = vmatprep.subr.mxu0 0.0
    %2190 = vmatpush1.msra.mxu0 %v1856
    %2191 = vmatprep.subr.mxu0 0.0
    %2192 = vmatpush1.msra.mxu0 %v1859
    %2193 = vmatprep.subr.mxu0 0.0
    %2194 = vmatpush1.msra.mxu0 %v1862
    %2195 = vmatprep.subr.mxu0 0.0
    %2196 = vmatpush1.msra.mxu0 %v1865
    %2197 = vmatprep.subr.mxu0 0.0
    %2198 = vmatpush1.msra.mxu0 %v1868
    %2199 = vmatprep.subr.mxu0 0.0
    %2200 = vmatpush1.msra.mxu0 %v1871
    %2201 = vmatprep.subr.mxu0 0.0
    %2202 = vmatpush1.msra.mxu0 %v1874
    %2203 = vmatprep.subr.mxu0 0.0
    %2204 = vmatpush1.msra.mxu0 %v1877
    %2205 = vmatprep.subr.mxu0 0.0
    %2206 = vmatpush1.msra.mxu0 %v1880
    %2207 = vmatprep.subr.mxu0 0.0
    %2208 = vmatpush1.msra.mxu0 %v1883
    %2209 = vmatprep.subr.mxu0 0.0
    %2210 = vmatpush1.msra.mxu0 %v1886
    %2211 = vmatprep.subr.mxu0 0.0
    %2212 = vmatpush1.msra.mxu0 %v1889
    %2213 = vmatprep.subr.mxu0 0.0
    %2214 = vmatpush1.msra.mxu0 %v1892
    %2215 = vmatprep.subr.mxu0 0.0
    %2216 = vmatpush1.msra.mxu0 %v1895
    %2217 = vmatprep.subr.mxu0 0.0
    %2218 = vmatpush1.msra.mxu0 %v1898
    %2219 = vmatprep.subr.mxu0 0.0
    %2220 = vmatpush1.msra.mxu0 %v1901
    %2221 = vmatprep.subr.mxu0 0.0
    %2222 = vmatpush1.msra.mxu0 %v1904
    %2223 = vmatprep.subr.mxu0 0.0
    %2224 = vmatpush1.msra.mxu0 %v1907
    %2225 = vmatprep.subr.mxu0 0.0
    %2226 = vmatpush1.msra.mxu0 %v1910
    %2227 = vmatprep.subr.mxu0 0.0
    %2228 = vmatpush1.msra.mxu0 0.0
    %2229 = vmatprep.subr.mxu0 0.0
    %2230 = vmatpush1.msra.mxu0 0.0
    %2231 = vmatprep.subr.mxu0 0.0
    %2232 = vmatpush1.msra.mxu0 0.0
    %2233 = vmatprep.subr.mxu0 0.0
    %2234 = vmatpush1.msra.mxu0 0.0
    %2235 = vmatprep.mubr.f32.mxu0 %v1938
    %2236 = vmatmul.mubr.f32.gmra.mrb[0].mxu0 %v1927
    %v2237 = vpop.f32.mrb[0].mxu0
    %v2238 = vadd.f32 %v2163, %v2237
    %v2239 = vpop.f32.mrb[0].mxu0
    %2240 = vmatprep.mubr.f32.mxu0 %v1940
    %2241 = vmatmul.mubr.f32.gmra.mrb[0].mxu0 %v1926
    %v2242 = vpop.f32.mrb[0].mxu0
    %v2243 = vadd.f32 %v2168, %v2242
    %v2244 = vpop.f32.mrb[0].mxu0
    %2245 = vdwg.mxu0
    %v2247 = vsel %vm1937, %v1518, 0
    %v2249 = vsel %vm1937, %v1524, 0
    %2251 = vmatprep.subr.mxu0 %v1551
    %2252 = vmatpush1.msra.mxu0 %v1550
    %2253 = vmatprep.subr.mxu0 %v1554
    %2254 = vmatpush1.msra.mxu0 %v1553
    %2255 = vmatprep.subr.mxu0 %v1557
    %2256 = vmatpush1.msra.mxu0 %v1556
    %2257 = vmatprep.subr.mxu0 %v1560
    %2258 = vmatpush1.msra.mxu0 %v1559
    %2259 = vmatprep.subr.mxu0 %v1563
    %2260 = vmatpush1.msra.mxu0 %v1562
    %2261 = vmatprep.subr.mxu0 %v1566
    %2262 = vmatpush1.msra.mxu0 %v1565
    %2263 = vmatprep.subr.mxu0 %v1569
    %2264 = vmatpush1.msra.mxu0 %v1568
    %2265 = vmatprep.subr.mxu0 %v1572
    %2266 = vmatpush1.msra.mxu0 %v1571
    %2267 = vmatprep.subr.mxu0 %v1575
    %2268 = vmatpush1.msra.mxu0 %v1574
    %2269 = vmatprep.subr.mxu0 %v1578
    %2270 = vmatpush1.msra.mxu0 %v1577
    %2271 = vmatprep.subr.mxu0 %v1581
    %2272 = vmatpush1.msra.mxu0 %v1580
    %2273 = vmatprep.subr.mxu0 %v1584
    %2274 = vmatpush1.msra.mxu0 %v1583
    %2275 = vmatprep.subr.mxu0 %v1587
    %2276 = vmatpush1.msra.mxu0 %v1586
    %2277 = vmatprep.subr.mxu0 %v1590
    %2278 = vmatpush1.msra.mxu0 %v1589
    %2279 = vmatprep.subr.mxu0 %v1593
    %2280 = vmatpush1.msra.mxu0 %v1592
    %2281 = vmatprep.subr.mxu0 %v1596
    %2282 = vmatpush1.msra.mxu0 %v1595
    %2283 = vmatprep.subr.mxu0 %v1599
    %2284 = vmatpush1.msra.mxu0 %v1598
    %2285 = vmatprep.subr.mxu0 %v1602
    %2286 = vmatpush1.msra.mxu0 %v1601
    %2287 = vmatprep.subr.mxu0 %v1605
    %2288 = vmatpush1.msra.mxu0 %v1604
    %2289 = vmatprep.subr.mxu0 %v1608
    %2290 = vmatpush1.msra.mxu0 %v1607
    %2291 = vmatprep.subr.mxu0 %v1611
    %2292 = vmatpush1.msra.mxu0 %v1610
    %2293 = vmatprep.subr.mxu0 %v1614
    %2294 = vmatpush1.msra.mxu0 %v1613
    %2295 = vmatprep.subr.mxu0 %v1617
    %2296 = vmatpush1.msra.mxu0 %v1616
    %2297 = vmatprep.subr.mxu0 %v1620
    %2298 = vmatpush1.msra.mxu0 %v1619
    %2299 = vmatprep.subr.mxu0 %v1623
    %2300 = vmatpush1.msra.mxu0 %v1622
    %2301 = vmatprep.subr.mxu0 %v1626
    %2302 = vmatpush1.msra.mxu0 %v1625
    %2303 = vmatprep.subr.mxu0 %v1629
    %2304 = vmatpush1.msra.mxu0 %v1628
    %2305 = vmatprep.subr.mxu0 %v1632
    %2306 = vmatpush1.msra.mxu0 %v1631
    %2307 = vmatprep.subr.mxu0 %v1635
    %2308 = vmatpush1.msra.mxu0 %v1634
    %2309 = vmatprep.subr.mxu0 %v1638
    %2310 = vmatpush1.msra.mxu0 %v1637
    %2311 = vmatprep.subr.mxu0 %v1641
    %2312 = vmatpush1.msra.mxu0 %v1640
    %2313 = vmatprep.subr.mxu0 %v1644
    %2314 = vmatpush1.msra.mxu0 %v1643
    %2315 = vmatprep.mubr.f32.mxu0 %v1417
    %2316 = vmatmul.mubr.f32.gmra.mrb[0].mxu0 %v1415
    %v2317 = vpop.f32.mrb[0].mxu0
    %v2318 = vadd.f32 %v2086, %v2317
    %v2319 = vpop.f32.mrb[0].mxu0
    %v2320 = vadd.f32 %v2088, %v2319
    %2321 = vmatprep.mubr.f32.mxu0 %v1423
    %2322 = vmatmul.mubr.f32.gmra.mrb[0].mxu0 %v1421
    %v2323 = vpop.f32.mrb[0].mxu0
    %v2324 = vadd.f32 %v2092, %v2323
    %v2325 = vpop.f32.mrb[0].mxu0
    %v2326 = vadd.f32 %v2094, %v2325
    %2327 = vdwg.mxu0
    %2328 = vmatprep.subr.mxu0 %v1647
    %2329 = vmatpush1.msra.mxu0 %v1646
    %2330 = vmatprep.subr.mxu0 %v1650
    %2331 = vmatpush1.msra.mxu0 %v1649
    %2332 = vmatprep.subr.mxu0 %v1653
    %2333 = vmatpush1.msra.mxu0 %v1652
    %2334 = vmatprep.subr.mxu0 %v1656
    %2335 = vmatpush1.msra.mxu0 %v1655
    %2336 = vmatprep.subr.mxu0 %v1659
    %2337 = vmatpush1.msra.mxu0 %v1658
    %2338 = vmatprep.subr.mxu0 %v1662
    %2339 = vmatpush1.msra.mxu0 %v1661
    %2340 = vmatprep.subr.mxu0 %v1665
    %2341 = vmatpush1.msra.mxu0 %v1664
    %2342 = vmatprep.subr.mxu0 %v1668
    %2343 = vmatpush1.msra.mxu0 %v1667
    %2344 = vmatprep.subr.mxu0 %v1671
    %2345 = vmatpush1.msra.mxu0 %v1670
    %2346 = vmatprep.subr.mxu0 %v1674
    %2347 = vmatpush1.msra.mxu0 %v1673
    %2348 = vmatprep.subr.mxu0 %v1677
    %2349 = vmatpush1.msra.mxu0 %v1676
    %2350 = vmatprep.subr.mxu0 %v1680
    %2351 = vmatpush1.msra.mxu0 %v1679
    %2352 = vmatprep.subr.mxu0 %v1683
    %2353 = vmatpush1.msra.mxu0 %v1682
    %2354 = vmatprep.subr.mxu0 %v1686
    %2355 = vmatpush1.msra.mxu0 %v1685
    %2356 = vmatprep.subr.mxu0 %v1689
    %2357 = vmatpush1.msra.mxu0 %v1688
    %2358 = vmatprep.subr.mxu0 %v1692
    %2359 = vmatpush1.msra.mxu0 %v1691
    %2360 = vmatprep.subr.mxu0 %v1695
    %2361 = vmatpush1.msra.mxu0 %v1694
    %2362 = vmatprep.subr.mxu0 %v1698
    %2363 = vmatpush1.msra.mxu0 %v1697
    %2364 = vmatprep.subr.mxu0 %v1701
    %2365 = vmatpush1.msra.mxu0 %v1700
    %2366 = vmatprep.subr.mxu0 %v1704
    %2367 = vmatpush1.msra.mxu0 %v1703
    %2368 = vmatprep.subr.mxu0 %v1707
    %2369 = vmatpush1.msra.mxu0 %v1706
    %2370 = vmatprep.subr.mxu0 %v1710
    %2371 = vmatpush1.msra.mxu0 %v1709
    %2372 = vmatprep.subr.mxu0 %v1713
    %2373 = vmatpush1.msra.mxu0 %v1712
    %2374 = vmatprep.subr.mxu0 %v1716
    %2375 = vmatpush1.msra.mxu0 %v1715
    %2376 = vmatprep.subr.mxu0 %v1719
    %2377 = vmatpush1.msra.mxu0 %v1718
    %2378 = vmatprep.subr.mxu0 %v1722
    %2379 = vmatpush1.msra.mxu0 %v1721
    %2380 = vmatprep.subr.mxu0 %v1725
    %2381 = vmatpush1.msra.mxu0 %v1724
    %2382 = vmatprep.subr.mxu0 %v1728
    %2383 = vmatpush1.msra.mxu0 %v1727
    %2384 = vmatprep.subr.mxu0 0.0
    %2385 = vmatpush1.msra.mxu0 0.0
    %2386 = vmatprep.subr.mxu0 0.0
    %2387 = vmatpush1.msra.mxu0 0.0
    %2388 = vmatprep.subr.mxu0 0.0
    %2389 = vmatpush1.msra.mxu0 0.0
    %2390 = vmatprep.subr.mxu0 0.0
    %2391 = vmatpush1.msra.mxu0 0.0
    %2392 = vmatprep.mubr.f32.mxu0 %v2247
    %2393 = vmatmul.mubr.f32.gmra.mrb[0].mxu0 %v1516
    %v2394 = vpop.f32.mrb[0].mxu0
    %v2395 = vadd.f32 %v2318, %v2394
    %v2396 = vpop.f32.mrb[0].mxu0
    %v2397 = vadd.f32 %v2320, %v2396
    %2398 = vmatprep.mubr.f32.mxu0 %v2249
    %2399 = vmatmul.mubr.f32.gmra.mrb[0].mxu0 %v1522
    %v2400 = vpop.f32.mrb[0].mxu0
    %v2401 = vadd.f32 %v2324, %v2400
    %v2402 = vpop.f32.mrb[0].mxu0
    %v2403 = vadd.f32 %v2326, %v2402
    %2404 = vdwg.mxu0
    %2405 = vmatprep.subr.mxu0 0.0
    %2406 = vmatpush1.msra.mxu0 %v1552
    %2407 = vmatprep.subr.mxu0 0.0
    %2408 = vmatpush1.msra.mxu0 %v1555
    %2409 = vmatprep.subr.mxu0 0.0
    %2410 = vmatpush1.msra.mxu0 %v1558
    %2411 = vmatprep.subr.mxu0 0.0
    %2412 = vmatpush1.msra.mxu0 %v1561
    %2413 = vmatprep.subr.mxu0 0.0
    %2414 = vmatpush1.msra.mxu0 %v1564
    %2415 = vmatprep.subr.mxu0 0.0
    %2416 = vmatpush1.msra.mxu0 %v1567
    %2417 = vmatprep.subr.mxu0 0.0
    %2418 = vmatpush1.msra.mxu0 %v1570
    %2419 = vmatprep.subr.mxu0 0.0
    %2420 = vmatpush1.msra.mxu0 %v1573
    %2421 = vmatprep.subr.mxu0 0.0
    %2422 = vmatpush1.msra.mxu0 %v1576
    %2423 = vmatprep.subr.mxu0 0.0
    %2424 = vmatpush1.msra.mxu0 %v1579
    %2425 = vmatprep.subr.mxu0 0.0
    %2426 = vmatpush1.msra.mxu0 %v1582
    %2427 = vmatprep.subr.mxu0 0.0
    %2428 = vmatpush1.msra.mxu0 %v1585
    %2429 = vmatprep.subr.mxu0 0.0
    %2430 = vmatpush1.msra.mxu0 %v1588
    %2431 = vmatprep.subr.mxu0 0.0
    %2432 = vmatpush1.msra.mxu0 %v1591
    %2433 = vmatprep.subr.mxu0 0.0
    %2434 = vmatpush1.msra.mxu0 %v1594
    %2435 = vmatprep.subr.mxu0 0.0
    %2436 = vmatpush1.msra.mxu0 %v1597
    %2437 = vmatprep.subr.mxu0 0.0
    %2438 = vmatpush1.msra.mxu0 %v1600
    %2439 = vmatprep.subr.mxu0 0.0
    %2440 = vmatpush1.msra.mxu0 %v1603
    %2441 = vmatprep.subr.mxu0 0.0
    %2442 = vmatpush1.msra.mxu0 %v1606
    %2443 = vmatprep.subr.mxu0 0.0
    %2444 = vmatpush1.msra.mxu0 %v1609
    %2445 = vmatprep.subr.mxu0 0.0
    %2446 = vmatpush1.msra.mxu0 %v1612
    %2447 = vmatprep.subr.mxu0 0.0
    %2448 = vmatpush1.msra.mxu0 %v1615
    %2449 = vmatprep.subr.mxu0 0.0
    %2450 = vmatpush1.msra.mxu0 %v1618
    %2451 = vmatprep.subr.mxu0 0.0
    %2452 = vmatpush1.msra.mxu0 %v1621
    %2453 = vmatprep.subr.mxu0 0.0
    %2454 = vmatpush1.msra.mxu0 %v1624
    %2455 = vmatprep.subr.mxu0 0.0
    %2456 = vmatpush1.msra.mxu0 %v1627
    %2457 = vmatprep.subr.mxu0 0.0
    %2458 = vmatpush1.msra.mxu0 %v1630
    %2459 = vmatprep.subr.mxu0 0.0
    %2460 = vmatpush1.msra.mxu0 %v1633
    %2461 = vmatprep.subr.mxu0 0.0
    %2462 = vmatpush1.msra.mxu0 %v1636
    %2463 = vmatprep.subr.mxu0 0.0
    %2464 = vmatpush1.msra.mxu0 %v1639
    %2465 = vmatprep.subr.mxu0 0.0
    %2466 = vmatpush1.msra.mxu0 %v1642
    %2467 = vmatprep.subr.mxu0 0.0
    %2468 = vmatpush1.msra.mxu0 %v1645
    %2469 = vmatprep.mubr.f32.mxu0 %v1417
    %2470 = vmatmul.mubr.f32.gmra.mrb[0].mxu0 %v1415
    %v2471 = vpop.f32.mrb[0].mxu0
    %v2472 = vadd.f32 %v2238, %v2471
    %v2473 = vpop.f32.mrb[0].mxu0
    %2474 = vmatprep.mubr.f32.mxu0 %v1423
    %2475 = vmatmul.mubr.f32.gmra.mrb[0].mxu0 %v1421
    %v2476 = vpop.f32.mrb[0].mxu0
    %v2477 = vadd.f32 %v2243, %v2476
    %v2478 = vpop.f32.mrb[0].mxu0
    %2479 = vdwg.mxu0
    %2480 = vmatprep.subr.mxu0 0.0
    %2481 = vmatpush1.msra.mxu0 %v1648
    %2482 = vmatprep.subr.mxu0 0.0
    %2483 = vmatpush1.msra.mxu0 %v1651
    %2484 = vmatprep.subr.mxu0 0.0
    %2485 = vmatpush1.msra.mxu0 %v1654
    %2486 = vmatprep.subr.mxu0 0.0
    %2487 = vmatpush1.msra.mxu0 %v1657
    %2488 = vmatprep.subr.mxu0 0.0
    %2489 = vmatpush1.msra.mxu0 %v1660
    %2490 = vmatprep.subr.mxu0 0.0
    %2491 = vmatpush1.msra.mxu0 %v1663
    %2492 = vmatprep.subr.mxu0 0.0
    %2493 = vmatpush1.msra.mxu0 %v1666
    %2494 = vmatprep.subr.mxu0 0.0
    %2495 = vmatpush1.msra.mxu0 %v1669
    %2496 = vmatprep.subr.mxu0 0.0
    %2497 = vmatpush1.msra.mxu0 %v1672
    %2498 = vmatprep.subr.mxu0 0.0
    %2499 = vmatpush1.msra.mxu0 %v1675
    %2500 = vmatprep.subr.mxu0 0.0
    %2501 = vmatpush1.msra.mxu0 %v1678
    %2502 = vmatprep.subr.mxu0 0.0
    %2503 = vmatpush1.msra.mxu0 %v1681
    %2504 = vmatprep.subr.mxu0 0.0
    %2505 = vmatpush1.msra.mxu0 %v1684
    %2506 = vmatprep.subr.mxu0 0.0
    %2507 = vmatpush1.msra.mxu0 %v1687
    %2508 = vmatprep.subr.mxu0 0.0
    %2509 = vmatpush1.msra.mxu0 %v1690
    %2510 = vmatprep.subr.mxu0 0.0
    %2511 = vmatpush1.msra.mxu0 %v1693
    %2512 = vmatprep.subr.mxu0 0.0
    %2513 = vmatpush1.msra.mxu0 %v1696
    %2514 = vmatprep.subr.mxu0 0.0
    %2515 = vmatpush1.msra.mxu0 %v1699
    %2516 = vmatprep.subr.mxu0 0.0
    %2517 = vmatpush1.msra.mxu0 %v1702
    %2518 = vmatprep.subr.mxu0 0.0
    %2519 = vmatpush1.msra.mxu0 %v1705
    %2520 = vmatprep.subr.mxu0 0.0
    %2521 = vmatpush1.msra.mxu0 %v1708
    %2522 = vmatprep.subr.mxu0 0.0
    %2523 = vmatpush1.msra.mxu0 %v1711
    %2524 = vmatprep.subr.mxu0 0.0
    %2525 = vmatpush1.msra.mxu0 %v1714
    %2526 = vmatprep.subr.mxu0 0.0
    %2527 = vmatpush1.msra.mxu0 %v1717
    %2528 = vmatprep.subr.mxu0 0.0
    %2529 = vmatpush1.msra.mxu0 %v1720
    %2530 = vmatprep.subr.mxu0 0.0
    %2531 = vmatpush1.msra.mxu0 %v1723
    %2532 = vmatprep.subr.mxu0 0.0
    %2533 = vmatpush1.msra.mxu0 %v1726
    %2534 = vmatprep.subr.mxu0 0.0
    %2535 = vmatpush1.msra.mxu0 %v1729
    %2536 = vmatprep.subr.mxu0 0.0
    %2537 = vmatpush1.msra.mxu0 0.0
    %2538 = vmatprep.subr.mxu0 0.0
    %2539 = vmatpush1.msra.mxu0 0.0
    %2540 = vmatprep.subr.mxu0 0.0
    %2541 = vmatpush1.msra.mxu0 0.0
    %2542 = vmatprep.subr.mxu0 0.0
    %2543 = vmatpush1.msra.mxu0 0.0
    %2544 = vmatprep.mubr.f32.mxu0 %v2247
    %2545 = vmatmul.mubr.f32.gmra.mrb[0].mxu0 %v1516
    %v2546 = vpop.f32.mrb[0].mxu0
    %v2547 = vadd.f32 %v2472, %v2546
    %v2548 = vpop.f32.mrb[0].mxu0
    %2549 = vmatprep.mubr.f32.mxu0 %v2249
    %2550 = vmatmul.mubr.f32.gmra.mrb[0].mxu0 %v1522
    %v2551 = vpop.f32.mrb[0].mxu0
    %v2552 = vadd.f32 %v2477, %v2551
    %v2553 = vpop.f32.mrb[0].mxu0
    %2554 = vdwg.mxu0
    %s2555 = scalar_lea.vmem %s6, 2880
    %v2556 = vld [vmem:[%s2555] sm:$0xff]
    %v2557 = vld [vmem:[%s2555 + $0x8] sm:$0xff]
    %v2558 = vld [vmem:[%s2555 + $0x10] sm:$0xff]
    %v2559 = vld [vmem:[%s2555 + $0x18] sm:$0xff]
    %v2560 = vld [vmem:[%s2555 + $0x20] sm:$0xff]
    %v2561 = vld [vmem:[%s2555 + $0x28] sm:$0xff]
    %v2562 = vld [vmem:[%s2555 + $0x30] sm:$0xff]
    %v2563 = vld [vmem:[%s2555 + $0x38] sm:$0xff]
    %v2564 = vld [vmem:[%s2555 + $0x40] sm:$0xff]
    %v2565 = vld [vmem:[%s2555 + $0x48] sm:$0xff]
    %v2566 = vld [vmem:[%s2555 + $0x50] sm:$0xff]
    %v2567 = vld [vmem:[%s2555 + $0x58] sm:$0xff]
    %v2568 = vld [vmem:[%s2555 + $0x60] sm:$0xff]
    %v2569 = vld [vmem:[%s2555 + $0x68] sm:$0xff]
    %v2570 = vld [vmem:[%s2555 + $0x70] sm:$0xff]
    %v2571 = vld [vmem:[%s2555 + $0x78] sm:$0xff]
    %v2572 = vld [vmem:[%s2555 + $0x80] sm:$0xff]
    %v2573 = vld [vmem:[%s2555 + $0x88] sm:$0xff]
    %v2574 = vld [vmem:[%s2555 + $0x90] sm:$0xff]
    %v2575 = vld [vmem:[%s2555 + $0x98] sm:$0xff]
    %v2576 = vld [vmem:[%s2555 + $0xa0] sm:$0xff]
    %v2577 = vld [vmem:[%s2555 + $0xa8] sm:$0xff]
    %v2578 = vld [vmem:[%s2555 + $0xb0] sm:$0xff]
    %v2579 = vld [vmem:[%s2555 + $0xb8] sm:$0xff]
    %v2580 = vld [vmem:[%s2555 + $0xc0] sm:$0xff]
    %v2581 = vld [vmem:[%s2555 + $0xc8] sm:$0xff]
    %v2582 = vld [vmem:[%s2555 + $0xd0] sm:$0xff]
    %v2583 = vld [vmem:[%s2555 + $0xd8] sm:$0xff]
    %v2584 = vld [vmem:[%s2555 + $0xe0] sm:$0xff]
    %v2585 = vld [vmem:[%s2555 + $0xe8] sm:$0xff]
    %v2586 = vld [vmem:[%s2555 + $0xf0] sm:$0xff]
    %v2587 = vld [vmem:[%s2555 + $0xf8] sm:$0xff]
    %v2588 = vld [vmem:[%s2555 + $0x100] sm:$0xff]
    %v2589 = vld [vmem:[%s2555 + $0x108] sm:$0xff]
    %v2590 = vld [vmem:[%s2555 + $0x110] sm:$0xff]
    %v2591 = vld [vmem:[%s2555 + $0x118] sm:$0xff]
    %v2592 = vld [vmem:[%s2555 + $0x120] sm:$0xff]
    %v2593 = vld [vmem:[%s2555 + $0x128] sm:$0xff]
    %v2594 = vld [vmem:[%s2555 + $0x130] sm:$0xff]
    %v2595 = vld [vmem:[%s2555 + $0x138] sm:$0xff]
    %v2596 = vld [vmem:[%s2555 + $0x140] sm:$0xff]
    %v2597 = vld [vmem:[%s2555 + $0x148] sm:$0xff]
    %v2598 = vld [vmem:[%s2555 + $0x150] sm:$0xff]
    %v2599 = vld [vmem:[%s2555 + $0x158] sm:$0xff]
    %v2600 = vld [vmem:[%s2555 + $0x160] sm:$0xff]
    %v2601 = vld [vmem:[%s2555 + $0x168] sm:$0xff]
    %v2602 = vld [vmem:[%s2555 + $0x170] sm:$0xff]
    %v2603 = vld [vmem:[%s2555 + $0x178] sm:$0xff]
    %v2604 = vld [vmem:[%s2555 + $0x180] sm:$0xff]
    %v2605 = vld [vmem:[%s2555 + $0x188] sm:$0xff]
    %v2606 = vld [vmem:[%s2555 + $0x190] sm:$0xff]
    %v2607 = vld [vmem:[%s2555 + $0x198] sm:$0xff]
    %v2608 = vld [vmem:[%s2555 + $0x1a0] sm:$0xff]
    %v2609 = vld [vmem:[%s2555 + $0x1a8] sm:$0xff]
    %v2610 = vld [vmem:[%s2555 + $0x1b0] sm:$0xff]
    %v2611 = vld [vmem:[%s2555 + $0x1b8] sm:$0xff]
    %v2612 = vld [vmem:[%s2555 + $0x1c0] sm:$0xff]
    %v2613 = vld [vmem:[%s2555 + $0x1c8] sm:$0xff]
    %v2614 = vld [vmem:[%s2555 + $0x1d0] sm:$0xff]
    %v2615 = vld [vmem:[%s2555 + $0x1d8] sm:$0xff]
    %v2616 = vld [vmem:[%s2555 + $0x1e0] sm:$0xff]
    %v2617 = vld [vmem:[%s2555 + $0x1e8] sm:$0xff]
    %v2618 = vld [vmem:[%s2555 + $0x1f0] sm:$0xff]
    %v2619 = vld [vmem:[%s2555 + $0x1f8] sm:$0xff]
    %v2620 = vld [vmem:[%s2555 + $0x200] sm:$0xff]
    %v2621 = vld [vmem:[%s2555 + $0x208] sm:$0xff]
    %v2622 = vld [vmem:[%s2555 + $0x210] sm:$0xff]
    %v2623 = vld [vmem:[%s2555 + $0x218] sm:$0xff]
    %v2624 = vld [vmem:[%s2555 + $0x220] sm:$0xff]
    %v2625 = vld [vmem:[%s2555 + $0x228] sm:$0xff]
    %v2626 = vld [vmem:[%s2555 + $0x230] sm:$0xff]
    %v2627 = vld [vmem:[%s2555 + $0x238] sm:$0xff]
    %v2628 = vld [vmem:[%s2555 + $0x240] sm:$0xff]
    %v2629 = vld [vmem:[%s2555 + $0x248] sm:$0xff]
    %v2630 = vld [vmem:[%s2555 + $0x250] sm:$0xff]
    %v2631 = vld [vmem:[%s2555 + $0x258] sm:$0xff]
    %v2632 = vld [vmem:[%s2555 + $0x260] sm:$0xff]
    %v2633 = vld [vmem:[%s2555 + $0x268] sm:$0xff]
    %v2634 = vld [vmem:[%s2555 + $0x270] sm:$0xff]
    %v2635 = vld [vmem:[%s2555 + $0x278] sm:$0xff]
    %v2636 = vld [vmem:[%s2555 + $0x280] sm:$0xff]
    %v2637 = vld [vmem:[%s2555 + $0x288] sm:$0xff]
    %v2638 = vld [vmem:[%s2555 + $0x290] sm:$0xff]
    %v2639 = vld [vmem:[%s2555 + $0x298] sm:$0xff]
    %v2640 = vld [vmem:[%s2555 + $0x2a0] sm:$0xff]
    %v2641 = vld [vmem:[%s2555 + $0x2a8] sm:$0xff]
    %v2642 = vld [vmem:[%s2555 + $0x2b0] sm:$0xff]
    %v2643 = vld [vmem:[%s2555 + $0x2b8] sm:$0xff]
    %v2644 = vld [vmem:[%s2555 + $0x2c0] sm:$0xff]
    %v2645 = vld [vmem:[%s2555 + $0x2c8] sm:$0xff]
    %v2646 = vld [vmem:[%s2555 + $0x2d0] sm:$0xff]
    %v2647 = vld [vmem:[%s2555 + $0x2d8] sm:$0xff]
    %v2648 = vld [vmem:[%s2555 + $0x2e0] sm:$0xff]
    %v2649 = vld [vmem:[%s2555 + $0x2e8] sm:$0xff]
    %v2650 = vld [vmem:[%s2555 + $0x2f0] sm:$0xff]
    %v2651 = vld [vmem:[%s2555 + $0x2f8] sm:$0xff]
    %v2652 = vld [vmem:[%s2555 + $0x300] sm:$0xff]
    %v2653 = vld [vmem:[%s2555 + $0x308] sm:$0xff]
    %v2654 = vld [vmem:[%s2555 + $0x310] sm:$0xff]
    %v2655 = vld [vmem:[%s2555 + $0x318] sm:$0xff]
    %v2656 = vld [vmem:[%s2555 + $0x320] sm:$0xff]
    %v2657 = vld [vmem:[%s2555 + $0x328] sm:$0xff]
    %v2658 = vld [vmem:[%s2555 + $0x330] sm:$0xff]
    %v2659 = vld [vmem:[%s2555 + $0x338] sm:$0xff]
    %v2660 = vld [vmem:[%s2555 + $0x340] sm:$0xff]
    %v2661 = vld [vmem:[%s2555 + $0x348] sm:$0xff]
    %v2662 = vld [vmem:[%s2555 + $0x350] sm:$0xff]
    %v2663 = vld [vmem:[%s2555 + $0x358] sm:$0xff]
    %v2664 = vld [vmem:[%s2555 + $0x360] sm:$0xff]
    %v2665 = vld [vmem:[%s2555 + $0x368] sm:$0xff]
    %v2666 = vld [vmem:[%s2555 + $0x370] sm:$0xff]
    %v2667 = vld [vmem:[%s2555 + $0x378] sm:$0xff]
    %v2668 = vld [vmem:[%s2555 + $0x380] sm:$0xff]
    %v2669 = vld [vmem:[%s2555 + $0x388] sm:$0xff]
    %v2670 = vld [vmem:[%s2555 + $0x390] sm:$0xff]
    %v2671 = vld [vmem:[%s2555 + $0x398] sm:$0xff]
    %v2672 = vld [vmem:[%s2555 + $0x3a0] sm:$0xff]
    %v2673 = vld [vmem:[%s2555 + $0x3a8] sm:$0xff]
    %v2674 = vld [vmem:[%s2555 + $0x3b0] sm:$0xff]
    %v2675 = vld [vmem:[%s2555 + $0x3b8] sm:$0xff]
    %v2676 = vld [vmem:[%s2555 + $0x3c0] sm:$0xff]
    %v2677 = vld [vmem:[%s2555 + $0x3c8] sm:$0xff]
    %v2678 = vld [vmem:[%s2555 + $0x3d0] sm:$0xff]
    %v2679 = vld [vmem:[%s2555 + $0x3d8] sm:$0xff]
    %v2680 = vld [vmem:[%s2555 + $0x3e0] sm:$0xff]
    %v2681 = vld [vmem:[%s2555 + $0x3e8] sm:$0xff]
    %v2682 = vld [vmem:[%s2555 + $0x3f0] sm:$0xff]
    %v2683 = vld [vmem:[%s2555 + $0x3f8] sm:$0xff]
    %v2684 = vld [vmem:[%s2555 + $0x400] sm:$0xff]
    %v2685 = vld [vmem:[%s2555 + $0x408] sm:$0xff]
    %v2686 = vld [vmem:[%s2555 + $0x410] sm:$0xff]
    %v2687 = vld [vmem:[%s2555 + $0x418] sm:$0xff]
    %v2688 = vld [vmem:[%s2555 + $0x420] sm:$0xff]
    %v2689 = vld [vmem:[%s2555 + $0x428] sm:$0xff]
    %v2690 = vld [vmem:[%s2555 + $0x430] sm:$0xff]
    %v2691 = vld [vmem:[%s2555 + $0x438] sm:$0xff]
    %v2692 = vld [vmem:[%s2555 + $0x440] sm:$0xff]
    %v2693 = vld [vmem:[%s2555 + $0x448] sm:$0xff]
    %v2694 = vld [vmem:[%s2555 + $0x450] sm:$0xff]
    %v2695 = vld [vmem:[%s2555 + $0x458] sm:$0xff]
    %v2696 = vld [vmem:[%s2555 + $0x460] sm:$0xff]
    %v2697 = vld [vmem:[%s2555 + $0x468] sm:$0xff]
    %v2698 = vld [vmem:[%s2555 + $0x470] sm:$0xff]
    %v2699 = vld [vmem:[%s2555 + $0x478] sm:$0xff]
    %v2700 = vld [vmem:[%s2555 + $0x480] sm:$0xff]
    %v2701 = vld [vmem:[%s2555 + $0x488] sm:$0xff]
    %v2702 = vld [vmem:[%s2555 + $0x490] sm:$0xff]
    %v2703 = vld [vmem:[%s2555 + $0x498] sm:$0xff]
    %v2704 = vld [vmem:[%s2555 + $0x4a0] sm:$0xff]
    %v2705 = vld [vmem:[%s2555 + $0x4a8] sm:$0xff]
    %v2706 = vld [vmem:[%s2555 + $0x4b0] sm:$0xff]
    %v2707 = vld [vmem:[%s2555 + $0x4b8] sm:$0xff]
    %v2708 = vld [vmem:[%s2555 + $0x4c0] sm:$0xff]
    %v2709 = vld [vmem:[%s2555 + $0x4c8] sm:$0xff]
    %v2710 = vld [vmem:[%s2555 + $0x4d0] sm:$0xff]
    %v2711 = vld [vmem:[%s2555 + $0x4d8] sm:$0xff]
    %v2712 = vld [vmem:[%s2555 + $0x4e0] sm:$0xff]
    %v2713 = vld [vmem:[%s2555 + $0x4e8] sm:$0xff]
    %v2714 = vld [vmem:[%s2555 + $0x4f0] sm:$0xff]
    %v2715 = vld [vmem:[%s2555 + $0x4f8] sm:$0xff]
    %v2716 = vld [vmem:[%s2555 + $0x500] sm:$0xff]
    %v2717 = vld [vmem:[%s2555 + $0x508] sm:$0xff]
    %v2718 = vld [vmem:[%s2555 + $0x510] sm:$0xff]
    %v2719 = vld [vmem:[%s2555 + $0x518] sm:$0xff]
    %v2720 = vld [vmem:[%s2555 + $0x520] sm:$0xff]
    %v2721 = vld [vmem:[%s2555 + $0x528] sm:$0xff]
    %v2722 = vld [vmem:[%s2555 + $0x530] sm:$0xff]
    %v2723 = vld [vmem:[%s2555 + $0x538] sm:$0xff]
    %v2724 = vld [vmem:[%s2555 + $0x540] sm:$0xff]
    %v2725 = vld [vmem:[%s2555 + $0x548] sm:$0xff]
    %v2726 = vld [vmem:[%s2555 + $0x550] sm:$0xff]
    %v2727 = vld [vmem:[%s2555 + $0x558] sm:$0xff]
    %v2728 = vld [vmem:[%s2555 + $0x560] sm:$0xff]
    %v2729 = vld [vmem:[%s2555 + $0x568] sm:$0xff]
    %v2730 = vld [vmem:[%s2555 + $0x570] sm:$0xff]
    %v2731 = vld [vmem:[%s2555 + $0x578] sm:$0xff]
    %v2732 = vld [vmem:[%s2555 + $0x580] sm:$0xff]
    %v2733 = vld [vmem:[%s2555 + $0x588] sm:$0xff]
    %v2734 = vld [vmem:[%s2555 + $0x590] sm:$0xff]
    %v2735 = vld [vmem:[%s2555 + $0x598] sm:$0xff]
    %v2737 = vsel %vm1937, %v1536, 0
    %v2740 = vsel %vm1937, %v1542, 0
    %2742 = vmatprep.subr.mxu0 %v2557
    %2743 = vmatpush1.msra.mxu0 %v2556
    %2744 = vmatprep.subr.mxu0 %v2560
    %2745 = vmatpush1.msra.mxu0 %v2559
    %2746 = vmatprep.subr.mxu0 %v2563
    %2747 = vmatpush1.msra.mxu0 %v2562
    %2748 = vmatprep.subr.mxu0 %v2566
    %2749 = vmatpush1.msra.mxu0 %v2565
    %2750 = vmatprep.subr.mxu0 %v2569
    %2751 = vmatpush1.msra.mxu0 %v2568
    %2752 = vmatprep.subr.mxu0 %v2572
    %2753 = vmatpush1.msra.mxu0 %v2571
    %2754 = vmatprep.subr.mxu0 %v2575
    %2755 = vmatpush1.msra.mxu0 %v2574
    %2756 = vmatprep.subr.mxu0 %v2578
    %2757 = vmatpush1.msra.mxu0 %v2577
    %2758 = vmatprep.subr.mxu0 %v2581
    %2759 = vmatpush1.msra.mxu0 %v2580
    %2760 = vmatprep.subr.mxu0 %v2584
    %2761 = vmatpush1.msra.mxu0 %v2583
    %2762 = vmatprep.subr.mxu0 %v2587
    %2763 = vmatpush1.msra.mxu0 %v2586
    %2764 = vmatprep.subr.mxu0 %v2590
    %2765 = vmatpush1.msra.mxu0 %v2589
    %2766 = vmatprep.subr.mxu0 %v2593
    %2767 = vmatpush1.msra.mxu0 %v2592
    %2768 = vmatprep.subr.mxu0 %v2596
    %2769 = vmatpush1.msra.mxu0 %v2595
    %2770 = vmatprep.subr.mxu0 %v2599
    %2771 = vmatpush1.msra.mxu0 %v2598
    %2772 = vmatprep.subr.mxu0 %v2602
    %2773 = vmatpush1.msra.mxu0 %v2601
    %2774 = vmatprep.subr.mxu0 %v2605
    %2775 = vmatpush1.msra.mxu0 %v2604
    %2776 = vmatprep.subr.mxu0 %v2608
    %2777 = vmatpush1.msra.mxu0 %v2607
    %2778 = vmatprep.subr.mxu0 %v2611
    %2779 = vmatpush1.msra.mxu0 %v2610
    %2780 = vmatprep.subr.mxu0 %v2614
    %2781 = vmatpush1.msra.mxu0 %v2613
    %2782 = vmatprep.subr.mxu0 %v2617
    %2783 = vmatpush1.msra.mxu0 %v2616
    %2784 = vmatprep.subr.mxu0 %v2620
    %2785 = vmatpush1.msra.mxu0 %v2619
    %2786 = vmatprep.subr.mxu0 %v2623
    %2787 = vmatpush1.msra.mxu0 %v2622
    %2788 = vmatprep.subr.mxu0 %v2626
    %2789 = vmatpush1.msra.mxu0 %v2625
    %2790 = vmatprep.subr.mxu0 %v2629
    %2791 = vmatpush1.msra.mxu0 %v2628
    %2792 = vmatprep.subr.mxu0 %v2632
    %2793 = vmatpush1.msra.mxu0 %v2631
    %2794 = vmatprep.subr.mxu0 %v2635
    %2795 = vmatpush1.msra.mxu0 %v2634
    %2796 = vmatprep.subr.mxu0 %v2638
    %2797 = vmatpush1.msra.mxu0 %v2637
    %2798 = vmatprep.subr.mxu0 %v2641
    %2799 = vmatpush1.msra.mxu0 %v2640
    %2800 = vmatprep.subr.mxu0 %v2644
    %2801 = vmatpush1.msra.mxu0 %v2643
    %2802 = vmatprep.subr.mxu0 %v2647
    %2803 = vmatpush1.msra.mxu0 %v2646
    %2804 = vmatprep.subr.mxu0 %v2650
    %2805 = vmatpush1.msra.mxu0 %v2649
    %2806 = vmatprep.mubr.f32.mxu0 %v1435
    %2807 = vmatmul.mubr.f32.gmra.mrb[0].mxu0 %v1433
    %v2808 = vpop.f32.mrb[0].mxu0
    %v2809 = vadd.f32 0.0, %v2808
    %v2810 = vpop.f32.mrb[0].mxu0
    %v2811 = vadd.f32 0.0, %v2810
    %2812 = vmatprep.mubr.f32.mxu0 %v1441
    %2813 = vmatmul.mubr.f32.gmra.mrb[0].mxu0 %v1439
    %v2814 = vpop.f32.mrb[0].mxu0
    %v2815 = vadd.f32 0.0, %v2814
    %v2816 = vpop.f32.mrb[0].mxu0
    %v2817 = vadd.f32 0.0, %v2816
    %2818 = vdwg.mxu0
    %2819 = vmatprep.subr.mxu0 %v2653
    %2820 = vmatpush1.msra.mxu0 %v2652
    %2821 = vmatprep.subr.mxu0 %v2656
    %2822 = vmatpush1.msra.mxu0 %v2655
    %2823 = vmatprep.subr.mxu0 %v2659
    %2824 = vmatpush1.msra.mxu0 %v2658
    %2825 = vmatprep.subr.mxu0 %v2662
    %2826 = vmatpush1.msra.mxu0 %v2661
    %2827 = vmatprep.subr.mxu0 %v2665
    %2828 = vmatpush1.msra.mxu0 %v2664
    %2829 = vmatprep.subr.mxu0 %v2668
    %2830 = vmatpush1.msra.mxu0 %v2667
    %2831 = vmatprep.subr.mxu0 %v2671
    %2832 = vmatpush1.msra.mxu0 %v2670
    %2833 = vmatprep.subr.mxu0 %v2674
    %2834 = vmatpush1.msra.mxu0 %v2673
    %2835 = vmatprep.subr.mxu0 %v2677
    %2836 = vmatpush1.msra.mxu0 %v2676
    %2837 = vmatprep.subr.mxu0 %v2680
    %2838 = vmatpush1.msra.mxu0 %v2679
    %2839 = vmatprep.subr.mxu0 %v2683
    %2840 = vmatpush1.msra.mxu0 %v2682
    %2841 = vmatprep.subr.mxu0 %v2686
    %2842 = vmatpush1.msra.mxu0 %v2685
    %2843 = vmatprep.subr.mxu0 %v2689
    %2844 = vmatpush1.msra.mxu0 %v2688
    %2845 = vmatprep.subr.mxu0 %v2692
    %2846 = vmatpush1.msra.mxu0 %v2691
    %2847 = vmatprep.subr.mxu0 %v2695
    %2848 = vmatpush1.msra.mxu0 %v2694
    %2849 = vmatprep.subr.mxu0 %v2698
    %2850 = vmatpush1.msra.mxu0 %v2697
    %2851 = vmatprep.subr.mxu0 %v2701
    %2852 = vmatpush1.msra.mxu0 %v2700
    %2853 = vmatprep.subr.mxu0 %v2704
    %2854 = vmatpush1.msra.mxu0 %v2703
    %2855 = vmatprep.subr.mxu0 %v2707
    %2856 = vmatpush1.msra.mxu0 %v2706
    %2857 = vmatprep.subr.mxu0 %v2710
    %2858 = vmatpush1.msra.mxu0 %v2709
    %2859 = vmatprep.subr.mxu0 %v2713
    %2860 = vmatpush1.msra.mxu0 %v2712
    %2861 = vmatprep.subr.mxu0 %v2716
    %2862 = vmatpush1.msra.mxu0 %v2715
    %2863 = vmatprep.subr.mxu0 %v2719
    %2864 = vmatpush1.msra.mxu0 %v2718
    %2865 = vmatprep.subr.mxu0 %v2722
    %2866 = vmatpush1.msra.mxu0 %v2721
    %2867 = vmatprep.subr.mxu0 %v2725
    %2868 = vmatpush1.msra.mxu0 %v2724
    %2869 = vmatprep.subr.mxu0 %v2728
    %2870 = vmatpush1.msra.mxu0 %v2727
    %2871 = vmatprep.subr.mxu0 %v2731
    %2872 = vmatpush1.msra.mxu0 %v2730
    %2873 = vmatprep.subr.mxu0 %v2734
    %2874 = vmatpush1.msra.mxu0 %v2733
    %2875 = vmatprep.subr.mxu0 0.0
    %2876 = vmatpush1.msra.mxu0 0.0
    %2877 = vmatprep.subr.mxu0 0.0
    %2878 = vmatpush1.msra.mxu0 0.0
    %2879 = vmatprep.subr.mxu0 0.0
    %2880 = vmatpush1.msra.mxu0 0.0
    %2881 = vmatprep.subr.mxu0 0.0
    %2882 = vmatpush1.msra.mxu0 0.0
    %2883 = vmatprep.mubr.f32.mxu0 %v2737
    %2884 = vmatmul.mubr.f32.gmra.mrb[0].mxu0 %v1534
    %v2885 = vpop.f32.mrb[0].mxu0
    %v2886 = vadd.f32 %v2809, %v2885
    %v2887 = vpop.f32.mrb[0].mxu0
    %v2888 = vadd.f32 %v2811, %v2887
    %2889 = vmatprep.mubr.f32.mxu0 %v2740
    %2890 = vmatmul.mubr.f32.gmra.mrb[0].mxu0 %v1540
    %v2891 = vpop.f32.mrb[0].mxu0
    %v2892 = vadd.f32 %v2815, %v2891
    %v2893 = vpop.f32.mrb[0].mxu0
    %v2894 = vadd.f32 %v2817, %v2893
    %2895 = vdwg.mxu0
    %2896 = vmatprep.subr.mxu0 0.0
    %2897 = vmatpush1.msra.mxu0 %v2558
    %2898 = vmatprep.subr.mxu0 0.0
    %2899 = vmatpush1.msra.mxu0 %v2561
    %2900 = vmatprep.subr.mxu0 0.0
    %2901 = vmatpush1.msra.mxu0 %v2564
    %2902 = vmatprep.subr.mxu0 0.0
    %2903 = vmatpush1.msra.mxu0 %v2567
    %2904 = vmatprep.subr.mxu0 0.0
    %2905 = vmatpush1.msra.mxu0 %v2570
    %2906 = vmatprep.subr.mxu0 0.0
    %2907 = vmatpush1.msra.mxu0 %v2573
    %2908 = vmatprep.subr.mxu0 0.0
    %2909 = vmatpush1.msra.mxu0 %v2576
    %2910 = vmatprep.subr.mxu0 0.0
    %2911 = vmatpush1.msra.mxu0 %v2579
    %2912 = vmatprep.subr.mxu0 0.0
    %2913 = vmatpush1.msra.mxu0 %v2582
    %2914 = vmatprep.subr.mxu0 0.0
    %2915 = vmatpush1.msra.mxu0 %v2585
    %2916 = vmatprep.subr.mxu0 0.0
    %2917 = vmatpush1.msra.mxu0 %v2588
    %2918 = vmatprep.subr.mxu0 0.0
    %2919 = vmatpush1.msra.mxu0 %v2591
    %2920 = vmatprep.subr.mxu0 0.0
    %2921 = vmatpush1.msra.mxu0 %v2594
    %2922 = vmatprep.subr.mxu0 0.0
    %2923 = vmatpush1.msra.mxu0 %v2597
    %2924 = vmatprep.subr.mxu0 0.0
    %2925 = vmatpush1.msra.mxu0 %v2600
    %2926 = vmatprep.subr.mxu0 0.0
    %2927 = vmatpush1.msra.mxu0 %v2603
    %2928 = vmatprep.subr.mxu0 0.0
    %2929 = vmatpush1.msra.mxu0 %v2606
    %2930 = vmatprep.subr.mxu0 0.0
    %2931 = vmatpush1.msra.mxu0 %v2609
    %2932 = vmatprep.subr.mxu0 0.0
    %2933 = vmatpush1.msra.mxu0 %v2612
    %2934 = vmatprep.subr.mxu0 0.0
    %2935 = vmatpush1.msra.mxu0 %v2615
    %2936 = vmatprep.subr.mxu0 0.0
    %2937 = vmatpush1.msra.mxu0 %v2618
    %2938 = vmatprep.subr.mxu0 0.0
    %2939 = vmatpush1.msra.mxu0 %v2621
    %2940 = vmatprep.subr.mxu0 0.0
    %2941 = vmatpush1.msra.mxu0 %v2624
    %2942 = vmatprep.subr.mxu0 0.0
    %2943 = vmatpush1.msra.mxu0 %v2627
    %2944 = vmatprep.subr.mxu0 0.0
    %2945 = vmatpush1.msra.mxu0 %v2630
    %2946 = vmatprep.subr.mxu0 0.0
    %2947 = vmatpush1.msra.mxu0 %v2633
    %2948 = vmatprep.subr.mxu0 0.0
    %2949 = vmatpush1.msra.mxu0 %v2636
    %2950 = vmatprep.subr.mxu0 0.0
    %2951 = vmatpush1.msra.mxu0 %v2639
    %2952 = vmatprep.subr.mxu0 0.0
    %2953 = vmatpush1.msra.mxu0 %v2642
    %2954 = vmatprep.subr.mxu0 0.0
    %2955 = vmatpush1.msra.mxu0 %v2645
    %2956 = vmatprep.subr.mxu0 0.0
    %2957 = vmatpush1.msra.mxu0 %v2648
    %2958 = vmatprep.subr.mxu0 0.0
    %2959 = vmatpush1.msra.mxu0 %v2651
    %2960 = vmatprep.mubr.f32.mxu0 %v1435
    %2961 = vmatmul.mubr.f32.gmra.mrb[0].mxu0 %v1433
    %v2962 = vpop.f32.mrb[0].mxu0
    %v2963 = vadd.f32 0.0, %v2962
    %v2964 = vpop.f32.mrb[0].mxu0
    %2965 = vmatprep.mubr.f32.mxu0 %v1441
    %2966 = vmatmul.mubr.f32.gmra.mrb[0].mxu0 %v1439
    %v2967 = vpop.f32.mrb[0].mxu0
    %v2968 = vadd.f32 0.0, %v2967
    %v2969 = vpop.f32.mrb[0].mxu0
    %2970 = vdwg.mxu0
    %2971 = vmatprep.subr.mxu0 0.0
    %2972 = vmatpush1.msra.mxu0 %v2654
    %2973 = vmatprep.subr.mxu0 0.0
    %2974 = vmatpush1.msra.mxu0 %v2657
    %2975 = vmatprep.subr.mxu0 0.0
    %2976 = vmatpush1.msra.mxu0 %v2660
    %2977 = vmatprep.subr.mxu0 0.0
    %2978 = vmatpush1.msra.mxu0 %v2663
    %2979 = vmatprep.subr.mxu0 0.0
    %2980 = vmatpush1.msra.mxu0 %v2666
    %2981 = vmatprep.subr.mxu0 0.0
    %2982 = vmatpush1.msra.mxu0 %v2669
    %2983 = vmatprep.subr.mxu0 0.0
    %2984 = vmatpush1.msra.mxu0 %v2672
    %2985 = vmatprep.subr.mxu0 0.0
    %2986 = vmatpush1.msra.mxu0 %v2675
    %2987 = vmatprep.subr.mxu0 0.0
    %2988 = vmatpush1.msra.mxu0 %v2678
    %2989 = vmatprep.subr.mxu0 0.0
    %2990 = vmatpush1.msra.mxu0 %v2681
    %2991 = vmatprep.subr.mxu0 0.0
    %2992 = vmatpush1.msra.mxu0 %v2684
    %2993 = vmatprep.subr.mxu0 0.0
    %2994 = vmatpush1.msra.mxu0 %v2687
    %2995 = vmatprep.subr.mxu0 0.0
    %2996 = vmatpush1.msra.mxu0 %v2690
    %2997 = vmatprep.subr.mxu0 0.0
    %2998 = vmatpush1.msra.mxu0 %v2693
    %2999 = vmatprep.subr.mxu0 0.0
    %3000 = vmatpush1.msra.mxu0 %v2696
    %3001 = vmatprep.subr.mxu0 0.0
    %3002 = vmatpush1.msra.mxu0 %v2699
    %3003 = vmatprep.subr.mxu0 0.0
    %3004 = vmatpush1.msra.mxu0 %v2702
    %3005 = vmatprep.subr.mxu0 0.0
    %3006 = vmatpush1.msra.mxu0 %v2705
    %3007 = vmatprep.subr.mxu0 0.0
    %3008 = vmatpush1.msra.mxu0 %v2708
    %3009 = vmatprep.subr.mxu0 0.0
    %3010 = vmatpush1.msra.mxu0 %v2711
    %3011 = vmatprep.subr.mxu0 0.0
    %3012 = vmatpush1.msra.mxu0 %v2714
    %3013 = vmatprep.subr.mxu0 0.0
    %3014 = vmatpush1.msra.mxu0 %v2717
    %3015 = vmatprep.subr.mxu0 0.0
    %3016 = vmatpush1.msra.mxu0 %v2720
    %3017 = vmatprep.subr.mxu0 0.0
    %3018 = vmatpush1.msra.mxu0 %v2723
    %3019 = vmatprep.subr.mxu0 0.0
    %3020 = vmatpush1.msra.mxu0 %v2726
    %3021 = vmatprep.subr.mxu0 0.0
    %3022 = vmatpush1.msra.mxu0 %v2729
    %3023 = vmatprep.subr.mxu0 0.0
    %3024 = vmatpush1.msra.mxu0 %v2732
    %3025 = vmatprep.subr.mxu0 0.0
    %3026 = vmatpush1.msra.mxu0 %v2735
    %3027 = vmatprep.subr.mxu0 0.0
    %3028 = vmatpush1.msra.mxu0 0.0
    %3029 = vmatprep.subr.mxu0 0.0
    %3030 = vmatpush1.msra.mxu0 0.0
    %3031 = vmatprep.subr.mxu0 0.0
    %3032 = vmatpush1.msra.mxu0 0.0
    %3033 = vmatprep.subr.mxu0 0.0
    %3034 = vmatpush1.msra.mxu0 0.0
    %3035 = vmatprep.mubr.f32.mxu0 %v2737
    %3036 = vmatmul.mubr.f32.gmra.mrb[0].mxu0 %v1534
    %v3037 = vpop.f32.mrb[0].mxu0
    %v3038 = vadd.f32 %v2963, %v3037
    %v3039 = vpop.f32.mrb[0].mxu0
    %3040 = vmatprep.mubr.f32.mxu0 %v2740
    %3041 = vmatmul.mubr.f32.gmra.mrb[0].mxu0 %v1540
    %v3042 = vpop.f32.mrb[0].mxu0
    %v3043 = vadd.f32 %v2968, %v3042
    %v3044 = vpop.f32.mrb[0].mxu0
    %3045 = vdwg.mxu0
    %v3046 = vadd.f32 %v2395, %v2886
    %v3047 = vadd.f32 %v2397, %v2888
    %v3048 = vadd.f32 %v2547, %v3038
    %v3049 = vadd.f32 %v2401, %v2892
    %v3050 = vadd.f32 %v2403, %v2894
    %v3051 = vadd.f32 %v2552, %v3043
    %s3052 = scalar_lea.vmem %s6, 4320
    %v3053 = vld [vmem:[%s3052] sm:$0xff]
    %v3054 = vld [vmem:[%s3052 + $0x8] sm:$0xff]
    %v3055 = vld [vmem:[%s3052 + $0x10] sm:$0xff]
    %v3056 = vld [vmem:[%s3052 + $0x18] sm:$0xff]
    %v3057 = vld [vmem:[%s3052 + $0x20] sm:$0xff]
    %v3058 = vld [vmem:[%s3052 + $0x28] sm:$0xff]
    %v3059 = vld [vmem:[%s3052 + $0x30] sm:$0xff]
    %v3060 = vld [vmem:[%s3052 + $0x38] sm:$0xff]
    %v3061 = vld [vmem:[%s3052 + $0x40] sm:$0xff]
    %v3062 = vld [vmem:[%s3052 + $0x48] sm:$0xff]
    %v3063 = vld [vmem:[%s3052 + $0x50] sm:$0xff]
    %v3064 = vld [vmem:[%s3052 + $0x58] sm:$0xff]
    %v3065 = vld [vmem:[%s3052 + $0x60] sm:$0xff]
    %v3066 = vld [vmem:[%s3052 + $0x68] sm:$0xff]
    %v3067 = vld [vmem:[%s3052 + $0x70] sm:$0xff]
    %v3068 = vld [vmem:[%s3052 + $0x78] sm:$0xff]
    %v3069 = vld [vmem:[%s3052 + $0x80] sm:$0xff]
    %v3070 = vld [vmem:[%s3052 + $0x88] sm:$0xff]
    %v3071 = vld [vmem:[%s3052 + $0x90] sm:$0xff]
    %v3072 = vld [vmem:[%s3052 + $0x98] sm:$0xff]
    %v3073 = vld [vmem:[%s3052 + $0xa0] sm:$0xff]
    %v3074 = vld [vmem:[%s3052 + $0xa8] sm:$0xff]
    %v3075 = vld [vmem:[%s3052 + $0xb0] sm:$0xff]
    %v3076 = vld [vmem:[%s3052 + $0xb8] sm:$0xff]
    %v3077 = vld [vmem:[%s3052 + $0xc0] sm:$0xff]
    %v3078 = vld [vmem:[%s3052 + $0xc8] sm:$0xff]
    %v3079 = vld [vmem:[%s3052 + $0xd0] sm:$0xff]
    %v3080 = vld [vmem:[%s3052 + $0xd8] sm:$0xff]
    %v3081 = vld [vmem:[%s3052 + $0xe0] sm:$0xff]
    %v3082 = vld [vmem:[%s3052 + $0xe8] sm:$0xff]
    %v3083 = vld [vmem:[%s3052 + $0xf0] sm:$0xff]
    %v3084 = vld [vmem:[%s3052 + $0xf8] sm:$0xff]
    %v3085 = vld [vmem:[%s3052 + $0x100] sm:$0xff]
    %v3086 = vld [vmem:[%s3052 + $0x108] sm:$0xff]
    %v3087 = vld [vmem:[%s3052 + $0x110] sm:$0xff]
    %v3088 = vld [vmem:[%s3052 + $0x118] sm:$0xff]
    %v3089 = vld [vmem:[%s3052 + $0x120] sm:$0xff]
    %v3090 = vld [vmem:[%s3052 + $0x128] sm:$0xff]
    %v3091 = vld [vmem:[%s3052 + $0x130] sm:$0xff]
    %v3092 = vld [vmem:[%s3052 + $0x138] sm:$0xff]
    %v3093 = vld [vmem:[%s3052 + $0x140] sm:$0xff]
    %v3094 = vld [vmem:[%s3052 + $0x148] sm:$0xff]
    %v3095 = vld [vmem:[%s3052 + $0x150] sm:$0xff]
    %v3096 = vld [vmem:[%s3052 + $0x158] sm:$0xff]
    %v3097 = vld [vmem:[%s3052 + $0x160] sm:$0xff]
    %v3098 = vld [vmem:[%s3052 + $0x168] sm:$0xff]
    %v3099 = vld [vmem:[%s3052 + $0x170] sm:$0xff]
    %v3100 = vld [vmem:[%s3052 + $0x178] sm:$0xff]
    %v3101 = vld [vmem:[%s3052 + $0x180] sm:$0xff]
    %v3102 = vld [vmem:[%s3052 + $0x188] sm:$0xff]
    %v3103 = vld [vmem:[%s3052 + $0x190] sm:$0xff]
    %v3104 = vld [vmem:[%s3052 + $0x198] sm:$0xff]
    %v3105 = vld [vmem:[%s3052 + $0x1a0] sm:$0xff]
    %v3106 = vld [vmem:[%s3052 + $0x1a8] sm:$0xff]
    %v3107 = vld [vmem:[%s3052 + $0x1b0] sm:$0xff]
    %v3108 = vld [vmem:[%s3052 + $0x1b8] sm:$0xff]
    %v3109 = vld [vmem:[%s3052 + $0x1c0] sm:$0xff]
    %v3110 = vld [vmem:[%s3052 + $0x1c8] sm:$0xff]
    %v3111 = vld [vmem:[%s3052 + $0x1d0] sm:$0xff]
    %v3112 = vld [vmem:[%s3052 + $0x1d8] sm:$0xff]
    %v3113 = vld [vmem:[%s3052 + $0x1e0] sm:$0xff]
    %v3114 = vld [vmem:[%s3052 + $0x1e8] sm:$0xff]
    %v3115 = vld [vmem:[%s3052 + $0x1f0] sm:$0xff]
    %v3116 = vld [vmem:[%s3052 + $0x1f8] sm:$0xff]
    %v3117 = vld [vmem:[%s3052 + $0x200] sm:$0xff]
    %v3118 = vld [vmem:[%s3052 + $0x208] sm:$0xff]
    %v3119 = vld [vmem:[%s3052 + $0x210] sm:$0xff]
    %v3120 = vld [vmem:[%s3052 + $0x218] sm:$0xff]
    %v3121 = vld [vmem:[%s3052 + $0x220] sm:$0xff]
    %v3122 = vld [vmem:[%s3052 + $0x228] sm:$0xff]
    %v3123 = vld [vmem:[%s3052 + $0x230] sm:$0xff]
    %v3124 = vld [vmem:[%s3052 + $0x238] sm:$0xff]
    %v3125 = vld [vmem:[%s3052 + $0x240] sm:$0xff]
    %v3126 = vld [vmem:[%s3052 + $0x248] sm:$0xff]
    %v3127 = vld [vmem:[%s3052 + $0x250] sm:$0xff]
    %v3128 = vld [vmem:[%s3052 + $0x258] sm:$0xff]
    %v3129 = vld [vmem:[%s3052 + $0x260] sm:$0xff]
    %v3130 = vld [vmem:[%s3052 + $0x268] sm:$0xff]
    %v3131 = vld [vmem:[%s3052 + $0x270] sm:$0xff]
    %v3132 = vld [vmem:[%s3052 + $0x278] sm:$0xff]
    %v3133 = vld [vmem:[%s3052 + $0x280] sm:$0xff]
    %v3134 = vld [vmem:[%s3052 + $0x288] sm:$0xff]
    %v3135 = vld [vmem:[%s3052 + $0x290] sm:$0xff]
    %v3136 = vld [vmem:[%s3052 + $0x298] sm:$0xff]
    %v3137 = vld [vmem:[%s3052 + $0x2a0] sm:$0xff]
    %v3138 = vld [vmem:[%s3052 + $0x2a8] sm:$0xff]
    %v3139 = vld [vmem:[%s3052 + $0x2b0] sm:$0xff]
    %v3140 = vld [vmem:[%s3052 + $0x2b8] sm:$0xff]
    %v3141 = vld [vmem:[%s3052 + $0x2c0] sm:$0xff]
    %v3142 = vld [vmem:[%s3052 + $0x2c8] sm:$0xff]
    %v3143 = vld [vmem:[%s3052 + $0x2d0] sm:$0xff]
    %v3144 = vld [vmem:[%s3052 + $0x2d8] sm:$0xff]
    %v3145 = vld [vmem:[%s3052 + $0x2e0] sm:$0xff]
    %v3146 = vld [vmem:[%s3052 + $0x2e8] sm:$0xff]
    %v3147 = vld [vmem:[%s3052 + $0x2f0] sm:$0xff]
    %v3148 = vld [vmem:[%s3052 + $0x2f8] sm:$0xff]
    %v3149 = vld [vmem:[%s3052 + $0x300] sm:$0xff]
    %v3150 = vld [vmem:[%s3052 + $0x308] sm:$0xff]
    %v3151 = vld [vmem:[%s3052 + $0x310] sm:$0xff]
    %v3152 = vld [vmem:[%s3052 + $0x318] sm:$0xff]
    %v3153 = vld [vmem:[%s3052 + $0x320] sm:$0xff]
    %v3154 = vld [vmem:[%s3052 + $0x328] sm:$0xff]
    %v3155 = vld [vmem:[%s3052 + $0x330] sm:$0xff]
    %v3156 = vld [vmem:[%s3052 + $0x338] sm:$0xff]
    %v3157 = vld [vmem:[%s3052 + $0x340] sm:$0xff]
    %v3158 = vld [vmem:[%s3052 + $0x348] sm:$0xff]
    %v3159 = vld [vmem:[%s3052 + $0x350] sm:$0xff]
    %v3160 = vld [vmem:[%s3052 + $0x358] sm:$0xff]
    %v3161 = vld [vmem:[%s3052 + $0x360] sm:$0xff]
    %v3162 = vld [vmem:[%s3052 + $0x368] sm:$0xff]
    %v3163 = vld [vmem:[%s3052 + $0x370] sm:$0xff]
    %v3164 = vld [vmem:[%s3052 + $0x378] sm:$0xff]
    %v3165 = vld [vmem:[%s3052 + $0x380] sm:$0xff]
    %v3166 = vld [vmem:[%s3052 + $0x388] sm:$0xff]
    %v3167 = vld [vmem:[%s3052 + $0x390] sm:$0xff]
    %v3168 = vld [vmem:[%s3052 + $0x398] sm:$0xff]
    %v3169 = vld [vmem:[%s3052 + $0x3a0] sm:$0xff]
    %v3170 = vld [vmem:[%s3052 + $0x3a8] sm:$0xff]
    %v3171 = vld [vmem:[%s3052 + $0x3b0] sm:$0xff]
    %v3172 = vld [vmem:[%s3052 + $0x3b8] sm:$0xff]
    %v3173 = vld [vmem:[%s3052 + $0x3c0] sm:$0xff]
    %v3174 = vld [vmem:[%s3052 + $0x3c8] sm:$0xff]
    %v3175 = vld [vmem:[%s3052 + $0x3d0] sm:$0xff]
    %v3176 = vld [vmem:[%s3052 + $0x3d8] sm:$0xff]
    %v3177 = vld [vmem:[%s3052 + $0x3e0] sm:$0xff]
    %v3178 = vld [vmem:[%s3052 + $0x3e8] sm:$0xff]
    %v3179 = vld [vmem:[%s3052 + $0x3f0] sm:$0xff]
    %v3180 = vld [vmem:[%s3052 + $0x3f8] sm:$0xff]
    %v3181 = vld [vmem:[%s3052 + $0x400] sm:$0xff]
    %v3182 = vld [vmem:[%s3052 + $0x408] sm:$0xff]
    %v3183 = vld [vmem:[%s3052 + $0x410] sm:$0xff]
    %v3184 = vld [vmem:[%s3052 + $0x418] sm:$0xff]
    %v3185 = vld [vmem:[%s3052 + $0x420] sm:$0xff]
    %v3186 = vld [vmem:[%s3052 + $0x428] sm:$0xff]
    %v3187 = vld [vmem:[%s3052 + $0x430] sm:$0xff]
    %v3188 = vld [vmem:[%s3052 + $0x438] sm:$0xff]
    %v3189 = vld [vmem:[%s3052 + $0x440] sm:$0xff]
    %v3190 = vld [vmem:[%s3052 + $0x448] sm:$0xff]
    %v3191 = vld [vmem:[%s3052 + $0x450] sm:$0xff]
    %v3192 = vld [vmem:[%s3052 + $0x458] sm:$0xff]
    %v3193 = vld [vmem:[%s3052 + $0x460] sm:$0xff]
    %v3194 = vld [vmem:[%s3052 + $0x468] sm:$0xff]
    %v3195 = vld [vmem:[%s3052 + $0x470] sm:$0xff]
    %v3196 = vld [vmem:[%s3052 + $0x478] sm:$0xff]
    %v3197 = vld [vmem:[%s3052 + $0x480] sm:$0xff]
    %v3198 = vld [vmem:[%s3052 + $0x488] sm:$0xff]
    %v3199 = vld [vmem:[%s3052 + $0x490] sm:$0xff]
    %v3200 = vld [vmem:[%s3052 + $0x498] sm:$0xff]
    %v3201 = vld [vmem:[%s3052 + $0x4a0] sm:$0xff]
    %v3202 = vld [vmem:[%s3052 + $0x4a8] sm:$0xff]
    %v3203 = vld [vmem:[%s3052 + $0x4b0] sm:$0xff]
    %v3204 = vld [vmem:[%s3052 + $0x4b8] sm:$0xff]
    %v3205 = vld [vmem:[%s3052 + $0x4c0] sm:$0xff]
    %v3206 = vld [vmem:[%s3052 + $0x4c8] sm:$0xff]
    %v3207 = vld [vmem:[%s3052 + $0x4d0] sm:$0xff]
    %v3208 = vld [vmem:[%s3052 + $0x4d8] sm:$0xff]
    %v3209 = vld [vmem:[%s3052 + $0x4e0] sm:$0xff]
    %v3210 = vld [vmem:[%s3052 + $0x4e8] sm:$0xff]
    %v3211 = vld [vmem:[%s3052 + $0x4f0] sm:$0xff]
    %v3212 = vld [vmem:[%s3052 + $0x4f8] sm:$0xff]
    %v3213 = vld [vmem:[%s3052 + $0x500] sm:$0xff]
    %v3214 = vld [vmem:[%s3052 + $0x508] sm:$0xff]
    %v3215 = vld [vmem:[%s3052 + $0x510] sm:$0xff]
    %v3216 = vld [vmem:[%s3052 + $0x518] sm:$0xff]
    %v3217 = vld [vmem:[%s3052 + $0x520] sm:$0xff]
    %v3218 = vld [vmem:[%s3052 + $0x528] sm:$0xff]
    %v3219 = vld [vmem:[%s3052 + $0x530] sm:$0xff]
    %v3220 = vld [vmem:[%s3052 + $0x538] sm:$0xff]
    %v3221 = vld [vmem:[%s3052 + $0x540] sm:$0xff]
    %v3222 = vld [vmem:[%s3052 + $0x548] sm:$0xff]
    %v3223 = vld [vmem:[%s3052 + $0x550] sm:$0xff]
    %v3224 = vld [vmem:[%s3052 + $0x558] sm:$0xff]
    %v3225 = vld [vmem:[%s3052 + $0x560] sm:$0xff]
    %v3226 = vld [vmem:[%s3052 + $0x568] sm:$0xff]
    %v3227 = vld [vmem:[%s3052 + $0x570] sm:$0xff]
    %v3228 = vld [vmem:[%s3052 + $0x578] sm:$0xff]
    %v3229 = vld [vmem:[%s3052 + $0x580] sm:$0xff]
    %v3230 = vld [vmem:[%s3052 + $0x588] sm:$0xff]
    %v3231 = vld [vmem:[%s3052 + $0x590] sm:$0xff]
    %v3232 = vld [vmem:[%s3052 + $0x598] sm:$0xff]
    %v3240 = vrot.slane %v1439, 4
    %v3241 = vrot.slane %v1445, 4
    %v3242 = vsel %vm799, %v3240, %v3241
    %v3243 = vrot.slane %v1441, 4
    %v3244 = vrot.slane %v1447, 4
    %v3245 = vsel %vm799, %v3243, %v3244
    %v3246 = vrot.slane %v1540, 4
    %v3247 = vrot.slane %v1546, 4
    %v3248 = vsel %vm799, %v3246, %v3247
    %v3249 = vrot.slane %v1542, 4
    %v3250 = vrot.slane %v1548, 4
    %v3251 = vsel %vm799, %v3249, %v3250
    %v3258 = vsel %vm1937, %v3251, 0
    %v3260 = vsel %vm1937, %v3250, 0
    %3262 = vmatprep.subr.mxu0 %v3054
    %3263 = vmatpush1.msra.mxu0 %v3053
    %3264 = vmatprep.subr.mxu0 %v3057
    %3265 = vmatpush1.msra.mxu0 %v3056
    %3266 = vmatprep.subr.mxu0 %v3060
    %3267 = vmatpush1.msra.mxu0 %v3059
    %3268 = vmatprep.subr.mxu0 %v3063
    %3269 = vmatpush1.msra.mxu0 %v3062
    %3270 = vmatprep.subr.mxu0 %v3066
    %3271 = vmatpush1.msra.mxu0 %v3065
    %3272 = vmatprep.subr.mxu0 %v3069
    %3273 = vmatpush1.msra.mxu0 %v3068
    %3274 = vmatprep.subr.mxu0 %v3072
    %3275 = vmatpush1.msra.mxu0 %v3071
    %3276 = vmatprep.subr.mxu0 %v3075
    %3277 = vmatpush1.msra.mxu0 %v3074
    %3278 = vmatprep.subr.mxu0 %v3078
    %3279 = vmatpush1.msra.mxu0 %v3077
    %3280 = vmatprep.subr.mxu0 %v3081
    %3281 = vmatpush1.msra.mxu0 %v3080
    %3282 = vmatprep.subr.mxu0 %v3084
    %3283 = vmatpush1.msra.mxu0 %v3083
    %3284 = vmatprep.subr.mxu0 %v3087
    %3285 = vmatpush1.msra.mxu0 %v3086
    %3286 = vmatprep.subr.mxu0 %v3090
    %3287 = vmatpush1.msra.mxu0 %v3089
    %3288 = vmatprep.subr.mxu0 %v3093
    %3289 = vmatpush1.msra.mxu0 %v3092
    %3290 = vmatprep.subr.mxu0 %v3096
    %3291 = vmatpush1.msra.mxu0 %v3095
    %3292 = vmatprep.subr.mxu0 %v3099
    %3293 = vmatpush1.msra.mxu0 %v3098
    %3294 = vmatprep.subr.mxu0 %v3102
    %3295 = vmatpush1.msra.mxu0 %v3101
    %3296 = vmatprep.subr.mxu0 %v3105
    %3297 = vmatpush1.msra.mxu0 %v3104
    %3298 = vmatprep.subr.mxu0 %v3108
    %3299 = vmatpush1.msra.mxu0 %v3107
    %3300 = vmatprep.subr.mxu0 %v3111
    %3301 = vmatpush1.msra.mxu0 %v3110
    %3302 = vmatprep.subr.mxu0 %v3114
    %3303 = vmatpush1.msra.mxu0 %v3113
    %3304 = vmatprep.subr.mxu0 %v3117
    %3305 = vmatpush1.msra.mxu0 %v3116
    %3306 = vmatprep.subr.mxu0 %v3120
    %3307 = vmatpush1.msra.mxu0 %v3119
    %3308 = vmatprep.subr.mxu0 %v3123
    %3309 = vmatpush1.msra.mxu0 %v3122
    %3310 = vmatprep.subr.mxu0 %v3126
    %3311 = vmatpush1.msra.mxu0 %v3125
    %3312 = vmatprep.subr.mxu0 %v3129
    %3313 = vmatpush1.msra.mxu0 %v3128
    %3314 = vmatprep.subr.mxu0 %v3132
    %3315 = vmatpush1.msra.mxu0 %v3131
    %3316 = vmatprep.subr.mxu0 %v3135
    %3317 = vmatpush1.msra.mxu0 %v3134
    %3318 = vmatprep.subr.mxu0 %v3138
    %3319 = vmatpush1.msra.mxu0 %v3137
    %3320 = vmatprep.subr.mxu0 %v3141
    %3321 = vmatpush1.msra.mxu0 %v3140
    %3322 = vmatprep.subr.mxu0 %v3144
    %3323 = vmatpush1.msra.mxu0 %v3143
    %3324 = vmatprep.subr.mxu0 %v3147
    %3325 = vmatpush1.msra.mxu0 %v3146
    %3326 = vmatprep.mubr.f32.mxu0 %v3245
    %3327 = vmatmul.mubr.f32.gmra.mrb[0].mxu0 %v3242
    %v3328 = vpop.f32.mrb[0].mxu0
    %v3329 = vadd.f32 0.0, %v3328
    %v3330 = vpop.f32.mrb[0].mxu0
    %v3331 = vadd.f32 0.0, %v3330
    %3332 = vmatprep.mubr.f32.mxu0 %v3244
    %3333 = vmatmul.mubr.f32.gmra.mrb[0].mxu0 %v3241
    %v3334 = vpop.f32.mrb[0].mxu0
    %v3335 = vadd.f32 0.0, %v3334
    %v3336 = vpop.f32.mrb[0].mxu0
    %v3337 = vadd.f32 0.0, %v3336
    %3338 = vdwg.mxu0
    %3339 = vmatprep.subr.mxu0 %v3150
    %3340 = vmatpush1.msra.mxu0 %v3149
    %3341 = vmatprep.subr.mxu0 %v3153
    %3342 = vmatpush1.msra.mxu0 %v3152
    %3343 = vmatprep.subr.mxu0 %v3156
    %3344 = vmatpush1.msra.mxu0 %v3155
    %3345 = vmatprep.subr.mxu0 %v3159
    %3346 = vmatpush1.msra.mxu0 %v3158
    %3347 = vmatprep.subr.mxu0 %v3162
    %3348 = vmatpush1.msra.mxu0 %v3161
    %3349 = vmatprep.subr.mxu0 %v3165
    %3350 = vmatpush1.msra.mxu0 %v3164
    %3351 = vmatprep.subr.mxu0 %v3168
    %3352 = vmatpush1.msra.mxu0 %v3167
    %3353 = vmatprep.subr.mxu0 %v3171
    %3354 = vmatpush1.msra.mxu0 %v3170
    %3355 = vmatprep.subr.mxu0 %v3174
    %3356 = vmatpush1.msra.mxu0 %v3173
    %3357 = vmatprep.subr.mxu0 %v3177
    %3358 = vmatpush1.msra.mxu0 %v3176
    %3359 = vmatprep.subr.mxu0 %v3180
    %3360 = vmatpush1.msra.mxu0 %v3179
    %3361 = vmatprep.subr.mxu0 %v3183
    %3362 = vmatpush1.msra.mxu0 %v3182
    %3363 = vmatprep.subr.mxu0 %v3186
    %3364 = vmatpush1.msra.mxu0 %v3185
    %3365 = vmatprep.subr.mxu0 %v3189
    %3366 = vmatpush1.msra.mxu0 %v3188
    %3367 = vmatprep.subr.mxu0 %v3192
    %3368 = vmatpush1.msra.mxu0 %v3191
    %3369 = vmatprep.subr.mxu0 %v3195
    %3370 = vmatpush1.msra.mxu0 %v3194
    %3371 = vmatprep.subr.mxu0 %v3198
    %3372 = vmatpush1.msra.mxu0 %v3197
    %3373 = vmatprep.subr.mxu0 %v3201
    %3374 = vmatpush1.msra.mxu0 %v3200
    %3375 = vmatprep.subr.mxu0 %v3204
    %3376 = vmatpush1.msra.mxu0 %v3203
    %3377 = vmatprep.subr.mxu0 %v3207
    %3378 = vmatpush1.msra.mxu0 %v3206
    %3379 = vmatprep.subr.mxu0 %v3210
    %3380 = vmatpush1.msra.mxu0 %v3209
    %3381 = vmatprep.subr.mxu0 %v3213
    %3382 = vmatpush1.msra.mxu0 %v3212
    %3383 = vmatprep.subr.mxu0 %v3216
    %3384 = vmatpush1.msra.mxu0 %v3215
    %3385 = vmatprep.subr.mxu0 %v3219
    %3386 = vmatpush1.msra.mxu0 %v3218
    %3387 = vmatprep.subr.mxu0 %v3222
    %3388 = vmatpush1.msra.mxu0 %v3221
    %3389 = vmatprep.subr.mxu0 %v3225
    %3390 = vmatpush1.msra.mxu0 %v3224
    %3391 = vmatprep.subr.mxu0 %v3228
    %3392 = vmatpush1.msra.mxu0 %v3227
    %3393 = vmatprep.subr.mxu0 %v3231
    %3394 = vmatpush1.msra.mxu0 %v3230
    %3395 = vmatprep.subr.mxu0 0.0
    %3396 = vmatpush1.msra.mxu0 0.0
    %3397 = vmatprep.subr.mxu0 0.0
    %3398 = vmatpush1.msra.mxu0 0.0
    %3399 = vmatprep.subr.mxu0 0.0
    %3400 = vmatpush1.msra.mxu0 0.0
    %3401 = vmatprep.subr.mxu0 0.0
    %3402 = vmatpush1.msra.mxu0 0.0
    %3403 = vmatprep.mubr.f32.mxu0 %v3258
    %3404 = vmatmul.mubr.f32.gmra.mrb[0].mxu0 %v3248
    %v3405 = vpop.f32.mrb[0].mxu0
    %v3406 = vadd.f32 %v3329, %v3405
    %v3407 = vpop.f32.mrb[0].mxu0
    %v3408 = vadd.f32 %v3331, %v3407
    %3409 = vmatprep.mubr.f32.mxu0 %v3260
    %3410 = vmatmul.mubr.f32.gmra.mrb[0].mxu0 %v3247
    %v3411 = vpop.f32.mrb[0].mxu0
    %v3412 = vadd.f32 %v3335, %v3411
    %v3413 = vpop.f32.mrb[0].mxu0
    %v3414 = vadd.f32 %v3337, %v3413
    %3415 = vdwg.mxu0
    %3416 = vmatprep.subr.mxu0 0.0
    %3417 = vmatpush1.msra.mxu0 %v3055
    %3418 = vmatprep.subr.mxu0 0.0
    %3419 = vmatpush1.msra.mxu0 %v3058
    %3420 = vmatprep.subr.mxu0 0.0
    %3421 = vmatpush1.msra.mxu0 %v3061
    %3422 = vmatprep.subr.mxu0 0.0
    %3423 = vmatpush1.msra.mxu0 %v3064
    %3424 = vmatprep.subr.mxu0 0.0
    %3425 = vmatpush1.msra.mxu0 %v3067
    %3426 = vmatprep.subr.mxu0 0.0
    %3427 = vmatpush1.msra.mxu0 %v3070
    %3428 = vmatprep.subr.mxu0 0.0
    %3429 = vmatpush1.msra.mxu0 %v3073
    %3430 = vmatprep.subr.mxu0 0.0
    %3431 = vmatpush1.msra.mxu0 %v3076
    %3432 = vmatprep.subr.mxu0 0.0
    %3433 = vmatpush1.msra.mxu0 %v3079
    %3434 = vmatprep.subr.mxu0 0.0
    %3435 = vmatpush1.msra.mxu0 %v3082
    %3436 = vmatprep.subr.mxu0 0.0
    %3437 = vmatpush1.msra.mxu0 %v3085
    %3438 = vmatprep.subr.mxu0 0.0
    %3439 = vmatpush1.msra.mxu0 %v3088
    %3440 = vmatprep.subr.mxu0 0.0
    %3441 = vmatpush1.msra.mxu0 %v3091
    %3442 = vmatprep.subr.mxu0 0.0
    %3443 = vmatpush1.msra.mxu0 %v3094
    %3444 = vmatprep.subr.mxu0 0.0
    %3445 = vmatpush1.msra.mxu0 %v3097
    %3446 = vmatprep.subr.mxu0 0.0
    %3447 = vmatpush1.msra.mxu0 %v3100
    %3448 = vmatprep.subr.mxu0 0.0
    %3449 = vmatpush1.msra.mxu0 %v3103
    %3450 = vmatprep.subr.mxu0 0.0
    %3451 = vmatpush1.msra.mxu0 %v3106
    %3452 = vmatprep.subr.mxu0 0.0
    %3453 = vmatpush1.msra.mxu0 %v3109
    %3454 = vmatprep.subr.mxu0 0.0
    %3455 = vmatpush1.msra.mxu0 %v3112
    %3456 = vmatprep.subr.mxu0 0.0
    %3457 = vmatpush1.msra.mxu0 %v3115
    %3458 = vmatprep.subr.mxu0 0.0
    %3459 = vmatpush1.msra.mxu0 %v3118
    %3460 = vmatprep.subr.mxu0 0.0
    %3461 = vmatpush1.msra.mxu0 %v3121
    %3462 = vmatprep.subr.mxu0 0.0
    %3463 = vmatpush1.msra.mxu0 %v3124
    %3464 = vmatprep.subr.mxu0 0.0
    %3465 = vmatpush1.msra.mxu0 %v3127
    %3466 = vmatprep.subr.mxu0 0.0
    %3467 = vmatpush1.msra.mxu0 %v3130
    %3468 = vmatprep.subr.mxu0 0.0
    %3469 = vmatpush1.msra.mxu0 %v3133
    %3470 = vmatprep.subr.mxu0 0.0
    %3471 = vmatpush1.msra.mxu0 %v3136
    %3472 = vmatprep.subr.mxu0 0.0
    %3473 = vmatpush1.msra.mxu0 %v3139
    %3474 = vmatprep.subr.mxu0 0.0
    %3475 = vmatpush1.msra.mxu0 %v3142
    %3476 = vmatprep.subr.mxu0 0.0
    %3477 = vmatpush1.msra.mxu0 %v3145
    %3478 = vmatprep.subr.mxu0 0.0
    %3479 = vmatpush1.msra.mxu0 %v3148
    %3480 = vmatprep.mubr.f32.mxu0 %v3245
    %3481 = vmatmul.mubr.f32.gmra.mrb[0].mxu0 %v3242
    %v3482 = vpop.f32.mrb[0].mxu0
    %v3483 = vadd.f32 0.0, %v3482
    %v3484 = vpop.f32.mrb[0].mxu0
    %3485 = vmatprep.mubr.f32.mxu0 %v3244
    %3486 = vmatmul.mubr.f32.gmra.mrb[0].mxu0 %v3241
    %v3487 = vpop.f32.mrb[0].mxu0
    %v3488 = vadd.f32 0.0, %v3487
    %v3489 = vpop.f32.mrb[0].mxu0
    %3490 = vdwg.mxu0
    %3491 = vmatprep.subr.mxu0 0.0
    %3492 = vmatpush1.msra.mxu0 %v3151
    %3493 = vmatprep.subr.mxu0 0.0
    %3494 = vmatpush1.msra.mxu0 %v3154
    %3495 = vmatprep.subr.mxu0 0.0
    %3496 = vmatpush1.msra.mxu0 %v3157
    %3497 = vmatprep.subr.mxu0 0.0
    %3498 = vmatpush1.msra.mxu0 %v3160
    %3499 = vmatprep.subr.mxu0 0.0
    %3500 = vmatpush1.msra.mxu0 %v3163
    %3501 = vmatprep.subr.mxu0 0.0
    %3502 = vmatpush1.msra.mxu0 %v3166
    %3503 = vmatprep.subr.mxu0 0.0
    %3504 = vmatpush1.msra.mxu0 %v3169
    %3505 = vmatprep.subr.mxu0 0.0
    %3506 = vmatpush1.msra.mxu0 %v3172
    %3507 = vmatprep.subr.mxu0 0.0
    %3508 = vmatpush1.msra.mxu0 %v3175
    %3509 = vmatprep.subr.mxu0 0.0
    %3510 = vmatpush1.msra.mxu0 %v3178
    %3511 = vmatprep.subr.mxu0 0.0
    %3512 = vmatpush1.msra.mxu0 %v3181
    %3513 = vmatprep.subr.mxu0 0.0
    %3514 = vmatpush1.msra.mxu0 %v3184
    %3515 = vmatprep.subr.mxu0 0.0
    %3516 = vmatpush1.msra.mxu0 %v3187
    %3517 = vmatprep.subr.mxu0 0.0
    %3518 = vmatpush1.msra.mxu0 %v3190
    %3519 = vmatprep.subr.mxu0 0.0
    %3520 = vmatpush1.msra.mxu0 %v3193
    %3521 = vmatprep.subr.mxu0 0.0
    %3522 = vmatpush1.msra.mxu0 %v3196
    %3523 = vmatprep.subr.mxu0 0.0
    %3524 = vmatpush1.msra.mxu0 %v3199
    %3525 = vmatprep.subr.mxu0 0.0
    %3526 = vmatpush1.msra.mxu0 %v3202
    %3527 = vmatprep.subr.mxu0 0.0
    %3528 = vmatpush1.msra.mxu0 %v3205
    %3529 = vmatprep.subr.mxu0 0.0
    %3530 = vmatpush1.msra.mxu0 %v3208
    %3531 = vmatprep.subr.mxu0 0.0
    %3532 = vmatpush1.msra.mxu0 %v3211
    %3533 = vmatprep.subr.mxu0 0.0
    %3534 = vmatpush1.msra.mxu0 %v3214
    %3535 = vmatprep.subr.mxu0 0.0
    %3536 = vmatpush1.msra.mxu0 %v3217
    %3537 = vmatprep.subr.mxu0 0.0
    %3538 = vmatpush1.msra.mxu0 %v3220
    %3539 = vmatprep.subr.mxu0 0.0
    %3540 = vmatpush1.msra.mxu0 %v3223
    %3541 = vmatprep.subr.mxu0 0.0
    %3542 = vmatpush1.msra.mxu0 %v3226
    %3543 = vmatprep.subr.mxu0 0.0
    %3544 = vmatpush1.msra.mxu0 %v3229
    %3545 = vmatprep.subr.mxu0 0.0
    %3546 = vmatpush1.msra.mxu0 %v3232
    %3547 = vmatprep.subr.mxu0 0.0
    %3548 = vmatpush1.msra.mxu0 0.0
    %3549 = vmatprep.subr.mxu0 0.0
    %3550 = vmatpush1.msra.mxu0 0.0
    %3551 = vmatprep.subr.mxu0 0.0
    %3552 = vmatpush1.msra.mxu0 0.0
    %3553 = vmatprep.subr.mxu0 0.0
    %3554 = vmatpush1.msra.mxu0 0.0
    %3555 = vmatprep.mubr.f32.mxu0 %v3258
    %3556 = vmatmul.mubr.f32.gmra.mrb[0].mxu0 %v3248
    %v3557 = vpop.f32.mrb[0].mxu0
    %v3558 = vadd.f32 %v3483, %v3557
    %v3559 = vpop.f32.mrb[0].mxu0
    %3560 = vmatprep.mubr.f32.mxu0 %v3260
    %3561 = vmatmul.mubr.f32.gmra.mrb[0].mxu0 %v3247
    %v3562 = vpop.f32.mrb[0].mxu0
    %v3563 = vadd.f32 %v3488, %v3562
    %v3564 = vpop.f32.mrb[0].mxu0
    %3565 = vdwg.mxu0
    %v3566 = vadd.f32 %v3046, %v3406
    %v3567 = vadd.f32 %v3047, %v3408
    %v3568 = vadd.f32 %v3048, %v3558
    %v3569 = vadd.f32 %v3049, %v3412
    %v3570 = vadd.f32 %v3050, %v3414
    %v3571 = vadd.f32 %v3051, %v3563
    %v3572 = vld [vmem:[%s9] sm:$0x7]
    %v3574 = vlaneseq
    %v3575 = vshrl.u32 %v3574, 7
    %v3576 = vsub.s32 0, %v3575
    %v3577 = vrot.slane %v3572, %v3576
    %v3578 = vlaneseq
    %v3579 = vshrl.u32 %v3578, 7
    %v3580 = vsub.s32 1, %v3579
    %v3581 = vrot.slane %v3572, %v3580
    %v3582 = vlaneseq
    %v3583 = vshrl.u32 %v3582, 7
    %v3584 = vsub.s32 2, %v3583
    %v3585 = vrot.slane %v3572, %v3584
    %v3589 = vadd.f32 %v3566, %v3577
    %v3590 = vadd.f32 %v3567, %v3581
    %v3591 = vadd.f32 %v3568, %v3585
    %v3592 = vadd.f32 %v3569, %v3577
    %v3593 = vadd.f32 %v3570, %v3581
    %v3594 = vadd.f32 %v3571, %v3585
    %v3595 = vmax.f32 %v3589, 0.0
    %v3596 = vmax.f32 %v3590, 0.0
    %v3597 = vmax.f32 %v3591, 0.0
    %v3598 = vmax.f32 %v3592, 0.0
    %v3599 = vmax.f32 %v3593, 0.0
    %v3600 = vmax.f32 %v3594, 0.0
    %v3601 = vld [vmem:[%s4] sm:$0xff]
    %v3602 = vld [vmem:[%s4 + $0x8] sm:$0xff]
    %vm3603 = vcmask 97280
    %v3605 = vsel %vm3603, %v3601, 0
    %v3608 = vsel %vm3603, %v3602, 0
    %v3611 = vsel %vm799, %v3598, 0
    %v3614 = vsel %vm799, %v3599, 0
    %v3617 = vsel %vm799, %v3600, 0
    %3619 = vmatprep.subr.mxu0 %v3596
    %3620 = vmatpush1.msra.mxu0 %v3595
    %3621 = vmatprep.subr.mxu0 %v3614
    %3622 = vmatpush1.msra.mxu0 %v3611
    %3623 = vmatprep.subr.mxu0 0.0
    %3624 = vmatpush1.msra.mxu0 0.0
    %3625 = vmatprep.subr.mxu0 0.0
    %3626 = vmatpush1.msra.mxu0 0.0
    %3627 = vmatprep.subr.mxu0 0.0
    %3628 = vmatpush1.msra.mxu0 0.0
    %3629 = vmatprep.subr.mxu0 0.0
    %3630 = vmatpush1.msra.mxu0 0.0
    %3631 = vmatprep.subr.mxu0 0.0
    %3632 = vmatpush1.msra.mxu0 0.0
    %3633 = vmatprep.subr.mxu0 0.0
    %3634 = vmatpush1.msra.mxu0 0.0
    %3635 = vmatprep.subr.mxu0 0.0
    %3636 = vmatpush1.msra.mxu0 0.0
    %3637 = vmatprep.subr.mxu0 0.0
    %3638 = vmatpush1.msra.mxu0 0.0
    %3639 = vmatprep.subr.mxu0 0.0
    %3640 = vmatpush1.msra.mxu0 0.0
    %3641 = vmatprep.subr.mxu0 0.0
    %3642 = vmatpush1.msra.mxu0 0.0
    %3643 = vmatprep.subr.mxu0 0.0
    %3644 = vmatpush1.msra.mxu0 0.0
    %3645 = vmatprep.subr.mxu0 0.0
    %3646 = vmatpush1.msra.mxu0 0.0
    %3647 = vmatprep.subr.mxu0 0.0
    %3648 = vmatpush1.msra.mxu0 0.0
    %3649 = vmatprep.subr.mxu0 0.0
    %3650 = vmatpush1.msra.mxu0 0.0
    %3651 = vmatprep.subr.mxu0 0.0
    %3652 = vmatpush1.msra.mxu0 0.0
    %3653 = vmatprep.subr.mxu0 0.0
    %3654 = vmatpush1.msra.mxu0 0.0
    %3655 = vmatprep.subr.mxu0 0.0
    %3656 = vmatpush1.msra.mxu0 0.0
    %3657 = vmatprep.subr.mxu0 0.0
    %3658 = vmatpush1.msra.mxu0 0.0
    %3659 = vmatprep.subr.mxu0 0.0
    %3660 = vmatpush1.msra.mxu0 0.0
    %3661 = vmatprep.subr.mxu0 0.0
    %3662 = vmatpush1.msra.mxu0 0.0
    %3663 = vmatprep.subr.mxu0 0.0
    %3664 = vmatpush1.msra.mxu0 0.0
    %3665 = vmatprep.subr.mxu0 0.0
    %3666 = vmatpush1.msra.mxu0 0.0
    %3667 = vmatprep.subr.mxu0 0.0
    %3668 = vmatpush1.msra.mxu0 0.0
    %3669 = vmatprep.subr.mxu0 0.0
    %3670 = vmatpush1.msra.mxu0 0.0
    %3671 = vmatprep.subr.mxu0 0.0
    %3672 = vmatpush1.msra.mxu0 0.0
    %3673 = vmatprep.subr.mxu0 0.0
    %3674 = vmatpush1.msra.mxu0 0.0
    %3675 = vmatprep.subr.mxu0 0.0
    %3676 = vmatpush1.msra.mxu0 0.0
    %3677 = vmatprep.subr.mxu0 0.0
    %3678 = vmatpush1.msra.mxu0 0.0
    %3679 = vmatprep.subr.mxu0 0.0
    %3680 = vmatpush1.msra.mxu0 0.0
    %3681 = vmatprep.subr.mxu0 0.0
    %3682 = vmatpush1.msra.mxu0 0.0
    %3683 = vmatprep.mubr.f32.mxu0 0.0
    %3684 = vmatmul.mubr.f32.gmra.mrb[0].mxu0 %v3605
    %v3685 = vpop.f32.mrb[0].mxu0
    %v3686 = vadd.f32 0.0, %v3685
    %v3687 = vpop.f32.mrb[0].mxu0
    %v3688 = vadd.f32 0.0, %v3687
    %3689 = vmatprep.mubr.f32.mxu0 0.0
    %3690 = vmatmul.mubr.f32.gmra.mrb[0].mxu0 %v3608
    %v3691 = vpop.f32.mrb[0].mxu0
    %v3692 = vadd.f32 0.0, %v3691
    %v3693 = vpop.f32.mrb[0].mxu0
    %v3694 = vadd.f32 0.0, %v3693
    %3695 = vdwg.mxu0
    %3696 = vmatprep.subr.mxu0 0.0
    %3697 = vmatpush1.msra.mxu0 %v3597
    %3698 = vmatprep.subr.mxu0 0.0
    %3699 = vmatpush1.msra.mxu0 %v3617
    %3700 = vmatprep.subr.mxu0 0.0
    %3701 = vmatpush1.msra.mxu0 0.0
    %3702 = vmatprep.subr.mxu0 0.0
    %3703 = vmatpush1.msra.mxu0 0.0
    %3704 = vmatprep.subr.mxu0 0.0
    %3705 = vmatpush1.msra.mxu0 0.0
    %3706 = vmatprep.subr.mxu0 0.0
    %3707 = vmatpush1.msra.mxu0 0.0
    %3708 = vmatprep.subr.mxu0 0.0
    %3709 = vmatpush1.msra.mxu0 0.0
    %3710 = vmatprep.subr.mxu0 0.0
    %3711 = vmatpush1.msra.mxu0 0.0
    %3712 = vmatprep.subr.mxu0 0.0
    %3713 = vmatpush1.msra.mxu0 0.0
    %3714 = vmatprep.subr.mxu0 0.0
    %3715 = vmatpush1.msra.mxu0 0.0
    %3716 = vmatprep.subr.mxu0 0.0
    %3717 = vmatpush1.msra.mxu0 0.0
    %3718 = vmatprep.subr.mxu0 0.0
    %3719 = vmatpush1.msra.mxu0 0.0
    %3720 = vmatprep.subr.mxu0 0.0
    %3721 = vmatpush1.msra.mxu0 0.0
    %3722 = vmatprep.subr.mxu0 0.0
    %3723 = vmatpush1.msra.mxu0 0.0
    %3724 = vmatprep.subr.mxu0 0.0
    %3725 = vmatpush1.msra.mxu0 0.0
    %3726 = vmatprep.subr.mxu0 0.0
    %3727 = vmatpush1.msra.mxu0 0.0
    %3728 = vmatprep.subr.mxu0 0.0
    %3729 = vmatpush1.msra.mxu0 0.0
    %3730 = vmatprep.subr.mxu0 0.0
    %3731 = vmatpush1.msra.mxu0 0.0
    %3732 = vmatprep.subr.mxu0 0.0
    %3733 = vmatpush1.msra.mxu0 0.0
    %3734 = vmatprep.subr.mxu0 0.0
    %3735 = vmatpush1.msra.mxu0 0.0
    %3736 = vmatprep.subr.mxu0 0.0
    %3737 = vmatpush1.msra.mxu0 0.0
    %3738 = vmatprep.subr.mxu0 0.0
    %3739 = vmatpush1.msra.mxu0 0.0
    %3740 = vmatprep.subr.mxu0 0.0
    %3741 = vmatpush1.msra.mxu0 0.0
    %3742 = vmatprep.subr.mxu0 0.0
    %3743 = vmatpush1.msra.mxu0 0.0
    %3744 = vmatprep.subr.mxu0 0.0
    %3745 = vmatpush1.msra.mxu0 0.0
    %3746 = vmatprep.subr.mxu0 0.0
    %3747 = vmatpush1.msra.mxu0 0.0
    %3748 = vmatprep.subr.mxu0 0.0
    %3749 = vmatpush1.msra.mxu0 0.0
    %3750 = vmatprep.subr.mxu0 0.0
    %3751 = vmatpush1.msra.mxu0 0.0
    %3752 = vmatprep.subr.mxu0 0.0
    %3753 = vmatpush1.msra.mxu0 0.0
    %3754 = vmatprep.subr.mxu0 0.0
    %3755 = vmatpush1.msra.mxu0 0.0
    %3756 = vmatprep.subr.mxu0 0.0
    %3757 = vmatpush1.msra.mxu0 0.0
    %3758 = vmatprep.subr.mxu0 0.0
    %3759 = vmatpush1.msra.mxu0 0.0
    %3760 = vmatprep.mubr.f32.mxu0 0.0
    %3761 = vmatmul.mubr.f32.gmra.mrb[0].mxu0 %v3605
    %v3762 = vpop.f32.mrb[0].mxu0
    %v3763 = vadd.f32 0.0, %v3762
    %v3764 = vpop.f32.mrb[0].mxu0
    %3765 = vmatprep.mubr.f32.mxu0 0.0
    %3766 = vmatmul.mubr.f32.gmra.mrb[0].mxu0 %v3608
    %v3767 = vpop.f32.mrb[0].mxu0
    %v3768 = vadd.f32 0.0, %v3767
    %v3769 = vpop.f32.mrb[0].mxu0
    %3770 = vdwg.mxu0
    %v3771 = vld [vmem:[#allocation3] sm:$0xff]
    %v3772 = vld [vmem:[#allocation3 + $0x8] sm:$0xff]
    %v3773 = vld [vmem:[#allocation3 + $0x10] sm:$0xff]
    %v3774 = vld [vmem:[#allocation3 + $0x18] sm:$0xff]
    %v3775 = vld [vmem:[#allocation3 + $0x20] sm:$0xff]
    %v3776 = vld [vmem:[#allocation3 + $0x28] sm:$0xff]
    %v3777 = vld [vmem:[#allocation3 + $0x30] sm:$0xff]
    %v3778 = vld [vmem:[#allocation3 + $0x38] sm:$0xff]
    %v3779 = vld [vmem:[#allocation3 + $0x40] sm:$0xff]
    %v3780 = vld [vmem:[#allocation3 + $0x48] sm:$0xff]
    %v3781 = vld [vmem:[#allocation3 + $0x50] sm:$0xff]
    %v3782 = vld [vmem:[#allocation3 + $0x58] sm:$0xff]
    %v3783 = vld [vmem:[#allocation3 + $0x60] sm:$0xff]
    %v3784 = vld [vmem:[#allocation3 + $0x68] sm:$0xff]
    %v3785 = vld [vmem:[#allocation3 + $0x70] sm:$0xff]
    %v3786 = vld [vmem:[#allocation3 + $0x78] sm:$0xff]
    %v3787 = vld [vmem:[#allocation3 + $0x80] sm:$0xff]
    %v3788 = vld [vmem:[#allocation3 + $0x88] sm:$0xff]
    %v3789 = vld [vmem:[#allocation3 + $0x90] sm:$0xff]
    %v3790 = vld [vmem:[#allocation3 + $0x98] sm:$0xff]
    %v3791 = vld [vmem:[#allocation3 + $0xa0] sm:$0xff]
    %v3792 = vld [vmem:[#allocation3 + $0xa8] sm:$0xff]
    %v3793 = vld [vmem:[#allocation3 + $0xb0] sm:$0xff]
    %v3794 = vld [vmem:[#allocation3 + $0xb8] sm:$0xff]
    %v3795 = vld [vmem:[#allocation3 + $0xc0] sm:$0xff]
    %v3796 = vld [vmem:[#allocation3 + $0xc8] sm:$0xff]
    %v3797 = vld [vmem:[#allocation3 + $0xd0] sm:$0xff]
    %v3798 = vld [vmem:[#allocation3 + $0xd8] sm:$0xff]
    %v3799 = vld [vmem:[#allocation3 + $0xe0] sm:$0xff]
    %v3800 = vld [vmem:[#allocation3 + $0xe8] sm:$0xff]
    %v3801 = vld [vmem:[#allocation3 + $0xf0] sm:$0xff]
    %v3802 = vld [vmem:[#allocation3 + $0xf8] sm:$0xff]
    %v3803 = vld [vmem:[#allocation3 + $0x100] sm:$0xff]
    %v3804 = vld [vmem:[#allocation3 + $0x108] sm:$0xff]
    %v3805 = vld [vmem:[#allocation3 + $0x110] sm:$0xff]
    %v3806 = vld [vmem:[#allocation3 + $0x118] sm:$0xff]
    %v3807 = vld [vmem:[#allocation3 + $0x120] sm:$0xff]
    %v3808 = vld [vmem:[#allocation3 + $0x128] sm:$0xff]
    %v3809 = vld [vmem:[#allocation3 + $0x130] sm:$0xff]
    %v3810 = vld [vmem:[#allocation3 + $0x138] sm:$0xff]
    %v3811 = vld [vmem:[#allocation3 + $0x140] sm:$0xff]
    %v3812 = vld [vmem:[#allocation3 + $0x148] sm:$0xff]
    %v3813 = vld [vmem:[#allocation3 + $0x150] sm:$0xff]
    %v3814 = vld [vmem:[#allocation3 + $0x158] sm:$0xff]
    %v3815 = vld [vmem:[#allocation3 + $0x160] sm:$0xff]
    %v3816 = vld [vmem:[#allocation3 + $0x168] sm:$0xff]
    %v3817 = vld [vmem:[#allocation3 + $0x170] sm:$0xff]
    %v3818 = vld [vmem:[#allocation3 + $0x178] sm:$0xff]
    %v3819 = vld [vmem:[#allocation3 + $0x180] sm:$0xff]
    %v3820 = vld [vmem:[#allocation3 + $0x188] sm:$0xff]
    %v3821 = vld [vmem:[#allocation3 + $0x190] sm:$0xff]
    %v3822 = vld [vmem:[#allocation3 + $0x198] sm:$0xff]
    %v3823 = vld [vmem:[#allocation3 + $0x1a0] sm:$0xff]
    %v3824 = vld [vmem:[#allocation3 + $0x1a8] sm:$0xff]
    %v3825 = vld [vmem:[#allocation3 + $0x1b0] sm:$0xff]
    %v3826 = vld [vmem:[#allocation3 + $0x1b8] sm:$0xff]
    %v3827 = vld [vmem:[#allocation3 + $0x1c0] sm:$0xff]
    %v3828 = vld [vmem:[#allocation3 + $0x1c8] sm:$0xff]
    %v3829 = vld [vmem:[#allocation3 + $0x1d0] sm:$0xff]
    %v3830 = vld [vmem:[#allocation3 + $0x1d8] sm:$0xff]
    %v3831 = vld [vmem:[#allocation3 + $0x1e0] sm:$0xff]
    %v3832 = vld [vmem:[#allocation3 + $0x1e8] sm:$0xff]
    %v3833 = vld [vmem:[#allocation3 + $0x1f0] sm:$0xff]
    %v3834 = vld [vmem:[#allocation3 + $0x1f8] sm:$0xff]
    %v3835 = vld [vmem:[#allocation3 + $0x200] sm:$0xff]
    %v3836 = vld [vmem:[#allocation3 + $0x208] sm:$0xff]
    %v3837 = vld [vmem:[#allocation3 + $0x210] sm:$0xff]
    %v3838 = vld [vmem:[#allocation3 + $0x218] sm:$0xff]
    %v3839 = vld [vmem:[#allocation3 + $0x220] sm:$0xff]
    %v3840 = vld [vmem:[#allocation3 + $0x228] sm:$0xff]
    %v3841 = vld [vmem:[#allocation3 + $0x230] sm:$0xff]
    %v3842 = vld [vmem:[#allocation3 + $0x238] sm:$0xff]
    %v3843 = vld [vmem:[#allocation3 + $0x240] sm:$0xff]
    %v3844 = vld [vmem:[#allocation3 + $0x248] sm:$0xff]
    %v3845 = vld [vmem:[#allocation3 + $0x250] sm:$0xff]
    %v3846 = vld [vmem:[#allocation3 + $0x258] sm:$0xff]
    %v3847 = vld [vmem:[#allocation3 + $0x260] sm:$0xff]
    %v3848 = vld [vmem:[#allocation3 + $0x268] sm:$0xff]
    %v3849 = vld [vmem:[#allocation3 + $0x270] sm:$0xff]
    %v3850 = vld [vmem:[#allocation3 + $0x278] sm:$0xff]
    %v3851 = vld [vmem:[#allocation3 + $0x280] sm:$0xff]
    %v3852 = vld [vmem:[#allocation3 + $0x288] sm:$0xff]
    %v3853 = vld [vmem:[#allocation3 + $0x290] sm:$0xff]
    %v3854 = vld [vmem:[#allocation3 + $0x298] sm:$0xff]
    %v3855 = vld [vmem:[#allocation3 + $0x2a0] sm:$0xff]
    %v3856 = vld [vmem:[#allocation3 + $0x2a8] sm:$0xff]
    %v3857 = vld [vmem:[#allocation3 + $0x2b0] sm:$0xff]
    %v3858 = vld [vmem:[#allocation3 + $0x2b8] sm:$0xff]
    %v3859 = vld [vmem:[#allocation3 + $0x2c0] sm:$0xff]
    %v3860 = vld [vmem:[#allocation3 + $0x2c8] sm:$0xff]
    %v3861 = vld [vmem:[#allocation3 + $0x2d0] sm:$0xff]
    %v3862 = vld [vmem:[#allocation3 + $0x2d8] sm:$0xff]
    %v3863 = vld [vmem:[#allocation3 + $0x2e0] sm:$0xff]
    %v3864 = vld [vmem:[#allocation3 + $0x2e8] sm:$0xff]
    %v3865 = vld [vmem:[#allocation3 + $0x2f0] sm:$0xff]
    %v3866 = vld [vmem:[#allocation3 + $0x2f8] sm:$0xff]
    %s3867 = scalar_lea.vmem [#allocation3], 768
    %v3868 = vld [vmem:[%s3867] sm:$0xff]
    %v3869 = vld [vmem:[%s3867 + $0x8] sm:$0xff]
    %v3870 = vld [vmem:[%s3867 + $0x10] sm:$0xff]
    %v3871 = vld [vmem:[%s3867 + $0x18] sm:$0xff]
    %v3872 = vld [vmem:[%s3867 + $0x20] sm:$0xff]
    %v3873 = vld [vmem:[%s3867 + $0x28] sm:$0xff]
    %v3874 = vld [vmem:[%s3867 + $0x30] sm:$0xff]
    %v3875 = vld [vmem:[%s3867 + $0x38] sm:$0xff]
    %v3876 = vld [vmem:[%s3867 + $0x40] sm:$0xff]
    %v3877 = vld [vmem:[%s3867 + $0x48] sm:$0xff]
    %v3878 = vld [vmem:[%s3867 + $0x50] sm:$0xff]
    %v3879 = vld [vmem:[%s3867 + $0x58] sm:$0xff]
    %v3880 = vld [vmem:[%s3867 + $0x60] sm:$0xff]
    %v3881 = vld [vmem:[%s3867 + $0x68] sm:$0xff]
    %v3882 = vld [vmem:[%s3867 + $0x70] sm:$0xff]
    %v3883 = vld [vmem:[%s3867 + $0x78] sm:$0xff]
    %v3884 = vld [vmem:[%s3867 + $0x80] sm:$0xff]
    %v3885 = vld [vmem:[%s3867 + $0x88] sm:$0xff]
    %v3886 = vld [vmem:[%s3867 + $0x90] sm:$0xff]
    %v3887 = vld [vmem:[%s3867 + $0x98] sm:$0xff]
    %v3888 = vld [vmem:[%s3867 + $0xa0] sm:$0xff]
    %v3889 = vld [vmem:[%s3867 + $0xa8] sm:$0xff]
    %v3890 = vld [vmem:[%s3867 + $0xb0] sm:$0xff]
    %v3891 = vld [vmem:[%s3867 + $0xb8] sm:$0xff]
    %v3892 = vld [vmem:[%s3867 + $0xc0] sm:$0xff]
    %v3893 = vld [vmem:[%s3867 + $0xc8] sm:$0xff]
    %v3894 = vld [vmem:[%s3867 + $0xd0] sm:$0xff]
    %v3895 = vld [vmem:[%s3867 + $0xd8] sm:$0xff]
    %v3896 = vld [vmem:[%s3867 + $0xe0] sm:$0xff]
    %v3897 = vld [vmem:[%s3867 + $0xe8] sm:$0xff]
    %v3898 = vld [vmem:[%s3867 + $0xf0] sm:$0xff]
    %v3899 = vld [vmem:[%s3867 + $0xf8] sm:$0xff]
    %v3900 = vld [vmem:[%s3867 + $0x100] sm:$0xff]
    %v3901 = vld [vmem:[%s3867 + $0x108] sm:$0xff]
    %v3902 = vld [vmem:[%s3867 + $0x110] sm:$0xff]
    %v3903 = vld [vmem:[%s3867 + $0x118] sm:$0xff]
    %v3904 = vld [vmem:[%s3867 + $0x120] sm:$0xff]
    %v3905 = vld [vmem:[%s3867 + $0x128] sm:$0xff]
    %v3906 = vld [vmem:[%s3867 + $0x130] sm:$0xff]
    %v3907 = vld [vmem:[%s3867 + $0x138] sm:$0xff]
    %v3908 = vld [vmem:[%s3867 + $0x140] sm:$0xff]
    %v3909 = vld [vmem:[%s3867 + $0x148] sm:$0xff]
    %v3910 = vld [vmem:[%s3867 + $0x150] sm:$0xff]
    %v3911 = vld [vmem:[%s3867 + $0x158] sm:$0xff]
    %v3912 = vld [vmem:[%s3867 + $0x160] sm:$0xff]
    %v3913 = vld [vmem:[%s3867 + $0x168] sm:$0xff]
    %v3914 = vld [vmem:[%s3867 + $0x170] sm:$0xff]
    %v3915 = vld [vmem:[%s3867 + $0x178] sm:$0xff]
    %v3916 = vld [vmem:[%s3867 + $0x180] sm:$0xff]
    %v3917 = vld [vmem:[%s3867 + $0x188] sm:$0xff]
    %v3918 = vld [vmem:[%s3867 + $0x190] sm:$0xff]
    %v3919 = vld [vmem:[%s3867 + $0x198] sm:$0xff]
    %v3920 = vld [vmem:[%s3867 + $0x1a0] sm:$0xff]
    %v3921 = vld [vmem:[%s3867 + $0x1a8] sm:$0xff]
    %v3922 = vld [vmem:[%s3867 + $0x1b0] sm:$0xff]
    %v3923 = vld [vmem:[%s3867 + $0x1b8] sm:$0xff]
    %v3924 = vld [vmem:[%s3867 + $0x1c0] sm:$0xff]
    %v3925 = vld [vmem:[%s3867 + $0x1c8] sm:$0xff]
    %v3926 = vld [vmem:[%s3867 + $0x1d0] sm:$0xff]
    %v3927 = vld [vmem:[%s3867 + $0x1d8] sm:$0xff]
    %v3928 = vld [vmem:[%s3867 + $0x1e0] sm:$0xff]
    %v3929 = vld [vmem:[%s3867 + $0x1e8] sm:$0xff]
    %v3930 = vld [vmem:[%s3867 + $0x1f0] sm:$0xff]
    %v3931 = vld [vmem:[%s3867 + $0x1f8] sm:$0xff]
    %v3932 = vld [vmem:[%s3867 + $0x200] sm:$0xff]
    %v3933 = vld [vmem:[%s3867 + $0x208] sm:$0xff]
    %v3934 = vld [vmem:[%s3867 + $0x210] sm:$0xff]
    %v3935 = vld [vmem:[%s3867 + $0x218] sm:$0xff]
    %v3936 = vld [vmem:[%s3867 + $0x220] sm:$0xff]
    %v3937 = vld [vmem:[%s3867 + $0x228] sm:$0xff]
    %v3938 = vld [vmem:[%s3867 + $0x230] sm:$0xff]
    %v3939 = vld [vmem:[%s3867 + $0x238] sm:$0xff]
    %v3940 = vld [vmem:[%s3867 + $0x240] sm:$0xff]
    %v3941 = vld [vmem:[%s3867 + $0x248] sm:$0xff]
    %v3942 = vld [vmem:[%s3867 + $0x250] sm:$0xff]
    %v3943 = vld [vmem:[%s3867 + $0x258] sm:$0xff]
    %v3944 = vld [vmem:[%s3867 + $0x260] sm:$0xff]
    %v3945 = vld [vmem:[%s3867 + $0x268] sm:$0xff]
    %v3946 = vld [vmem:[%s3867 + $0x270] sm:$0xff]
    %v3947 = vld [vmem:[%s3867 + $0x278] sm:$0xff]
    %v3948 = vld [vmem:[%s3867 + $0x280] sm:$0xff]
    %v3949 = vld [vmem:[%s3867 + $0x288] sm:$0xff]
    %v3950 = vld [vmem:[%s3867 + $0x290] sm:$0xff]
    %v3951 = vld [vmem:[%s3867 + $0x298] sm:$0xff]
    %v3952 = vld [vmem:[%s3867 + $0x2a0] sm:$0xff]
    %v3953 = vld [vmem:[%s3867 + $0x2a8] sm:$0xff]
    %v3954 = vld [vmem:[%s3867 + $0x2b0] sm:$0xff]
    %v3955 = vld [vmem:[%s3867 + $0x2b8] sm:$0xff]
    %v3956 = vld [vmem:[%s3867 + $0x2c0] sm:$0xff]
    %v3957 = vld [vmem:[%s3867 + $0x2c8] sm:$0xff]
    %v3958 = vld [vmem:[%s3867 + $0x2d0] sm:$0xff]
    %v3959 = vld [vmem:[%s3867 + $0x2d8] sm:$0xff]
    %v3960 = vld [vmem:[%s3867 + $0x2e0] sm:$0xff]
    %v3961 = vld [vmem:[%s3867 + $0x2e8] sm:$0xff]
    %v3962 = vld [vmem:[%s3867 + $0x2f0] sm:$0xff]
    %v3963 = vld [vmem:[%s3867 + $0x2f8] sm:$0xff]
    %v3967 = vrot.slane %v3686, 4
    %v3968 = vrot.slane %v3688, 4
    %v3969 = vrot.slane %v3763, 4
    %3973 = vmatprep.subr.mxu0 %v3869
    %3974 = vmatpush1.msra.mxu0 %v3868
    %3975 = vmatprep.subr.mxu0 %v3871
    %3976 = vmatpush1.msra.mxu0 %v3870
    %3977 = vmatprep.subr.mxu0 %v3873
    %3978 = vmatpush1.msra.mxu0 %v3872
    %3979 = vmatprep.subr.mxu0 %v3875
    %3980 = vmatpush1.msra.mxu0 %v3874
    %3981 = vmatprep.subr.mxu0 %v3877
    %3982 = vmatpush1.msra.mxu0 %v3876
    %3983 = vmatprep.subr.mxu0 %v3879
    %3984 = vmatpush1.msra.mxu0 %v3878
    %3985 = vmatprep.subr.mxu0 %v3881
    %3986 = vmatpush1.msra.mxu0 %v3880
    %3987 = vmatprep.subr.mxu0 %v3883
    %3988 = vmatpush1.msra.mxu0 %v3882
    %3989 = vmatprep.subr.mxu0 %v3885
    %3990 = vmatpush1.msra.mxu0 %v3884
    %3991 = vmatprep.subr.mxu0 %v3887
    %3992 = vmatpush1.msra.mxu0 %v3886
    %3993 = vmatprep.subr.mxu0 %v3889
    %3994 = vmatpush1.msra.mxu0 %v3888
    %3995 = vmatprep.subr.mxu0 %v3891
    %3996 = vmatpush1.msra.mxu0 %v3890
    %3997 = vmatprep.subr.mxu0 %v3893
    %3998 = vmatpush1.msra.mxu0 %v3892
    %3999 = vmatprep.subr.mxu0 %v3895
    %4000 = vmatpush1.msra.mxu0 %v3894
    %4001 = vmatprep.subr.mxu0 %v3897
    %4002 = vmatpush1.msra.mxu0 %v3896
    %4003 = vmatprep.subr.mxu0 %v3899
    %4004 = vmatpush1.msra.mxu0 %v3898
    %4005 = vmatprep.subr.mxu0 %v3901
    %4006 = vmatpush1.msra.mxu0 %v3900
    %4007 = vmatprep.subr.mxu0 %v3903
    %4008 = vmatpush1.msra.mxu0 %v3902
    %4009 = vmatprep.subr.mxu0 %v3905
    %4010 = vmatpush1.msra.mxu0 %v3904
    %4011 = vmatprep.subr.mxu0 %v3907
    %4012 = vmatpush1.msra.mxu0 %v3906
    %4013 = vmatprep.subr.mxu0 %v3909
    %4014 = vmatpush1.msra.mxu0 %v3908
    %4015 = vmatprep.subr.mxu0 %v3911
    %4016 = vmatpush1.msra.mxu0 %v3910
    %4017 = vmatprep.subr.mxu0 %v3913
    %4018 = vmatpush1.msra.mxu0 %v3912
    %4019 = vmatprep.subr.mxu0 %v3915
    %4020 = vmatpush1.msra.mxu0 %v3914
    %4021 = vmatprep.subr.mxu0 %v3917
    %4022 = vmatpush1.msra.mxu0 %v3916
    %4023 = vmatprep.subr.mxu0 %v3919
    %4024 = vmatpush1.msra.mxu0 %v3918
    %4025 = vmatprep.subr.mxu0 %v3921
    %4026 = vmatpush1.msra.mxu0 %v3920
    %4027 = vmatprep.subr.mxu0 %v3923
    %4028 = vmatpush1.msra.mxu0 %v3922
    %4029 = vmatprep.subr.mxu0 %v3925
    %4030 = vmatpush1.msra.mxu0 %v3924
    %4031 = vmatprep.subr.mxu0 %v3927
    %4032 = vmatpush1.msra.mxu0 %v3926
    %4033 = vmatprep.subr.mxu0 %v3929
    %4034 = vmatpush1.msra.mxu0 %v3928
    %4035 = vmatprep.subr.mxu0 %v3931
    %4036 = vmatpush1.msra.mxu0 %v3930
    %4037 = vmatprep.mubr.f32.mxu0 %v3968
    %4038 = vmatmul.mubr.f32.gmra.mrb[0].mxu0 %v3967
    %v4039 = vpop.f32.mrb[0].mxu0
    %v4040 = vadd.f32 0.0, %v4039
    %v4041 = vpop.f32.mrb[0].mxu0
    %v4042 = vadd.f32 0.0, %v4041
    %4043 = vdwg.mxu0
    %4044 = vmatprep.subr.mxu0 %v3933
    %4045 = vmatpush1.msra.mxu0 %v3932
    %4046 = vmatprep.subr.mxu0 %v3935
    %4047 = vmatpush1.msra.mxu0 %v3934
    %4048 = vmatprep.subr.mxu0 %v3937
    %4049 = vmatpush1.msra.mxu0 %v3936
    %4050 = vmatprep.subr.mxu0 %v3939
    %4051 = vmatpush1.msra.mxu0 %v3938
    %4052 = vmatprep.subr.mxu0 %v3941
    %4053 = vmatpush1.msra.mxu0 %v3940
    %4054 = vmatprep.subr.mxu0 %v3943
    %4055 = vmatpush1.msra.mxu0 %v3942
    %4056 = vmatprep.subr.mxu0 %v3945
    %4057 = vmatpush1.msra.mxu0 %v3944
    %4058 = vmatprep.subr.mxu0 %v3947
    %4059 = vmatpush1.msra.mxu0 %v3946
    %4060 = vmatprep.subr.mxu0 %v3949
    %4061 = vmatpush1.msra.mxu0 %v3948
    %4062 = vmatprep.subr.mxu0 %v3951
    %4063 = vmatpush1.msra.mxu0 %v3950
    %4064 = vmatprep.subr.mxu0 %v3953
    %4065 = vmatpush1.msra.mxu0 %v3952
    %4066 = vmatprep.subr.mxu0 %v3955
    %4067 = vmatpush1.msra.mxu0 %v3954
    %4068 = vmatprep.subr.mxu0 %v3957
    %4069 = vmatpush1.msra.mxu0 %v3956
    %4070 = vmatprep.subr.mxu0 %v3959
    %4071 = vmatpush1.msra.mxu0 %v3958
    %4072 = vmatprep.subr.mxu0 %v3961
    %4073 = vmatpush1.msra.mxu0 %v3960
    %4074 = vmatprep.subr.mxu0 %v3963
    %4075 = vmatpush1.msra.mxu0 %v3962
    %4076 = vmatprep.subr.mxu0 0.0
    %4077 = vmatpush1.msra.mxu0 0.0
    %4078 = vmatprep.subr.mxu0 0.0
    %4079 = vmatpush1.msra.mxu0 0.0
    %4080 = vmatprep.subr.mxu0 0.0
    %4081 = vmatpush1.msra.mxu0 0.0
    %4082 = vmatprep.subr.mxu0 0.0
    %4083 = vmatpush1.msra.mxu0 0.0
    %4084 = vmatprep.subr.mxu0 0.0
    %4085 = vmatpush1.msra.mxu0 0.0
    %4086 = vmatprep.subr.mxu0 0.0
    %4087 = vmatpush1.msra.mxu0 0.0
    %4088 = vmatprep.subr.mxu0 0.0
    %4089 = vmatpush1.msra.mxu0 0.0
    %4090 = vmatprep.subr.mxu0 0.0
    %4091 = vmatpush1.msra.mxu0 0.0
    %4092 = vmatprep.subr.mxu0 0.0
    %4093 = vmatpush1.msra.mxu0 0.0
    %4094 = vmatprep.subr.mxu0 0.0
    %4095 = vmatpush1.msra.mxu0 0.0
    %4096 = vmatprep.subr.mxu0 0.0
    %4097 = vmatpush1.msra.mxu0 0.0
    %4098 = vmatprep.subr.mxu0 0.0
    %4099 = vmatpush1.msra.mxu0 0.0
    %4100 = vmatprep.subr.mxu0 0.0
    %4101 = vmatpush1.msra.mxu0 0.0
    %4102 = vmatprep.subr.mxu0 0.0
    %4103 = vmatpush1.msra.mxu0 0.0
    %4104 = vmatprep.subr.mxu0 0.0
    %4105 = vmatpush1.msra.mxu0 0.0
    %4106 = vmatprep.subr.mxu0 0.0
    %4107 = vmatpush1.msra.mxu0 0.0
    %4108 = vmatprep.mubr.f32.mxu0 0.0
    %4109 = vmatmul.mubr.f32.gmra.mrb[0].mxu0 %v3969
    %v4110 = vpop.f32.mrb[0].mxu0
    %v4111 = vadd.f32 %v4040, %v4110
    %v4112 = vpop.f32.mrb[0].mxu0
    %v4113 = vadd.f32 %v4042, %v4112
    %4114 = vdwg.mxu0
    %4115 = vmatprep.subr.mxu0 %v3772
    %4116 = vmatpush1.msra.mxu0 %v3771
    %4117 = vmatprep.subr.mxu0 %v3774
    %4118 = vmatpush1.msra.mxu0 %v3773
    %4119 = vmatprep.subr.mxu0 %v3776
    %4120 = vmatpush1.msra.mxu0 %v3775
    %4121 = vmatprep.subr.mxu0 %v3778
    %4122 = vmatpush1.msra.mxu0 %v3777
    %4123 = vmatprep.subr.mxu0 %v3780
    %4124 = vmatpush1.msra.mxu0 %v3779
    %4125 = vmatprep.subr.mxu0 %v3782
    %4126 = vmatpush1.msra.mxu0 %v3781
    %4127 = vmatprep.subr.mxu0 %v3784
    %4128 = vmatpush1.msra.mxu0 %v3783
    %4129 = vmatprep.subr.mxu0 %v3786
    %4130 = vmatpush1.msra.mxu0 %v3785
    %4131 = vmatprep.subr.mxu0 %v3788
    %4132 = vmatpush1.msra.mxu0 %v3787
    %4133 = vmatprep.subr.mxu0 %v3790
    %4134 = vmatpush1.msra.mxu0 %v3789
    %4135 = vmatprep.subr.mxu0 %v3792
    %4136 = vmatpush1.msra.mxu0 %v3791
    %4137 = vmatprep.subr.mxu0 %v3794
    %4138 = vmatpush1.msra.mxu0 %v3793
    %4139 = vmatprep.subr.mxu0 %v3796
    %4140 = vmatpush1.msra.mxu0 %v3795
    %4141 = vmatprep.subr.mxu0 %v3798
    %4142 = vmatpush1.msra.mxu0 %v3797
    %4143 = vmatprep.subr.mxu0 %v3800
    %4144 = vmatpush1.msra.mxu0 %v3799
    %4145 = vmatprep.subr.mxu0 %v3802
    %4146 = vmatpush1.msra.mxu0 %v3801
    %4147 = vmatprep.subr.mxu0 %v3804
    %4148 = vmatpush1.msra.mxu0 %v3803
    %4149 = vmatprep.subr.mxu0 %v3806
    %4150 = vmatpush1.msra.mxu0 %v3805
    %4151 = vmatprep.subr.mxu0 %v3808
    %4152 = vmatpush1.msra.mxu0 %v3807
    %4153 = vmatprep.subr.mxu0 %v3810
    %4154 = vmatpush1.msra.mxu0 %v3809
    %4155 = vmatprep.subr.mxu0 %v3812
    %4156 = vmatpush1.msra.mxu0 %v3811
    %4157 = vmatprep.subr.mxu0 %v3814
    %4158 = vmatpush1.msra.mxu0 %v3813
    %4159 = vmatprep.subr.mxu0 %v3816
    %4160 = vmatpush1.msra.mxu0 %v3815
    %4161 = vmatprep.subr.mxu0 %v3818
    %4162 = vmatpush1.msra.mxu0 %v3817
    %4163 = vmatprep.subr.mxu0 %v3820
    %4164 = vmatpush1.msra.mxu0 %v3819
    %4165 = vmatprep.subr.mxu0 %v3822
    %4166 = vmatpush1.msra.mxu0 %v3821
    %4167 = vmatprep.subr.mxu0 %v3824
    %4168 = vmatpush1.msra.mxu0 %v3823
    %4169 = vmatprep.subr.mxu0 %v3826
    %4170 = vmatpush1.msra.mxu0 %v3825
    %4171 = vmatprep.subr.mxu0 %v3828
    %4172 = vmatpush1.msra.mxu0 %v3827
    %4173 = vmatprep.subr.mxu0 %v3830
    %4174 = vmatpush1.msra.mxu0 %v3829
    %4175 = vmatprep.subr.mxu0 %v3832
    %4176 = vmatpush1.msra.mxu0 %v3831
    %4177 = vmatprep.subr.mxu0 %v3834
    %4178 = vmatpush1.msra.mxu0 %v3833
    %4179 = vmatprep.mubr.f32.mxu0 %v3688
    %4180 = vmatmul.mubr.f32.gmra.mrb[0].mxu0 %v3686
    %v4181 = vpop.f32.mrb[0].mxu0
    %v4182 = vadd.f32 %v4111, %v4181
    %v4183 = vpop.f32.mrb[0].mxu0
    %v4184 = vadd.f32 %v4113, %v4183
    %4185 = vdwg.mxu0
    %4186 = vmatprep.subr.mxu0 %v3836
    %4187 = vmatpush1.msra.mxu0 %v3835
    %4188 = vmatprep.subr.mxu0 %v3838
    %4189 = vmatpush1.msra.mxu0 %v3837
    %4190 = vmatprep.subr.mxu0 %v3840
    %4191 = vmatpush1.msra.mxu0 %v3839
    %4192 = vmatprep.subr.mxu0 %v3842
    %4193 = vmatpush1.msra.mxu0 %v3841
    %4194 = vmatprep.subr.mxu0 %v3844
    %4195 = vmatpush1.msra.mxu0 %v3843
    %4196 = vmatprep.subr.mxu0 %v3846
    %4197 = vmatpush1.msra.mxu0 %v3845
    %4198 = vmatprep.subr.mxu0 %v3848
    %4199 = vmatpush1.msra.mxu0 %v3847
    %4200 = vmatprep.subr.mxu0 %v3850
    %4201 = vmatpush1.msra.mxu0 %v3849
    %4202 = vmatprep.subr.mxu0 %v3852
    %4203 = vmatpush1.msra.mxu0 %v3851
    %4204 = vmatprep.subr.mxu0 %v3854
    %4205 = vmatpush1.msra.mxu0 %v3853
    %4206 = vmatprep.subr.mxu0 %v3856
    %4207 = vmatpush1.msra.mxu0 %v3855
    %4208 = vmatprep.subr.mxu0 %v3858
    %4209 = vmatpush1.msra.mxu0 %v3857
    %4210 = vmatprep.subr.mxu0 %v3860
    %4211 = vmatpush1.msra.mxu0 %v3859
    %4212 = vmatprep.subr.mxu0 %v3862
    %4213 = vmatpush1.msra.mxu0 %v3861
    %4214 = vmatprep.subr.mxu0 %v3864
    %4215 = vmatpush1.msra.mxu0 %v3863
    %4216 = vmatprep.subr.mxu0 %v3866
    %4217 = vmatpush1.msra.mxu0 %v3865
    %4218 = vmatprep.subr.mxu0 0.0
    %4219 = vmatpush1.msra.mxu0 0.0
    %4220 = vmatprep.subr.mxu0 0.0
    %4221 = vmatpush1.msra.mxu0 0.0
    %4222 = vmatprep.subr.mxu0 0.0
    %4223 = vmatpush1.msra.mxu0 0.0
    %4224 = vmatprep.subr.mxu0 0.0
    %4225 = vmatpush1.msra.mxu0 0.0
    %4226 = vmatprep.subr.mxu0 0.0
    %4227 = vmatpush1.msra.mxu0 0.0
    %4228 = vmatprep.subr.mxu0 0.0
    %4229 = vmatpush1.msra.mxu0 0.0
    %4230 = vmatprep.subr.mxu0 0.0
    %4231 = vmatpush1.msra.mxu0 0.0
    %4232 = vmatprep.subr.mxu0 0.0
    %4233 = vmatpush1.msra.mxu0 0.0
    %4234 = vmatprep.subr.mxu0 0.0
    %4235 = vmatpush1.msra.mxu0 0.0
    %4236 = vmatprep.subr.mxu0 0.0
    %4237 = vmatpush1.msra.mxu0 0.0
    %4238 = vmatprep.subr.mxu0 0.0
    %4239 = vmatpush1.msra.mxu0 0.0
    %4240 = vmatprep.subr.mxu0 0.0
    %4241 = vmatpush1.msra.mxu0 0.0
    %4242 = vmatprep.subr.mxu0 0.0
    %4243 = vmatpush1.msra.mxu0 0.0
    %4244 = vmatprep.subr.mxu0 0.0
    %4245 = vmatpush1.msra.mxu0 0.0
    %4246 = vmatprep.subr.mxu0 0.0
    %4247 = vmatpush1.msra.mxu0 0.0
    %4248 = vmatprep.subr.mxu0 0.0
    %4249 = vmatpush1.msra.mxu0 0.0
    %4250 = vmatprep.mubr.f32.mxu0 0.0
    %4251 = vmatmul.mubr.f32.gmra.mrb[0].mxu0 %v3763
    %v4252 = vpop.f32.mrb[0].mxu0
    %v4253 = vadd.f32 %v4182, %v4252
    %v4254 = vpop.f32.mrb[0].mxu0
    %v4255 = vadd.f32 %v4184, %v4254
    %4256 = vdwg.mxu0
    %s4257 = scalar_lea.vmem [#allocation3], 1536
    %v4258 = vld [vmem:[%s4257] sm:$0xff]
    %v4259 = vld [vmem:[%s4257 + $0x8] sm:$0xff]
    %v4260 = vld [vmem:[%s4257 + $0x10] sm:$0xff]
    %v4261 = vld [vmem:[%s4257 + $0x18] sm:$0xff]
    %v4262 = vld [vmem:[%s4257 + $0x20] sm:$0xff]
    %v4263 = vld [vmem:[%s4257 + $0x28] sm:$0xff]
    %v4264 = vld [vmem:[%s4257 + $0x30] sm:$0xff]
    %v4265 = vld [vmem:[%s4257 + $0x38] sm:$0xff]
    %v4266 = vld [vmem:[%s4257 + $0x40] sm:$0xff]
    %v4267 = vld [vmem:[%s4257 + $0x48] sm:$0xff]
    %v4268 = vld [vmem:[%s4257 + $0x50] sm:$0xff]
    %v4269 = vld [vmem:[%s4257 + $0x58] sm:$0xff]
    %v4270 = vld [vmem:[%s4257 + $0x60] sm:$0xff]
    %v4271 = vld [vmem:[%s4257 + $0x68] sm:$0xff]
    %v4272 = vld [vmem:[%s4257 + $0x70] sm:$0xff]
    %v4273 = vld [vmem:[%s4257 + $0x78] sm:$0xff]
    %v4274 = vld [vmem:[%s4257 + $0x80] sm:$0xff]
    %v4275 = vld [vmem:[%s4257 + $0x88] sm:$0xff]
    %v4276 = vld [vmem:[%s4257 + $0x90] sm:$0xff]
    %v4277 = vld [vmem:[%s4257 + $0x98] sm:$0xff]
    %v4278 = vld [vmem:[%s4257 + $0xa0] sm:$0xff]
    %v4279 = vld [vmem:[%s4257 + $0xa8] sm:$0xff]
    %v4280 = vld [vmem:[%s4257 + $0xb0] sm:$0xff]
    %v4281 = vld [vmem:[%s4257 + $0xb8] sm:$0xff]
    %v4282 = vld [vmem:[%s4257 + $0xc0] sm:$0xff]
    %v4283 = vld [vmem:[%s4257 + $0xc8] sm:$0xff]
    %v4284 = vld [vmem:[%s4257 + $0xd0] sm:$0xff]
    %v4285 = vld [vmem:[%s4257 + $0xd8] sm:$0xff]
    %v4286 = vld [vmem:[%s4257 + $0xe0] sm:$0xff]
    %v4287 = vld [vmem:[%s4257 + $0xe8] sm:$0xff]
    %v4288 = vld [vmem:[%s4257 + $0xf0] sm:$0xff]
    %v4289 = vld [vmem:[%s4257 + $0xf8] sm:$0xff]
    %v4290 = vld [vmem:[%s4257 + $0x100] sm:$0xff]
    %v4291 = vld [vmem:[%s4257 + $0x108] sm:$0xff]
    %v4292 = vld [vmem:[%s4257 + $0x110] sm:$0xff]
    %v4293 = vld [vmem:[%s4257 + $0x118] sm:$0xff]
    %v4294 = vld [vmem:[%s4257 + $0x120] sm:$0xff]
    %v4295 = vld [vmem:[%s4257 + $0x128] sm:$0xff]
    %v4296 = vld [vmem:[%s4257 + $0x130] sm:$0xff]
    %v4297 = vld [vmem:[%s4257 + $0x138] sm:$0xff]
    %v4298 = vld [vmem:[%s4257 + $0x140] sm:$0xff]
    %v4299 = vld [vmem:[%s4257 + $0x148] sm:$0xff]
    %v4300 = vld [vmem:[%s4257 + $0x150] sm:$0xff]
    %v4301 = vld [vmem:[%s4257 + $0x158] sm:$0xff]
    %v4302 = vld [vmem:[%s4257 + $0x160] sm:$0xff]
    %v4303 = vld [vmem:[%s4257 + $0x168] sm:$0xff]
    %v4304 = vld [vmem:[%s4257 + $0x170] sm:$0xff]
    %v4305 = vld [vmem:[%s4257 + $0x178] sm:$0xff]
    %v4306 = vld [vmem:[%s4257 + $0x180] sm:$0xff]
    %v4307 = vld [vmem:[%s4257 + $0x188] sm:$0xff]
    %v4308 = vld [vmem:[%s4257 + $0x190] sm:$0xff]
    %v4309 = vld [vmem:[%s4257 + $0x198] sm:$0xff]
    %v4310 = vld [vmem:[%s4257 + $0x1a0] sm:$0xff]
    %v4311 = vld [vmem:[%s4257 + $0x1a8] sm:$0xff]
    %v4312 = vld [vmem:[%s4257 + $0x1b0] sm:$0xff]
    %v4313 = vld [vmem:[%s4257 + $0x1b8] sm:$0xff]
    %v4314 = vld [vmem:[%s4257 + $0x1c0] sm:$0xff]
    %v4315 = vld [vmem:[%s4257 + $0x1c8] sm:$0xff]
    %v4316 = vld [vmem:[%s4257 + $0x1d0] sm:$0xff]
    %v4317 = vld [vmem:[%s4257 + $0x1d8] sm:$0xff]
    %v4318 = vld [vmem:[%s4257 + $0x1e0] sm:$0xff]
    %v4319 = vld [vmem:[%s4257 + $0x1e8] sm:$0xff]
    %v4320 = vld [vmem:[%s4257 + $0x1f0] sm:$0xff]
    %v4321 = vld [vmem:[%s4257 + $0x1f8] sm:$0xff]
    %v4322 = vld [vmem:[%s4257 + $0x200] sm:$0xff]
    %v4323 = vld [vmem:[%s4257 + $0x208] sm:$0xff]
    %v4324 = vld [vmem:[%s4257 + $0x210] sm:$0xff]
    %v4325 = vld [vmem:[%s4257 + $0x218] sm:$0xff]
    %v4326 = vld [vmem:[%s4257 + $0x220] sm:$0xff]
    %v4327 = vld [vmem:[%s4257 + $0x228] sm:$0xff]
    %v4328 = vld [vmem:[%s4257 + $0x230] sm:$0xff]
    %v4329 = vld [vmem:[%s4257 + $0x238] sm:$0xff]
    %v4330 = vld [vmem:[%s4257 + $0x240] sm:$0xff]
    %v4331 = vld [vmem:[%s4257 + $0x248] sm:$0xff]
    %v4332 = vld [vmem:[%s4257 + $0x250] sm:$0xff]
    %v4333 = vld [vmem:[%s4257 + $0x258] sm:$0xff]
    %v4334 = vld [vmem:[%s4257 + $0x260] sm:$0xff]
    %v4335 = vld [vmem:[%s4257 + $0x268] sm:$0xff]
    %v4336 = vld [vmem:[%s4257 + $0x270] sm:$0xff]
    %v4337 = vld [vmem:[%s4257 + $0x278] sm:$0xff]
    %v4338 = vld [vmem:[%s4257 + $0x280] sm:$0xff]
    %v4339 = vld [vmem:[%s4257 + $0x288] sm:$0xff]
    %v4340 = vld [vmem:[%s4257 + $0x290] sm:$0xff]
    %v4341 = vld [vmem:[%s4257 + $0x298] sm:$0xff]
    %v4342 = vld [vmem:[%s4257 + $0x2a0] sm:$0xff]
    %v4343 = vld [vmem:[%s4257 + $0x2a8] sm:$0xff]
    %v4344 = vld [vmem:[%s4257 + $0x2b0] sm:$0xff]
    %v4345 = vld [vmem:[%s4257 + $0x2b8] sm:$0xff]
    %v4346 = vld [vmem:[%s4257 + $0x2c0] sm:$0xff]
    %v4347 = vld [vmem:[%s4257 + $0x2c8] sm:$0xff]
    %v4348 = vld [vmem:[%s4257 + $0x2d0] sm:$0xff]
    %v4349 = vld [vmem:[%s4257 + $0x2d8] sm:$0xff]
    %v4350 = vld [vmem:[%s4257 + $0x2e0] sm:$0xff]
    %v4351 = vld [vmem:[%s4257 + $0x2e8] sm:$0xff]
    %v4352 = vld [vmem:[%s4257 + $0x2f0] sm:$0xff]
    %v4353 = vld [vmem:[%s4257 + $0x2f8] sm:$0xff]
    %4354 = vmatprep.subr.mxu0 %v4259
    %4355 = vmatpush1.msra.mxu0 %v4258
    %4356 = vmatprep.subr.mxu0 %v4261
    %4357 = vmatpush1.msra.mxu0 %v4260
    %4358 = vmatprep.subr.mxu0 %v4263
    %4359 = vmatpush1.msra.mxu0 %v4262
    %4360 = vmatprep.subr.mxu0 %v4265
    %4361 = vmatpush1.msra.mxu0 %v4264
    %4362 = vmatprep.subr.mxu0 %v4267
    %4363 = vmatpush1.msra.mxu0 %v4266
    %4364 = vmatprep.subr.mxu0 %v4269
    %4365 = vmatpush1.msra.mxu0 %v4268
    %4366 = vmatprep.subr.mxu0 %v4271
    %4367 = vmatpush1.msra.mxu0 %v4270
    %4368 = vmatprep.subr.mxu0 %v4273
    %4369 = vmatpush1.msra.mxu0 %v4272
    %4370 = vmatprep.subr.mxu0 %v4275
    %4371 = vmatpush1.msra.mxu0 %v4274
    %4372 = vmatprep.subr.mxu0 %v4277
    %4373 = vmatpush1.msra.mxu0 %v4276
    %4374 = vmatprep.subr.mxu0 %v4279
    %4375 = vmatpush1.msra.mxu0 %v4278
    %4376 = vmatprep.subr.mxu0 %v4281
    %4377 = vmatpush1.msra.mxu0 %v4280
    %4378 = vmatprep.subr.mxu0 %v4283
    %4379 = vmatpush1.msra.mxu0 %v4282
    %4380 = vmatprep.subr.mxu0 %v4285
    %4381 = vmatpush1.msra.mxu0 %v4284
    %4382 = vmatprep.subr.mxu0 %v4287
    %4383 = vmatpush1.msra.mxu0 %v4286
    %4384 = vmatprep.subr.mxu0 %v4289
    %4385 = vmatpush1.msra.mxu0 %v4288
    %4386 = vmatprep.subr.mxu0 %v4291
    %4387 = vmatpush1.msra.mxu0 %v4290
    %4388 = vmatprep.subr.mxu0 %v4293
    %4389 = vmatpush1.msra.mxu0 %v4292
    %4390 = vmatprep.subr.mxu0 %v4295
    %4391 = vmatpush1.msra.mxu0 %v4294
    %4392 = vmatprep.subr.mxu0 %v4297
    %4393 = vmatpush1.msra.mxu0 %v4296
    %4394 = vmatprep.subr.mxu0 %v4299
    %4395 = vmatpush1.msra.mxu0 %v4298
    %4396 = vmatprep.subr.mxu0 %v4301
    %4397 = vmatpush1.msra.mxu0 %v4300
    %4398 = vmatprep.subr.mxu0 %v4303
    %4399 = vmatpush1.msra.mxu0 %v4302
    %4400 = vmatprep.subr.mxu0 %v4305
    %4401 = vmatpush1.msra.mxu0 %v4304
    %4402 = vmatprep.subr.mxu0 %v4307
    %4403 = vmatpush1.msra.mxu0 %v4306
    %4404 = vmatprep.subr.mxu0 %v4309
    %4405 = vmatpush1.msra.mxu0 %v4308
    %4406 = vmatprep.subr.mxu0 %v4311
    %4407 = vmatpush1.msra.mxu0 %v4310
    %4408 = vmatprep.subr.mxu0 %v4313
    %4409 = vmatpush1.msra.mxu0 %v4312
    %4410 = vmatprep.subr.mxu0 %v4315
    %4411 = vmatpush1.msra.mxu0 %v4314
    %4412 = vmatprep.subr.mxu0 %v4317
    %4413 = vmatpush1.msra.mxu0 %v4316
    %4414 = vmatprep.subr.mxu0 %v4319
    %4415 = vmatpush1.msra.mxu0 %v4318
    %4416 = vmatprep.subr.mxu0 %v4321
    %4417 = vmatpush1.msra.mxu0 %v4320
    %4418 = vmatprep.mubr.f32.mxu0 %v3694
    %4419 = vmatmul.mubr.f32.gmra.mrb[0].mxu0 %v3692
    %v4420 = vpop.f32.mrb[0].mxu0
    %v4421 = vadd.f32 0.0, %v4420
    %v4422 = vpop.f32.mrb[0].mxu0
    %v4423 = vadd.f32 0.0, %v4422
    %4424 = vdwg.mxu0
    %4425 = vmatprep.subr.mxu0 %v4323
    %4426 = vmatpush1.msra.mxu0 %v4322
    %4427 = vmatprep.subr.mxu0 %v4325
    %4428 = vmatpush1.msra.mxu0 %v4324
    %4429 = vmatprep.subr.mxu0 %v4327
    %4430 = vmatpush1.msra.mxu0 %v4326
    %4431 = vmatprep.subr.mxu0 %v4329
    %4432 = vmatpush1.msra.mxu0 %v4328
    %4433 = vmatprep.subr.mxu0 %v4331
    %4434 = vmatpush1.msra.mxu0 %v4330
    %4435 = vmatprep.subr.mxu0 %v4333
    %4436 = vmatpush1.msra.mxu0 %v4332
    %4437 = vmatprep.subr.mxu0 %v4335
    %4438 = vmatpush1.msra.mxu0 %v4334
    %4439 = vmatprep.subr.mxu0 %v4337
    %4440 = vmatpush1.msra.mxu0 %v4336
    %4441 = vmatprep.subr.mxu0 %v4339
    %4442 = vmatpush1.msra.mxu0 %v4338
    %4443 = vmatprep.subr.mxu0 %v4341
    %4444 = vmatpush1.msra.mxu0 %v4340
    %4445 = vmatprep.subr.mxu0 %v4343
    %4446 = vmatpush1.msra.mxu0 %v4342
    %4447 = vmatprep.subr.mxu0 %v4345
    %4448 = vmatpush1.msra.mxu0 %v4344
    %4449 = vmatprep.subr.mxu0 %v4347
    %4450 = vmatpush1.msra.mxu0 %v4346
    %4451 = vmatprep.subr.mxu0 %v4349
    %4452 = vmatpush1.msra.mxu0 %v4348
    %4453 = vmatprep.subr.mxu0 %v4351
    %4454 = vmatpush1.msra.mxu0 %v4350
    %4455 = vmatprep.subr.mxu0 %v4353
    %4456 = vmatpush1.msra.mxu0 %v4352
    %4457 = vmatprep.subr.mxu0 0.0
    %4458 = vmatpush1.msra.mxu0 0.0
    %4459 = vmatprep.subr.mxu0 0.0
    %4460 = vmatpush1.msra.mxu0 0.0
    %4461 = vmatprep.subr.mxu0 0.0
    %4462 = vmatpush1.msra.mxu0 0.0
    %4463 = vmatprep.subr.mxu0 0.0
    %4464 = vmatpush1.msra.mxu0 0.0
    %4465 = vmatprep.subr.mxu0 0.0
    %4466 = vmatpush1.msra.mxu0 0.0
    %4467 = vmatprep.subr.mxu0 0.0
    %4468 = vmatpush1.msra.mxu0 0.0
    %4469 = vmatprep.subr.mxu0 0.0
    %4470 = vmatpush1.msra.mxu0 0.0
    %4471 = vmatprep.subr.mxu0 0.0
    %4472 = vmatpush1.msra.mxu0 0.0
    %4473 = vmatprep.subr.mxu0 0.0
    %4474 = vmatpush1.msra.mxu0 0.0
    %4475 = vmatprep.subr.mxu0 0.0
    %4476 = vmatpush1.msra.mxu0 0.0
    %4477 = vmatprep.subr.mxu0 0.0
    %4478 = vmatpush1.msra.mxu0 0.0
    %4479 = vmatprep.subr.mxu0 0.0
    %4480 = vmatpush1.msra.mxu0 0.0
    %4481 = vmatprep.subr.mxu0 0.0
    %4482 = vmatpush1.msra.mxu0 0.0
    %4483 = vmatprep.subr.mxu0 0.0
    %4484 = vmatpush1.msra.mxu0 0.0
    %4485 = vmatprep.subr.mxu0 0.0
    %4486 = vmatpush1.msra.mxu0 0.0
    %4487 = vmatprep.subr.mxu0 0.0
    %4488 = vmatpush1.msra.mxu0 0.0
    %4489 = vmatprep.mubr.f32.mxu0 0.0
    %4490 = vmatmul.mubr.f32.gmra.mrb[0].mxu0 %v3768
    %v4491 = vpop.f32.mrb[0].mxu0
    %v4492 = vadd.f32 %v4421, %v4491
    %v4493 = vpop.f32.mrb[0].mxu0
    %v4494 = vadd.f32 %v4423, %v4493
    %4495 = vdwg.mxu0
    %v4496 = vadd.f32 %v4253, %v4492
    %v4497 = vadd.f32 %v4255, %v4494
    %s4498 = scalar_lea.vmem [#allocation3], 2304
    %v4499 = vld [vmem:[%s4498] sm:$0xff]
    %v4500 = vld [vmem:[%s4498 + $0x8] sm:$0xff]
    %v4501 = vld [vmem:[%s4498 + $0x10] sm:$0xff]
    %v4502 = vld [vmem:[%s4498 + $0x18] sm:$0xff]
    %v4503 = vld [vmem:[%s4498 + $0x20] sm:$0xff]
    %v4504 = vld [vmem:[%s4498 + $0x28] sm:$0xff]
    %v4505 = vld [vmem:[%s4498 + $0x30] sm:$0xff]
    %v4506 = vld [vmem:[%s4498 + $0x38] sm:$0xff]
    %v4507 = vld [vmem:[%s4498 + $0x40] sm:$0xff]
    %v4508 = vld [vmem:[%s4498 + $0x48] sm:$0xff]
    %v4509 = vld [vmem:[%s4498 + $0x50] sm:$0xff]
    %v4510 = vld [vmem:[%s4498 + $0x58] sm:$0xff]
    %v4511 = vld [vmem:[%s4498 + $0x60] sm:$0xff]
    %v4512 = vld [vmem:[%s4498 + $0x68] sm:$0xff]
    %v4513 = vld [vmem:[%s4498 + $0x70] sm:$0xff]
    %v4514 = vld [vmem:[%s4498 + $0x78] sm:$0xff]
    %v4515 = vld [vmem:[%s4498 + $0x80] sm:$0xff]
    %v4516 = vld [vmem:[%s4498 + $0x88] sm:$0xff]
    %v4517 = vld [vmem:[%s4498 + $0x90] sm:$0xff]
    %v4518 = vld [vmem:[%s4498 + $0x98] sm:$0xff]
    %v4519 = vld [vmem:[%s4498 + $0xa0] sm:$0xff]
    %v4520 = vld [vmem:[%s4498 + $0xa8] sm:$0xff]
    %v4521 = vld [vmem:[%s4498 + $0xb0] sm:$0xff]
    %v4522 = vld [vmem:[%s4498 + $0xb8] sm:$0xff]
    %v4523 = vld [vmem:[%s4498 + $0xc0] sm:$0xff]
    %v4524 = vld [vmem:[%s4498 + $0xc8] sm:$0xff]
    %v4525 = vld [vmem:[%s4498 + $0xd0] sm:$0xff]
    %v4526 = vld [vmem:[%s4498 + $0xd8] sm:$0xff]
    %v4527 = vld [vmem:[%s4498 + $0xe0] sm:$0xff]
    %v4528 = vld [vmem:[%s4498 + $0xe8] sm:$0xff]
    %v4529 = vld [vmem:[%s4498 + $0xf0] sm:$0xff]
    %v4530 = vld [vmem:[%s4498 + $0xf8] sm:$0xff]
    %v4531 = vld [vmem:[%s4498 + $0x100] sm:$0xff]
    %v4532 = vld [vmem:[%s4498 + $0x108] sm:$0xff]
    %v4533 = vld [vmem:[%s4498 + $0x110] sm:$0xff]
    %v4534 = vld [vmem:[%s4498 + $0x118] sm:$0xff]
    %v4535 = vld [vmem:[%s4498 + $0x120] sm:$0xff]
    %v4536 = vld [vmem:[%s4498 + $0x128] sm:$0xff]
    %v4537 = vld [vmem:[%s4498 + $0x130] sm:$0xff]
    %v4538 = vld [vmem:[%s4498 + $0x138] sm:$0xff]
    %v4539 = vld [vmem:[%s4498 + $0x140] sm:$0xff]
    %v4540 = vld [vmem:[%s4498 + $0x148] sm:$0xff]
    %v4541 = vld [vmem:[%s4498 + $0x150] sm:$0xff]
    %v4542 = vld [vmem:[%s4498 + $0x158] sm:$0xff]
    %v4543 = vld [vmem:[%s4498 + $0x160] sm:$0xff]
    %v4544 = vld [vmem:[%s4498 + $0x168] sm:$0xff]
    %v4545 = vld [vmem:[%s4498 + $0x170] sm:$0xff]
    %v4546 = vld [vmem:[%s4498 + $0x178] sm:$0xff]
    %v4547 = vld [vmem:[%s4498 + $0x180] sm:$0xff]
    %v4548 = vld [vmem:[%s4498 + $0x188] sm:$0xff]
    %v4549 = vld [vmem:[%s4498 + $0x190] sm:$0xff]
    %v4550 = vld [vmem:[%s4498 + $0x198] sm:$0xff]
    %v4551 = vld [vmem:[%s4498 + $0x1a0] sm:$0xff]
    %v4552 = vld [vmem:[%s4498 + $0x1a8] sm:$0xff]
    %v4553 = vld [vmem:[%s4498 + $0x1b0] sm:$0xff]
    %v4554 = vld [vmem:[%s4498 + $0x1b8] sm:$0xff]
    %v4555 = vld [vmem:[%s4498 + $0x1c0] sm:$0xff]
    %v4556 = vld [vmem:[%s4498 + $0x1c8] sm:$0xff]
    %v4557 = vld [vmem:[%s4498 + $0x1d0] sm:$0xff]
    %v4558 = vld [vmem:[%s4498 + $0x1d8] sm:$0xff]
    %v4559 = vld [vmem:[%s4498 + $0x1e0] sm:$0xff]
    %v4560 = vld [vmem:[%s4498 + $0x1e8] sm:$0xff]
    %v4561 = vld [vmem:[%s4498 + $0x1f0] sm:$0xff]
    %v4562 = vld [vmem:[%s4498 + $0x1f8] sm:$0xff]
    %v4563 = vld [vmem:[%s4498 + $0x200] sm:$0xff]
    %v4564 = vld [vmem:[%s4498 + $0x208] sm:$0xff]
    %v4565 = vld [vmem:[%s4498 + $0x210] sm:$0xff]
    %v4566 = vld [vmem:[%s4498 + $0x218] sm:$0xff]
    %v4567 = vld [vmem:[%s4498 + $0x220] sm:$0xff]
    %v4568 = vld [vmem:[%s4498 + $0x228] sm:$0xff]
    %v4569 = vld [vmem:[%s4498 + $0x230] sm:$0xff]
    %v4570 = vld [vmem:[%s4498 + $0x238] sm:$0xff]
    %v4571 = vld [vmem:[%s4498 + $0x240] sm:$0xff]
    %v4572 = vld [vmem:[%s4498 + $0x248] sm:$0xff]
    %v4573 = vld [vmem:[%s4498 + $0x250] sm:$0xff]
    %v4574 = vld [vmem:[%s4498 + $0x258] sm:$0xff]
    %v4575 = vld [vmem:[%s4498 + $0x260] sm:$0xff]
    %v4576 = vld [vmem:[%s4498 + $0x268] sm:$0xff]
    %v4577 = vld [vmem:[%s4498 + $0x270] sm:$0xff]
    %v4578 = vld [vmem:[%s4498 + $0x278] sm:$0xff]
    %v4579 = vld [vmem:[%s4498 + $0x280] sm:$0xff]
    %v4580 = vld [vmem:[%s4498 + $0x288] sm:$0xff]
    %v4581 = vld [vmem:[%s4498 + $0x290] sm:$0xff]
    %v4582 = vld [vmem:[%s4498 + $0x298] sm:$0xff]
    %v4583 = vld [vmem:[%s4498 + $0x2a0] sm:$0xff]
    %v4584 = vld [vmem:[%s4498 + $0x2a8] sm:$0xff]
    %v4585 = vld [vmem:[%s4498 + $0x2b0] sm:$0xff]
    %v4586 = vld [vmem:[%s4498 + $0x2b8] sm:$0xff]
    %v4587 = vld [vmem:[%s4498 + $0x2c0] sm:$0xff]
    %v4588 = vld [vmem:[%s4498 + $0x2c8] sm:$0xff]
    %v4589 = vld [vmem:[%s4498 + $0x2d0] sm:$0xff]
    %v4590 = vld [vmem:[%s4498 + $0x2d8] sm:$0xff]
    %v4591 = vld [vmem:[%s4498 + $0x2e0] sm:$0xff]
    %v4592 = vld [vmem:[%s4498 + $0x2e8] sm:$0xff]
    %v4593 = vld [vmem:[%s4498 + $0x2f0] sm:$0xff]
    %v4594 = vld [vmem:[%s4498 + $0x2f8] sm:$0xff]
    %v4598 = vrot.slane %v3692, 4
    %v4599 = vrot.slane %v3694, 4
    %v4600 = vrot.slane %v3768, 4
    %4604 = vmatprep.subr.mxu0 %v4500
    %4605 = vmatpush1.msra.mxu0 %v4499
    %4606 = vmatprep.subr.mxu0 %v4502
    %4607 = vmatpush1.msra.mxu0 %v4501
    %4608 = vmatprep.subr.mxu0 %v4504
    %4609 = vmatpush1.msra.mxu0 %v4503
    %4610 = vmatprep.subr.mxu0 %v4506
    %4611 = vmatpush1.msra.mxu0 %v4505
    %4612 = vmatprep.subr.mxu0 %v4508
    %4613 = vmatpush1.msra.mxu0 %v4507
    %4614 = vmatprep.subr.mxu0 %v4510
    %4615 = vmatpush1.msra.mxu0 %v4509
    %4616 = vmatprep.subr.mxu0 %v4512
    %4617 = vmatpush1.msra.mxu0 %v4511
    %4618 = vmatprep.subr.mxu0 %v4514
    %4619 = vmatpush1.msra.mxu0 %v4513
    %4620 = vmatprep.subr.mxu0 %v4516
    %4621 = vmatpush1.msra.mxu0 %v4515
    %4622 = vmatprep.subr.mxu0 %v4518
    %4623 = vmatpush1.msra.mxu0 %v4517
    %4624 = vmatprep.subr.mxu0 %v4520
    %4625 = vmatpush1.msra.mxu0 %v4519
    %4626 = vmatprep.subr.mxu0 %v4522
    %4627 = vmatpush1.msra.mxu0 %v4521
    %4628 = vmatprep.subr.mxu0 %v4524
    %4629 = vmatpush1.msra.mxu0 %v4523
    %4630 = vmatprep.subr.mxu0 %v4526
    %4631 = vmatpush1.msra.mxu0 %v4525
    %4632 = vmatprep.subr.mxu0 %v4528
    %4633 = vmatpush1.msra.mxu0 %v4527
    %4634 = vmatprep.subr.mxu0 %v4530
    %4635 = vmatpush1.msra.mxu0 %v4529
    %4636 = vmatprep.subr.mxu0 %v4532
    %4637 = vmatpush1.msra.mxu0 %v4531
    %4638 = vmatprep.subr.mxu0 %v4534
    %4639 = vmatpush1.msra.mxu0 %v4533
    %4640 = vmatprep.subr.mxu0 %v4536
    %4641 = vmatpush1.msra.mxu0 %v4535
    %4642 = vmatprep.subr.mxu0 %v4538
    %4643 = vmatpush1.msra.mxu0 %v4537
    %4644 = vmatprep.subr.mxu0 %v4540
    %4645 = vmatpush1.msra.mxu0 %v4539
    %4646 = vmatprep.subr.mxu0 %v4542
    %4647 = vmatpush1.msra.mxu0 %v4541
    %4648 = vmatprep.subr.mxu0 %v4544
    %4649 = vmatpush1.msra.mxu0 %v4543
    %4650 = vmatprep.subr.mxu0 %v4546
    %4651 = vmatpush1.msra.mxu0 %v4545
    %4652 = vmatprep.subr.mxu0 %v4548
    %4653 = vmatpush1.msra.mxu0 %v4547
    %4654 = vmatprep.subr.mxu0 %v4550
    %4655 = vmatpush1.msra.mxu0 %v4549
    %4656 = vmatprep.subr.mxu0 %v4552
    %4657 = vmatpush1.msra.mxu0 %v4551
    %4658 = vmatprep.subr.mxu0 %v4554
    %4659 = vmatpush1.msra.mxu0 %v4553
    %4660 = vmatprep.subr.mxu0 %v4556
    %4661 = vmatpush1.msra.mxu0 %v4555
    %4662 = vmatprep.subr.mxu0 %v4558
    %4663 = vmatpush1.msra.mxu0 %v4557
    %4664 = vmatprep.subr.mxu0 %v4560
    %4665 = vmatpush1.msra.mxu0 %v4559
    %4666 = vmatprep.subr.mxu0 %v4562
    %4667 = vmatpush1.msra.mxu0 %v4561
    %4668 = vmatprep.mubr.f32.mxu0 %v4599
    %4669 = vmatmul.mubr.f32.gmra.mrb[0].mxu0 %v4598
    %v4670 = vpop.f32.mrb[0].mxu0
    %v4671 = vadd.f32 0.0, %v4670
    %v4672 = vpop.f32.mrb[0].mxu0
    %v4673 = vadd.f32 0.0, %v4672
    %4674 = vdwg.mxu0
    %4675 = vmatprep.subr.mxu0 %v4564
    %4676 = vmatpush1.msra.mxu0 %v4563
    %4677 = vmatprep.subr.mxu0 %v4566
    %4678 = vmatpush1.msra.mxu0 %v4565
    %4679 = vmatprep.subr.mxu0 %v4568
    %4680 = vmatpush1.msra.mxu0 %v4567
    %4681 = vmatprep.subr.mxu0 %v4570
    %4682 = vmatpush1.msra.mxu0 %v4569
    %4683 = vmatprep.subr.mxu0 %v4572
    %4684 = vmatpush1.msra.mxu0 %v4571
    %4685 = vmatprep.subr.mxu0 %v4574
    %4686 = vmatpush1.msra.mxu0 %v4573
    %4687 = vmatprep.subr.mxu0 %v4576
    %4688 = vmatpush1.msra.mxu0 %v4575
    %4689 = vmatprep.subr.mxu0 %v4578
    %4690 = vmatpush1.msra.mxu0 %v4577
    %4691 = vmatprep.subr.mxu0 %v4580
    %4692 = vmatpush1.msra.mxu0 %v4579
    %4693 = vmatprep.subr.mxu0 %v4582
    %4694 = vmatpush1.msra.mxu0 %v4581
    %4695 = vmatprep.subr.mxu0 %v4584
    %4696 = vmatpush1.msra.mxu0 %v4583
    %4697 = vmatprep.subr.mxu0 %v4586
    %4698 = vmatpush1.msra.mxu0 %v4585
    %4699 = vmatprep.subr.mxu0 %v4588
    %4700 = vmatpush1.msra.mxu0 %v4587
    %4701 = vmatprep.subr.mxu0 %v4590
    %4702 = vmatpush1.msra.mxu0 %v4589
    %4703 = vmatprep.subr.mxu0 %v4592
    %4704 = vmatpush1.msra.mxu0 %v4591
    %4705 = vmatprep.subr.mxu0 %v4594
    %4706 = vmatpush1.msra.mxu0 %v4593
    %4707 = vmatprep.subr.mxu0 0.0
    %4708 = vmatpush1.msra.mxu0 0.0
    %4709 = vmatprep.subr.mxu0 0.0
    %4710 = vmatpush1.msra.mxu0 0.0
    %4711 = vmatprep.subr.mxu0 0.0
    %4712 = vmatpush1.msra.mxu0 0.0
    %4713 = vmatprep.subr.mxu0 0.0
    %4714 = vmatpush1.msra.mxu0 0.0
    %4715 = vmatprep.subr.mxu0 0.0
    %4716 = vmatpush1.msra.mxu0 0.0
    %4717 = vmatprep.subr.mxu0 0.0
    %4718 = vmatpush1.msra.mxu0 0.0
    %4719 = vmatprep.subr.mxu0 0.0
    %4720 = vmatpush1.msra.mxu0 0.0
    %4721 = vmatprep.subr.mxu0 0.0
    %4722 = vmatpush1.msra.mxu0 0.0
    %4723 = vmatprep.subr.mxu0 0.0
    %4724 = vmatpush1.msra.mxu0 0.0
    %4725 = vmatprep.subr.mxu0 0.0
    %4726 = vmatpush1.msra.mxu0 0.0
    %4727 = vmatprep.subr.mxu0 0.0
    %4728 = vmatpush1.msra.mxu0 0.0
    %4729 = vmatprep.subr.mxu0 0.0
    %4730 = vmatpush1.msra.mxu0 0.0
    %4731 = vmatprep.subr.mxu0 0.0
    %4732 = vmatpush1.msra.mxu0 0.0
    %4733 = vmatprep.subr.mxu0 0.0
    %4734 = vmatpush1.msra.mxu0 0.0
    %4735 = vmatprep.subr.mxu0 0.0
    %4736 = vmatpush1.msra.mxu0 0.0
    %4737 = vmatprep.subr.mxu0 0.0
    %4738 = vmatpush1.msra.mxu0 0.0
    %4739 = vmatprep.mubr.f32.mxu0 0.0
    %4740 = vmatmul.mubr.f32.gmra.mrb[0].mxu0 %v4600
    %v4741 = vpop.f32.mrb[0].mxu0
    %v4742 = vadd.f32 %v4671, %v4741
    %v4743 = vpop.f32.mrb[0].mxu0
    %v4744 = vadd.f32 %v4673, %v4743
    %4745 = vdwg.mxu0
    %v4746 = vadd.f32 %v4496, %v4742
    %v4747 = vadd.f32 %v4497, %v4744
    %v4748 = vld [vmem:[%s10] sm:$0x3]
    %v4750 = vlaneseq
    %v4751 = vshrl.u32 %v4750, 7
    %v4752 = vsub.s32 0, %v4751
    %v4753 = vrot.slane %v4748, %v4752
    %v4754 = vlaneseq
    %v4755 = vshrl.u32 %v4754, 7
    %v4756 = vsub.s32 1, %v4755
    %v4757 = vrot.slane %v4748, %v4756
    %v4760 = vadd.f32 %v4746, %v4753
    %v4761 = vadd.f32 %v4747, %v4757
    %v4762 = vmax.f32 %v4760, 0.0
    %v4763 = vmax.f32 %v4761, 0.0
    %v4766 = vrot.slane %v4762, 2
    %v4767 = vrot.slane %v4763, 2
    %v4770 = vmax.f32 %v4762, %v4766
    %v4771 = vmax.f32 %v4763, %v4767
    %4773 = vrot.lane.b32.xlu0 %v4770, 64
    %v4774 = vpop.permute.xlu0 %4773
    %v4776 = vmax.f32 %v4770, %v4774
    %4778 = vrot.lane.b32.xlu0 %v4771, 64
    %v4779 = vpop.permute.xlu0 %4778
    %v4781 = vmax.f32 %v4771, %v4779
    %v4782 = vld [vmem:[%s1] sm:$0x3]
    %v4783 = vld [vmem:[%s11] sm:$0xff]
    %v4784 = vld [vmem:[%s11 + $0x8] sm:$0xff]
    %v4785 = vld [vmem:[%s11 + $0x10] sm:$0xff]
    %v4786 = vld [vmem:[%s11 + $0x18] sm:$0xff]
    %v4787 = vld [vmem:[%s11 + $0x20] sm:$0xff]
    %v4788 = vld [vmem:[%s11 + $0x28] sm:$0xff]
    %v4789 = vld [vmem:[%s11 + $0x30] sm:$0xff]
    %v4790 = vld [vmem:[%s11 + $0x38] sm:$0xff]
    %v4791 = vld [vmem:[%s11 + $0x40] sm:$0xff]
    %v4792 = vld [vmem:[%s11 + $0x48] sm:$0xff]
    %v4793 = vld [vmem:[%s11 + $0x50] sm:$0xff]
    %v4794 = vld [vmem:[%s11 + $0x58] sm:$0xff]
    %v4795 = vld [vmem:[%s11 + $0x60] sm:$0xff]
    %v4796 = vld [vmem:[%s11 + $0x68] sm:$0xff]
    %v4797 = vld [vmem:[%s11 + $0x70] sm:$0xff]
    %v4798 = vld [vmem:[%s11 + $0x78] sm:$0xff]
    %v4799 = vld [vmem:[%s11 + $0x80] sm:$0xff]
    %v4800 = vld [vmem:[%s11 + $0x88] sm:$0xff]
    %v4801 = vld [vmem:[%s11 + $0x90] sm:$0xff]
    %v4802 = vld [vmem:[%s11 + $0x98] sm:$0xff]
    %v4803 = vld [vmem:[%s11 + $0xa0] sm:$0xff]
    %v4804 = vld [vmem:[%s11 + $0xa8] sm:$0xff]
    %v4805 = vld [vmem:[%s11 + $0xb0] sm:$0xff]
    %v4806 = vld [vmem:[%s11 + $0xb8] sm:$0xff]
    %v4807 = vld [vmem:[%s11 + $0xc0] sm:$0xff]
    %v4808 = vld [vmem:[%s11 + $0xc8] sm:$0xff]
    %v4809 = vld [vmem:[%s11 + $0xd0] sm:$0xff]
    %v4810 = vld [vmem:[%s11 + $0xd8] sm:$0xff]
    %v4811 = vld [vmem:[%s11 + $0xe0] sm:$0xff]
    %v4812 = vld [vmem:[%s11 + $0xe8] sm:$0xff]
    %v4813 = vld [vmem:[%s11 + $0xf0] sm:$0xff]
    %v4814 = vld [vmem:[%s11 + $0xf8] sm:$0xff]
    %v4815 = vld [vmem:[%s11 + $0x100] sm:$0xff]
    %v4816 = vld [vmem:[%s11 + $0x108] sm:$0xff]
    %v4817 = vld [vmem:[%s11 + $0x110] sm:$0xff]
    %v4818 = vld [vmem:[%s11 + $0x118] sm:$0xff]
    %v4819 = vld [vmem:[%s11 + $0x120] sm:$0xff]
    %v4820 = vld [vmem:[%s11 + $0x128] sm:$0xff]
    %v4821 = vld [vmem:[%s11 + $0x130] sm:$0xff]
    %v4822 = vld [vmem:[%s11 + $0x138] sm:$0xff]
    %v4823 = vld [vmem:[%s11 + $0x140] sm:$0xff]
    %v4824 = vld [vmem:[%s11 + $0x148] sm:$0xff]
    %v4825 = vld [vmem:[%s11 + $0x150] sm:$0xff]
    %v4826 = vld [vmem:[%s11 + $0x158] sm:$0xff]
    %v4827 = vld [vmem:[%s11 + $0x160] sm:$0xff]
    %v4828 = vld [vmem:[%s11 + $0x168] sm:$0xff]
    %v4829 = vld [vmem:[%s11 + $0x170] sm:$0xff]
    %v4830 = vld [vmem:[%s11 + $0x178] sm:$0xff]
    %v4831 = vld [vmem:[%s11 + $0x180] sm:$0xff]
    %v4832 = vld [vmem:[%s11 + $0x188] sm:$0xff]
    %v4833 = vld [vmem:[%s11 + $0x190] sm:$0xff]
    %v4834 = vld [vmem:[%s11 + $0x198] sm:$0xff]
    %v4835 = vld [vmem:[%s11 + $0x1a0] sm:$0xff]
    %v4836 = vld [vmem:[%s11 + $0x1a8] sm:$0xff]
    %v4837 = vld [vmem:[%s11 + $0x1b0] sm:$0xff]
    %v4838 = vld [vmem:[%s11 + $0x1b8] sm:$0xff]
    %v4839 = vld [vmem:[%s14] sm:$0x7f]
    %v4841 = vlaneseq
    %v4842 = vshrl.u32 %v4841, 7
    %v4843 = vsub.s32 0, %v4842
    %v4844 = vrot.slane %v4839, %v4843
    %v4845 = vlaneseq
    %v4846 = vshrl.u32 %v4845, 7
    %v4847 = vsub.s32 1, %v4846
    %v4848 = vrot.slane %v4839, %v4847
    %v4849 = vlaneseq
    %v4850 = vshrl.u32 %v4849, 7
    %v4851 = vsub.s32 2, %v4850
    %v4852 = vrot.slane %v4839, %v4851
    %v4853 = vlaneseq
    %v4854 = vshrl.u32 %v4853, 7
    %v4855 = vsub.s32 3, %v4854
    %v4856 = vrot.slane %v4839, %v4855
    %v4857 = vlaneseq
    %v4858 = vshrl.u32 %v4857, 7
    %v4859 = vsub.s32 4, %v4858
    %v4860 = vrot.slane %v4839, %v4859
    %v4861 = vlaneseq
    %v4862 = vshrl.u32 %v4861, 7
    %v4863 = vsub.s32 5, %v4862
    %v4864 = vrot.slane %v4839, %v4863
    %v4865 = vlaneseq
    %v4866 = vshrl.u32 %v4865, 7
    %v4867 = vsub.s32 6, %v4866
    %v4868 = vrot.slane %v4839, %v4867
    %v4877 = vsel %vm121, %v4782, 0
    %4879 = vmatprep.subr.mxu0 %v4784
    %4880 = vmatpush1.msra.mxu0 %v4783
    %4881 = vmatprep.subr.mxu0 %v4791
    %4882 = vmatpush1.msra.mxu0 %v4790
    %4883 = vmatprep.subr.mxu0 %v4798
    %4884 = vmatpush1.msra.mxu0 %v4797
    %4885 = vmatprep.subr.mxu0 %v4805
    %4886 = vmatpush1.msra.mxu0 %v4804
    %4887 = vmatprep.subr.mxu0 %v4812
    %4888 = vmatpush1.msra.mxu0 %v4811
    %4889 = vmatprep.subr.mxu0 %v4819
    %4890 = vmatpush1.msra.mxu0 %v4818
    %4891 = vmatprep.subr.mxu0 %v4826
    %4892 = vmatpush1.msra.mxu0 %v4825
    %4893 = vmatprep.subr.mxu0 %v4833
    %4894 = vmatpush1.msra.mxu0 %v4832
    %4895 = vmatprep.subr.mxu0 0.0
    %4896 = vmatpush1.msra.mxu0 0.0
    %4897 = vmatprep.subr.mxu0 0.0
    %4898 = vmatpush1.msra.mxu0 0.0
    %4899 = vmatprep.subr.mxu0 0.0
    %4900 = vmatpush1.msra.mxu0 0.0
    %4901 = vmatprep.subr.mxu0 0.0
    %4902 = vmatpush1.msra.mxu0 0.0
    %4903 = vmatprep.subr.mxu0 0.0
    %4904 = vmatpush1.msra.mxu0 0.0
    %4905 = vmatprep.subr.mxu0 0.0
    %4906 = vmatpush1.msra.mxu0 0.0
    %4907 = vmatprep.subr.mxu0 0.0
    %4908 = vmatpush1.msra.mxu0 0.0
    %4909 = vmatprep.subr.mxu0 0.0
    %4910 = vmatpush1.msra.mxu0 0.0
    %4911 = vmatprep.subr.mxu0 0.0
    %4912 = vmatpush1.msra.mxu0 0.0
    %4913 = vmatprep.subr.mxu0 0.0
    %4914 = vmatpush1.msra.mxu0 0.0
    %4915 = vmatprep.subr.mxu0 0.0
    %4916 = vmatpush1.msra.mxu0 0.0
    %4917 = vmatprep.subr.mxu0 0.0
    %4918 = vmatpush1.msra.mxu0 0.0
    %4919 = vmatprep.subr.mxu0 0.0
    %4920 = vmatpush1.msra.mxu0 0.0
    %4921 = vmatprep.subr.mxu0 0.0
    %4922 = vmatpush1.msra.mxu0 0.0
    %4923 = vmatprep.subr.mxu0 0.0
    %4924 = vmatpush1.msra.mxu0 0.0
    %4925 = vmatprep.subr.mxu0 0.0
    %4926 = vmatpush1.msra.mxu0 0.0
    %4927 = vmatprep.subr.mxu0 0.0
    %4928 = vmatpush1.msra.mxu0 0.0
    %4929 = vmatprep.subr.mxu0 0.0
    %4930 = vmatpush1.msra.mxu0 0.0
    %4931 = vmatprep.subr.mxu0 0.0
    %4932 = vmatpush1.msra.mxu0 0.0
    %4933 = vmatprep.subr.mxu0 0.0
    %4934 = vmatpush1.msra.mxu0 0.0
    %4935 = vmatprep.subr.mxu0 0.0
    %4936 = vmatpush1.msra.mxu0 0.0
    %4937 = vmatprep.subr.mxu0 0.0
    %4938 = vmatpush1.msra.mxu0 0.0
    %4939 = vmatprep.subr.mxu0 0.0
    %4940 = vmatpush1.msra.mxu0 0.0
    %4941 = vmatprep.subr.mxu0 0.0
    %4942 = vmatpush1.msra.mxu0 0.0
    %4943 = vmatprep.mubr.f32.mxu0 0.0
    %4944 = vmatmul.mubr.f32.gmra.mrb[0].mxu0 %v4877
    %v4945 = vpop.f32.mrb[0].mxu0
    %v4946 = vadd.f32 %v4844, %v4945
    %v4947 = vpop.f32.mrb[0].mxu0
    %v4948 = vadd.f32 %v4848, %v4947
    %4949 = vdwg.mxu0
    %4950 = vmatprep.subr.mxu0 %v4786
    %4951 = vmatpush1.msra.mxu0 %v4785
    %4952 = vmatprep.subr.mxu0 %v4793
    %4953 = vmatpush1.msra.mxu0 %v4792
    %4954 = vmatprep.subr.mxu0 %v4800
    %4955 = vmatpush1.msra.mxu0 %v4799
    %4956 = vmatprep.subr.mxu0 %v4807
    %4957 = vmatpush1.msra.mxu0 %v4806
    %4958 = vmatprep.subr.mxu0 %v4814
    %4959 = vmatpush1.msra.mxu0 %v4813
    %4960 = vmatprep.subr.mxu0 %v4821
    %4961 = vmatpush1.msra.mxu0 %v4820
    %4962 = vmatprep.subr.mxu0 %v4828
    %4963 = vmatpush1.msra.mxu0 %v4827
    %4964 = vmatprep.subr.mxu0 %v4835
    %4965 = vmatpush1.msra.mxu0 %v4834
    %4966 = vmatprep.subr.mxu0 0.0
    %4967 = vmatpush1.msra.mxu0 0.0
    %4968 = vmatprep.subr.mxu0 0.0
    %4969 = vmatpush1.msra.mxu0 0.0
    %4970 = vmatprep.subr.mxu0 0.0
    %4971 = vmatpush1.msra.mxu0 0.0
    %4972 = vmatprep.subr.mxu0 0.0
    %4973 = vmatpush1.msra.mxu0 0.0
    %4974 = vmatprep.subr.mxu0 0.0
    %4975 = vmatpush1.msra.mxu0 0.0
    %4976 = vmatprep.subr.mxu0 0.0
    %4977 = vmatpush1.msra.mxu0 0.0
    %4978 = vmatprep.subr.mxu0 0.0
    %4979 = vmatpush1.msra.mxu0 0.0
    %4980 = vmatprep.subr.mxu0 0.0
    %4981 = vmatpush1.msra.mxu0 0.0
    %4982 = vmatprep.subr.mxu0 0.0
    %4983 = vmatpush1.msra.mxu0 0.0
    %4984 = vmatprep.subr.mxu0 0.0
    %4985 = vmatpush1.msra.mxu0 0.0
    %4986 = vmatprep.subr.mxu0 0.0
    %4987 = vmatpush1.msra.mxu0 0.0
    %4988 = vmatprep.subr.mxu0 0.0
    %4989 = vmatpush1.msra.mxu0 0.0
    %4990 = vmatprep.subr.mxu0 0.0
    %4991 = vmatpush1.msra.mxu0 0.0
    %4992 = vmatprep.subr.mxu0 0.0
    %4993 = vmatpush1.msra.mxu0 0.0
    %4994 = vmatprep.subr.mxu0 0.0
    %4995 = vmatpush1.msra.mxu0 0.0
    %4996 = vmatprep.subr.mxu0 0.0
    %4997 = vmatpush1.msra.mxu0 0.0
    %4998 = vmatprep.subr.mxu0 0.0
    %4999 = vmatpush1.msra.mxu0 0.0
    %5000 = vmatprep.subr.mxu0 0.0
    %5001 = vmatpush1.msra.mxu0 0.0
    %5002 = vmatprep.subr.mxu0 0.0
    %5003 = vmatpush1.msra.mxu0 0.0
    %5004 = vmatprep.subr.mxu0 0.0
    %5005 = vmatpush1.msra.mxu0 0.0
    %5006 = vmatprep.subr.mxu0 0.0
    %5007 = vmatpush1.msra.mxu0 0.0
    %5008 = vmatprep.subr.mxu0 0.0
    %5009 = vmatpush1.msra.mxu0 0.0
    %5010 = vmatprep.subr.mxu0 0.0
    %5011 = vmatpush1.msra.mxu0 0.0
    %5012 = vmatprep.subr.mxu0 0.0
    %5013 = vmatpush1.msra.mxu0 0.0
    %5014 = vmatprep.mubr.f32.mxu0 0.0
    %5015 = vmatmul.mubr.f32.gmra.mrb[0].mxu0 %v4877
    %v5016 = vpop.f32.mrb[0].mxu0
    %v5017 = vadd.f32 %v4852, %v5016
    %v5018 = vpop.f32.mrb[0].mxu0
    %v5019 = vadd.f32 %v4856, %v5018
    %5020 = vdwg.mxu0
    %5021 = vmatprep.subr.mxu0 %v4788
    %5022 = vmatpush1.msra.mxu0 %v4787
    %5023 = vmatprep.subr.mxu0 %v4795
    %5024 = vmatpush1.msra.mxu0 %v4794
    %5025 = vmatprep.subr.mxu0 %v4802
    %5026 = vmatpush1.msra.mxu0 %v4801
    %5027 = vmatprep.subr.mxu0 %v4809
    %5028 = vmatpush1.msra.mxu0 %v4808
    %5029 = vmatprep.subr.mxu0 %v4816
    %5030 = vmatpush1.msra.mxu0 %v4815
    %5031 = vmatprep.subr.mxu0 %v4823
    %5032 = vmatpush1.msra.mxu0 %v4822
    %5033 = vmatprep.subr.mxu0 %v4830
    %5034 = vmatpush1.msra.mxu0 %v4829
    %5035 = vmatprep.subr.mxu0 %v4837
    %5036 = vmatpush1.msra.mxu0 %v4836
    %5037 = vmatprep.subr.mxu0 0.0
    %5038 = vmatpush1.msra.mxu0 0.0
    %5039 = vmatprep.subr.mxu0 0.0
    %5040 = vmatpush1.msra.mxu0 0.0
    %5041 = vmatprep.subr.mxu0 0.0
    %5042 = vmatpush1.msra.mxu0 0.0
    %5043 = vmatprep.subr.mxu0 0.0
    %5044 = vmatpush1.msra.mxu0 0.0
    %5045 = vmatprep.subr.mxu0 0.0
    %5046 = vmatpush1.msra.mxu0 0.0
    %5047 = vmatprep.subr.mxu0 0.0
    %5048 = vmatpush1.msra.mxu0 0.0
    %5049 = vmatprep.subr.mxu0 0.0
    %5050 = vmatpush1.msra.mxu0 0.0
    %5051 = vmatprep.subr.mxu0 0.0
    %5052 = vmatpush1.msra.mxu0 0.0
    %5053 = vmatprep.subr.mxu0 0.0
    %5054 = vmatpush1.msra.mxu0 0.0
    %5055 = vmatprep.subr.mxu0 0.0
    %5056 = vmatpush1.msra.mxu0 0.0
    %5057 = vmatprep.subr.mxu0 0.0
    %5058 = vmatpush1.msra.mxu0 0.0
    %5059 = vmatprep.subr.mxu0 0.0
    %5060 = vmatpush1.msra.mxu0 0.0
    %5061 = vmatprep.subr.mxu0 0.0
    %5062 = vmatpush1.msra.mxu0 0.0
    %5063 = vmatprep.subr.mxu0 0.0
    %5064 = vmatpush1.msra.mxu0 0.0
    %5065 = vmatprep.subr.mxu0 0.0
    %5066 = vmatpush1.msra.mxu0 0.0
    %5067 = vmatprep.subr.mxu0 0.0
    %5068 = vmatpush1.msra.mxu0 0.0
    %5069 = vmatprep.subr.mxu0 0.0
    %5070 = vmatpush1.msra.mxu0 0.0
    %5071 = vmatprep.subr.mxu0 0.0
    %5072 = vmatpush1.msra.mxu0 0.0
    %5073 = vmatprep.subr.mxu0 0.0
    %5074 = vmatpush1.msra.mxu0 0.0
    %5075 = vmatprep.subr.mxu0 0.0
    %5076 = vmatpush1.msra.mxu0 0.0
    %5077 = vmatprep.subr.mxu0 0.0
    %5078 = vmatpush1.msra.mxu0 0.0
    %5079 = vmatprep.subr.mxu0 0.0
    %5080 = vmatpush1.msra.mxu0 0.0
    %5081 = vmatprep.subr.mxu0 0.0
    %5082 = vmatpush1.msra.mxu0 0.0
    %5083 = vmatprep.subr.mxu0 0.0
    %5084 = vmatpush1.msra.mxu0 0.0
    %5085 = vmatprep.mubr.f32.mxu0 0.0
    %5086 = vmatmul.mubr.f32.gmra.mrb[0].mxu0 %v4877
    %v5087 = vpop.f32.mrb[0].mxu0
    %v5088 = vadd.f32 %v4860, %v5087
    %v5089 = vpop.f32.mrb[0].mxu0
    %v5090 = vadd.f32 %v4864, %v5089
    %5091 = vdwg.mxu0
    %5092 = vmatprep.subr.mxu0 0.0
    %5093 = vmatpush1.msra.mxu0 %v4789
    %5094 = vmatprep.subr.mxu0 0.0
    %5095 = vmatpush1.msra.mxu0 %v4796
    %5096 = vmatprep.subr.mxu0 0.0
    %5097 = vmatpush1.msra.mxu0 %v4803
    %5098 = vmatprep.subr.mxu0 0.0
    %5099 = vmatpush1.msra.mxu0 %v4810
    %5100 = vmatprep.subr.mxu0 0.0
    %5101 = vmatpush1.msra.mxu0 %v4817
    %5102 = vmatprep.subr.mxu0 0.0
    %5103 = vmatpush1.msra.mxu0 %v4824
    %5104 = vmatprep.subr.mxu0 0.0
    %5105 = vmatpush1.msra.mxu0 %v4831
    %5106 = vmatprep.subr.mxu0 0.0
    %5107 = vmatpush1.msra.mxu0 %v4838
    %5108 = vmatprep.subr.mxu0 0.0
    %5109 = vmatpush1.msra.mxu0 0.0
    %5110 = vmatprep.subr.mxu0 0.0
    %5111 = vmatpush1.msra.mxu0 0.0
    %5112 = vmatprep.subr.mxu0 0.0
    %5113 = vmatpush1.msra.mxu0 0.0
    %5114 = vmatprep.subr.mxu0 0.0
    %5115 = vmatpush1.msra.mxu0 0.0
    %5116 = vmatprep.subr.mxu0 0.0
    %5117 = vmatpush1.msra.mxu0 0.0
    %5118 = vmatprep.subr.mxu0 0.0
    %5119 = vmatpush1.msra.mxu0 0.0
    %5120 = vmatprep.subr.mxu0 0.0
    %5121 = vmatpush1.msra.mxu0 0.0
    %5122 = vmatprep.subr.mxu0 0.0
    %5123 = vmatpush1.msra.mxu0 0.0
    %5124 = vmatprep.subr.mxu0 0.0
    %5125 = vmatpush1.msra.mxu0 0.0
    %5126 = vmatprep.subr.mxu0 0.0
    %5127 = vmatpush1.msra.mxu0 0.0
    %5128 = vmatprep.subr.mxu0 0.0
    %5129 = vmatpush1.msra.mxu0 0.0
    %5130 = vmatprep.subr.mxu0 0.0
    %5131 = vmatpush1.msra.mxu0 0.0
    %5132 = vmatprep.subr.mxu0 0.0
    %5133 = vmatpush1.msra.mxu0 0.0
    %5134 = vmatprep.subr.mxu0 0.0
    %5135 = vmatpush1.msra.mxu0 0.0
    %5136 = vmatprep.subr.mxu0 0.0
    %5137 = vmatpush1.msra.mxu0 0.0
    %5138 = vmatprep.subr.mxu0 0.0
    %5139 = vmatpush1.msra.mxu0 0.0
    %5140 = vmatprep.subr.mxu0 0.0
    %5141 = vmatpush1.msra.mxu0 0.0
    %5142 = vmatprep.subr.mxu0 0.0
    %5143 = vmatpush1.msra.mxu0 0.0
    %5144 = vmatprep.subr.mxu0 0.0
    %5145 = vmatpush1.msra.mxu0 0.0
    %5146 = vmatprep.subr.mxu0 0.0
    %5147 = vmatpush1.msra.mxu0 0.0
    %5148 = vmatprep.subr.mxu0 0.0
    %5149 = vmatpush1.msra.mxu0 0.0
    %5150 = vmatprep.subr.mxu0 0.0
    %5151 = vmatpush1.msra.mxu0 0.0
    %5152 = vmatprep.subr.mxu0 0.0
    %5153 = vmatpush1.msra.mxu0 0.0
    %5154 = vmatprep.subr.mxu0 0.0
    %5155 = vmatpush1.msra.mxu0 0.0
    %5156 = vmatprep.mubr.f32.mxu0 0.0
    %5157 = vmatmul.mubr.f32.gmra.mrb[0].mxu0 %v4877
    %v5158 = vpop.f32.mrb[0].mxu0
    %v5159 = vadd.f32 %v4868, %v5158
    %v5160 = vpop.f32.mrb[0].mxu0
    %5161 = vdwg.mxu0
    %v5162 = vmax.f32 %v4946, 0.0
    %v5163 = vmax.f32 %v4948, 0.0
    %v5164 = vmax.f32 %v5017, 0.0
    %v5165 = vmax.f32 %v5019, 0.0
    %v5166 = vmax.f32 %v5088, 0.0
    %v5167 = vmax.f32 %v5090, 0.0
    %v5168 = vmax.f32 %v5159, 0.0
    %v5169 = vld [vmem:[%s12] sm:$0xff]
    %v5170 = vld [vmem:[%s12 + $0x8] sm:$0xff]
    %v5171 = vld [vmem:[%s12 + $0x10] sm:$0xff]
    %v5172 = vld [vmem:[%s12 + $0x18] sm:$0xff]
    %v5173 = vld [vmem:[%s12 + $0x20] sm:$0xff]
    %v5174 = vld [vmem:[%s12 + $0x28] sm:$0xff]
    %v5175 = vld [vmem:[%s12 + $0x30] sm:$0xff]
    %v5176 = vld [vmem:[%s12 + $0x38] sm:$0xff]
    %v5177 = vld [vmem:[%s12 + $0x40] sm:$0xff]
    %v5178 = vld [vmem:[%s12 + $0x48] sm:$0xff]
    %v5179 = vld [vmem:[%s12 + $0x50] sm:$0xff]
    %v5180 = vld [vmem:[%s12 + $0x58] sm:$0xff]
    %v5181 = vld [vmem:[%s12 + $0x60] sm:$0xff]
    %v5182 = vld [vmem:[%s12 + $0x68] sm:$0xff]
    %v5183 = vld [vmem:[%s12 + $0x70] sm:$0xff]
    %v5184 = vld [vmem:[%s12 + $0x78] sm:$0xff]
    %v5185 = vld [vmem:[%s12 + $0x80] sm:$0xff]
    %v5186 = vld [vmem:[%s12 + $0x88] sm:$0xff]
    %v5187 = vld [vmem:[%s12 + $0x90] sm:$0xff]
    %v5188 = vld [vmem:[%s12 + $0x98] sm:$0xff]
    %v5189 = vld [vmem:[%s12 + $0xa0] sm:$0xff]
    %v5190 = vld [vmem:[%s12 + $0xa8] sm:$0xff]
    %v5191 = vld [vmem:[%s12 + $0xb0] sm:$0xff]
    %v5192 = vld [vmem:[%s12 + $0xb8] sm:$0xff]
    %v5193 = vld [vmem:[%s12 + $0xc0] sm:$0xff]
    %v5194 = vld [vmem:[%s12 + $0xc8] sm:$0xff]
    %v5195 = vld [vmem:[%s12 + $0xd0] sm:$0xff]
    %v5196 = vld [vmem:[%s12 + $0xd8] sm:$0xff]
    %v5197 = vld [vmem:[%s12 + $0xe0] sm:$0xff]
    %v5198 = vld [vmem:[%s12 + $0xe8] sm:$0xff]
    %v5199 = vld [vmem:[%s12 + $0xf0] sm:$0xff]
    %v5200 = vld [vmem:[%s12 + $0xf8] sm:$0xff]
    %v5201 = vld [vmem:[%s12 + $0x100] sm:$0xff]
    %v5202 = vld [vmem:[%s12 + $0x108] sm:$0xff]
    %v5203 = vld [vmem:[%s12 + $0x110] sm:$0xff]
    %v5204 = vld [vmem:[%s12 + $0x118] sm:$0xff]
    %v5205 = vld [vmem:[%s12 + $0x120] sm:$0xff]
    %v5206 = vld [vmem:[%s12 + $0x128] sm:$0xff]
    %v5207 = vld [vmem:[%s12 + $0x130] sm:$0xff]
    %v5208 = vld [vmem:[%s12 + $0x138] sm:$0xff]
    %v5209 = vld [vmem:[%s12 + $0x140] sm:$0xff]
    %v5210 = vld [vmem:[%s12 + $0x148] sm:$0xff]
    %v5211 = vld [vmem:[%s12 + $0x150] sm:$0xff]
    %v5212 = vld [vmem:[%s12 + $0x158] sm:$0xff]
    %v5213 = vld [vmem:[%s12 + $0x160] sm:$0xff]
    %v5214 = vld [vmem:[%s12 + $0x168] sm:$0xff]
    %v5215 = vld [vmem:[%s12 + $0x170] sm:$0xff]
    %v5216 = vld [vmem:[%s12 + $0x178] sm:$0xff]
    %v5217 = vld [vmem:[%s12 + $0x180] sm:$0xff]
    %v5218 = vld [vmem:[%s12 + $0x188] sm:$0xff]
    %v5219 = vld [vmem:[%s12 + $0x190] sm:$0xff]
    %v5220 = vld [vmem:[%s12 + $0x198] sm:$0xff]
    %v5221 = vld [vmem:[%s12 + $0x1a0] sm:$0xff]
    %v5222 = vld [vmem:[%s12 + $0x1a8] sm:$0xff]
    %v5223 = vld [vmem:[%s12 + $0x1b0] sm:$0xff]
    %v5224 = vld [vmem:[%s12 + $0x1b8] sm:$0xff]
    %v5225 = vld [vmem:[%s12 + $0x1c0] sm:$0xff]
    %v5226 = vld [vmem:[%s12 + $0x1c8] sm:$0xff]
    %v5227 = vld [vmem:[%s12 + $0x1d0] sm:$0xff]
    %v5228 = vld [vmem:[%s12 + $0x1d8] sm:$0xff]
    %v5229 = vld [vmem:[%s12 + $0x1e0] sm:$0xff]
    %v5230 = vld [vmem:[%s12 + $0x1e8] sm:$0xff]
    %v5231 = vld [vmem:[%s12 + $0x1f0] sm:$0xff]
    %v5232 = vld [vmem:[%s12 + $0x1f8] sm:$0xff]
    %v5233 = vld [vmem:[%s12 + $0x200] sm:$0xff]
    %v5234 = vld [vmem:[%s12 + $0x208] sm:$0xff]
    %v5235 = vld [vmem:[%s12 + $0x210] sm:$0xff]
    %v5236 = vld [vmem:[%s12 + $0x218] sm:$0xff]
    %v5237 = vld [vmem:[%s12 + $0x220] sm:$0xff]
    %v5238 = vld [vmem:[%s12 + $0x228] sm:$0xff]
    %v5239 = vld [vmem:[%s12 + $0x230] sm:$0xff]
    %v5240 = vld [vmem:[%s12 + $0x238] sm:$0xff]
    %v5241 = vld [vmem:[%s12 + $0x240] sm:$0xff]
    %v5242 = vld [vmem:[%s12 + $0x248] sm:$0xff]
    %v5243 = vld [vmem:[%s12 + $0x250] sm:$0xff]
    %v5244 = vld [vmem:[%s12 + $0x258] sm:$0xff]
    %v5245 = vld [vmem:[%s12 + $0x260] sm:$0xff]
    %v5246 = vld [vmem:[%s12 + $0x268] sm:$0xff]
    %v5247 = vld [vmem:[%s12 + $0x270] sm:$0xff]
    %v5248 = vld [vmem:[%s12 + $0x278] sm:$0xff]
    %v5249 = vld [vmem:[%s12 + $0x280] sm:$0xff]
    %v5250 = vld [vmem:[%s12 + $0x288] sm:$0xff]
    %v5251 = vld [vmem:[%s12 + $0x290] sm:$0xff]
    %v5252 = vld [vmem:[%s12 + $0x298] sm:$0xff]
    %v5253 = vld [vmem:[%s12 + $0x2a0] sm:$0xff]
    %v5254 = vld [vmem:[%s12 + $0x2a8] sm:$0xff]
    %v5255 = vld [vmem:[%s12 + $0x2b0] sm:$0xff]
    %v5256 = vld [vmem:[%s12 + $0x2b8] sm:$0xff]
    %v5257 = vld [vmem:[%s12 + $0x2c0] sm:$0xff]
    %v5258 = vld [vmem:[%s12 + $0x2c8] sm:$0xff]
    %v5259 = vld [vmem:[%s12 + $0x2d0] sm:$0xff]
    %v5260 = vld [vmem:[%s12 + $0x2d8] sm:$0xff]
    %v5261 = vld [vmem:[%s12 + $0x2e0] sm:$0xff]
    %v5262 = vld [vmem:[%s12 + $0x2e8] sm:$0xff]
    %v5263 = vld [vmem:[%s12 + $0x2f0] sm:$0xff]
    %v5264 = vld [vmem:[%s12 + $0x2f8] sm:$0xff]
    %v5265 = vld [vmem:[%s12 + $0x300] sm:$0xff]
    %v5266 = vld [vmem:[%s12 + $0x308] sm:$0xff]
    %v5267 = vld [vmem:[%s12 + $0x310] sm:$0xff]
    %v5268 = vld [vmem:[%s12 + $0x318] sm:$0xff]
    %v5269 = vld [vmem:[%s12 + $0x320] sm:$0xff]
    %v5270 = vld [vmem:[%s12 + $0x328] sm:$0xff]
    %v5271 = vld [vmem:[%s12 + $0x330] sm:$0xff]
    %v5272 = vld [vmem:[%s12 + $0x338] sm:$0xff]
    %v5273 = vld [vmem:[%s12 + $0x340] sm:$0xff]
    %v5274 = vld [vmem:[%s12 + $0x348] sm:$0xff]
    %v5275 = vld [vmem:[%s12 + $0x350] sm:$0xff]
    %v5276 = vld [vmem:[%s12 + $0x358] sm:$0xff]
    %v5277 = vld [vmem:[%s12 + $0x360] sm:$0xff]
    %v5278 = vld [vmem:[%s12 + $0x368] sm:$0xff]
    %v5279 = vld [vmem:[%s12 + $0x370] sm:$0xff]
    %v5280 = vld [vmem:[%s12 + $0x378] sm:$0xff]
    %v5281 = vld [vmem:[%s12 + $0x380] sm:$0xff]
    %v5282 = vld [vmem:[%s12 + $0x388] sm:$0xff]
    %v5283 = vld [vmem:[%s12 + $0x390] sm:$0xff]
    %v5284 = vld [vmem:[%s12 + $0x398] sm:$0xff]
    %v5285 = vld [vmem:[%s12 + $0x3a0] sm:$0xff]
    %v5286 = vld [vmem:[%s12 + $0x3a8] sm:$0xff]
    %v5287 = vld [vmem:[%s12 + $0x3b0] sm:$0xff]
    %v5288 = vld [vmem:[%s12 + $0x3b8] sm:$0xff]
    %v5289 = vld [vmem:[%s12 + $0x3c0] sm:$0xff]
    %v5290 = vld [vmem:[%s12 + $0x3c8] sm:$0xff]
    %v5291 = vld [vmem:[%s12 + $0x3d0] sm:$0xff]
    %v5292 = vld [vmem:[%s12 + $0x3d8] sm:$0xff]
    %v5293 = vld [vmem:[%s12 + $0x3e0] sm:$0xff]
    %v5294 = vld [vmem:[%s12 + $0x3e8] sm:$0xff]
    %v5295 = vld [vmem:[%s12 + $0x3f0] sm:$0xff]
    %v5296 = vld [vmem:[%s12 + $0x3f8] sm:$0xff]
    %v5297 = vld [vmem:[%s12 + $0x400] sm:$0xff]
    %v5298 = vld [vmem:[%s12 + $0x408] sm:$0xff]
    %v5299 = vld [vmem:[%s12 + $0x410] sm:$0xff]
    %v5300 = vld [vmem:[%s12 + $0x418] sm:$0xff]
    %v5301 = vld [vmem:[%s12 + $0x420] sm:$0xff]
    %v5302 = vld [vmem:[%s12 + $0x428] sm:$0xff]
    %v5303 = vld [vmem:[%s12 + $0x430] sm:$0xff]
    %v5304 = vld [vmem:[%s12 + $0x438] sm:$0xff]
    %v5305 = vld [vmem:[%s12 + $0x440] sm:$0xff]
    %v5306 = vld [vmem:[%s12 + $0x448] sm:$0xff]
    %v5307 = vld [vmem:[%s12 + $0x450] sm:$0xff]
    %v5308 = vld [vmem:[%s12 + $0x458] sm:$0xff]
    %v5309 = vld [vmem:[%s12 + $0x460] sm:$0xff]
    %v5310 = vld [vmem:[%s12 + $0x468] sm:$0xff]
    %v5311 = vld [vmem:[%s12 + $0x470] sm:$0xff]
    %v5312 = vld [vmem:[%s12 + $0x478] sm:$0xff]
    %v5313 = vld [vmem:[%s12 + $0x480] sm:$0xff]
    %v5314 = vld [vmem:[%s12 + $0x488] sm:$0xff]
    %v5315 = vld [vmem:[%s12 + $0x490] sm:$0xff]
    %v5316 = vld [vmem:[%s12 + $0x498] sm:$0xff]
    %v5317 = vld [vmem:[%s12 + $0x4a0] sm:$0xff]
    %v5318 = vld [vmem:[%s12 + $0x4a8] sm:$0xff]
    %v5319 = vld [vmem:[%s12 + $0x4b0] sm:$0xff]
    %v5320 = vld [vmem:[%s12 + $0x4b8] sm:$0xff]
    %v5321 = vld [vmem:[%s12 + $0x4c0] sm:$0xff]
    %v5322 = vld [vmem:[%s12 + $0x4c8] sm:$0xff]
    %v5323 = vld [vmem:[%s12 + $0x4d0] sm:$0xff]
    %v5324 = vld [vmem:[%s12 + $0x4d8] sm:$0xff]
    %v5325 = vld [vmem:[%s12 + $0x4e0] sm:$0xff]
    %v5326 = vld [vmem:[%s12 + $0x4e8] sm:$0xff]
    %v5327 = vld [vmem:[%s12 + $0x4f0] sm:$0xff]
    %v5328 = vld [vmem:[%s12 + $0x4f8] sm:$0xff]
    %v5329 = vld [vmem:[%s12 + $0x500] sm:$0xff]
    %v5330 = vld [vmem:[%s12 + $0x508] sm:$0xff]
    %v5331 = vld [vmem:[%s12 + $0x510] sm:$0xff]
    %v5332 = vld [vmem:[%s12 + $0x518] sm:$0xff]
    %v5333 = vld [vmem:[%s12 + $0x520] sm:$0xff]
    %v5334 = vld [vmem:[%s12 + $0x528] sm:$0xff]
    %v5335 = vld [vmem:[%s12 + $0x530] sm:$0xff]
    %v5336 = vld [vmem:[%s12 + $0x538] sm:$0xff]
    %v5337 = vld [vmem:[%s12 + $0x540] sm:$0xff]
    %v5338 = vld [vmem:[%s12 + $0x548] sm:$0xff]
    %v5339 = vld [vmem:[%s12 + $0x550] sm:$0xff]
    %v5340 = vld [vmem:[%s12 + $0x558] sm:$0xff]
    %v5341 = vld [vmem:[%s12 + $0x560] sm:$0xff]
    %v5342 = vld [vmem:[%s12 + $0x568] sm:$0xff]
    %v5343 = vld [vmem:[%s12 + $0x570] sm:$0xff]
    %v5344 = vld [vmem:[%s12 + $0x578] sm:$0xff]
    %v5345 = vld [vmem:[%s12 + $0x580] sm:$0xff]
    %v5346 = vld [vmem:[%s12 + $0x588] sm:$0xff]
    %v5347 = vld [vmem:[%s12 + $0x590] sm:$0xff]
    %v5348 = vld [vmem:[%s12 + $0x598] sm:$0xff]
    %v5349 = vld [vmem:[%s12 + $0x5a0] sm:$0xff]
    %v5350 = vld [vmem:[%s12 + $0x5a8] sm:$0xff]
    %v5351 = vld [vmem:[%s12 + $0x5b0] sm:$0xff]
    %v5352 = vld [vmem:[%s12 + $0x5b8] sm:$0xff]
    %v5353 = vld [vmem:[%s12 + $0x5c0] sm:$0xff]
    %v5354 = vld [vmem:[%s12 + $0x5c8] sm:$0xff]
    %v5355 = vld [vmem:[%s12 + $0x5d0] sm:$0xff]
    %v5356 = vld [vmem:[%s12 + $0x5d8] sm:$0xff]
    %v5357 = vld [vmem:[%s12 + $0x5e0] sm:$0xff]
    %v5358 = vld [vmem:[%s12 + $0x5e8] sm:$0xff]
    %v5359 = vld [vmem:[%s12 + $0x5f0] sm:$0xff]
    %v5360 = vld [vmem:[%s12 + $0x5f8] sm:$0xff]
    %v5361 = vld [vmem:[%s12 + $0x600] sm:$0xff]
    %v5362 = vld [vmem:[%s12 + $0x608] sm:$0xff]
    %v5363 = vld [vmem:[%s12 + $0x610] sm:$0xff]
    %v5364 = vld [vmem:[%s12 + $0x618] sm:$0xff]
    %v5365 = vld [vmem:[%s12 + $0x620] sm:$0xff]
    %v5366 = vld [vmem:[%s12 + $0x628] sm:$0xff]
    %v5367 = vld [vmem:[%s12 + $0x630] sm:$0xff]
    %v5368 = vld [vmem:[%s12 + $0x638] sm:$0xff]
    %v5369 = vld [vmem:[%s12 + $0x640] sm:$0xff]
    %v5370 = vld [vmem:[%s12 + $0x648] sm:$0xff]
    %v5371 = vld [vmem:[%s12 + $0x650] sm:$0xff]
    %v5372 = vld [vmem:[%s12 + $0x658] sm:$0xff]
    %v5373 = vld [vmem:[%s12 + $0x660] sm:$0xff]
    %v5374 = vld [vmem:[%s12 + $0x668] sm:$0xff]
    %v5375 = vld [vmem:[%s12 + $0x670] sm:$0xff]
    %v5376 = vld [vmem:[%s12 + $0x678] sm:$0xff]
    %v5377 = vld [vmem:[%s12 + $0x680] sm:$0xff]
    %v5378 = vld [vmem:[%s12 + $0x688] sm:$0xff]
    %v5379 = vld [vmem:[%s12 + $0x690] sm:$0xff]
    %v5380 = vld [vmem:[%s12 + $0x698] sm:$0xff]
    %v5381 = vld [vmem:[%s12 + $0x6a0] sm:$0xff]
    %v5382 = vld [vmem:[%s12 + $0x6a8] sm:$0xff]
    %v5383 = vld [vmem:[%s12 + $0x6b0] sm:$0xff]
    %v5384 = vld [vmem:[%s12 + $0x6b8] sm:$0xff]
    %v5385 = vld [vmem:[%s12 + $0x6c0] sm:$0xff]
    %v5386 = vld [vmem:[%s12 + $0x6c8] sm:$0xff]
    %v5387 = vld [vmem:[%s12 + $0x6d0] sm:$0xff]
    %v5388 = vld [vmem:[%s12 + $0x6d8] sm:$0xff]
    %v5389 = vld [vmem:[%s12 + $0x6e0] sm:$0xff]
    %v5390 = vld [vmem:[%s12 + $0x6e8] sm:$0xff]
    %v5391 = vld [vmem:[%s12 + $0x6f0] sm:$0xff]
    %v5392 = vld [vmem:[%s12 + $0x6f8] sm:$0xff]
    %v5393 = vld [vmem:[%s12 + $0x700] sm:$0xff]
    %v5394 = vld [vmem:[%s12 + $0x708] sm:$0xff]
    %v5395 = vld [vmem:[%s12 + $0x710] sm:$0xff]
    %v5396 = vld [vmem:[%s12 + $0x718] sm:$0xff]
    %v5397 = vld [vmem:[%s12 + $0x720] sm:$0xff]
    %v5398 = vld [vmem:[%s12 + $0x728] sm:$0xff]
    %v5399 = vld [vmem:[%s12 + $0x730] sm:$0xff]
    %v5400 = vld [vmem:[%s12 + $0x738] sm:$0xff]
    %v5401 = vld [vmem:[%s12 + $0x740] sm:$0xff]
    %v5402 = vld [vmem:[%s12 + $0x748] sm:$0xff]
    %v5403 = vld [vmem:[%s12 + $0x750] sm:$0xff]
    %v5404 = vld [vmem:[%s12 + $0x758] sm:$0xff]
    %v5405 = vld [vmem:[%s12 + $0x760] sm:$0xff]
    %v5406 = vld [vmem:[%s12 + $0x768] sm:$0xff]
    %v5407 = vld [vmem:[%s12 + $0x770] sm:$0xff]
    %v5408 = vld [vmem:[%s12 + $0x778] sm:$0xff]
    %v5409 = vld [vmem:[%s12 + $0x780] sm:$0xff]
    %v5410 = vld [vmem:[%s12 + $0x788] sm:$0xff]
    %v5411 = vld [vmem:[%s12 + $0x790] sm:$0xff]
    %v5412 = vld [vmem:[%s12 + $0x798] sm:$0xff]
    %v5413 = vld [vmem:[%s12 + $0x7a0] sm:$0xff]
    %v5414 = vld [vmem:[%s12 + $0x7a8] sm:$0xff]
    %v5415 = vld [vmem:[%s12 + $0x7b0] sm:$0xff]
    %v5416 = vld [vmem:[%s12 + $0x7b8] sm:$0xff]
    %v5417 = vld [vmem:[%s12 + $0x7c0] sm:$0xff]
    %v5418 = vld [vmem:[%s12 + $0x7c8] sm:$0xff]
    %v5419 = vld [vmem:[%s12 + $0x7d0] sm:$0xff]
    %v5420 = vld [vmem:[%s12 + $0x7d8] sm:$0xff]
    %v5421 = vld [vmem:[%s12 + $0x7e0] sm:$0xff]
    %v5422 = vld [vmem:[%s12 + $0x7e8] sm:$0xff]
    %v5423 = vld [vmem:[%s12 + $0x7f0] sm:$0xff]
    %v5424 = vld [vmem:[%s12 + $0x7f8] sm:$0xff]
    %v5425 = vld [vmem:[%s12 + $0x800] sm:$0xff]
    %v5426 = vld [vmem:[%s12 + $0x808] sm:$0xff]
    %v5427 = vld [vmem:[%s12 + $0x810] sm:$0xff]
    %v5428 = vld [vmem:[%s12 + $0x818] sm:$0xff]
    %v5429 = vld [vmem:[%s12 + $0x820] sm:$0xff]
    %v5430 = vld [vmem:[%s12 + $0x828] sm:$0xff]
    %v5431 = vld [vmem:[%s12 + $0x830] sm:$0xff]
    %v5432 = vld [vmem:[%s12 + $0x838] sm:$0xff]
    %v5433 = vld [vmem:[%s12 + $0x840] sm:$0xff]
    %v5434 = vld [vmem:[%s12 + $0x848] sm:$0xff]
    %v5435 = vld [vmem:[%s12 + $0x850] sm:$0xff]
    %v5436 = vld [vmem:[%s12 + $0x858] sm:$0xff]
    %v5437 = vld [vmem:[%s12 + $0x860] sm:$0xff]
    %v5438 = vld [vmem:[%s12 + $0x868] sm:$0xff]
    %v5439 = vld [vmem:[%s12 + $0x870] sm:$0xff]
    %v5440 = vld [vmem:[%s12 + $0x878] sm:$0xff]
    %v5441 = vld [vmem:[%s12 + $0x880] sm:$0xff]
    %v5442 = vld [vmem:[%s12 + $0x888] sm:$0xff]
    %v5443 = vld [vmem:[%s12 + $0x890] sm:$0xff]
    %v5444 = vld [vmem:[%s12 + $0x898] sm:$0xff]
    %v5445 = vld [vmem:[%s12 + $0x8a0] sm:$0xff]
    %v5446 = vld [vmem:[%s12 + $0x8a8] sm:$0xff]
    %v5447 = vld [vmem:[%s12 + $0x8b0] sm:$0xff]
    %v5448 = vld [vmem:[%s12 + $0x8b8] sm:$0xff]
    %v5449 = vld [vmem:[%s12 + $0x8c0] sm:$0xff]
    %v5450 = vld [vmem:[%s12 + $0x8c8] sm:$0xff]
    %v5451 = vld [vmem:[%s12 + $0x8d0] sm:$0xff]
    %v5452 = vld [vmem:[%s12 + $0x8d8] sm:$0xff]
    %v5453 = vld [vmem:[%s12 + $0x8e0] sm:$0xff]
    %v5454 = vld [vmem:[%s12 + $0x8e8] sm:$0xff]
    %v5455 = vld [vmem:[%s12 + $0x8f0] sm:$0xff]
    %v5456 = vld [vmem:[%s12 + $0x8f8] sm:$0xff]
    %v5457 = vld [vmem:[%s12 + $0x900] sm:$0xff]
    %v5458 = vld [vmem:[%s12 + $0x908] sm:$0xff]
    %v5459 = vld [vmem:[%s12 + $0x910] sm:$0xff]
    %v5460 = vld [vmem:[%s12 + $0x918] sm:$0xff]
    %v5461 = vld [vmem:[%s12 + $0x920] sm:$0xff]
    %v5462 = vld [vmem:[%s12 + $0x928] sm:$0xff]
    %v5463 = vld [vmem:[%s12 + $0x930] sm:$0xff]
    %v5464 = vld [vmem:[%s12 + $0x938] sm:$0xff]
    %v5465 = vld [vmem:[%s12 + $0x940] sm:$0xff]
    %v5466 = vld [vmem:[%s12 + $0x948] sm:$0xff]
    %v5467 = vld [vmem:[%s12 + $0x950] sm:$0xff]
    %v5468 = vld [vmem:[%s12 + $0x958] sm:$0xff]
    %v5469 = vld [vmem:[%s12 + $0x960] sm:$0xff]
    %v5470 = vld [vmem:[%s12 + $0x968] sm:$0xff]
    %v5471 = vld [vmem:[%s12 + $0x970] sm:$0xff]
    %v5472 = vld [vmem:[%s12 + $0x978] sm:$0xff]
    %v5473 = vld [vmem:[%s12 + $0x980] sm:$0xff]
    %v5474 = vld [vmem:[%s12 + $0x988] sm:$0xff]
    %v5475 = vld [vmem:[%s12 + $0x990] sm:$0xff]
    %v5476 = vld [vmem:[%s12 + $0x998] sm:$0xff]
    %v5477 = vld [vmem:[%s12 + $0x9a0] sm:$0xff]
    %v5478 = vld [vmem:[%s12 + $0x9a8] sm:$0xff]
    %v5479 = vld [vmem:[%s12 + $0x9b0] sm:$0xff]
    %v5480 = vld [vmem:[%s12 + $0x9b8] sm:$0xff]
    %v5481 = vld [vmem:[%s12 + $0x9c0] sm:$0xff]
    %v5482 = vld [vmem:[%s12 + $0x9c8] sm:$0xff]
    %v5483 = vld [vmem:[%s12 + $0x9d0] sm:$0xff]
    %v5484 = vld [vmem:[%s12 + $0x9d8] sm:$0xff]
    %v5485 = vld [vmem:[%s12 + $0x9e0] sm:$0xff]
    %v5486 = vld [vmem:[%s12 + $0x9e8] sm:$0xff]
    %v5487 = vld [vmem:[%s12 + $0x9f0] sm:$0xff]
    %v5488 = vld [vmem:[%s12 + $0x9f8] sm:$0xff]
    %v5489 = vld [vmem:[%s12 + $0xa00] sm:$0xff]
    %v5490 = vld [vmem:[%s12 + $0xa08] sm:$0xff]
    %v5491 = vld [vmem:[%s12 + $0xa10] sm:$0xff]
    %v5492 = vld [vmem:[%s12 + $0xa18] sm:$0xff]
    %v5493 = vld [vmem:[%s12 + $0xa20] sm:$0xff]
    %v5494 = vld [vmem:[%s12 + $0xa28] sm:$0xff]
    %v5495 = vld [vmem:[%s12 + $0xa30] sm:$0xff]
    %v5496 = vld [vmem:[%s12 + $0xa38] sm:$0xff]
    %v5497 = vld [vmem:[%s12 + $0xa40] sm:$0xff]
    %v5498 = vld [vmem:[%s12 + $0xa48] sm:$0xff]
    %v5499 = vld [vmem:[%s12 + $0xa50] sm:$0xff]
    %v5500 = vld [vmem:[%s12 + $0xa58] sm:$0xff]
    %v5501 = vld [vmem:[%s12 + $0xa60] sm:$0xff]
    %v5502 = vld [vmem:[%s12 + $0xa68] sm:$0xff]
    %v5503 = vld [vmem:[%s12 + $0xa70] sm:$0xff]
    %v5504 = vld [vmem:[%s12 + $0xa78] sm:$0xff]
    %v5505 = vld [vmem:[%s12 + $0xa80] sm:$0xff]
    %v5506 = vld [vmem:[%s12 + $0xa88] sm:$0xff]
    %v5507 = vld [vmem:[%s12 + $0xa90] sm:$0xff]
    %v5508 = vld [vmem:[%s12 + $0xa98] sm:$0xff]
    %v5509 = vld [vmem:[%s12 + $0xaa0] sm:$0xff]
    %v5510 = vld [vmem:[%s12 + $0xaa8] sm:$0xff]
    %v5511 = vld [vmem:[%s12 + $0xab0] sm:$0xff]
    %v5512 = vld [vmem:[%s12 + $0xab8] sm:$0xff]
    %v5513 = vld [vmem:[%s12 + $0xac0] sm:$0xff]
    %v5514 = vld [vmem:[%s12 + $0xac8] sm:$0xff]
    %v5515 = vld [vmem:[%s12 + $0xad0] sm:$0xff]
    %v5516 = vld [vmem:[%s12 + $0xad8] sm:$0xff]
    %v5517 = vld [vmem:[%s12 + $0xae0] sm:$0xff]
    %v5518 = vld [vmem:[%s12 + $0xae8] sm:$0xff]
    %v5519 = vld [vmem:[%s12 + $0xaf0] sm:$0xff]
    %v5520 = vld [vmem:[%s12 + $0xaf8] sm:$0xff]
    %v5521 = vld [vmem:[%s12 + $0xb00] sm:$0xff]
    %v5522 = vld [vmem:[%s12 + $0xb08] sm:$0xff]
    %v5523 = vld [vmem:[%s12 + $0xb10] sm:$0xff]
    %v5524 = vld [vmem:[%s12 + $0xb18] sm:$0xff]
    %v5525 = vld [vmem:[%s12 + $0xb20] sm:$0xff]
    %v5526 = vld [vmem:[%s12 + $0xb28] sm:$0xff]
    %v5527 = vld [vmem:[%s12 + $0xb30] sm:$0xff]
    %v5528 = vld [vmem:[%s12 + $0xb38] sm:$0xff]
    %v5529 = vld [vmem:[%s12 + $0xb40] sm:$0xff]
    %v5530 = vld [vmem:[%s12 + $0xb48] sm:$0xff]
    %v5531 = vld [vmem:[%s12 + $0xb50] sm:$0xff]
    %v5532 = vld [vmem:[%s12 + $0xb58] sm:$0xff]
    %v5533 = vld [vmem:[%s12 + $0xb60] sm:$0xff]
    %v5534 = vld [vmem:[%s12 + $0xb68] sm:$0xff]
    %v5535 = vld [vmem:[%s12 + $0xb70] sm:$0xff]
    %v5536 = vld [vmem:[%s12 + $0xb78] sm:$0xff]
    %v5537 = vld [vmem:[%s12 + $0xb80] sm:$0xff]
    %v5538 = vld [vmem:[%s12 + $0xb88] sm:$0xff]
    %v5539 = vld [vmem:[%s12 + $0xb90] sm:$0xff]
    %v5540 = vld [vmem:[%s12 + $0xb98] sm:$0xff]
    %v5541 = vld [vmem:[%s12 + $0xba0] sm:$0xff]
    %v5542 = vld [vmem:[%s12 + $0xba8] sm:$0xff]
    %v5543 = vld [vmem:[%s12 + $0xbb0] sm:$0xff]
    %v5544 = vld [vmem:[%s12 + $0xbb8] sm:$0xff]
    %v5545 = vld [vmem:[%s12 + $0xbc0] sm:$0xff]
    %v5546 = vld [vmem:[%s12 + $0xbc8] sm:$0xff]
    %v5547 = vld [vmem:[%s12 + $0xbd0] sm:$0xff]
    %v5548 = vld [vmem:[%s12 + $0xbd8] sm:$0xff]
    %v5549 = vld [vmem:[%s12 + $0xbe0] sm:$0xff]
    %v5550 = vld [vmem:[%s12 + $0xbe8] sm:$0xff]
    %v5551 = vld [vmem:[%s12 + $0xbf0] sm:$0xff]
    %v5552 = vld [vmem:[%s12 + $0xbf8] sm:$0xff]
    %v5553 = vld [vmem:[%s12 + $0xc00] sm:$0xff]
    %v5554 = vld [vmem:[%s12 + $0xc08] sm:$0xff]
    %v5555 = vld [vmem:[%s12 + $0xc10] sm:$0xff]
    %v5556 = vld [vmem:[%s12 + $0xc18] sm:$0xff]
    %v5557 = vld [vmem:[%s12 + $0xc20] sm:$0xff]
    %v5558 = vld [vmem:[%s12 + $0xc28] sm:$0xff]
    %v5559 = vld [vmem:[%s12 + $0xc30] sm:$0xff]
    %v5560 = vld [vmem:[%s12 + $0xc38] sm:$0xff]
    %v5561 = vld [vmem:[%s12 + $0xc40] sm:$0xff]
    %v5562 = vld [vmem:[%s12 + $0xc48] sm:$0xff]
    %v5563 = vld [vmem:[%s12 + $0xc50] sm:$0xff]
    %v5564 = vld [vmem:[%s12 + $0xc58] sm:$0xff]
    %v5565 = vld [vmem:[%s12 + $0xc60] sm:$0xff]
    %v5566 = vld [vmem:[%s12 + $0xc68] sm:$0xff]
    %v5567 = vld [vmem:[%s12 + $0xc70] sm:$0xff]
    %v5568 = vld [vmem:[%s12 + $0xc78] sm:$0xff]
    %v5569 = vld [vmem:[%s12 + $0xc80] sm:$0xff]
    %v5570 = vld [vmem:[%s12 + $0xc88] sm:$0xff]
    %v5571 = vld [vmem:[%s12 + $0xc90] sm:$0xff]
    %v5572 = vld [vmem:[%s12 + $0xc98] sm:$0xff]
    %v5573 = vld [vmem:[%s12 + $0xca0] sm:$0xff]
    %v5574 = vld [vmem:[%s12 + $0xca8] sm:$0xff]
    %v5575 = vld [vmem:[%s12 + $0xcb0] sm:$0xff]
    %v5576 = vld [vmem:[%s12 + $0xcb8] sm:$0xff]
    %v5577 = vld [vmem:[%s12 + $0xcc0] sm:$0xff]
    %v5578 = vld [vmem:[%s12 + $0xcc8] sm:$0xff]
    %v5579 = vld [vmem:[%s12 + $0xcd0] sm:$0xff]
    %v5580 = vld [vmem:[%s12 + $0xcd8] sm:$0xff]
    %v5581 = vld [vmem:[%s12 + $0xce0] sm:$0xff]
    %v5582 = vld [vmem:[%s12 + $0xce8] sm:$0xff]
    %v5583 = vld [vmem:[%s12 + $0xcf0] sm:$0xff]
    %v5584 = vld [vmem:[%s12 + $0xcf8] sm:$0xff]
    %v5585 = vld [vmem:[%s12 + $0xd00] sm:$0xff]
    %v5586 = vld [vmem:[%s12 + $0xd08] sm:$0xff]
    %v5587 = vld [vmem:[%s12 + $0xd10] sm:$0xff]
    %v5588 = vld [vmem:[%s12 + $0xd18] sm:$0xff]
    %v5589 = vld [vmem:[%s12 + $0xd20] sm:$0xff]
    %v5590 = vld [vmem:[%s12 + $0xd28] sm:$0xff]
    %v5591 = vld [vmem:[%s12 + $0xd30] sm:$0xff]
    %v5592 = vld [vmem:[%s12 + $0xd38] sm:$0xff]
    %v5593 = vld [vmem:[%s12 + $0xd40] sm:$0xff]
    %v5594 = vld [vmem:[%s12 + $0xd48] sm:$0xff]
    %v5595 = vld [vmem:[%s12 + $0xd50] sm:$0xff]
    %v5596 = vld [vmem:[%s12 + $0xd58] sm:$0xff]
    %v5597 = vld [vmem:[%s12 + $0xd60] sm:$0xff]
    %v5598 = vld [vmem:[%s12 + $0xd68] sm:$0xff]
    %v5599 = vld [vmem:[%s12 + $0xd70] sm:$0xff]
    %v5600 = vld [vmem:[%s12 + $0xd78] sm:$0xff]
    %v5601 = vld [vmem:[%s12 + $0xd80] sm:$0xff]
    %v5602 = vld [vmem:[%s12 + $0xd88] sm:$0xff]
    %v5603 = vld [vmem:[%s12 + $0xd90] sm:$0xff]
    %v5604 = vld [vmem:[%s12 + $0xd98] sm:$0xff]
    %v5605 = vld [vmem:[%s12 + $0xda0] sm:$0xff]
    %v5606 = vld [vmem:[%s12 + $0xda8] sm:$0xff]
    %v5607 = vld [vmem:[%s12 + $0xdb0] sm:$0xff]
    %v5608 = vld [vmem:[%s12 + $0xdb8] sm:$0xff]
    %v5609 = vld [vmem:[%s12 + $0xdc0] sm:$0xff]
    %v5610 = vld [vmem:[%s12 + $0xdc8] sm:$0xff]
    %v5611 = vld [vmem:[%s12 + $0xdd0] sm:$0xff]
    %v5612 = vld [vmem:[%s12 + $0xdd8] sm:$0xff]
    %v5613 = vld [vmem:[%s12 + $0xde0] sm:$0xff]
    %v5614 = vld [vmem:[%s12 + $0xde8] sm:$0xff]
    %v5615 = vld [vmem:[%s12 + $0xdf0] sm:$0xff]
    %v5616 = vld [vmem:[%s12 + $0xdf8] sm:$0xff]
    %v5617 = vld [vmem:[%s12 + $0xe00] sm:$0xff]
    %v5618 = vld [vmem:[%s12 + $0xe08] sm:$0xff]
    %v5619 = vld [vmem:[%s12 + $0xe10] sm:$0xff]
    %v5620 = vld [vmem:[%s12 + $0xe18] sm:$0xff]
    %v5621 = vld [vmem:[%s12 + $0xe20] sm:$0xff]
    %v5622 = vld [vmem:[%s12 + $0xe28] sm:$0xff]
    %v5623 = vld [vmem:[%s12 + $0xe30] sm:$0xff]
    %v5624 = vld [vmem:[%s12 + $0xe38] sm:$0xff]
    %v5625 = vld [vmem:[%s12 + $0xe40] sm:$0xff]
    %v5626 = vld [vmem:[%s12 + $0xe48] sm:$0xff]
    %v5627 = vld [vmem:[%s12 + $0xe50] sm:$0xff]
    %v5628 = vld [vmem:[%s12 + $0xe58] sm:$0xff]
    %v5629 = vld [vmem:[%s12 + $0xe60] sm:$0xff]
    %v5630 = vld [vmem:[%s12 + $0xe68] sm:$0xff]
    %v5631 = vld [vmem:[%s12 + $0xe70] sm:$0xff]
    %v5632 = vld [vmem:[%s12 + $0xe78] sm:$0xff]
    %v5633 = vld [vmem:[%s12 + $0xe80] sm:$0xff]
    %v5634 = vld [vmem:[%s12 + $0xe88] sm:$0xff]
    %v5635 = vld [vmem:[%s12 + $0xe90] sm:$0xff]
    %v5636 = vld [vmem:[%s12 + $0xe98] sm:$0xff]
    %v5637 = vld [vmem:[%s12 + $0xea0] sm:$0xff]
    %v5638 = vld [vmem:[%s12 + $0xea8] sm:$0xff]
    %v5639 = vld [vmem:[%s12 + $0xeb0] sm:$0xff]
    %v5640 = vld [vmem:[%s12 + $0xeb8] sm:$0xff]
    %v5641 = vld [vmem:[%s12 + $0xec0] sm:$0xff]
    %v5642 = vld [vmem:[%s12 + $0xec8] sm:$0xff]
    %v5643 = vld [vmem:[%s12 + $0xed0] sm:$0xff]
    %v5644 = vld [vmem:[%s12 + $0xed8] sm:$0xff]
    %v5645 = vld [vmem:[%s12 + $0xee0] sm:$0xff]
    %v5646 = vld [vmem:[%s12 + $0xee8] sm:$0xff]
    %v5647 = vld [vmem:[%s12 + $0xef0] sm:$0xff]
    %v5648 = vld [vmem:[%s12 + $0xef8] sm:$0xff]
    %v5649 = vld [vmem:[%s12 + $0xf00] sm:$0xff]
    %v5650 = vld [vmem:[%s12 + $0xf08] sm:$0xff]
    %v5651 = vld [vmem:[%s12 + $0xf10] sm:$0xff]
    %v5652 = vld [vmem:[%s12 + $0xf18] sm:$0xff]
    %v5653 = vld [vmem:[%s12 + $0xf20] sm:$0xff]
    %v5654 = vld [vmem:[%s12 + $0xf28] sm:$0xff]
    %v5655 = vld [vmem:[%s12 + $0xf30] sm:$0xff]
    %v5656 = vld [vmem:[%s12 + $0xf38] sm:$0xff]
    %v5657 = vld [vmem:[%s12 + $0xf40] sm:$0xff]
    %v5658 = vld [vmem:[%s12 + $0xf48] sm:$0xff]
    %v5659 = vld [vmem:[%s15] sm:$0x1f]
    %v5661 = vlaneseq
    %v5662 = vshrl.u32 %v5661, 7
    %v5663 = vsub.s32 0, %v5662
    %v5664 = vrot.slane %v5659, %v5663
    %v5665 = vlaneseq
    %v5666 = vshrl.u32 %v5665, 7
    %v5667 = vsub.s32 1, %v5666
    %v5668 = vrot.slane %v5659, %v5667
    %v5669 = vlaneseq
    %v5670 = vshrl.u32 %v5669, 7
    %v5671 = vsub.s32 2, %v5670
    %v5672 = vrot.slane %v5659, %v5671
    %v5673 = vlaneseq
    %v5674 = vshrl.u32 %v5673, 7
    %v5675 = vsub.s32 3, %v5674
    %v5676 = vrot.slane %v5659, %v5675
    %v5677 = vlaneseq
    %v5678 = vshrl.u32 %v5677, 7
    %v5679 = vsub.s32 4, %v5678
    %v5680 = vrot.slane %v5659, %v5679
    %vm5686 = vcmask 130048
    %v5688 = vsel %vm5686, %v5168, 0
    %5690 = vmatprep.subr.mxu0 %v5170
    %5691 = vmatpush1.msra.mxu0 %v5169
    %5692 = vmatprep.subr.mxu0 %v5175
    %5693 = vmatpush1.msra.mxu0 %v5174
    %5694 = vmatprep.subr.mxu0 %v5180
    %5695 = vmatpush1.msra.mxu0 %v5179
    %5696 = vmatprep.subr.mxu0 %v5185
    %5697 = vmatpush1.msra.mxu0 %v5184
    %5698 = vmatprep.subr.mxu0 %v5190
    %5699 = vmatpush1.msra.mxu0 %v5189
    %5700 = vmatprep.subr.mxu0 %v5195
    %5701 = vmatpush1.msra.mxu0 %v5194
    %5702 = vmatprep.subr.mxu0 %v5200
    %5703 = vmatpush1.msra.mxu0 %v5199
    %5704 = vmatprep.subr.mxu0 %v5205
    %5705 = vmatpush1.msra.mxu0 %v5204
    %5706 = vmatprep.subr.mxu0 %v5210
    %5707 = vmatpush1.msra.mxu0 %v5209
    %5708 = vmatprep.subr.mxu0 %v5215
    %5709 = vmatpush1.msra.mxu0 %v5214
    %5710 = vmatprep.subr.mxu0 %v5220
    %5711 = vmatpush1.msra.mxu0 %v5219
    %5712 = vmatprep.subr.mxu0 %v5225
    %5713 = vmatpush1.msra.mxu0 %v5224
    %5714 = vmatprep.subr.mxu0 %v5230
    %5715 = vmatpush1.msra.mxu0 %v5229
    %5716 = vmatprep.subr.mxu0 %v5235
    %5717 = vmatpush1.msra.mxu0 %v5234
    %5718 = vmatprep.subr.mxu0 %v5240
    %5719 = vmatpush1.msra.mxu0 %v5239
    %5720 = vmatprep.subr.mxu0 %v5245
    %5721 = vmatpush1.msra.mxu0 %v5244
    %5722 = vmatprep.subr.mxu0 %v5250
    %5723 = vmatpush1.msra.mxu0 %v5249
    %5724 = vmatprep.subr.mxu0 %v5255
    %5725 = vmatpush1.msra.mxu0 %v5254
    %5726 = vmatprep.subr.mxu0 %v5260
    %5727 = vmatpush1.msra.mxu0 %v5259
    %5728 = vmatprep.subr.mxu0 %v5265
    %5729 = vmatpush1.msra.mxu0 %v5264
    %5730 = vmatprep.subr.mxu0 %v5270
    %5731 = vmatpush1.msra.mxu0 %v5269
    %5732 = vmatprep.subr.mxu0 %v5275
    %5733 = vmatpush1.msra.mxu0 %v5274
    %5734 = vmatprep.subr.mxu0 %v5280
    %5735 = vmatpush1.msra.mxu0 %v5279
    %5736 = vmatprep.subr.mxu0 %v5285
    %5737 = vmatpush1.msra.mxu0 %v5284
    %5738 = vmatprep.subr.mxu0 %v5290
    %5739 = vmatpush1.msra.mxu0 %v5289
    %5740 = vmatprep.subr.mxu0 %v5295
    %5741 = vmatpush1.msra.mxu0 %v5294
    %5742 = vmatprep.subr.mxu0 %v5300
    %5743 = vmatpush1.msra.mxu0 %v5299
    %5744 = vmatprep.subr.mxu0 %v5305
    %5745 = vmatpush1.msra.mxu0 %v5304
    %5746 = vmatprep.subr.mxu0 %v5310
    %5747 = vmatpush1.msra.mxu0 %v5309
    %5748 = vmatprep.subr.mxu0 %v5315
    %5749 = vmatpush1.msra.mxu0 %v5314
    %5750 = vmatprep.subr.mxu0 %v5320
    %5751 = vmatpush1.msra.mxu0 %v5319
    %5752 = vmatprep.subr.mxu0 %v5325
    %5753 = vmatpush1.msra.mxu0 %v5324
    %5754 = vmatprep.mubr.f32.mxu0 %v5163
    %5755 = vmatmul.mubr.f32.gmra.mrb[0].mxu0 %v5162
    %v5756 = vpop.f32.mrb[0].mxu0
    %v5757 = vadd.f32 %v5664, %v5756
    %v5758 = vpop.f32.mrb[0].mxu0
    %v5759 = vadd.f32 %v5668, %v5758
    %5760 = vdwg.mxu0
    %5761 = vmatprep.subr.mxu0 %v5330
    %5762 = vmatpush1.msra.mxu0 %v5329
    %5763 = vmatprep.subr.mxu0 %v5335
    %5764 = vmatpush1.msra.mxu0 %v5334
    %5765 = vmatprep.subr.mxu0 %v5340
    %5766 = vmatpush1.msra.mxu0 %v5339
    %5767 = vmatprep.subr.mxu0 %v5345
    %5768 = vmatpush1.msra.mxu0 %v5344
    %5769 = vmatprep.subr.mxu0 %v5350
    %5770 = vmatpush1.msra.mxu0 %v5349
    %5771 = vmatprep.subr.mxu0 %v5355
    %5772 = vmatpush1.msra.mxu0 %v5354
    %5773 = vmatprep.subr.mxu0 %v5360
    %5774 = vmatpush1.msra.mxu0 %v5359
    %5775 = vmatprep.subr.mxu0 %v5365
    %5776 = vmatpush1.msra.mxu0 %v5364
    %5777 = vmatprep.subr.mxu0 %v5370
    %5778 = vmatpush1.msra.mxu0 %v5369
    %5779 = vmatprep.subr.mxu0 %v5375
    %5780 = vmatpush1.msra.mxu0 %v5374
    %5781 = vmatprep.subr.mxu0 %v5380
    %5782 = vmatpush1.msra.mxu0 %v5379
    %5783 = vmatprep.subr.mxu0 %v5385
    %5784 = vmatpush1.msra.mxu0 %v5384
    %5785 = vmatprep.subr.mxu0 %v5390
    %5786 = vmatpush1.msra.mxu0 %v5389
    %5787 = vmatprep.subr.mxu0 %v5395
    %5788 = vmatpush1.msra.mxu0 %v5394
    %5789 = vmatprep.subr.mxu0 %v5400
    %5790 = vmatpush1.msra.mxu0 %v5399
    %5791 = vmatprep.subr.mxu0 %v5405
    %5792 = vmatpush1.msra.mxu0 %v5404
    %5793 = vmatprep.subr.mxu0 %v5410
    %5794 = vmatpush1.msra.mxu0 %v5409
    %5795 = vmatprep.subr.mxu0 %v5415
    %5796 = vmatpush1.msra.mxu0 %v5414
    %5797 = vmatprep.subr.mxu0 %v5420
    %5798 = vmatpush1.msra.mxu0 %v5419
    %5799 = vmatprep.subr.mxu0 %v5425
    %5800 = vmatpush1.msra.mxu0 %v5424
    %5801 = vmatprep.subr.mxu0 %v5430
    %5802 = vmatpush1.msra.mxu0 %v5429
    %5803 = vmatprep.subr.mxu0 %v5435
    %5804 = vmatpush1.msra.mxu0 %v5434
    %5805 = vmatprep.subr.mxu0 %v5440
    %5806 = vmatpush1.msra.mxu0 %v5439
    %5807 = vmatprep.subr.mxu0 %v5445
    %5808 = vmatpush1.msra.mxu0 %v5444
    %5809 = vmatprep.subr.mxu0 %v5450
    %5810 = vmatpush1.msra.mxu0 %v5449
    %5811 = vmatprep.subr.mxu0 %v5455
    %5812 = vmatpush1.msra.mxu0 %v5454
    %5813 = vmatprep.subr.mxu0 %v5460
    %5814 = vmatpush1.msra.mxu0 %v5459
    %5815 = vmatprep.subr.mxu0 %v5465
    %5816 = vmatpush1.msra.mxu0 %v5464
    %5817 = vmatprep.subr.mxu0 %v5470
    %5818 = vmatpush1.msra.mxu0 %v5469
    %5819 = vmatprep.subr.mxu0 %v5475
    %5820 = vmatpush1.msra.mxu0 %v5474
    %5821 = vmatprep.subr.mxu0 %v5480
    %5822 = vmatpush1.msra.mxu0 %v5479
    %5823 = vmatprep.subr.mxu0 %v5485
    %5824 = vmatpush1.msra.mxu0 %v5484
    %5825 = vmatprep.mubr.f32.mxu0 %v5165
    %5826 = vmatmul.mubr.f32.gmra.mrb[0].mxu0 %v5164
    %v5827 = vpop.f32.mrb[0].mxu0
    %v5828 = vadd.f32 %v5757, %v5827
    %v5829 = vpop.f32.mrb[0].mxu0
    %v5830 = vadd.f32 %v5759, %v5829
    %5831 = vdwg.mxu0
    %5832 = vmatprep.subr.mxu0 %v5490
    %5833 = vmatpush1.msra.mxu0 %v5489
    %5834 = vmatprep.subr.mxu0 %v5495
    %5835 = vmatpush1.msra.mxu0 %v5494
    %5836 = vmatprep.subr.mxu0 %v5500
    %5837 = vmatpush1.msra.mxu0 %v5499
    %5838 = vmatprep.subr.mxu0 %v5505
    %5839 = vmatpush1.msra.mxu0 %v5504
    %5840 = vmatprep.subr.mxu0 %v5510
    %5841 = vmatpush1.msra.mxu0 %v5509
    %5842 = vmatprep.subr.mxu0 %v5515
    %5843 = vmatpush1.msra.mxu0 %v5514
    %5844 = vmatprep.subr.mxu0 %v5520
    %5845 = vmatpush1.msra.mxu0 %v5519
    %5846 = vmatprep.subr.mxu0 %v5525
    %5847 = vmatpush1.msra.mxu0 %v5524
    %5848 = vmatprep.subr.mxu0 %v5530
    %5849 = vmatpush1.msra.mxu0 %v5529
    %5850 = vmatprep.subr.mxu0 %v5535
    %5851 = vmatpush1.msra.mxu0 %v5534
    %5852 = vmatprep.subr.mxu0 %v5540
    %5853 = vmatpush1.msra.mxu0 %v5539
    %5854 = vmatprep.subr.mxu0 %v5545
    %5855 = vmatpush1.msra.mxu0 %v5544
    %5856 = vmatprep.subr.mxu0 %v5550
    %5857 = vmatpush1.msra.mxu0 %v5549
    %5858 = vmatprep.subr.mxu0 %v5555
    %5859 = vmatpush1.msra.mxu0 %v5554
    %5860 = vmatprep.subr.mxu0 %v5560
    %5861 = vmatpush1.msra.mxu0 %v5559
    %5862 = vmatprep.subr.mxu0 %v5565
    %5863 = vmatpush1.msra.mxu0 %v5564
    %5864 = vmatprep.subr.mxu0 %v5570
    %5865 = vmatpush1.msra.mxu0 %v5569
    %5866 = vmatprep.subr.mxu0 %v5575
    %5867 = vmatpush1.msra.mxu0 %v5574
    %5868 = vmatprep.subr.mxu0 %v5580
    %5869 = vmatpush1.msra.mxu0 %v5579
    %5870 = vmatprep.subr.mxu0 %v5585
    %5871 = vmatpush1.msra.mxu0 %v5584
    %5872 = vmatprep.subr.mxu0 %v5590
    %5873 = vmatpush1.msra.mxu0 %v5589
    %5874 = vmatprep.subr.mxu0 %v5595
    %5875 = vmatpush1.msra.mxu0 %v5594
    %5876 = vmatprep.subr.mxu0 %v5600
    %5877 = vmatpush1.msra.mxu0 %v5599
    %5878 = vmatprep.subr.mxu0 %v5605
    %5879 = vmatpush1.msra.mxu0 %v5604
    %5880 = vmatprep.subr.mxu0 %v5610
    %5881 = vmatpush1.msra.mxu0 %v5609
    %5882 = vmatprep.subr.mxu0 %v5615
    %5883 = vmatpush1.msra.mxu0 %v5614
    %5884 = vmatprep.subr.mxu0 %v5620
    %5885 = vmatpush1.msra.mxu0 %v5619
    %5886 = vmatprep.subr.mxu0 %v5625
    %5887 = vmatpush1.msra.mxu0 %v5624
    %5888 = vmatprep.subr.mxu0 %v5630
    %5889 = vmatpush1.msra.mxu0 %v5629
    %5890 = vmatprep.subr.mxu0 %v5635
    %5891 = vmatpush1.msra.mxu0 %v5634
    %5892 = vmatprep.subr.mxu0 %v5640
    %5893 = vmatpush1.msra.mxu0 %v5639
    %5894 = vmatprep.subr.mxu0 %v5645
    %5895 = vmatpush1.msra.mxu0 %v5644
    %5896 = vmatprep.mubr.f32.mxu0 %v5167
    %5897 = vmatmul.mubr.f32.gmra.mrb[0].mxu0 %v5166
    %v5898 = vpop.f32.mrb[0].mxu0
    %v5899 = vadd.f32 %v5828, %v5898
    %v5900 = vpop.f32.mrb[0].mxu0
    %v5901 = vadd.f32 %v5830, %v5900
    %5902 = vdwg.mxu0
    %5903 = vmatprep.subr.mxu0 %v5650
    %5904 = vmatpush1.msra.mxu0 %v5649
    %5905 = vmatprep.subr.mxu0 %v5655
    %5906 = vmatpush1.msra.mxu0 %v5654
    %5907 = vmatprep.subr.mxu0 0.0
    %5908 = vmatpush1.msra.mxu0 0.0
    %5909 = vmatprep.subr.mxu0 0.0
    %5910 = vmatpush1.msra.mxu0 0.0
    %5911 = vmatprep.subr.mxu0 0.0
    %5912 = vmatpush1.msra.mxu0 0.0
    %5913 = vmatprep.subr.mxu0 0.0
    %5914 = vmatpush1.msra.mxu0 0.0
    %5915 = vmatprep.subr.mxu0 0.0
    %5916 = vmatpush1.msra.mxu0 0.0
    %5917 = vmatprep.subr.mxu0 0.0
    %5918 = vmatpush1.msra.mxu0 0.0
    %5919 = vmatprep.subr.mxu0 0.0
    %5920 = vmatpush1.msra.mxu0 0.0
    %5921 = vmatprep.subr.mxu0 0.0
    %5922 = vmatpush1.msra.mxu0 0.0
    %5923 = vmatprep.subr.mxu0 0.0
    %5924 = vmatpush1.msra.mxu0 0.0
    %5925 = vmatprep.subr.mxu0 0.0
    %5926 = vmatpush1.msra.mxu0 0.0
    %5927 = vmatprep.subr.mxu0 0.0
    %5928 = vmatpush1.msra.mxu0 0.0
    %5929 = vmatprep.subr.mxu0 0.0
    %5930 = vmatpush1.msra.mxu0 0.0
    %5931 = vmatprep.subr.mxu0 0.0
    %5932 = vmatpush1.msra.mxu0 0.0
    %5933 = vmatprep.subr.mxu0 0.0
    %5934 = vmatpush1.msra.mxu0 0.0
    %5935 = vmatprep.subr.mxu0 0.0
    %5936 = vmatpush1.msra.mxu0 0.0
    %5937 = vmatprep.subr.mxu0 0.0
    %5938 = vmatpush1.msra.mxu0 0.0
    %5939 = vmatprep.subr.mxu0 0.0
    %5940 = vmatpush1.msra.mxu0 0.0
    %5941 = vmatprep.subr.mxu0 0.0
    %5942 = vmatpush1.msra.mxu0 0.0
    %5943 = vmatprep.subr.mxu0 0.0
    %5944 = vmatpush1.msra.mxu0 0.0
    %5945 = vmatprep.subr.mxu0 0.0
    %5946 = vmatpush1.msra.mxu0 0.0
    %5947 = vmatprep.subr.mxu0 0.0
    %5948 = vmatpush1.msra.mxu0 0.0
    %5949 = vmatprep.subr.mxu0 0.0
    %5950 = vmatpush1.msra.mxu0 0.0
    %5951 = vmatprep.subr.mxu0 0.0
    %5952 = vmatpush1.msra.mxu0 0.0
    %5953 = vmatprep.subr.mxu0 0.0
    %5954 = vmatpush1.msra.mxu0 0.0
    %5955 = vmatprep.subr.mxu0 0.0
    %5956 = vmatpush1.msra.mxu0 0.0
    %5957 = vmatprep.subr.mxu0 0.0
    %5958 = vmatpush1.msra.mxu0 0.0
    %5959 = vmatprep.subr.mxu0 0.0
    %5960 = vmatpush1.msra.mxu0 0.0
    %5961 = vmatprep.subr.mxu0 0.0
    %5962 = vmatpush1.msra.mxu0 0.0
    %5963 = vmatprep.subr.mxu0 0.0
    %5964 = vmatpush1.msra.mxu0 0.0
    %5965 = vmatprep.subr.mxu0 0.0
    %5966 = vmatpush1.msra.mxu0 0.0
    %5967 = vmatprep.mubr.f32.mxu0 0.0
    %5968 = vmatmul.mubr.f32.gmra.mrb[0].mxu0 %v5688
    %v5969 = vpop.f32.mrb[0].mxu0
    %v5970 = vadd.f32 %v5899, %v5969
    %v5971 = vpop.f32.mrb[0].mxu0
    %v5972 = vadd.f32 %v5901, %v5971
    %5973 = vdwg.mxu0
    %5974 = vmatprep.subr.mxu0 %v5172
    %5975 = vmatpush1.msra.mxu0 %v5171
    %5976 = vmatprep.subr.mxu0 %v5177
    %5977 = vmatpush1.msra.mxu0 %v5176
    %5978 = vmatprep.subr.mxu0 %v5182
    %5979 = vmatpush1.msra.mxu0 %v5181
    %5980 = vmatprep.subr.mxu0 %v5187
    %5981 = vmatpush1.msra.mxu0 %v5186
    %5982 = vmatprep.subr.mxu0 %v5192
    %5983 = vmatpush1.msra.mxu0 %v5191
    %5984 = vmatprep.subr.mxu0 %v5197
    %5985 = vmatpush1.msra.mxu0 %v5196
    %5986 = vmatprep.subr.mxu0 %v5202
    %5987 = vmatpush1.msra.mxu0 %v5201
    %5988 = vmatprep.subr.mxu0 %v5207
    %5989 = vmatpush1.msra.mxu0 %v5206
    %5990 = vmatprep.subr.mxu0 %v5212
    %5991 = vmatpush1.msra.mxu0 %v5211
    %5992 = vmatprep.subr.mxu0 %v5217
    %5993 = vmatpush1.msra.mxu0 %v5216
    %5994 = vmatprep.subr.mxu0 %v5222
    %5995 = vmatpush1.msra.mxu0 %v5221
    %5996 = vmatprep.subr.mxu0 %v5227
    %5997 = vmatpush1.msra.mxu0 %v5226
    %5998 = vmatprep.subr.mxu0 %v5232
    %5999 = vmatpush1.msra.mxu0 %v5231
    %6000 = vmatprep.subr.mxu0 %v5237
    %6001 = vmatpush1.msra.mxu0 %v5236
    %6002 = vmatprep.subr.mxu0 %v5242
    %6003 = vmatpush1.msra.mxu0 %v5241
    %6004 = vmatprep.subr.mxu0 %v5247
    %6005 = vmatpush1.msra.mxu0 %v5246
    %6006 = vmatprep.subr.mxu0 %v5252
    %6007 = vmatpush1.msra.mxu0 %v5251
    %6008 = vmatprep.subr.mxu0 %v5257
    %6009 = vmatpush1.msra.mxu0 %v5256
    %6010 = vmatprep.subr.mxu0 %v5262
    %6011 = vmatpush1.msra.mxu0 %v5261
    %6012 = vmatprep.subr.mxu0 %v5267
    %6013 = vmatpush1.msra.mxu0 %v5266
    %6014 = vmatprep.subr.mxu0 %v5272
    %6015 = vmatpush1.msra.mxu0 %v5271
    %6016 = vmatprep.subr.mxu0 %v5277
    %6017 = vmatpush1.msra.mxu0 %v5276
    %6018 = vmatprep.subr.mxu0 %v5282
    %6019 = vmatpush1.msra.mxu0 %v5281
    %6020 = vmatprep.subr.mxu0 %v5287
    %6021 = vmatpush1.msra.mxu0 %v5286
    %6022 = vmatprep.subr.mxu0 %v5292
    %6023 = vmatpush1.msra.mxu0 %v5291
    %6024 = vmatprep.subr.mxu0 %v5297
    %6025 = vmatpush1.msra.mxu0 %v5296
    %6026 = vmatprep.subr.mxu0 %v5302
    %6027 = vmatpush1.msra.mxu0 %v5301
    %6028 = vmatprep.subr.mxu0 %v5307
    %6029 = vmatpush1.msra.mxu0 %v5306
    %6030 = vmatprep.subr.mxu0 %v5312
    %6031 = vmatpush1.msra.mxu0 %v5311
    %6032 = vmatprep.subr.mxu0 %v5317
    %6033 = vmatpush1.msra.mxu0 %v5316
    %6034 = vmatprep.subr.mxu0 %v5322
    %6035 = vmatpush1.msra.mxu0 %v5321
    %6036 = vmatprep.subr.mxu0 %v5327
    %6037 = vmatpush1.msra.mxu0 %v5326
    %6038 = vmatprep.mubr.f32.mxu0 %v5163
    %6039 = vmatmul.mubr.f32.gmra.mrb[0].mxu0 %v5162
    %v6040 = vpop.f32.mrb[0].mxu0
    %v6041 = vadd.f32 %v5672, %v6040
    %v6042 = vpop.f32.mrb[0].mxu0
    %v6043 = vadd.f32 %v5676, %v6042
    %6044 = vdwg.mxu0
    %6045 = vmatprep.subr.mxu0 %v5332
    %6046 = vmatpush1.msra.mxu0 %v5331
    %6047 = vmatprep.subr.mxu0 %v5337
    %6048 = vmatpush1.msra.mxu0 %v5336
    %6049 = vmatprep.subr.mxu0 %v5342
    %6050 = vmatpush1.msra.mxu0 %v5341
    %6051 = vmatprep.subr.mxu0 %v5347
    %6052 = vmatpush1.msra.mxu0 %v5346
    %6053 = vmatprep.subr.mxu0 %v5352
    %6054 = vmatpush1.msra.mxu0 %v5351
    %6055 = vmatprep.subr.mxu0 %v5357
    %6056 = vmatpush1.msra.mxu0 %v5356
    %6057 = vmatprep.subr.mxu0 %v5362
    %6058 = vmatpush1.msra.mxu0 %v5361
    %6059 = vmatprep.subr.mxu0 %v5367
    %6060 = vmatpush1.msra.mxu0 %v5366
    %6061 = vmatprep.subr.mxu0 %v5372
    %6062 = vmatpush1.msra.mxu0 %v5371
    %6063 = vmatprep.subr.mxu0 %v5377
    %6064 = vmatpush1.msra.mxu0 %v5376
    %6065 = vmatprep.subr.mxu0 %v5382
    %6066 = vmatpush1.msra.mxu0 %v5381
    %6067 = vmatprep.subr.mxu0 %v5387
    %6068 = vmatpush1.msra.mxu0 %v5386
    %6069 = vmatprep.subr.mxu0 %v5392
    %6070 = vmatpush1.msra.mxu0 %v5391
    %6071 = vmatprep.subr.mxu0 %v5397
    %6072 = vmatpush1.msra.mxu0 %v5396
    %6073 = vmatprep.subr.mxu0 %v5402
    %6074 = vmatpush1.msra.mxu0 %v5401
    %6075 = vmatprep.subr.mxu0 %v5407
    %6076 = vmatpush1.msra.mxu0 %v5406
    %6077 = vmatprep.subr.mxu0 %v5412
    %6078 = vmatpush1.msra.mxu0 %v5411
    %6079 = vmatprep.subr.mxu0 %v5417
    %6080 = vmatpush1.msra.mxu0 %v5416
    %6081 = vmatprep.subr.mxu0 %v5422
    %6082 = vmatpush1.msra.mxu0 %v5421
    %6083 = vmatprep.subr.mxu0 %v5427
    %6084 = vmatpush1.msra.mxu0 %v5426
    %6085 = vmatprep.subr.mxu0 %v5432
    %6086 = vmatpush1.msra.mxu0 %v5431
    %6087 = vmatprep.subr.mxu0 %v5437
    %6088 = vmatpush1.msra.mxu0 %v5436
    %6089 = vmatprep.subr.mxu0 %v5442
    %6090 = vmatpush1.msra.mxu0 %v5441
    %6091 = vmatprep.subr.mxu0 %v5447
    %6092 = vmatpush1.msra.mxu0 %v5446
    %6093 = vmatprep.subr.mxu0 %v5452
    %6094 = vmatpush1.msra.mxu0 %v5451
    %6095 = vmatprep.subr.mxu0 %v5457
    %6096 = vmatpush1.msra.mxu0 %v5456
    %6097 = vmatprep.subr.mxu0 %v5462
    %6098 = vmatpush1.msra.mxu0 %v5461
    %6099 = vmatprep.subr.mxu0 %v5467
    %6100 = vmatpush1.msra.mxu0 %v5466
    %6101 = vmatprep.subr.mxu0 %v5472
    %6102 = vmatpush1.msra.mxu0 %v5471
    %6103 = vmatprep.subr.mxu0 %v5477
    %6104 = vmatpush1.msra.mxu0 %v5476
    %6105 = vmatprep.subr.mxu0 %v5482
    %6106 = vmatpush1.msra.mxu0 %v5481
    %6107 = vmatprep.subr.mxu0 %v5487
    %6108 = vmatpush1.msra.mxu0 %v5486
    %6109 = vmatprep.mubr.f32.mxu0 %v5165
    %6110 = vmatmul.mubr.f32.gmra.mrb[0].mxu0 %v5164
    %v6111 = vpop.f32.mrb[0].mxu0
    %v6112 = vadd.f32 %v6041, %v6111
    %v6113 = vpop.f32.mrb[0].mxu0
    %v6114 = vadd.f32 %v6043, %v6113
    %6115 = vdwg.mxu0
    %6116 = vmatprep.subr.mxu0 %v5492
    %6117 = vmatpush1.msra.mxu0 %v5491
    %6118 = vmatprep.subr.mxu0 %v5497
    %6119 = vmatpush1.msra.mxu0 %v5496
    %6120 = vmatprep.subr.mxu0 %v5502
    %6121 = vmatpush1.msra.mxu0 %v5501
    %6122 = vmatprep.subr.mxu0 %v5507
    %6123 = vmatpush1.msra.mxu0 %v5506
    %6124 = vmatprep.subr.mxu0 %v5512
    %6125 = vmatpush1.msra.mxu0 %v5511
    %6126 = vmatprep.subr.mxu0 %v5517
    %6127 = vmatpush1.msra.mxu0 %v5516
    %6128 = vmatprep.subr.mxu0 %v5522
    %6129 = vmatpush1.msra.mxu0 %v5521
    %6130 = vmatprep.subr.mxu0 %v5527
    %6131 = vmatpush1.msra.mxu0 %v5526
    %6132 = vmatprep.subr.mxu0 %v5532
    %6133 = vmatpush1.msra.mxu0 %v5531
    %6134 = vmatprep.subr.mxu0 %v5537
    %6135 = vmatpush1.msra.mxu0 %v5536
    %6136 = vmatprep.subr.mxu0 %v5542
    %6137 = vmatpush1.msra.mxu0 %v5541
    %6138 = vmatprep.subr.mxu0 %v5547
    %6139 = vmatpush1.msra.mxu0 %v5546
    %6140 = vmatprep.subr.mxu0 %v5552
    %6141 = vmatpush1.msra.mxu0 %v5551
    %6142 = vmatprep.subr.mxu0 %v5557
    %6143 = vmatpush1.msra.mxu0 %v5556
    %6144 = vmatprep.subr.mxu0 %v5562
    %6145 = vmatpush1.msra.mxu0 %v5561
    %6146 = vmatprep.subr.mxu0 %v5567
    %6147 = vmatpush1.msra.mxu0 %v5566
    %6148 = vmatprep.subr.mxu0 %v5572
    %6149 = vmatpush1.msra.mxu0 %v5571
    %6150 = vmatprep.subr.mxu0 %v5577
    %6151 = vmatpush1.msra.mxu0 %v5576
    %6152 = vmatprep.subr.mxu0 %v5582
    %6153 = vmatpush1.msra.mxu0 %v5581
    %6154 = vmatprep.subr.mxu0 %v5587
    %6155 = vmatpush1.msra.mxu0 %v5586
    %6156 = vmatprep.subr.mxu0 %v5592
    %6157 = vmatpush1.msra.mxu0 %v5591
    %6158 = vmatprep.subr.mxu0 %v5597
    %6159 = vmatpush1.msra.mxu0 %v5596
    %6160 = vmatprep.subr.mxu0 %v5602
    %6161 = vmatpush1.msra.mxu0 %v5601
    %6162 = vmatprep.subr.mxu0 %v5607
    %6163 = vmatpush1.msra.mxu0 %v5606
    %6164 = vmatprep.subr.mxu0 %v5612
    %6165 = vmatpush1.msra.mxu0 %v5611
    %6166 = vmatprep.subr.mxu0 %v5617
    %6167 = vmatpush1.msra.mxu0 %v5616
    %6168 = vmatprep.subr.mxu0 %v5622
    %6169 = vmatpush1.msra.mxu0 %v5621
    %6170 = vmatprep.subr.mxu0 %v5627
    %6171 = vmatpush1.msra.mxu0 %v5626
    %6172 = vmatprep.subr.mxu0 %v5632
    %6173 = vmatpush1.msra.mxu0 %v5631
    %6174 = vmatprep.subr.mxu0 %v5637
    %6175 = vmatpush1.msra.mxu0 %v5636
    %6176 = vmatprep.subr.mxu0 %v5642
    %6177 = vmatpush1.msra.mxu0 %v5641
    %6178 = vmatprep.subr.mxu0 %v5647
    %6179 = vmatpush1.msra.mxu0 %v5646
    %6180 = vmatprep.mubr.f32.mxu0 %v5167
    %6181 = vmatmul.mubr.f32.gmra.mrb[0].mxu0 %v5166
    %v6182 = vpop.f32.mrb[0].mxu0
    %v6183 = vadd.f32 %v6112, %v6182
    %v6184 = vpop.f32.mrb[0].mxu0
    %v6185 = vadd.f32 %v6114, %v6184
    %6186 = vdwg.mxu0
    %6187 = vmatprep.subr.mxu0 %v5652
    %6188 = vmatpush1.msra.mxu0 %v5651
    %6189 = vmatprep.subr.mxu0 %v5657
    %6190 = vmatpush1.msra.mxu0 %v5656
    %6191 = vmatprep.subr.mxu0 0.0
    %6192 = vmatpush1.msra.mxu0 0.0
    %6193 = vmatprep.subr.mxu0 0.0
    %6194 = vmatpush1.msra.mxu0 0.0
    %6195 = vmatprep.subr.mxu0 0.0
    %6196 = vmatpush1.msra.mxu0 0.0
    %6197 = vmatprep.subr.mxu0 0.0
    %6198 = vmatpush1.msra.mxu0 0.0
    %6199 = vmatprep.subr.mxu0 0.0
    %6200 = vmatpush1.msra.mxu0 0.0
    %6201 = vmatprep.subr.mxu0 0.0
    %6202 = vmatpush1.msra.mxu0 0.0
    %6203 = vmatprep.subr.mxu0 0.0
    %6204 = vmatpush1.msra.mxu0 0.0
    %6205 = vmatprep.subr.mxu0 0.0
    %6206 = vmatpush1.msra.mxu0 0.0
    %6207 = vmatprep.subr.mxu0 0.0
    %6208 = vmatpush1.msra.mxu0 0.0
    %6209 = vmatprep.subr.mxu0 0.0
    %6210 = vmatpush1.msra.mxu0 0.0
    %6211 = vmatprep.subr.mxu0 0.0
    %6212 = vmatpush1.msra.mxu0 0.0
    %6213 = vmatprep.subr.mxu0 0.0
    %6214 = vmatpush1.msra.mxu0 0.0
    %6215 = vmatprep.subr.mxu0 0.0
    %6216 = vmatpush1.msra.mxu0 0.0
    %6217 = vmatprep.subr.mxu0 0.0
    %6218 = vmatpush1.msra.mxu0 0.0
    %6219 = vmatprep.subr.mxu0 0.0
    %6220 = vmatpush1.msra.mxu0 0.0
    %6221 = vmatprep.subr.mxu0 0.0
    %6222 = vmatpush1.msra.mxu0 0.0
    %6223 = vmatprep.subr.mxu0 0.0
    %6224 = vmatpush1.msra.mxu0 0.0
    %6225 = vmatprep.subr.mxu0 0.0
    %6226 = vmatpush1.msra.mxu0 0.0
    %6227 = vmatprep.subr.mxu0 0.0
    %6228 = vmatpush1.msra.mxu0 0.0
    %6229 = vmatprep.subr.mxu0 0.0
    %6230 = vmatpush1.msra.mxu0 0.0
    %6231 = vmatprep.subr.mxu0 0.0
    %6232 = vmatpush1.msra.mxu0 0.0
    %6233 = vmatprep.subr.mxu0 0.0
    %6234 = vmatpush1.msra.mxu0 0.0
    %6235 = vmatprep.subr.mxu0 0.0
    %6236 = vmatpush1.msra.mxu0 0.0
    %6237 = vmatprep.subr.mxu0 0.0
    %6238 = vmatpush1.msra.mxu0 0.0
    %6239 = vmatprep.subr.mxu0 0.0
    %6240 = vmatpush1.msra.mxu0 0.0
    %6241 = vmatprep.subr.mxu0 0.0
    %6242 = vmatpush1.msra.mxu0 0.0
    %6243 = vmatprep.subr.mxu0 0.0
    %6244 = vmatpush1.msra.mxu0 0.0
    %6245 = vmatprep.subr.mxu0 0.0
    %6246 = vmatpush1.msra.mxu0 0.0
    %6247 = vmatprep.subr.mxu0 0.0
    %6248 = vmatpush1.msra.mxu0 0.0
    %6249 = vmatprep.subr.mxu0 0.0
    %6250 = vmatpush1.msra.mxu0 0.0
    %6251 = vmatprep.mubr.f32.mxu0 0.0
    %6252 = vmatmul.mubr.f32.gmra.mrb[0].mxu0 %v5688
    %v6253 = vpop.f32.mrb[0].mxu0
    %v6254 = vadd.f32 %v6183, %v6253
    %v6255 = vpop.f32.mrb[0].mxu0
    %v6256 = vadd.f32 %v6185, %v6255
    %6257 = vdwg.mxu0
    %6258 = vmatprep.subr.mxu0 0.0
    %6259 = vmatpush1.msra.mxu0 %v5173
    %6260 = vmatprep.subr.mxu0 0.0
    %6261 = vmatpush1.msra.mxu0 %v5178
    %6262 = vmatprep.subr.mxu0 0.0
    %6263 = vmatpush1.msra.mxu0 %v5183
    %6264 = vmatprep.subr.mxu0 0.0
    %6265 = vmatpush1.msra.mxu0 %v5188
    %6266 = vmatprep.subr.mxu0 0.0
    %6267 = vmatpush1.msra.mxu0 %v5193
    %6268 = vmatprep.subr.mxu0 0.0
    %6269 = vmatpush1.msra.mxu0 %v5198
    %6270 = vmatprep.subr.mxu0 0.0
    %6271 = vmatpush1.msra.mxu0 %v5203
    %6272 = vmatprep.subr.mxu0 0.0
    %6273 = vmatpush1.msra.mxu0 %v5208
    %6274 = vmatprep.subr.mxu0 0.0
    %6275 = vmatpush1.msra.mxu0 %v5213
    %6276 = vmatprep.subr.mxu0 0.0
    %6277 = vmatpush1.msra.mxu0 %v5218
    %6278 = vmatprep.subr.mxu0 0.0
    %6279 = vmatpush1.msra.mxu0 %v5223
    %6280 = vmatprep.subr.mxu0 0.0
    %6281 = vmatpush1.msra.mxu0 %v5228
    %6282 = vmatprep.subr.mxu0 0.0
    %6283 = vmatpush1.msra.mxu0 %v5233
    %6284 = vmatprep.subr.mxu0 0.0
    %6285 = vmatpush1.msra.mxu0 %v5238
    %6286 = vmatprep.subr.mxu0 0.0
    %6287 = vmatpush1.msra.mxu0 %v5243
    %6288 = vmatprep.subr.mxu0 0.0
    %6289 = vmatpush1.msra.mxu0 %v5248
    %6290 = vmatprep.subr.mxu0 0.0
    %6291 = vmatpush1.msra.mxu0 %v5253
    %6292 = vmatprep.subr.mxu0 0.0
    %6293 = vmatpush1.msra.mxu0 %v5258
    %6294 = vmatprep.subr.mxu0 0.0
    %6295 = vmatpush1.msra.mxu0 %v5263
    %6296 = vmatprep.subr.mxu0 0.0
    %6297 = vmatpush1.msra.mxu0 %v5268
    %6298 = vmatprep.subr.mxu0 0.0
    %6299 = vmatpush1.msra.mxu0 %v5273
    %6300 = vmatprep.subr.mxu0 0.0
    %6301 = vmatpush1.msra.mxu0 %v5278
    %6302 = vmatprep.subr.mxu0 0.0
    %6303 = vmatpush1.msra.mxu0 %v5283
    %6304 = vmatprep.subr.mxu0 0.0
    %6305 = vmatpush1.msra.mxu0 %v5288
    %6306 = vmatprep.subr.mxu0 0.0
    %6307 = vmatpush1.msra.mxu0 %v5293
    %6308 = vmatprep.subr.mxu0 0.0
    %6309 = vmatpush1.msra.mxu0 %v5298
    %6310 = vmatprep.subr.mxu0 0.0
    %6311 = vmatpush1.msra.mxu0 %v5303
    %6312 = vmatprep.subr.mxu0 0.0
    %6313 = vmatpush1.msra.mxu0 %v5308
    %6314 = vmatprep.subr.mxu0 0.0
    %6315 = vmatpush1.msra.mxu0 %v5313
    %6316 = vmatprep.subr.mxu0 0.0
    %6317 = vmatpush1.msra.mxu0 %v5318
    %6318 = vmatprep.subr.mxu0 0.0
    %6319 = vmatpush1.msra.mxu0 %v5323
    %6320 = vmatprep.subr.mxu0 0.0
    %6321 = vmatpush1.msra.mxu0 %v5328
    %6322 = vmatprep.mubr.f32.mxu0 %v5163
    %6323 = vmatmul.mubr.f32.gmra.mrb[0].mxu0 %v5162
    %v6324 = vpop.f32.mrb[0].mxu0
    %v6325 = vadd.f32 %v5680, %v6324
    %v6326 = vpop.f32.mrb[0].mxu0
    %6327 = vdwg.mxu0
    %6328 = vmatprep.subr.mxu0 0.0
    %6329 = vmatpush1.msra.mxu0 %v5333
    %6330 = vmatprep.subr.mxu0 0.0
    %6331 = vmatpush1.msra.mxu0 %v5338
    %6332 = vmatprep.subr.mxu0 0.0
    %6333 = vmatpush1.msra.mxu0 %v5343
    %6334 = vmatprep.subr.mxu0 0.0
    %6335 = vmatpush1.msra.mxu0 %v5348
    %6336 = vmatprep.subr.mxu0 0.0
    %6337 = vmatpush1.msra.mxu0 %v5353
    %6338 = vmatprep.subr.mxu0 0.0
    %6339 = vmatpush1.msra.mxu0 %v5358
    %6340 = vmatprep.subr.mxu0 0.0
    %6341 = vmatpush1.msra.mxu0 %v5363
    %6342 = vmatprep.subr.mxu0 0.0
    %6343 = vmatpush1.msra.mxu0 %v5368
    %6344 = vmatprep.subr.mxu0 0.0
    %6345 = vmatpush1.msra.mxu0 %v5373
    %6346 = vmatprep.subr.mxu0 0.0
    %6347 = vmatpush1.msra.mxu0 %v5378
    %6348 = vmatprep.subr.mxu0 0.0
    %6349 = vmatpush1.msra.mxu0 %v5383
    %6350 = vmatprep.subr.mxu0 0.0
    %6351 = vmatpush1.msra.mxu0 %v5388
    %6352 = vmatprep.subr.mxu0 0.0
    %6353 = vmatpush1.msra.mxu0 %v5393
    %6354 = vmatprep.subr.mxu0 0.0
    %6355 = vmatpush1.msra.mxu0 %v5398
    %6356 = vmatprep.subr.mxu0 0.0
    %6357 = vmatpush1.msra.mxu0 %v5403
    %6358 = vmatprep.subr.mxu0 0.0
    %6359 = vmatpush1.msra.mxu0 %v5408
    %6360 = vmatprep.subr.mxu0 0.0
    %6361 = vmatpush1.msra.mxu0 %v5413
    %6362 = vmatprep.subr.mxu0 0.0
    %6363 = vmatpush1.msra.mxu0 %v5418
    %6364 = vmatprep.subr.mxu0 0.0
    %6365 = vmatpush1.msra.mxu0 %v5423
    %6366 = vmatprep.subr.mxu0 0.0
    %6367 = vmatpush1.msra.mxu0 %v5428
    %6368 = vmatprep.subr.mxu0 0.0
    %6369 = vmatpush1.msra.mxu0 %v5433
    %6370 = vmatprep.subr.mxu0 0.0
    %6371 = vmatpush1.msra.mxu0 %v5438
    %6372 = vmatprep.subr.mxu0 0.0
    %6373 = vmatpush1.msra.mxu0 %v5443
    %6374 = vmatprep.subr.mxu0 0.0
    %6375 = vmatpush1.msra.mxu0 %v5448
    %6376 = vmatprep.subr.mxu0 0.0
    %6377 = vmatpush1.msra.mxu0 %v5453
    %6378 = vmatprep.subr.mxu0 0.0
    %6379 = vmatpush1.msra.mxu0 %v5458
    %6380 = vmatprep.subr.mxu0 0.0
    %6381 = vmatpush1.msra.mxu0 %v5463
    %6382 = vmatprep.subr.mxu0 0.0
    %6383 = vmatpush1.msra.mxu0 %v5468
    %6384 = vmatprep.subr.mxu0 0.0
    %6385 = vmatpush1.msra.mxu0 %v5473
    %6386 = vmatprep.subr.mxu0 0.0
    %6387 = vmatpush1.msra.mxu0 %v5478
    %6388 = vmatprep.subr.mxu0 0.0
    %6389 = vmatpush1.msra.mxu0 %v5483
    %6390 = vmatprep.subr.mxu0 0.0
    %6391 = vmatpush1.msra.mxu0 %v5488
    %6392 = vmatprep.mubr.f32.mxu0 %v5165
    %6393 = vmatmul.mubr.f32.gmra.mrb[0].mxu0 %v5164
    %v6394 = vpop.f32.mrb[0].mxu0
    %v6395 = vadd.f32 %v6325, %v6394
    %v6396 = vpop.f32.mrb[0].mxu0
    %6397 = vdwg.mxu0
    %6398 = vmatprep.subr.mxu0 0.0
    %6399 = vmatpush1.msra.mxu0 %v5493
    %6400 = vmatprep.subr.mxu0 0.0
    %6401 = vmatpush1.msra.mxu0 %v5498
    %6402 = vmatprep.subr.mxu0 0.0
    %6403 = vmatpush1.msra.mxu0 %v5503
    %6404 = vmatprep.subr.mxu0 0.0
    %6405 = vmatpush1.msra.mxu0 %v5508
    %6406 = vmatprep.subr.mxu0 0.0
    %6407 = vmatpush1.msra.mxu0 %v5513
    %6408 = vmatprep.subr.mxu0 0.0
    %6409 = vmatpush1.msra.mxu0 %v5518
    %6410 = vmatprep.subr.mxu0 0.0
    %6411 = vmatpush1.msra.mxu0 %v5523
    %6412 = vmatprep.subr.mxu0 0.0
    %6413 = vmatpush1.msra.mxu0 %v5528
    %6414 = vmatprep.subr.mxu0 0.0
    %6415 = vmatpush1.msra.mxu0 %v5533
    %6416 = vmatprep.subr.mxu0 0.0
    %6417 = vmatpush1.msra.mxu0 %v5538
    %6418 = vmatprep.subr.mxu0 0.0
    %6419 = vmatpush1.msra.mxu0 %v5543
    %6420 = vmatprep.subr.mxu0 0.0
    %6421 = vmatpush1.msra.mxu0 %v5548
    %6422 = vmatprep.subr.mxu0 0.0
    %6423 = vmatpush1.msra.mxu0 %v5553
    %6424 = vmatprep.subr.mxu0 0.0
    %6425 = vmatpush1.msra.mxu0 %v5558
    %6426 = vmatprep.subr.mxu0 0.0
    %6427 = vmatpush1.msra.mxu0 %v5563
    %6428 = vmatprep.subr.mxu0 0.0
    %6429 = vmatpush1.msra.mxu0 %v5568
    %6430 = vmatprep.subr.mxu0 0.0
    %6431 = vmatpush1.msra.mxu0 %v5573
    %6432 = vmatprep.subr.mxu0 0.0
    %6433 = vmatpush1.msra.mxu0 %v5578
    %6434 = vmatprep.subr.mxu0 0.0
    %6435 = vmatpush1.msra.mxu0 %v5583
    %6436 = vmatprep.subr.mxu0 0.0
    %6437 = vmatpush1.msra.mxu0 %v5588
    %6438 = vmatprep.subr.mxu0 0.0
    %6439 = vmatpush1.msra.mxu0 %v5593
    %6440 = vmatprep.subr.mxu0 0.0
    %6441 = vmatpush1.msra.mxu0 %v5598
    %6442 = vmatprep.subr.mxu0 0.0
    %6443 = vmatpush1.msra.mxu0 %v5603
    %6444 = vmatprep.subr.mxu0 0.0
    %6445 = vmatpush1.msra.mxu0 %v5608
    %6446 = vmatprep.subr.mxu0 0.0
    %6447 = vmatpush1.msra.mxu0 %v5613
    %6448 = vmatprep.subr.mxu0 0.0
    %6449 = vmatpush1.msra.mxu0 %v5618
    %6450 = vmatprep.subr.mxu0 0.0
    %6451 = vmatpush1.msra.mxu0 %v5623
    %6452 = vmatprep.subr.mxu0 0.0
    %6453 = vmatpush1.msra.mxu0 %v5628
    %6454 = vmatprep.subr.mxu0 0.0
    %6455 = vmatpush1.msra.mxu0 %v5633
    %6456 = vmatprep.subr.mxu0 0.0
    %6457 = vmatpush1.msra.mxu0 %v5638
    %6458 = vmatprep.subr.mxu0 0.0
    %6459 = vmatpush1.msra.mxu0 %v5643
    %6460 = vmatprep.subr.mxu0 0.0
    %6461 = vmatpush1.msra.mxu0 %v5648
    %6462 = vmatprep.mubr.f32.mxu0 %v5167
    %6463 = vmatmul.mubr.f32.gmra.mrb[0].mxu0 %v5166
    %v6464 = vpop.f32.mrb[0].mxu0
    %v6465 = vadd.f32 %v6395, %v6464
    %v6466 = vpop.f32.mrb[0].mxu0
    %6467 = vdwg.mxu0
    %6468 = vmatprep.subr.mxu0 0.0
    %6469 = vmatpush1.msra.mxu0 %v5653
    %6470 = vmatprep.subr.mxu0 0.0
    %6471 = vmatpush1.msra.mxu0 %v5658
    %6472 = vmatprep.subr.mxu0 0.0
    %6473 = vmatpush1.msra.mxu0 0.0
    %6474 = vmatprep.subr.mxu0 0.0
    %6475 = vmatpush1.msra.mxu0 0.0
    %6476 = vmatprep.subr.mxu0 0.0
    %6477 = vmatpush1.msra.mxu0 0.0
    %6478 = vmatprep.subr.mxu0 0.0
    %6479 = vmatpush1.msra.mxu0 0.0
    %6480 = vmatprep.subr.mxu0 0.0
    %6481 = vmatpush1.msra.mxu0 0.0
    %6482 = vmatprep.subr.mxu0 0.0
    %6483 = vmatpush1.msra.mxu0 0.0
    %6484 = vmatprep.subr.mxu0 0.0
    %6485 = vmatpush1.msra.mxu0 0.0
    %6486 = vmatprep.subr.mxu0 0.0
    %6487 = vmatpush1.msra.mxu0 0.0
    %6488 = vmatprep.subr.mxu0 0.0
    %6489 = vmatpush1.msra.mxu0 0.0
    %6490 = vmatprep.subr.mxu0 0.0
    %6491 = vmatpush1.msra.mxu0 0.0
    %6492 = vmatprep.subr.mxu0 0.0
    %6493 = vmatpush1.msra.mxu0 0.0
    %6494 = vmatprep.subr.mxu0 0.0
    %6495 = vmatpush1.msra.mxu0 0.0
    %6496 = vmatprep.subr.mxu0 0.0
    %6497 = vmatpush1.msra.mxu0 0.0
    %6498 = vmatprep.subr.mxu0 0.0
    %6499 = vmatpush1.msra.mxu0 0.0
    %6500 = vmatprep.subr.mxu0 0.0
    %6501 = vmatpush1.msra.mxu0 0.0
    %6502 = vmatprep.subr.mxu0 0.0
    %6503 = vmatpush1.msra.mxu0 0.0
    %6504 = vmatprep.subr.mxu0 0.0
    %6505 = vmatpush1.msra.mxu0 0.0
    %6506 = vmatprep.subr.mxu0 0.0
    %6507 = vmatpush1.msra.mxu0 0.0
    %6508 = vmatprep.subr.mxu0 0.0
    %6509 = vmatpush1.msra.mxu0 0.0
    %6510 = vmatprep.subr.mxu0 0.0
    %6511 = vmatpush1.msra.mxu0 0.0
    %6512 = vmatprep.subr.mxu0 0.0
    %6513 = vmatpush1.msra.mxu0 0.0
    %6514 = vmatprep.subr.mxu0 0.0
    %6515 = vmatpush1.msra.mxu0 0.0
    %6516 = vmatprep.subr.mxu0 0.0
    %6517 = vmatpush1.msra.mxu0 0.0
    %6518 = vmatprep.subr.mxu0 0.0
    %6519 = vmatpush1.msra.mxu0 0.0
    %6520 = vmatprep.subr.mxu0 0.0
    %6521 = vmatpush1.msra.mxu0 0.0
    %6522 = vmatprep.subr.mxu0 0.0
    %6523 = vmatpush1.msra.mxu0 0.0
    %6524 = vmatprep.subr.mxu0 0.0
    %6525 = vmatpush1.msra.mxu0 0.0
    %6526 = vmatprep.subr.mxu0 0.0
    %6527 = vmatpush1.msra.mxu0 0.0
    %6528 = vmatprep.subr.mxu0 0.0
    %6529 = vmatpush1.msra.mxu0 0.0
    %6530 = vmatprep.subr.mxu0 0.0
    %6531 = vmatpush1.msra.mxu0 0.0
    %6532 = vmatprep.mubr.f32.mxu0 0.0
    %6533 = vmatmul.mubr.f32.gmra.mrb[0].mxu0 %v5688
    %v6534 = vpop.f32.mrb[0].mxu0
    %v6535 = vadd.f32 %v6465, %v6534
    %v6536 = vpop.f32.mrb[0].mxu0
    %6537 = vdwg.mxu0
    %v6538 = vmax.f32 %v5970, 0.0
    %v6539 = vmax.f32 %v5972, 0.0
    %v6540 = vmax.f32 %v6254, 0.0
    %v6541 = vmax.f32 %v6256, 0.0
    %v6542 = vmax.f32 %v6535, 0.0
    %v6543 = vld [vmem:[#allocation5] sm:$0xff]
    %v6544 = vld [vmem:[#allocation5 + $0x8] sm:$0xff]
    %v6545 = vld [vmem:[#allocation5 + $0x10] sm:$0xff]
    %v6546 = vld [vmem:[#allocation5 + $0x18] sm:$0xff]
    %v6547 = vld [vmem:[#allocation5 + $0x20] sm:$0xff]
    %v6548 = vld [vmem:[#allocation5 + $0x28] sm:$0xff]
    %v6549 = vld [vmem:[#allocation5 + $0x30] sm:$0xff]
    %v6550 = vld [vmem:[#allocation5 + $0x38] sm:$0xff]
    %v6551 = vld [vmem:[#allocation5 + $0x40] sm:$0xff]
    %v6552 = vld [vmem:[#allocation5 + $0x48] sm:$0xff]
    %v6553 = vld [vmem:[#allocation5 + $0x50] sm:$0xff]
    %v6554 = vld [vmem:[#allocation5 + $0x58] sm:$0xff]
    %v6555 = vld [vmem:[#allocation5 + $0x60] sm:$0xff]
    %v6556 = vld [vmem:[#allocation5 + $0x68] sm:$0xff]
    %v6557 = vld [vmem:[#allocation5 + $0x70] sm:$0xff]
    %v6558 = vld [vmem:[#allocation5 + $0x78] sm:$0xff]
    %v6559 = vld [vmem:[#allocation5 + $0x80] sm:$0xff]
    %v6560 = vld [vmem:[#allocation5 + $0x88] sm:$0xff]
    %v6561 = vld [vmem:[#allocation5 + $0x90] sm:$0xff]
    %v6562 = vld [vmem:[#allocation5 + $0x98] sm:$0xff]
    %v6563 = vld [vmem:[#allocation5 + $0xa0] sm:$0xff]
    %v6564 = vld [vmem:[#allocation5 + $0xa8] sm:$0xff]
    %v6565 = vld [vmem:[#allocation5 + $0xb0] sm:$0xff]
    %v6566 = vld [vmem:[#allocation5 + $0xb8] sm:$0xff]
    %v6567 = vld [vmem:[#allocation5 + $0xc0] sm:$0xff]
    %v6568 = vld [vmem:[#allocation5 + $0xc8] sm:$0xff]
    %v6569 = vld [vmem:[#allocation5 + $0xd0] sm:$0xff]
    %v6570 = vld [vmem:[#allocation5 + $0xd8] sm:$0xff]
    %v6571 = vld [vmem:[#allocation5 + $0xe0] sm:$0xff]
    %v6572 = vld [vmem:[#allocation5 + $0xe8] sm:$0xff]
    %v6573 = vld [vmem:[#allocation5 + $0xf0] sm:$0xff]
    %v6574 = vld [vmem:[#allocation5 + $0xf8] sm:$0xff]
    %v6575 = vld [vmem:[#allocation5 + $0x100] sm:$0xff]
    %v6576 = vld [vmem:[#allocation5 + $0x108] sm:$0xff]
    %v6577 = vld [vmem:[#allocation5 + $0x110] sm:$0xff]
    %v6578 = vld [vmem:[#allocation5 + $0x118] sm:$0xff]
    %v6579 = vld [vmem:[#allocation5 + $0x120] sm:$0xff]
    %v6580 = vld [vmem:[#allocation5 + $0x128] sm:$0xff]
    %v6581 = vld [vmem:[#allocation5 + $0x130] sm:$0xff]
    %v6582 = vld [vmem:[#allocation5 + $0x138] sm:$0xff]
    %v6583 = vld [vmem:[#allocation5 + $0x140] sm:$0xff]
    %v6584 = vld [vmem:[#allocation5 + $0x148] sm:$0xff]
    %v6585 = vld [vmem:[#allocation5 + $0x150] sm:$0xff]
    %v6586 = vld [vmem:[#allocation5 + $0x158] sm:$0xff]
    %v6587 = vld [vmem:[#allocation5 + $0x160] sm:$0xff]
    %v6588 = vld [vmem:[#allocation5 + $0x168] sm:$0xff]
    %v6589 = vld [vmem:[#allocation5 + $0x170] sm:$0xff]
    %v6590 = vld [vmem:[#allocation5 + $0x178] sm:$0xff]
    %v6591 = vld [vmem:[#allocation5 + $0x180] sm:$0xff]
    %v6592 = vld [vmem:[#allocation5 + $0x188] sm:$0xff]
    %v6593 = vld [vmem:[#allocation5 + $0x190] sm:$0xff]
    %v6594 = vld [vmem:[#allocation5 + $0x198] sm:$0xff]
    %v6595 = vld [vmem:[#allocation5 + $0x1a0] sm:$0xff]
    %v6596 = vld [vmem:[#allocation5 + $0x1a8] sm:$0xff]
    %v6597 = vld [vmem:[#allocation5 + $0x1b0] sm:$0xff]
    %v6598 = vld [vmem:[#allocation5 + $0x1b8] sm:$0xff]
    %v6599 = vld [vmem:[#allocation5 + $0x1c0] sm:$0xff]
    %v6600 = vld [vmem:[#allocation5 + $0x1c8] sm:$0xff]
    %v6601 = vld [vmem:[#allocation5 + $0x1d0] sm:$0xff]
    %v6602 = vld [vmem:[#allocation5 + $0x1d8] sm:$0xff]
    %v6603 = vld [vmem:[#allocation5 + $0x1e0] sm:$0xff]
    %v6604 = vld [vmem:[#allocation5 + $0x1e8] sm:$0xff]
    %v6605 = vld [vmem:[#allocation5 + $0x1f0] sm:$0xff]
    %v6606 = vld [vmem:[#allocation5 + $0x1f8] sm:$0xff]
    %v6607 = vld [vmem:[#allocation5 + $0x200] sm:$0xff]
    %v6608 = vld [vmem:[#allocation5 + $0x208] sm:$0xff]
    %v6609 = vld [vmem:[#allocation5 + $0x210] sm:$0xff]
    %v6610 = vld [vmem:[#allocation5 + $0x218] sm:$0xff]
    %v6611 = vld [vmem:[#allocation5 + $0x220] sm:$0xff]
    %v6612 = vld [vmem:[#allocation5 + $0x228] sm:$0xff]
    %v6613 = vld [vmem:[#allocation5 + $0x230] sm:$0xff]
    %v6614 = vld [vmem:[#allocation5 + $0x238] sm:$0xff]
    %v6615 = vld [vmem:[#allocation5 + $0x240] sm:$0xff]
    %v6616 = vld [vmem:[#allocation5 + $0x248] sm:$0xff]
    %v6617 = vld [vmem:[#allocation5 + $0x250] sm:$0xff]
    %v6618 = vld [vmem:[#allocation5 + $0x258] sm:$0xff]
    %v6619 = vld [vmem:[#allocation5 + $0x260] sm:$0xff]
    %v6620 = vld [vmem:[#allocation5 + $0x268] sm:$0xff]
    %v6621 = vld [vmem:[#allocation5 + $0x270] sm:$0xff]
    %v6622 = vld [vmem:[#allocation5 + $0x278] sm:$0xff]
    %v6623 = vld [vmem:[#allocation5 + $0x280] sm:$0xff]
    %v6624 = vld [vmem:[#allocation5 + $0x288] sm:$0xff]
    %v6625 = vld [vmem:[#allocation5 + $0x290] sm:$0xff]
    %v6626 = vld [vmem:[#allocation5 + $0x298] sm:$0xff]
    %v6627 = vld [vmem:[#allocation5 + $0x2a0] sm:$0xff]
    %v6628 = vld [vmem:[#allocation5 + $0x2a8] sm:$0xff]
    %v6629 = vld [vmem:[#allocation5 + $0x2b0] sm:$0xff]
    %v6630 = vld [vmem:[#allocation5 + $0x2b8] sm:$0xff]
    %v6631 = vld [vmem:[#allocation5 + $0x2c0] sm:$0xff]
    %v6632 = vld [vmem:[#allocation5 + $0x2c8] sm:$0xff]
    %v6633 = vld [vmem:[#allocation5 + $0x2d0] sm:$0xff]
    %v6634 = vld [vmem:[#allocation5 + $0x2d8] sm:$0xff]
    %v6635 = vld [vmem:[#allocation5 + $0x2e0] sm:$0xff]
    %v6636 = vld [vmem:[#allocation5 + $0x2e8] sm:$0xff]
    %v6637 = vld [vmem:[#allocation5 + $0x2f0] sm:$0xff]
    %v6638 = vld [vmem:[#allocation5 + $0x2f8] sm:$0xff]
    %v6639 = vld [vmem:[#allocation5 + $0x300] sm:$0xff]
    %v6640 = vld [vmem:[#allocation5 + $0x308] sm:$0xff]
    %v6641 = vld [vmem:[#allocation5 + $0x310] sm:$0xff]
    %v6642 = vld [vmem:[#allocation5 + $0x318] sm:$0xff]
    %v6643 = vld [vmem:[#allocation5 + $0x320] sm:$0xff]
    %v6644 = vld [vmem:[#allocation5 + $0x328] sm:$0xff]
    %v6645 = vld [vmem:[#allocation5 + $0x330] sm:$0xff]
    %v6646 = vld [vmem:[#allocation5 + $0x338] sm:$0xff]
    %v6647 = vld [vmem:[#allocation5 + $0x340] sm:$0xff]
    %v6648 = vld [vmem:[#allocation5 + $0x348] sm:$0xff]
    %v6649 = vld [vmem:[#allocation5 + $0x350] sm:$0xff]
    %v6650 = vld [vmem:[#allocation5 + $0x358] sm:$0xff]
    %v6651 = vld [vmem:[#allocation5 + $0x360] sm:$0xff]
    %v6652 = vld [vmem:[#allocation5 + $0x368] sm:$0xff]
    %v6653 = vld [vmem:[#allocation5 + $0x370] sm:$0xff]
    %v6654 = vld [vmem:[#allocation5 + $0x378] sm:$0xff]
    %v6655 = vld [vmem:[#allocation5 + $0x380] sm:$0xff]
    %v6656 = vld [vmem:[#allocation5 + $0x388] sm:$0xff]
    %v6657 = vld [vmem:[#allocation5 + $0x390] sm:$0xff]
    %v6658 = vld [vmem:[#allocation5 + $0x398] sm:$0xff]
    %v6659 = vld [vmem:[#allocation5 + $0x3a0] sm:$0xff]
    %v6660 = vld [vmem:[#allocation5 + $0x3a8] sm:$0xff]
    %v6661 = vld [vmem:[#allocation5 + $0x3b0] sm:$0xff]
    %v6662 = vld [vmem:[#allocation5 + $0x3b8] sm:$0xff]
    %v6663 = vld [vmem:[#allocation5 + $0x3c0] sm:$0xff]
    %v6664 = vld [vmem:[#allocation5 + $0x3c8] sm:$0xff]
    %v6665 = vld [vmem:[#allocation5 + $0x3d0] sm:$0xff]
    %v6666 = vld [vmem:[#allocation5 + $0x3d8] sm:$0xff]
    %v6667 = vld [vmem:[#allocation5 + $0x3e0] sm:$0xff]
    %v6668 = vld [vmem:[#allocation5 + $0x3e8] sm:$0xff]
    %v6669 = vld [vmem:[#allocation5 + $0x3f0] sm:$0xff]
    %v6670 = vld [vmem:[#allocation5 + $0x3f8] sm:$0xff]
    %v6671 = vld [vmem:[#allocation5 + $0x400] sm:$0xff]
    %v6672 = vld [vmem:[#allocation5 + $0x408] sm:$0xff]
    %v6673 = vld [vmem:[#allocation5 + $0x410] sm:$0xff]
    %v6674 = vld [vmem:[#allocation5 + $0x418] sm:$0xff]
    %v6675 = vld [vmem:[#allocation5 + $0x420] sm:$0xff]
    %v6676 = vld [vmem:[#allocation5 + $0x428] sm:$0xff]
    %v6677 = vld [vmem:[#allocation5 + $0x430] sm:$0xff]
    %v6678 = vld [vmem:[#allocation5 + $0x438] sm:$0xff]
    %v6679 = vld [vmem:[#allocation5 + $0x440] sm:$0xff]
    %v6680 = vld [vmem:[#allocation5 + $0x448] sm:$0xff]
    %v6681 = vld [vmem:[#allocation5 + $0x450] sm:$0xff]
    %v6682 = vld [vmem:[#allocation5 + $0x458] sm:$0xff]
    %v6683 = vld [vmem:[#allocation5 + $0x460] sm:$0xff]
    %v6684 = vld [vmem:[#allocation5 + $0x468] sm:$0xff]
    %v6685 = vld [vmem:[#allocation5 + $0x470] sm:$0xff]
    %v6686 = vld [vmem:[#allocation5 + $0x478] sm:$0xff]
    %v6687 = vld [vmem:[#allocation5 + $0x480] sm:$0xff]
    %v6688 = vld [vmem:[#allocation5 + $0x488] sm:$0xff]
    %v6689 = vld [vmem:[#allocation5 + $0x490] sm:$0xff]
    %v6690 = vld [vmem:[#allocation5 + $0x498] sm:$0xff]
    %v6691 = vld [vmem:[#allocation5 + $0x4a0] sm:$0xff]
    %v6692 = vld [vmem:[#allocation5 + $0x4a8] sm:$0xff]
    %v6693 = vld [vmem:[#allocation5 + $0x4b0] sm:$0xff]
    %v6694 = vld [vmem:[#allocation5 + $0x4b8] sm:$0xff]
    %v6695 = vld [vmem:[#allocation5 + $0x4c0] sm:$0xff]
    %v6696 = vld [vmem:[#allocation5 + $0x4c8] sm:$0xff]
    %v6697 = vld [vmem:[#allocation5 + $0x4d0] sm:$0xff]
    %v6698 = vld [vmem:[#allocation5 + $0x4d8] sm:$0xff]
    %v6699 = vld [vmem:[#allocation5 + $0x4e0] sm:$0xff]
    %v6700 = vld [vmem:[#allocation5 + $0x4e8] sm:$0xff]
    %v6701 = vld [vmem:[#allocation5 + $0x4f0] sm:$0xff]
    %v6702 = vld [vmem:[#allocation5 + $0x4f8] sm:$0xff]
    %v6703 = vld [vmem:[#allocation5 + $0x500] sm:$0xff]
    %v6704 = vld [vmem:[#allocation5 + $0x508] sm:$0xff]
    %v6705 = vld [vmem:[#allocation5 + $0x510] sm:$0xff]
    %v6706 = vld [vmem:[#allocation5 + $0x518] sm:$0xff]
    %v6707 = vld [vmem:[#allocation5 + $0x520] sm:$0xff]
    %v6708 = vld [vmem:[#allocation5 + $0x528] sm:$0xff]
    %v6709 = vld [vmem:[#allocation5 + $0x530] sm:$0xff]
    %v6710 = vld [vmem:[#allocation5 + $0x538] sm:$0xff]
    %v6711 = vld [vmem:[#allocation5 + $0x540] sm:$0xff]
    %v6712 = vld [vmem:[#allocation5 + $0x548] sm:$0xff]
    %v6713 = vld [vmem:[#allocation5 + $0x550] sm:$0xff]
    %v6714 = vld [vmem:[#allocation5 + $0x558] sm:$0xff]
    %v6715 = vld [vmem:[#allocation5 + $0x560] sm:$0xff]
    %v6716 = vld [vmem:[#allocation5 + $0x568] sm:$0xff]
    %v6717 = vld [vmem:[#allocation5 + $0x570] sm:$0xff]
    %v6718 = vld [vmem:[#allocation5 + $0x578] sm:$0xff]
    %v6719 = vld [vmem:[#allocation5 + $0x580] sm:$0xff]
    %v6720 = vld [vmem:[#allocation5 + $0x588] sm:$0xff]
    %v6721 = vld [vmem:[#allocation5 + $0x590] sm:$0xff]
    %v6722 = vld [vmem:[#allocation5 + $0x598] sm:$0xff]
    %v6723 = vld [vmem:[#allocation5 + $0x5a0] sm:$0xff]
    %v6724 = vld [vmem:[#allocation5 + $0x5a8] sm:$0xff]
    %v6725 = vld [vmem:[#allocation5 + $0x5b0] sm:$0xff]
    %v6726 = vld [vmem:[#allocation5 + $0x5b8] sm:$0xff]
    %v6727 = vld [vmem:[#allocation5 + $0x5c0] sm:$0xff]
    %v6728 = vld [vmem:[#allocation5 + $0x5c8] sm:$0xff]
    %v6729 = vld [vmem:[#allocation5 + $0x5d0] sm:$0xff]
    %v6730 = vld [vmem:[#allocation5 + $0x5d8] sm:$0xff]
    %v6731 = vld [vmem:[#allocation5 + $0x5e0] sm:$0xff]
    %v6732 = vld [vmem:[#allocation5 + $0x5e8] sm:$0xff]
    %v6733 = vld [vmem:[#allocation5 + $0x5f0] sm:$0xff]
    %v6734 = vld [vmem:[#allocation5 + $0x5f8] sm:$0xff]
    %v6735 = vld [vmem:[#allocation5 + $0x600] sm:$0xff]
    %v6736 = vld [vmem:[#allocation5 + $0x608] sm:$0xff]
    %v6737 = vld [vmem:[#allocation5 + $0x610] sm:$0xff]
    %v6738 = vld [vmem:[#allocation5 + $0x618] sm:$0xff]
    %v6739 = vld [vmem:[#allocation5 + $0x620] sm:$0xff]
    %v6740 = vld [vmem:[#allocation5 + $0x628] sm:$0xff]
    %v6741 = vld [vmem:[#allocation5 + $0x630] sm:$0xff]
    %v6742 = vld [vmem:[#allocation5 + $0x638] sm:$0xff]
    %v6743 = vld [vmem:[#allocation5 + $0x640] sm:$0xff]
    %v6744 = vld [vmem:[#allocation5 + $0x648] sm:$0xff]
    %v6745 = vld [vmem:[#allocation5 + $0x650] sm:$0xff]
    %v6746 = vld [vmem:[#allocation5 + $0x658] sm:$0xff]
    %v6747 = vld [vmem:[#allocation5 + $0x660] sm:$0xff]
    %v6748 = vld [vmem:[#allocation5 + $0x668] sm:$0xff]
    %v6749 = vld [vmem:[#allocation5 + $0x670] sm:$0xff]
    %v6750 = vld [vmem:[#allocation5 + $0x678] sm:$0xff]
    %v6751 = vld [vmem:[#allocation5 + $0x680] sm:$0xff]
    %v6752 = vld [vmem:[#allocation5 + $0x688] sm:$0xff]
    %v6753 = vld [vmem:[#allocation5 + $0x690] sm:$0xff]
    %v6754 = vld [vmem:[#allocation5 + $0x698] sm:$0xff]
    %v6755 = vld [vmem:[#allocation5 + $0x6a0] sm:$0xff]
    %v6756 = vld [vmem:[#allocation5 + $0x6a8] sm:$0xff]
    %v6757 = vld [vmem:[#allocation5 + $0x6b0] sm:$0xff]
    %v6758 = vld [vmem:[#allocation5 + $0x6b8] sm:$0xff]
    %v6759 = vld [vmem:[#allocation5 + $0x6c0] sm:$0xff]
    %v6760 = vld [vmem:[#allocation5 + $0x6c8] sm:$0xff]
    %v6761 = vld [vmem:[#allocation5 + $0x6d0] sm:$0xff]
    %v6762 = vld [vmem:[#allocation5 + $0x6d8] sm:$0xff]
    %v6763 = vld [vmem:[#allocation5 + $0x6e0] sm:$0xff]
    %v6764 = vld [vmem:[#allocation5 + $0x6e8] sm:$0xff]
    %v6765 = vld [vmem:[#allocation5 + $0x6f0] sm:$0xff]
    %v6766 = vld [vmem:[#allocation5 + $0x6f8] sm:$0xff]
    %v6767 = vld [vmem:[#allocation5 + $0x700] sm:$0xff]
    %v6768 = vld [vmem:[#allocation5 + $0x708] sm:$0xff]
    %v6769 = vld [vmem:[#allocation5 + $0x710] sm:$0xff]
    %v6770 = vld [vmem:[#allocation5 + $0x718] sm:$0xff]
    %v6771 = vld [vmem:[#allocation5 + $0x720] sm:$0xff]
    %v6772 = vld [vmem:[#allocation5 + $0x728] sm:$0xff]
    %v6773 = vld [vmem:[#allocation5 + $0x730] sm:$0xff]
    %v6774 = vld [vmem:[#allocation5 + $0x738] sm:$0xff]
    %v6775 = vld [vmem:[#allocation5 + $0x740] sm:$0xff]
    %v6776 = vld [vmem:[#allocation5 + $0x748] sm:$0xff]
    %v6777 = vld [vmem:[#allocation5 + $0x750] sm:$0xff]
    %v6778 = vld [vmem:[#allocation5 + $0x758] sm:$0xff]
    %v6779 = vld [vmem:[#allocation5 + $0x760] sm:$0xff]
    %v6780 = vld [vmem:[#allocation5 + $0x768] sm:$0xff]
    %v6781 = vld [vmem:[#allocation5 + $0x770] sm:$0xff]
    %v6782 = vld [vmem:[#allocation5 + $0x778] sm:$0xff]
    %v6783 = vld [vmem:[#allocation5 + $0x780] sm:$0xff]
    %v6784 = vld [vmem:[#allocation5 + $0x788] sm:$0xff]
    %v6785 = vld [vmem:[#allocation5 + $0x790] sm:$0xff]
    %v6786 = vld [vmem:[#allocation5 + $0x798] sm:$0xff]
    %v6787 = vld [vmem:[#allocation5 + $0x7a0] sm:$0xff]
    %v6788 = vld [vmem:[#allocation5 + $0x7a8] sm:$0xff]
    %v6789 = vld [vmem:[#allocation5 + $0x7b0] sm:$0xff]
    %v6790 = vld [vmem:[#allocation5 + $0x7b8] sm:$0xff]
    %v6791 = vld [vmem:[#allocation5 + $0x7c0] sm:$0xff]
    %v6792 = vld [vmem:[#allocation5 + $0x7c8] sm:$0xff]
    %v6793 = vld [vmem:[#allocation5 + $0x7d0] sm:$0xff]
    %v6794 = vld [vmem:[#allocation5 + $0x7d8] sm:$0xff]
    %v6795 = vld [vmem:[#allocation5 + $0x7e0] sm:$0xff]
    %v6796 = vld [vmem:[#allocation5 + $0x7e8] sm:$0xff]
    %v6797 = vld [vmem:[#allocation5 + $0x7f0] sm:$0xff]
    %v6798 = vld [vmem:[#allocation5 + $0x7f8] sm:$0xff]
    %v6799 = vld [vmem:[#allocation5 + $0x800] sm:$0xff]
    %v6800 = vld [vmem:[#allocation5 + $0x808] sm:$0xff]
    %v6801 = vld [vmem:[#allocation5 + $0x810] sm:$0xff]
    %v6802 = vld [vmem:[#allocation5 + $0x818] sm:$0xff]
    %v6803 = vld [vmem:[#allocation5 + $0x820] sm:$0xff]
    %v6804 = vld [vmem:[#allocation5 + $0x828] sm:$0xff]
    %v6805 = vld [vmem:[#allocation5 + $0x830] sm:$0xff]
    %v6806 = vld [vmem:[#allocation5 + $0x838] sm:$0xff]
    %v6807 = vld [vmem:[#allocation5 + $0x840] sm:$0xff]
    %v6808 = vld [vmem:[#allocation5 + $0x848] sm:$0xff]
    %v6809 = vld [vmem:[#allocation5 + $0x850] sm:$0xff]
    %v6810 = vld [vmem:[#allocation5 + $0x858] sm:$0xff]
    %v6811 = vld [vmem:[#allocation5 + $0x860] sm:$0xff]
    %v6812 = vld [vmem:[#allocation5 + $0x868] sm:$0xff]
    %v6813 = vld [vmem:[#allocation5 + $0x870] sm:$0xff]
    %v6814 = vld [vmem:[#allocation5 + $0x878] sm:$0xff]
    %v6815 = vld [vmem:[#allocation5 + $0x880] sm:$0xff]
    %v6816 = vld [vmem:[#allocation5 + $0x888] sm:$0xff]
    %v6817 = vld [vmem:[#allocation5 + $0x890] sm:$0xff]
    %v6818 = vld [vmem:[#allocation5 + $0x898] sm:$0xff]
    %v6819 = vld [vmem:[#allocation5 + $0x8a0] sm:$0xff]
    %v6820 = vld [vmem:[#allocation5 + $0x8a8] sm:$0xff]
    %v6821 = vld [vmem:[#allocation5 + $0x8b0] sm:$0xff]
    %v6822 = vld [vmem:[#allocation5 + $0x8b8] sm:$0xff]
    %v6823 = vld [vmem:[#allocation5 + $0x8c0] sm:$0xff]
    %v6824 = vld [vmem:[#allocation5 + $0x8c8] sm:$0xff]
    %v6825 = vld [vmem:[#allocation5 + $0x8d0] sm:$0xff]
    %v6826 = vld [vmem:[#allocation5 + $0x8d8] sm:$0xff]
    %v6827 = vld [vmem:[#allocation5 + $0x8e0] sm:$0xff]
    %v6828 = vld [vmem:[#allocation5 + $0x8e8] sm:$0xff]
    %v6829 = vld [vmem:[#allocation5 + $0x8f0] sm:$0xff]
    %v6830 = vld [vmem:[#allocation5 + $0x8f8] sm:$0xff]
    %v6831 = vld [vmem:[#allocation5 + $0x900] sm:$0xff]
    %v6832 = vld [vmem:[#allocation5 + $0x908] sm:$0xff]
    %v6833 = vld [vmem:[#allocation5 + $0x910] sm:$0xff]
    %v6834 = vld [vmem:[#allocation5 + $0x918] sm:$0xff]
    %v6835 = vld [vmem:[#allocation5 + $0x920] sm:$0xff]
    %v6836 = vld [vmem:[#allocation5 + $0x928] sm:$0xff]
    %v6837 = vld [vmem:[#allocation5 + $0x930] sm:$0xff]
    %v6838 = vld [vmem:[#allocation5 + $0x938] sm:$0xff]
    %v6839 = vld [vmem:[#allocation5 + $0x940] sm:$0xff]
    %v6840 = vld [vmem:[#allocation5 + $0x948] sm:$0xff]
    %v6841 = vld [vmem:[#allocation5 + $0x950] sm:$0xff]
    %v6842 = vld [vmem:[#allocation5 + $0x958] sm:$0xff]
    %v6843 = vld [vmem:[#allocation5 + $0x960] sm:$0xff]
    %v6844 = vld [vmem:[#allocation5 + $0x968] sm:$0xff]
    %v6845 = vld [vmem:[#allocation5 + $0x970] sm:$0xff]
    %v6846 = vld [vmem:[#allocation5 + $0x978] sm:$0xff]
    %v6847 = vld [vmem:[#allocation5 + $0x980] sm:$0xff]
    %v6848 = vld [vmem:[#allocation5 + $0x988] sm:$0xff]
    %v6849 = vld [vmem:[#allocation5 + $0x990] sm:$0xff]
    %v6850 = vld [vmem:[#allocation5 + $0x998] sm:$0xff]
    %v6851 = vld [vmem:[#allocation5 + $0x9a0] sm:$0xff]
    %v6852 = vld [vmem:[#allocation5 + $0x9a8] sm:$0xff]
    %v6853 = vld [vmem:[#allocation5 + $0x9b0] sm:$0xff]
    %v6854 = vld [vmem:[#allocation5 + $0x9b8] sm:$0xff]
    %v6855 = vld [vmem:[#allocation5 + $0x9c0] sm:$0xff]
    %v6856 = vld [vmem:[#allocation5 + $0x9c8] sm:$0xff]
    %v6857 = vld [vmem:[#allocation5 + $0x9d0] sm:$0xff]
    %v6858 = vld [vmem:[#allocation5 + $0x9d8] sm:$0xff]
    %v6859 = vld [vmem:[#allocation5 + $0x9e0] sm:$0xff]
    %v6860 = vld [vmem:[#allocation5 + $0x9e8] sm:$0xff]
    %v6861 = vld [vmem:[#allocation5 + $0x9f0] sm:$0xff]
    %v6862 = vld [vmem:[#allocation5 + $0x9f8] sm:$0xff]
    %v6863 = vld [vmem:[#allocation5 + $0xa00] sm:$0xff]
    %v6864 = vld [vmem:[#allocation5 + $0xa08] sm:$0xff]
    %v6865 = vld [vmem:[#allocation5 + $0xa10] sm:$0xff]
    %v6866 = vld [vmem:[#allocation5 + $0xa18] sm:$0xff]
    %v6867 = vld [vmem:[#allocation5 + $0xa20] sm:$0xff]
    %v6868 = vld [vmem:[#allocation5 + $0xa28] sm:$0xff]
    %v6869 = vld [vmem:[#allocation5 + $0xa30] sm:$0xff]
    %v6870 = vld [vmem:[#allocation5 + $0xa38] sm:$0xff]
    %v6871 = vld [vmem:[#allocation5 + $0xa40] sm:$0xff]
    %v6872 = vld [vmem:[#allocation5 + $0xa48] sm:$0xff]
    %v6873 = vld [vmem:[#allocation5 + $0xa50] sm:$0xff]
    %v6874 = vld [vmem:[#allocation5 + $0xa58] sm:$0xff]
    %v6875 = vld [vmem:[#allocation5 + $0xa60] sm:$0xff]
    %v6876 = vld [vmem:[#allocation5 + $0xa68] sm:$0xff]
    %v6877 = vld [vmem:[#allocation5 + $0xa70] sm:$0xff]
    %v6878 = vld [vmem:[#allocation5 + $0xa78] sm:$0xff]
    %v6879 = vld [vmem:[#allocation5 + $0xa80] sm:$0xff]
    %v6880 = vld [vmem:[#allocation5 + $0xa88] sm:$0xff]
    %v6881 = vld [vmem:[#allocation5 + $0xa90] sm:$0xff]
    %v6882 = vld [vmem:[#allocation5 + $0xa98] sm:$0xff]
    %v6883 = vld [vmem:[%s16] sm:$0x1f]
    %v6885 = vlaneseq
    %v6886 = vshrl.u32 %v6885, 7
    %v6887 = vsub.s32 0, %v6886
    %v6888 = vrot.slane %v6883, %v6887
    %v6889 = vlaneseq
    %v6890 = vshrl.u32 %v6889, 7
    %v6891 = vsub.s32 1, %v6890
    %v6892 = vrot.slane %v6883, %v6891
    %v6893 = vlaneseq
    %v6894 = vshrl.u32 %v6893, 7
    %v6895 = vsub.s32 2, %v6894
    %v6896 = vrot.slane %v6883, %v6895
    %v6897 = vlaneseq
    %v6898 = vshrl.u32 %v6897, 7
    %v6899 = vsub.s32 3, %v6898
    %v6900 = vrot.slane %v6883, %v6899
    %v6901 = vlaneseq
    %v6902 = vshrl.u32 %v6901, 7
    %v6903 = vsub.s32 4, %v6902
    %v6904 = vrot.slane %v6883, %v6903
    %vm6910 = vcmask 261120
    %v6912 = vsel %vm6910, %v6542, 0
    %6914 = vmatprep.subr.mxu0 %v6544
    %6915 = vmatpush1.msra.mxu0 %v6543
    %6916 = vmatprep.subr.mxu0 %v6549
    %6917 = vmatpush1.msra.mxu0 %v6548
    %6918 = vmatprep.subr.mxu0 %v6554
    %6919 = vmatpush1.msra.mxu0 %v6553
    %6920 = vmatprep.subr.mxu0 %v6559
    %6921 = vmatpush1.msra.mxu0 %v6558
    %6922 = vmatprep.subr.mxu0 %v6564
    %6923 = vmatpush1.msra.mxu0 %v6563
    %6924 = vmatprep.subr.mxu0 %v6569
    %6925 = vmatpush1.msra.mxu0 %v6568
    %6926 = vmatprep.subr.mxu0 %v6574
    %6927 = vmatpush1.msra.mxu0 %v6573
    %6928 = vmatprep.subr.mxu0 %v6579
    %6929 = vmatpush1.msra.mxu0 %v6578
    %6930 = vmatprep.subr.mxu0 %v6584
    %6931 = vmatpush1.msra.mxu0 %v6583
    %6932 = vmatprep.subr.mxu0 %v6589
    %6933 = vmatpush1.msra.mxu0 %v6588
    %6934 = vmatprep.subr.mxu0 %v6594
    %6935 = vmatpush1.msra.mxu0 %v6593
    %6936 = vmatprep.subr.mxu0 %v6599
    %6937 = vmatpush1.msra.mxu0 %v6598
    %6938 = vmatprep.subr.mxu0 %v6604
    %6939 = vmatpush1.msra.mxu0 %v6603
    %6940 = vmatprep.subr.mxu0 %v6609
    %6941 = vmatpush1.msra.mxu0 %v6608
    %6942 = vmatprep.subr.mxu0 %v6614
    %6943 = vmatpush1.msra.mxu0 %v6613
    %6944 = vmatprep.subr.mxu0 %v6619
    %6945 = vmatpush1.msra.mxu0 %v6618
    %6946 = vmatprep.subr.mxu0 %v6624
    %6947 = vmatpush1.msra.mxu0 %v6623
    %6948 = vmatprep.subr.mxu0 %v6629
    %6949 = vmatpush1.msra.mxu0 %v6628
    %6950 = vmatprep.subr.mxu0 %v6634
    %6951 = vmatpush1.msra.mxu0 %v6633
    %6952 = vmatprep.subr.mxu0 %v6639
    %6953 = vmatpush1.msra.mxu0 %v6638
    %6954 = vmatprep.subr.mxu0 %v6644
    %6955 = vmatpush1.msra.mxu0 %v6643
    %6956 = vmatprep.subr.mxu0 %v6649
    %6957 = vmatpush1.msra.mxu0 %v6648
    %6958 = vmatprep.subr.mxu0 %v6654
    %6959 = vmatpush1.msra.mxu0 %v6653
    %6960 = vmatprep.subr.mxu0 %v6659
    %6961 = vmatpush1.msra.mxu0 %v6658
    %6962 = vmatprep.subr.mxu0 %v6664
    %6963 = vmatpush1.msra.mxu0 %v6663
    %6964 = vmatprep.subr.mxu0 %v6669
    %6965 = vmatpush1.msra.mxu0 %v6668
    %6966 = vmatprep.subr.mxu0 %v6674
    %6967 = vmatpush1.msra.mxu0 %v6673
    %6968 = vmatprep.subr.mxu0 %v6679
    %6969 = vmatpush1.msra.mxu0 %v6678
    %6970 = vmatprep.subr.mxu0 %v6684
    %6971 = vmatpush1.msra.mxu0 %v6683
    %6972 = vmatprep.subr.mxu0 %v6689
    %6973 = vmatpush1.msra.mxu0 %v6688
    %6974 = vmatprep.subr.mxu0 %v6694
    %6975 = vmatpush1.msra.mxu0 %v6693
    %6976 = vmatprep.subr.mxu0 %v6699
    %6977 = vmatpush1.msra.mxu0 %v6698
    %6978 = vmatprep.mubr.f32.mxu0 %v6539
    %6979 = vmatmul.mubr.f32.gmra.mrb[0].mxu0 %v6538
    %v6980 = vpop.f32.mrb[0].mxu0
    %v6981 = vadd.f32 %v6888, %v6980
    %v6982 = vpop.f32.mrb[0].mxu0
    %v6983 = vadd.f32 %v6892, %v6982
    %6984 = vdwg.mxu0
    %6985 = vmatprep.subr.mxu0 %v6704
    %6986 = vmatpush1.msra.mxu0 %v6703
    %6987 = vmatprep.subr.mxu0 %v6709
    %6988 = vmatpush1.msra.mxu0 %v6708
    %6989 = vmatprep.subr.mxu0 %v6714
    %6990 = vmatpush1.msra.mxu0 %v6713
    %6991 = vmatprep.subr.mxu0 %v6719
    %6992 = vmatpush1.msra.mxu0 %v6718
    %6993 = vmatprep.subr.mxu0 %v6724
    %6994 = vmatpush1.msra.mxu0 %v6723
    %6995 = vmatprep.subr.mxu0 %v6729
    %6996 = vmatpush1.msra.mxu0 %v6728
    %6997 = vmatprep.subr.mxu0 %v6734
    %6998 = vmatpush1.msra.mxu0 %v6733
    %6999 = vmatprep.subr.mxu0 %v6739
    %7000 = vmatpush1.msra.mxu0 %v6738
    %7001 = vmatprep.subr.mxu0 %v6744
    %7002 = vmatpush1.msra.mxu0 %v6743
    %7003 = vmatprep.subr.mxu0 %v6749
    %7004 = vmatpush1.msra.mxu0 %v6748
    %7005 = vmatprep.subr.mxu0 %v6754
    %7006 = vmatpush1.msra.mxu0 %v6753
    %7007 = vmatprep.subr.mxu0 %v6759
    %7008 = vmatpush1.msra.mxu0 %v6758
    %7009 = vmatprep.subr.mxu0 %v6764
    %7010 = vmatpush1.msra.mxu0 %v6763
    %7011 = vmatprep.subr.mxu0 %v6769
    %7012 = vmatpush1.msra.mxu0 %v6768
    %7013 = vmatprep.subr.mxu0 %v6774
    %7014 = vmatpush1.msra.mxu0 %v6773
    %7015 = vmatprep.subr.mxu0 %v6779
    %7016 = vmatpush1.msra.mxu0 %v6778
    %7017 = vmatprep.subr.mxu0 %v6784
    %7018 = vmatpush1.msra.mxu0 %v6783
    %7019 = vmatprep.subr.mxu0 %v6789
    %7020 = vmatpush1.msra.mxu0 %v6788
    %7021 = vmatprep.subr.mxu0 %v6794
    %7022 = vmatpush1.msra.mxu0 %v6793
    %7023 = vmatprep.subr.mxu0 %v6799
    %7024 = vmatpush1.msra.mxu0 %v6798
    %7025 = vmatprep.subr.mxu0 %v6804
    %7026 = vmatpush1.msra.mxu0 %v6803
    %7027 = vmatprep.subr.mxu0 %v6809
    %7028 = vmatpush1.msra.mxu0 %v6808
    %7029 = vmatprep.subr.mxu0 %v6814
    %7030 = vmatpush1.msra.mxu0 %v6813
    %7031 = vmatprep.subr.mxu0 %v6819
    %7032 = vmatpush1.msra.mxu0 %v6818
    %7033 = vmatprep.subr.mxu0 %v6824
    %7034 = vmatpush1.msra.mxu0 %v6823
    %7035 = vmatprep.subr.mxu0 %v6829
    %7036 = vmatpush1.msra.mxu0 %v6828
    %7037 = vmatprep.subr.mxu0 %v6834
    %7038 = vmatpush1.msra.mxu0 %v6833
    %7039 = vmatprep.subr.mxu0 %v6839
    %7040 = vmatpush1.msra.mxu0 %v6838
    %7041 = vmatprep.subr.mxu0 %v6844
    %7042 = vmatpush1.msra.mxu0 %v6843
    %7043 = vmatprep.subr.mxu0 %v6849
    %7044 = vmatpush1.msra.mxu0 %v6848
    %7045 = vmatprep.subr.mxu0 %v6854
    %7046 = vmatpush1.msra.mxu0 %v6853
    %7047 = vmatprep.subr.mxu0 %v6859
    %7048 = vmatpush1.msra.mxu0 %v6858
    %7049 = vmatprep.mubr.f32.mxu0 %v6541
    %7050 = vmatmul.mubr.f32.gmra.mrb[0].mxu0 %v6540
    %v7051 = vpop.f32.mrb[0].mxu0
    %v7052 = vadd.f32 %v6981, %v7051
    %v7053 = vpop.f32.mrb[0].mxu0
    %v7054 = vadd.f32 %v6983, %v7053
    %7055 = vdwg.mxu0
    %7056 = vmatprep.subr.mxu0 %v6864
    %7057 = vmatpush1.msra.mxu0 %v6863
    %7058 = vmatprep.subr.mxu0 %v6869
    %7059 = vmatpush1.msra.mxu0 %v6868
    %7060 = vmatprep.subr.mxu0 %v6874
    %7061 = vmatpush1.msra.mxu0 %v6873
    %7062 = vmatprep.subr.mxu0 %v6879
    %7063 = vmatpush1.msra.mxu0 %v6878
    %7064 = vmatprep.subr.mxu0 0.0
    %7065 = vmatpush1.msra.mxu0 0.0
    %7066 = vmatprep.subr.mxu0 0.0
    %7067 = vmatpush1.msra.mxu0 0.0
    %7068 = vmatprep.subr.mxu0 0.0
    %7069 = vmatpush1.msra.mxu0 0.0
    %7070 = vmatprep.subr.mxu0 0.0
    %7071 = vmatpush1.msra.mxu0 0.0
    %7072 = vmatprep.subr.mxu0 0.0
    %7073 = vmatpush1.msra.mxu0 0.0
    %7074 = vmatprep.subr.mxu0 0.0
    %7075 = vmatpush1.msra.mxu0 0.0
    %7076 = vmatprep.subr.mxu0 0.0
    %7077 = vmatpush1.msra.mxu0 0.0
    %7078 = vmatprep.subr.mxu0 0.0
    %7079 = vmatpush1.msra.mxu0 0.0
    %7080 = vmatprep.subr.mxu0 0.0
    %7081 = vmatpush1.msra.mxu0 0.0
    %7082 = vmatprep.subr.mxu0 0.0
    %7083 = vmatpush1.msra.mxu0 0.0
    %7084 = vmatprep.subr.mxu0 0.0
    %7085 = vmatpush1.msra.mxu0 0.0
    %7086 = vmatprep.subr.mxu0 0.0
    %7087 = vmatpush1.msra.mxu0 0.0
    %7088 = vmatprep.subr.mxu0 0.0
    %7089 = vmatpush1.msra.mxu0 0.0
    %7090 = vmatprep.subr.mxu0 0.0
    %7091 = vmatpush1.msra.mxu0 0.0
    %7092 = vmatprep.subr.mxu0 0.0
    %7093 = vmatpush1.msra.mxu0 0.0
    %7094 = vmatprep.subr.mxu0 0.0
    %7095 = vmatpush1.msra.mxu0 0.0
    %7096 = vmatprep.subr.mxu0 0.0
    %7097 = vmatpush1.msra.mxu0 0.0
    %7098 = vmatprep.subr.mxu0 0.0
    %7099 = vmatpush1.msra.mxu0 0.0
    %7100 = vmatprep.subr.mxu0 0.0
    %7101 = vmatpush1.msra.mxu0 0.0
    %7102 = vmatprep.subr.mxu0 0.0
    %7103 = vmatpush1.msra.mxu0 0.0
    %7104 = vmatprep.subr.mxu0 0.0
    %7105 = vmatpush1.msra.mxu0 0.0
    %7106 = vmatprep.subr.mxu0 0.0
    %7107 = vmatpush1.msra.mxu0 0.0
    %7108 = vmatprep.subr.mxu0 0.0
    %7109 = vmatpush1.msra.mxu0 0.0
    %7110 = vmatprep.subr.mxu0 0.0
    %7111 = vmatpush1.msra.mxu0 0.0
    %7112 = vmatprep.subr.mxu0 0.0
    %7113 = vmatpush1.msra.mxu0 0.0
    %7114 = vmatprep.subr.mxu0 0.0
    %7115 = vmatpush1.msra.mxu0 0.0
    %7116 = vmatprep.subr.mxu0 0.0
    %7117 = vmatpush1.msra.mxu0 0.0
    %7118 = vmatprep.subr.mxu0 0.0
    %7119 = vmatpush1.msra.mxu0 0.0
    %7120 = vmatprep.mubr.f32.mxu0 0.0
    %7121 = vmatmul.mubr.f32.gmra.mrb[0].mxu0 %v6912
    %v7122 = vpop.f32.mrb[0].mxu0
    %v7123 = vadd.f32 %v7052, %v7122
    %v7124 = vpop.f32.mrb[0].mxu0
    %v7125 = vadd.f32 %v7054, %v7124
    %7126 = vdwg.mxu0
    %7127 = vmatprep.subr.mxu0 %v6546
    %7128 = vmatpush1.msra.mxu0 %v6545
    %7129 = vmatprep.subr.mxu0 %v6551
    %7130 = vmatpush1.msra.mxu0 %v6550
    %7131 = vmatprep.subr.mxu0 %v6556
    %7132 = vmatpush1.msra.mxu0 %v6555
    %7133 = vmatprep.subr.mxu0 %v6561
    %7134 = vmatpush1.msra.mxu0 %v6560
    %7135 = vmatprep.subr.mxu0 %v6566
    %7136 = vmatpush1.msra.mxu0 %v6565
    %7137 = vmatprep.subr.mxu0 %v6571
    %7138 = vmatpush1.msra.mxu0 %v6570
    %7139 = vmatprep.subr.mxu0 %v6576
    %7140 = vmatpush1.msra.mxu0 %v6575
    %7141 = vmatprep.subr.mxu0 %v6581
    %7142 = vmatpush1.msra.mxu0 %v6580
    %7143 = vmatprep.subr.mxu0 %v6586
    %7144 = vmatpush1.msra.mxu0 %v6585
    %7145 = vmatprep.subr.mxu0 %v6591
    %7146 = vmatpush1.msra.mxu0 %v6590
    %7147 = vmatprep.subr.mxu0 %v6596
    %7148 = vmatpush1.msra.mxu0 %v6595
    %7149 = vmatprep.subr.mxu0 %v6601
    %7150 = vmatpush1.msra.mxu0 %v6600
    %7151 = vmatprep.subr.mxu0 %v6606
    %7152 = vmatpush1.msra.mxu0 %v6605
    %7153 = vmatprep.subr.mxu0 %v6611
    %7154 = vmatpush1.msra.mxu0 %v6610
    %7155 = vmatprep.subr.mxu0 %v6616
    %7156 = vmatpush1.msra.mxu0 %v6615
    %7157 = vmatprep.subr.mxu0 %v6621
    %7158 = vmatpush1.msra.mxu0 %v6620
    %7159 = vmatprep.subr.mxu0 %v6626
    %7160 = vmatpush1.msra.mxu0 %v6625
    %7161 = vmatprep.subr.mxu0 %v6631
    %7162 = vmatpush1.msra.mxu0 %v6630
    %7163 = vmatprep.subr.mxu0 %v6636
    %7164 = vmatpush1.msra.mxu0 %v6635
    %7165 = vmatprep.subr.mxu0 %v6641
    %7166 = vmatpush1.msra.mxu0 %v6640
    %7167 = vmatprep.subr.mxu0 %v6646
    %7168 = vmatpush1.msra.mxu0 %v6645
    %7169 = vmatprep.subr.mxu0 %v6651
    %7170 = vmatpush1.msra.mxu0 %v6650
    %7171 = vmatprep.subr.mxu0 %v6656
    %7172 = vmatpush1.msra.mxu0 %v6655
    %7173 = vmatprep.subr.mxu0 %v6661
    %7174 = vmatpush1.msra.mxu0 %v6660
    %7175 = vmatprep.subr.mxu0 %v6666
    %7176 = vmatpush1.msra.mxu0 %v6665
    %7177 = vmatprep.subr.mxu0 %v6671
    %7178 = vmatpush1.msra.mxu0 %v6670
    %7179 = vmatprep.subr.mxu0 %v6676
    %7180 = vmatpush1.msra.mxu0 %v6675
    %7181 = vmatprep.subr.mxu0 %v6681
    %7182 = vmatpush1.msra.mxu0 %v6680
    %7183 = vmatprep.subr.mxu0 %v6686
    %7184 = vmatpush1.msra.mxu0 %v6685
    %7185 = vmatprep.subr.mxu0 %v6691
    %7186 = vmatpush1.msra.mxu0 %v6690
    %7187 = vmatprep.subr.mxu0 %v6696
    %7188 = vmatpush1.msra.mxu0 %v6695
    %7189 = vmatprep.subr.mxu0 %v6701
    %7190 = vmatpush1.msra.mxu0 %v6700
    %7191 = vmatprep.mubr.f32.mxu0 %v6539
    %7192 = vmatmul.mubr.f32.gmra.mrb[0].mxu0 %v6538
    %v7193 = vpop.f32.mrb[0].mxu0
    %v7194 = vadd.f32 %v6896, %v7193
    %v7195 = vpop.f32.mrb[0].mxu0
    %v7196 = vadd.f32 %v6900, %v7195
    %7197 = vdwg.mxu0
    %7198 = vmatprep.subr.mxu0 %v6706
    %7199 = vmatpush1.msra.mxu0 %v6705
    %7200 = vmatprep.subr.mxu0 %v6711
    %7201 = vmatpush1.msra.mxu0 %v6710
    %7202 = vmatprep.subr.mxu0 %v6716
    %7203 = vmatpush1.msra.mxu0 %v6715
    %7204 = vmatprep.subr.mxu0 %v6721
    %7205 = vmatpush1.msra.mxu0 %v6720
    %7206 = vmatprep.subr.mxu0 %v6726
    %7207 = vmatpush1.msra.mxu0 %v6725
    %7208 = vmatprep.subr.mxu0 %v6731
    %7209 = vmatpush1.msra.mxu0 %v6730
    %7210 = vmatprep.subr.mxu0 %v6736
    %7211 = vmatpush1.msra.mxu0 %v6735
    %7212 = vmatprep.subr.mxu0 %v6741
    %7213 = vmatpush1.msra.mxu0 %v6740
    %7214 = vmatprep.subr.mxu0 %v6746
    %7215 = vmatpush1.msra.mxu0 %v6745
    %7216 = vmatprep.subr.mxu0 %v6751
    %7217 = vmatpush1.msra.mxu0 %v6750
    %7218 = vmatprep.subr.mxu0 %v6756
    %7219 = vmatpush1.msra.mxu0 %v6755
    %7220 = vmatprep.subr.mxu0 %v6761
    %7221 = vmatpush1.msra.mxu0 %v6760
    %7222 = vmatprep.subr.mxu0 %v6766
    %7223 = vmatpush1.msra.mxu0 %v6765
    %7224 = vmatprep.subr.mxu0 %v6771
    %7225 = vmatpush1.msra.mxu0 %v6770
    %7226 = vmatprep.subr.mxu0 %v6776
    %7227 = vmatpush1.msra.mxu0 %v6775
    %7228 = vmatprep.subr.mxu0 %v6781
    %7229 = vmatpush1.msra.mxu0 %v6780
    %7230 = vmatprep.subr.mxu0 %v6786
    %7231 = vmatpush1.msra.mxu0 %v6785
    %7232 = vmatprep.subr.mxu0 %v6791
    %7233 = vmatpush1.msra.mxu0 %v6790
    %7234 = vmatprep.subr.mxu0 %v6796
    %7235 = vmatpush1.msra.mxu0 %v6795
    %7236 = vmatprep.subr.mxu0 %v6801
    %7237 = vmatpush1.msra.mxu0 %v6800
    %7238 = vmatprep.subr.mxu0 %v6806
    %7239 = vmatpush1.msra.mxu0 %v6805
    %7240 = vmatprep.subr.mxu0 %v6811
    %7241 = vmatpush1.msra.mxu0 %v6810
    %7242 = vmatprep.subr.mxu0 %v6816
    %7243 = vmatpush1.msra.mxu0 %v6815
    %7244 = vmatprep.subr.mxu0 %v6821
    %7245 = vmatpush1.msra.mxu0 %v6820
    %7246 = vmatprep.subr.mxu0 %v6826
    %7247 = vmatpush1.msra.mxu0 %v6825
    %7248 = vmatprep.subr.mxu0 %v6831
    %7249 = vmatpush1.msra.mxu0 %v6830
    %7250 = vmatprep.subr.mxu0 %v6836
    %7251 = vmatpush1.msra.mxu0 %v6835
    %7252 = vmatprep.subr.mxu0 %v6841
    %7253 = vmatpush1.msra.mxu0 %v6840
    %7254 = vmatprep.subr.mxu0 %v6846
    %7255 = vmatpush1.msra.mxu0 %v6845
    %7256 = vmatprep.subr.mxu0 %v6851
    %7257 = vmatpush1.msra.mxu0 %v6850
    %7258 = vmatprep.subr.mxu0 %v6856
    %7259 = vmatpush1.msra.mxu0 %v6855
    %7260 = vmatprep.subr.mxu0 %v6861
    %7261 = vmatpush1.msra.mxu0 %v6860
    %7262 = vmatprep.mubr.f32.mxu0 %v6541
    %7263 = vmatmul.mubr.f32.gmra.mrb[0].mxu0 %v6540
    %v7264 = vpop.f32.mrb[0].mxu0
    %v7265 = vadd.f32 %v7194, %v7264
    %v7266 = vpop.f32.mrb[0].mxu0
    %v7267 = vadd.f32 %v7196, %v7266
    %7268 = vdwg.mxu0
    %7269 = vmatprep.subr.mxu0 %v6866
    %7270 = vmatpush1.msra.mxu0 %v6865
    %7271 = vmatprep.subr.mxu0 %v6871
    %7272 = vmatpush1.msra.mxu0 %v6870
    %7273 = vmatprep.subr.mxu0 %v6876
    %7274 = vmatpush1.msra.mxu0 %v6875
    %7275 = vmatprep.subr.mxu0 %v6881
    %7276 = vmatpush1.msra.mxu0 %v6880
    %7277 = vmatprep.subr.mxu0 0.0
    %7278 = vmatpush1.msra.mxu0 0.0
    %7279 = vmatprep.subr.mxu0 0.0
    %7280 = vmatpush1.msra.mxu0 0.0
    %7281 = vmatprep.subr.mxu0 0.0
    %7282 = vmatpush1.msra.mxu0 0.0
    %7283 = vmatprep.subr.mxu0 0.0
    %7284 = vmatpush1.msra.mxu0 0.0
    %7285 = vmatprep.subr.mxu0 0.0
    %7286 = vmatpush1.msra.mxu0 0.0
    %7287 = vmatprep.subr.mxu0 0.0
    %7288 = vmatpush1.msra.mxu0 0.0
    %7289 = vmatprep.subr.mxu0 0.0
    %7290 = vmatpush1.msra.mxu0 0.0
    %7291 = vmatprep.subr.mxu0 0.0
    %7292 = vmatpush1.msra.mxu0 0.0
    %7293 = vmatprep.subr.mxu0 0.0
    %7294 = vmatpush1.msra.mxu0 0.0
    %7295 = vmatprep.subr.mxu0 0.0
    %7296 = vmatpush1.msra.mxu0 0.0
    %7297 = vmatprep.subr.mxu0 0.0
    %7298 = vmatpush1.msra.mxu0 0.0
    %7299 = vmatprep.subr.mxu0 0.0
    %7300 = vmatpush1.msra.mxu0 0.0
    %7301 = vmatprep.subr.mxu0 0.0
    %7302 = vmatpush1.msra.mxu0 0.0
    %7303 = vmatprep.subr.mxu0 0.0
    %7304 = vmatpush1.msra.mxu0 0.0
    %7305 = vmatprep.subr.mxu0 0.0
    %7306 = vmatpush1.msra.mxu0 0.0
    %7307 = vmatprep.subr.mxu0 0.0
    %7308 = vmatpush1.msra.mxu0 0.0
    %7309 = vmatprep.subr.mxu0 0.0
    %7310 = vmatpush1.msra.mxu0 0.0
    %7311 = vmatprep.subr.mxu0 0.0
    %7312 = vmatpush1.msra.mxu0 0.0
    %7313 = vmatprep.subr.mxu0 0.0
    %7314 = vmatpush1.msra.mxu0 0.0
    %7315 = vmatprep.subr.mxu0 0.0
    %7316 = vmatpush1.msra.mxu0 0.0
    %7317 = vmatprep.subr.mxu0 0.0
    %7318 = vmatpush1.msra.mxu0 0.0
    %7319 = vmatprep.subr.mxu0 0.0
    %7320 = vmatpush1.msra.mxu0 0.0
    %7321 = vmatprep.subr.mxu0 0.0
    %7322 = vmatpush1.msra.mxu0 0.0
    %7323 = vmatprep.subr.mxu0 0.0
    %7324 = vmatpush1.msra.mxu0 0.0
    %7325 = vmatprep.subr.mxu0 0.0
    %7326 = vmatpush1.msra.mxu0 0.0
    %7327 = vmatprep.subr.mxu0 0.0
    %7328 = vmatpush1.msra.mxu0 0.0
    %7329 = vmatprep.subr.mxu0 0.0
    %7330 = vmatpush1.msra.mxu0 0.0
    %7331 = vmatprep.subr.mxu0 0.0
    %7332 = vmatpush1.msra.mxu0 0.0
    %7333 = vmatprep.mubr.f32.mxu0 0.0
    %7334 = vmatmul.mubr.f32.gmra.mrb[0].mxu0 %v6912
    %v7335 = vpop.f32.mrb[0].mxu0
    %v7336 = vadd.f32 %v7265, %v7335
    %v7337 = vpop.f32.mrb[0].mxu0
    %v7338 = vadd.f32 %v7267, %v7337
    %7339 = vdwg.mxu0
    %7340 = vmatprep.subr.mxu0 0.0
    %7341 = vmatpush1.msra.mxu0 %v6547
    %7342 = vmatprep.subr.mxu0 0.0
    %7343 = vmatpush1.msra.mxu0 %v6552
    %7344 = vmatprep.subr.mxu0 0.0
    %7345 = vmatpush1.msra.mxu0 %v6557
    %7346 = vmatprep.subr.mxu0 0.0
    %7347 = vmatpush1.msra.mxu0 %v6562
    %7348 = vmatprep.subr.mxu0 0.0
    %7349 = vmatpush1.msra.mxu0 %v6567
    %7350 = vmatprep.subr.mxu0 0.0
    %7351 = vmatpush1.msra.mxu0 %v6572
    %7352 = vmatprep.subr.mxu0 0.0
    %7353 = vmatpush1.msra.mxu0 %v6577
    %7354 = vmatprep.subr.mxu0 0.0
    %7355 = vmatpush1.msra.mxu0 %v6582
    %7356 = vmatprep.subr.mxu0 0.0
    %7357 = vmatpush1.msra.mxu0 %v6587
    %7358 = vmatprep.subr.mxu0 0.0
    %7359 = vmatpush1.msra.mxu0 %v6592
    %7360 = vmatprep.subr.mxu0 0.0
    %7361 = vmatpush1.msra.mxu0 %v6597
    %7362 = vmatprep.subr.mxu0 0.0
    %7363 = vmatpush1.msra.mxu0 %v6602
    %7364 = vmatprep.subr.mxu0 0.0
    %7365 = vmatpush1.msra.mxu0 %v6607
    %7366 = vmatprep.subr.mxu0 0.0
    %7367 = vmatpush1.msra.mxu0 %v6612
    %7368 = vmatprep.subr.mxu0 0.0
    %7369 = vmatpush1.msra.mxu0 %v6617
    %7370 = vmatprep.subr.mxu0 0.0
    %7371 = vmatpush1.msra.mxu0 %v6622
    %7372 = vmatprep.subr.mxu0 0.0
    %7373 = vmatpush1.msra.mxu0 %v6627
    %7374 = vmatprep.subr.mxu0 0.0
    %7375 = vmatpush1.msra.mxu0 %v6632
    %7376 = vmatprep.subr.mxu0 0.0
    %7377 = vmatpush1.msra.mxu0 %v6637
    %7378 = vmatprep.subr.mxu0 0.0
    %7379 = vmatpush1.msra.mxu0 %v6642
    %7380 = vmatprep.subr.mxu0 0.0
    %7381 = vmatpush1.msra.mxu0 %v6647
    %7382 = vmatprep.subr.mxu0 0.0
    %7383 = vmatpush1.msra.mxu0 %v6652
    %7384 = vmatprep.subr.mxu0 0.0
    %7385 = vmatpush1.msra.mxu0 %v6657
    %7386 = vmatprep.subr.mxu0 0.0
    %7387 = vmatpush1.msra.mxu0 %v6662
    %7388 = vmatprep.subr.mxu0 0.0
    %7389 = vmatpush1.msra.mxu0 %v6667
    %7390 = vmatprep.subr.mxu0 0.0
    %7391 = vmatpush1.msra.mxu0 %v6672
    %7392 = vmatprep.subr.mxu0 0.0
    %7393 = vmatpush1.msra.mxu0 %v6677
    %7394 = vmatprep.subr.mxu0 0.0
    %7395 = vmatpush1.msra.mxu0 %v6682
    %7396 = vmatprep.subr.mxu0 0.0
    %7397 = vmatpush1.msra.mxu0 %v6687
    %7398 = vmatprep.subr.mxu0 0.0
    %7399 = vmatpush1.msra.mxu0 %v6692
    %7400 = vmatprep.subr.mxu0 0.0
    %7401 = vmatpush1.msra.mxu0 %v6697
    %7402 = vmatprep.subr.mxu0 0.0
    %7403 = vmatpush1.msra.mxu0 %v6702
    %7404 = vmatprep.mubr.f32.mxu0 %v6539
    %7405 = vmatmul.mubr.f32.gmra.mrb[0].mxu0 %v6538
    %v7406 = vpop.f32.mrb[0].mxu0
    %v7407 = vadd.f32 %v6904, %v7406
    %v7408 = vpop.f32.mrb[0].mxu0
    %7409 = vdwg.mxu0
    %7410 = vmatprep.subr.mxu0 0.0
    %7411 = vmatpush1.msra.mxu0 %v6707
    %7412 = vmatprep.subr.mxu0 0.0
    %7413 = vmatpush1.msra.mxu0 %v6712
    %7414 = vmatprep.subr.mxu0 0.0
    %7415 = vmatpush1.msra.mxu0 %v6717
    %7416 = vmatprep.subr.mxu0 0.0
    %7417 = vmatpush1.msra.mxu0 %v6722
    %7418 = vmatprep.subr.mxu0 0.0
    %7419 = vmatpush1.msra.mxu0 %v6727
    %7420 = vmatprep.subr.mxu0 0.0
    %7421 = vmatpush1.msra.mxu0 %v6732
    %7422 = vmatprep.subr.mxu0 0.0
    %7423 = vmatpush1.msra.mxu0 %v6737
    %7424 = vmatprep.subr.mxu0 0.0
    %7425 = vmatpush1.msra.mxu0 %v6742
    %7426 = vmatprep.subr.mxu0 0.0
    %7427 = vmatpush1.msra.mxu0 %v6747
    %7428 = vmatprep.subr.mxu0 0.0
    %7429 = vmatpush1.msra.mxu0 %v6752
    %7430 = vmatprep.subr.mxu0 0.0
    %7431 = vmatpush1.msra.mxu0 %v6757
    %7432 = vmatprep.subr.mxu0 0.0
    %7433 = vmatpush1.msra.mxu0 %v6762
    %7434 = vmatprep.subr.mxu0 0.0
    %7435 = vmatpush1.msra.mxu0 %v6767
    %7436 = vmatprep.subr.mxu0 0.0
    %7437 = vmatpush1.msra.mxu0 %v6772
    %7438 = vmatprep.subr.mxu0 0.0
    %7439 = vmatpush1.msra.mxu0 %v6777
    %7440 = vmatprep.subr.mxu0 0.0
    %7441 = vmatpush1.msra.mxu0 %v6782
    %7442 = vmatprep.subr.mxu0 0.0
    %7443 = vmatpush1.msra.mxu0 %v6787
    %7444 = vmatprep.subr.mxu0 0.0
    %7445 = vmatpush1.msra.mxu0 %v6792
    %7446 = vmatprep.subr.mxu0 0.0
    %7447 = vmatpush1.msra.mxu0 %v6797
    %7448 = vmatprep.subr.mxu0 0.0
    %7449 = vmatpush1.msra.mxu0 %v6802
    %7450 = vmatprep.subr.mxu0 0.0
    %7451 = vmatpush1.msra.mxu0 %v6807
    %7452 = vmatprep.subr.mxu0 0.0
    %7453 = vmatpush1.msra.mxu0 %v6812
    %7454 = vmatprep.subr.mxu0 0.0
    %7455 = vmatpush1.msra.mxu0 %v6817
    %7456 = vmatprep.subr.mxu0 0.0
    %7457 = vmatpush1.msra.mxu0 %v6822
    %7458 = vmatprep.subr.mxu0 0.0
    %7459 = vmatpush1.msra.mxu0 %v6827
    %7460 = vmatprep.subr.mxu0 0.0
    %7461 = vmatpush1.msra.mxu0 %v6832
    %7462 = vmatprep.subr.mxu0 0.0
    %7463 = vmatpush1.msra.mxu0 %v6837
    %7464 = vmatprep.subr.mxu0 0.0
    %7465 = vmatpush1.msra.mxu0 %v6842
    %7466 = vmatprep.subr.mxu0 0.0
    %7467 = vmatpush1.msra.mxu0 %v6847
    %7468 = vmatprep.subr.mxu0 0.0
    %7469 = vmatpush1.msra.mxu0 %v6852
    %7470 = vmatprep.subr.mxu0 0.0
    %7471 = vmatpush1.msra.mxu0 %v6857
    %7472 = vmatprep.subr.mxu0 0.0
    %7473 = vmatpush1.msra.mxu0 %v6862
    %7474 = vmatprep.mubr.f32.mxu0 %v6541
    %7475 = vmatmul.mubr.f32.gmra.mrb[0].mxu0 %v6540
    %v7476 = vpop.f32.mrb[0].mxu0
    %v7477 = vadd.f32 %v7407, %v7476
    %v7478 = vpop.f32.mrb[0].mxu0
    %7479 = vdwg.mxu0
    %7480 = vmatprep.subr.mxu0 0.0
    %7481 = vmatpush1.msra.mxu0 %v6867
    %7482 = vmatprep.subr.mxu0 0.0
    %7483 = vmatpush1.msra.mxu0 %v6872
    %7484 = vmatprep.subr.mxu0 0.0
    %7485 = vmatpush1.msra.mxu0 %v6877
    %7486 = vmatprep.subr.mxu0 0.0
    %7487 = vmatpush1.msra.mxu0 %v6882
    %7488 = vmatprep.subr.mxu0 0.0
    %7489 = vmatpush1.msra.mxu0 0.0
    %7490 = vmatprep.subr.mxu0 0.0
    %7491 = vmatpush1.msra.mxu0 0.0
    %7492 = vmatprep.subr.mxu0 0.0
    %7493 = vmatpush1.msra.mxu0 0.0
    %7494 = vmatprep.subr.mxu0 0.0
    %7495 = vmatpush1.msra.mxu0 0.0
    %7496 = vmatprep.subr.mxu0 0.0
    %7497 = vmatpush1.msra.mxu0 0.0
    %7498 = vmatprep.subr.mxu0 0.0
    %7499 = vmatpush1.msra.mxu0 0.0
    %7500 = vmatprep.subr.mxu0 0.0
    %7501 = vmatpush1.msra.mxu0 0.0
    %7502 = vmatprep.subr.mxu0 0.0
    %7503 = vmatpush1.msra.mxu0 0.0
    %7504 = vmatprep.subr.mxu0 0.0
    %7505 = vmatpush1.msra.mxu0 0.0
    %7506 = vmatprep.subr.mxu0 0.0
    %7507 = vmatpush1.msra.mxu0 0.0
    %7508 = vmatprep.subr.mxu0 0.0
    %7509 = vmatpush1.msra.mxu0 0.0
    %7510 = vmatprep.subr.mxu0 0.0
    %7511 = vmatpush1.msra.mxu0 0.0
    %7512 = vmatprep.subr.mxu0 0.0
    %7513 = vmatpush1.msra.mxu0 0.0
    %7514 = vmatprep.subr.mxu0 0.0
    %7515 = vmatpush1.msra.mxu0 0.0
    %7516 = vmatprep.subr.mxu0 0.0
    %7517 = vmatpush1.msra.mxu0 0.0
    %7518 = vmatprep.subr.mxu0 0.0
    %7519 = vmatpush1.msra.mxu0 0.0
    %7520 = vmatprep.subr.mxu0 0.0
    %7521 = vmatpush1.msra.mxu0 0.0
    %7522 = vmatprep.subr.mxu0 0.0
    %7523 = vmatpush1.msra.mxu0 0.0
    %7524 = vmatprep.subr.mxu0 0.0
    %7525 = vmatpush1.msra.mxu0 0.0
    %7526 = vmatprep.subr.mxu0 0.0
    %7527 = vmatpush1.msra.mxu0 0.0
    %7528 = vmatprep.subr.mxu0 0.0
    %7529 = vmatpush1.msra.mxu0 0.0
    %7530 = vmatprep.subr.mxu0 0.0
    %7531 = vmatpush1.msra.mxu0 0.0
    %7532 = vmatprep.subr.mxu0 0.0
    %7533 = vmatpush1.msra.mxu0 0.0
    %7534 = vmatprep.subr.mxu0 0.0
    %7535 = vmatpush1.msra.mxu0 0.0
    %7536 = vmatprep.subr.mxu0 0.0
    %7537 = vmatpush1.msra.mxu0 0.0
    %7538 = vmatprep.subr.mxu0 0.0
    %7539 = vmatpush1.msra.mxu0 0.0
    %7540 = vmatprep.subr.mxu0 0.0
    %7541 = vmatpush1.msra.mxu0 0.0
    %7542 = vmatprep.subr.mxu0 0.0
    %7543 = vmatpush1.msra.mxu0 0.0
    %7544 = vmatprep.mubr.f32.mxu0 0.0
    %7545 = vmatmul.mubr.f32.gmra.mrb[0].mxu0 %v6912
    %v7546 = vpop.f32.mrb[0].mxu0
    %v7547 = vadd.f32 %v7477, %v7546
    %v7548 = vpop.f32.mrb[0].mxu0
    %7549 = vdwg.mxu0
    %v7550 = vmax.f32 %v7123, 0.0
    %v7551 = vmax.f32 %v7125, 0.0
    %v7552 = vmax.f32 %v7336, 0.0
    %v7553 = vmax.f32 %v7338, 0.0
    %v7554 = vmax.f32 %v7547, 0.0
    %7556 = vrot.lane.b32.xlu0 %v7550, 64
    %v7557 = vpop.permute.xlu0 %7556
    %v7559 = vmax.f32 %v7550, %v7557
    %v7560 = vmax.f32 %v7559, %v7551
    %7562 = vrot.lane.b32.xlu0 %v7551, 64
    %v7563 = vpop.permute.xlu0 %7562
    %v7565 = vmax.f32 %v7560, %v7563
    %v7566 = vmax.f32 %v7565, %v7552
    %7568 = vrot.lane.b32.xlu0 %v7552, 64
    %v7569 = vpop.permute.xlu0 %7568
    %v7571 = vmax.f32 %v7566, %v7569
    %v7572 = vmax.f32 %v7571, %v7553
    %7574 = vrot.lane.b32.xlu0 %v7553, 64
    %v7575 = vpop.permute.xlu0 %7574
    %v7577 = vmax.f32 %v7572, %v7575
    %v7578 = vmax.f32 %v7577, %v7554
    %7580 = vrot.lane.b32.xlu0 %v7554, 64
    %v7581 = vpop.permute.xlu0 %7580
    %v7583 = vmax.f32 %v7578, %v7581
    %7585 = vrot.lane.b32.xlu0 %v4781, 64
    %v7586 = vpop.permute.xlu0 %7585
    %v7588 = vsel %vm121, %v4776, %v7586
    %v7589 = vld [vmem:[%s17] sm:$0xff]
    %v7590 = vld [vmem:[%s17 + $0x8] sm:$0xff]
    %v7591 = vld [vmem:[%s17 + $0x10] sm:$0xff]
    %v7592 = vld [vmem:[%s17 + $0x18] sm:$0xff]
    %v7593 = vld [vmem:[%s17 + $0x20] sm:$0xff]
    %v7594 = vld [vmem:[%s17 + $0x28] sm:$0xff]
    %v7595 = vld [vmem:[%s17 + $0x30] sm:$0xff]
    %v7596 = vld [vmem:[%s17 + $0x38] sm:$0xff]
    %v7597 = vld [vmem:[%s17 + $0x40] sm:$0xff]
    %v7598 = vld [vmem:[%s17 + $0x48] sm:$0xff]
    %v7599 = vld [vmem:[%s17 + $0x50] sm:$0xff]
    %v7600 = vld [vmem:[%s17 + $0x58] sm:$0xff]
    %v7601 = vld [vmem:[%s17 + $0x60] sm:$0xff]
    %v7602 = vld [vmem:[%s17 + $0x68] sm:$0xff]
    %v7603 = vld [vmem:[%s17 + $0x70] sm:$0xff]
    %v7604 = vld [vmem:[%s17 + $0x78] sm:$0xff]
    %v7605 = vld [vmem:[%s17 + $0x80] sm:$0xff]
    %v7606 = vld [vmem:[%s17 + $0x88] sm:$0xff]
    %v7607 = vld [vmem:[%s17 + $0x90] sm:$0xff]
    %v7608 = vld [vmem:[%s17 + $0x98] sm:$0xff]
    %v7609 = vld [vmem:[%s17 + $0xa0] sm:$0xff]
    %v7610 = vld [vmem:[%s17 + $0xa8] sm:$0xff]
    %v7611 = vld [vmem:[%s17 + $0xb0] sm:$0xff]
    %v7612 = vld [vmem:[%s17 + $0xb8] sm:$0xff]
    %v7613 = vld [vmem:[%s18] sm:$0x1]
    %v7615 = vlaneseq
    %v7616 = vshrl.u32 %v7615, 7
    %v7617 = vsub.s32 0, %v7616
    %v7618 = vrot.slane %v7613, %v7617
    %v7621 = vsel %vm121, %v7583, 0
    %7623 = vmatprep.subr.mxu0 0.0
    %7624 = vmatpush1.msra.mxu0 %v7589
    %7625 = vmatprep.subr.mxu0 0.0
    %7626 = vmatpush1.msra.mxu0 %v7590
    %7627 = vmatprep.subr.mxu0 0.0
    %7628 = vmatpush1.msra.mxu0 %v7591
    %7629 = vmatprep.subr.mxu0 0.0
    %7630 = vmatpush1.msra.mxu0 %v7592
    %7631 = vmatprep.subr.mxu0 0.0
    %7632 = vmatpush1.msra.mxu0 %v7593
    %7633 = vmatprep.subr.mxu0 0.0
    %7634 = vmatpush1.msra.mxu0 %v7594
    %7635 = vmatprep.subr.mxu0 0.0
    %7636 = vmatpush1.msra.mxu0 %v7595
    %7637 = vmatprep.subr.mxu0 0.0
    %7638 = vmatpush1.msra.mxu0 %v7596
    %7639 = vmatprep.subr.mxu0 0.0
    %7640 = vmatpush1.msra.mxu0 %v7597
    %7641 = vmatprep.subr.mxu0 0.0
    %7642 = vmatpush1.msra.mxu0 %v7598
    %7643 = vmatprep.subr.mxu0 0.0
    %7644 = vmatpush1.msra.mxu0 %v7599
    %7645 = vmatprep.subr.mxu0 0.0
    %7646 = vmatpush1.msra.mxu0 %v7600
    %7647 = vmatprep.subr.mxu0 0.0
    %7648 = vmatpush1.msra.mxu0 %v7601
    %7649 = vmatprep.subr.mxu0 0.0
    %7650 = vmatpush1.msra.mxu0 %v7602
    %7651 = vmatprep.subr.mxu0 0.0
    %7652 = vmatpush1.msra.mxu0 %v7603
    %7653 = vmatprep.subr.mxu0 0.0
    %7654 = vmatpush1.msra.mxu0 %v7604
    %7655 = vmatprep.subr.mxu0 0.0
    %7656 = vmatpush1.msra.mxu0 %v7605
    %7657 = vmatprep.subr.mxu0 0.0
    %7658 = vmatpush1.msra.mxu0 %v7606
    %7659 = vmatprep.subr.mxu0 0.0
    %7660 = vmatpush1.msra.mxu0 %v7607
    %7661 = vmatprep.subr.mxu0 0.0
    %7662 = vmatpush1.msra.mxu0 %v7608
    %7663 = vmatprep.subr.mxu0 0.0
    %7664 = vmatpush1.msra.mxu0 %v7609
    %7665 = vmatprep.subr.mxu0 0.0
    %7666 = vmatpush1.msra.mxu0 %v7610
    %7667 = vmatprep.subr.mxu0 0.0
    %7668 = vmatpush1.msra.mxu0 %v7611
    %7669 = vmatprep.subr.mxu0 0.0
    %7670 = vmatpush1.msra.mxu0 %v7612
    %7671 = vmatprep.subr.mxu0 0.0
    %7672 = vmatpush1.msra.mxu0 0.0
    %7673 = vmatprep.subr.mxu0 0.0
    %7674 = vmatpush1.msra.mxu0 0.0
    %7675 = vmatprep.subr.mxu0 0.0
    %7676 = vmatpush1.msra.mxu0 0.0
    %7677 = vmatprep.subr.mxu0 0.0
    %7678 = vmatpush1.msra.mxu0 0.0
    %7679 = vmatprep.subr.mxu0 0.0
    %7680 = vmatpush1.msra.mxu0 0.0
    %7681 = vmatprep.subr.mxu0 0.0
    %7682 = vmatpush1.msra.mxu0 0.0
    %7683 = vmatprep.subr.mxu0 0.0
    %7684 = vmatpush1.msra.mxu0 0.0
    %7685 = vmatprep.subr.mxu0 0.0
    %7686 = vmatpush1.msra.mxu0 0.0
    %7687 = vmatprep.mubr.f32.mxu0 %v7621
    %7688 = vmatmul.mubr.f32.gmra.mrb[0].mxu0 %v7588
    %v7689 = vpop.f32.mrb[0].mxu0
    %v7690 = vadd.f32 %v7618, %v7689
    %v7691 = vpop.f32.mrb[0].mxu0
    %7692 = vdwg.mxu0
    %v7693 = vmax.f32 %v7690, 0.0
    %v7694 = vld [vmem:[%s19] sm:$0xff]
    %v7695 = vld [vmem:[%s19 + $0x8] sm:$0xff]
    %v7696 = vld [vmem:[%s19 + $0x10] sm:$0xff]
    %v7697 = vld [vmem:[%s19 + $0x18] sm:$0xff]
    %v7698 = vld [vmem:[#allocation2] sm:$0x1]
    %v7700 = vlaneseq
    %v7701 = vshrl.u32 %v7700, 7
    %v7702 = vsub.s32 0, %v7701
    %v7703 = vrot.slane %v7698, %v7702
    %v7706 = vsel %vm6910, %v7693, 0
    %7708 = vmatprep.subr.mxu0 0.0
    %7709 = vmatpush1.msra.mxu0 %v7694
    %7710 = vmatprep.subr.mxu0 0.0
    %7711 = vmatpush1.msra.mxu0 %v7695
    %7712 = vmatprep.subr.mxu0 0.0
    %7713 = vmatpush1.msra.mxu0 %v7696
    %7714 = vmatprep.subr.mxu0 0.0
    %7715 = vmatpush1.msra.mxu0 %v7697
    %7716 = vmatprep.subr.mxu0 0.0
    %7717 = vmatpush1.msra.mxu0 0.0
    %7718 = vmatprep.subr.mxu0 0.0
    %7719 = vmatpush1.msra.mxu0 0.0
    %7720 = vmatprep.subr.mxu0 0.0
    %7721 = vmatpush1.msra.mxu0 0.0
    %7722 = vmatprep.subr.mxu0 0.0
    %7723 = vmatpush1.msra.mxu0 0.0
    %7724 = vmatprep.subr.mxu0 0.0
    %7725 = vmatpush1.msra.mxu0 0.0
    %7726 = vmatprep.subr.mxu0 0.0
    %7727 = vmatpush1.msra.mxu0 0.0
    %7728 = vmatprep.subr.mxu0 0.0
    %7729 = vmatpush1.msra.mxu0 0.0
    %7730 = vmatprep.subr.mxu0 0.0
    %7731 = vmatpush1.msra.mxu0 0.0
    %7732 = vmatprep.subr.mxu0 0.0
    %7733 = vmatpush1.msra.mxu0 0.0
    %7734 = vmatprep.subr.mxu0 0.0
    %7735 = vmatpush1.msra.mxu0 0.0
    %7736 = vmatprep.subr.mxu0 0.0
    %7737 = vmatpush1.msra.mxu0 0.0
    %7738 = vmatprep.subr.mxu0 0.0
    %7739 = vmatpush1.msra.mxu0 0.0
    %7740 = vmatprep.subr.mxu0 0.0
    %7741 = vmatpush1.msra.mxu0 0.0
    %7742 = vmatprep.subr.mxu0 0.0
    %7743 = vmatpush1.msra.mxu0 0.0
    %7744 = vmatprep.subr.mxu0 0.0
    %7745 = vmatpush1.msra.mxu0 0.0
    %7746 = vmatprep.subr.mxu0 0.0
    %7747 = vmatpush1.msra.mxu0 0.0
    %7748 = vmatprep.subr.mxu0 0.0
    %7749 = vmatpush1.msra.mxu0 0.0
    %7750 = vmatprep.subr.mxu0 0.0
    %7751 = vmatpush1.msra.mxu0 0.0
    %7752 = vmatprep.subr.mxu0 0.0
    %7753 = vmatpush1.msra.mxu0 0.0
    %7754 = vmatprep.subr.mxu0 0.0
    %7755 = vmatpush1.msra.mxu0 0.0
    %7756 = vmatprep.subr.mxu0 0.0
    %7757 = vmatpush1.msra.mxu0 0.0
    %7758 = vmatprep.subr.mxu0 0.0
    %7759 = vmatpush1.msra.mxu0 0.0
    %7760 = vmatprep.subr.mxu0 0.0
    %7761 = vmatpush1.msra.mxu0 0.0
    %7762 = vmatprep.subr.mxu0 0.0
    %7763 = vmatpush1.msra.mxu0 0.0
    %7764 = vmatprep.subr.mxu0 0.0
    %7765 = vmatpush1.msra.mxu0 0.0
    %7766 = vmatprep.subr.mxu0 0.0
    %7767 = vmatpush1.msra.mxu0 0.0
    %7768 = vmatprep.subr.mxu0 0.0
    %7769 = vmatpush1.msra.mxu0 0.0
    %7770 = vmatprep.subr.mxu0 0.0
    %7771 = vmatpush1.msra.mxu0 0.0
    %7772 = vmatprep.mubr.f32.mxu0 0.0
    %7773 = vmatmul.mubr.f32.gmra.mrb[0].mxu0 %v7706
    %v7774 = vpop.f32.mrb[0].mxu0
    %v7775 = vadd.f32 %v7703, %v7774
    %v7776 = vpop.f32.mrb[0].mxu0
    %7777 = vdwg.mxu0
    %v7778 = vxor.u32 %v7775, 2147483648
    %v7779 = vmul.f32 %v7778, 1.442695
    %v7780 = vpow.pop %v7779
    %v7781 = vadd.f32 %v7780, 1.0
    %v7782 = vrcp.pop %v7781
    %v7783 = vmul.f32 1.0, %v7782
    %vm7784 = vcmask 1024
    %7785 = vst.msk [vmem:[%s21] sm:$0x3] %vm7784, %v7783
    // Predicated region
    $region94: #{vccnn_forward.1} parent=1 // pred_check
      _
    $region95: #{vccnn_forward.1} parent=1 // pred_check_branch
      %7787 = sbr.rel (0) target = $region97
    $region96: #{vccnn_forward.1} parent=1 // pred_region
      _
    $region97: #{vccnn_forward.1} parent=1 // pred_fallthru
      _
    // Predicated region
    $region98: #{vccnn_forward.1} parent=1 // pred_check
      _
    $region99: #{vccnn_forward.1} parent=1 // pred_check_branch
      %7789 = sbr.rel (0) target = $region101
    $region100: #{vccnn_forward.1} parent=1 // pred_region
      _
    $region101: #{vccnn_forward.1} parent=1 // pred_fallthru
      _
    %7790 = vsyncpa [#allocation4], 1
    %7791 = vsyncpa [#allocation6], 1

</llo_original>
